<compile_context>
chip_gen: v7x
topology: tpu7x:2x2x1
jax: 0.10.0
libtpu: 0.0.40
codegen_flags: <defaults>
</compile_context>

<pallas_src>
import functools

import jax
import jax.numpy as jnp
from jax.experimental import pallas as pl
from jax.experimental.pallas import tpu as pltpu

# ---- mini-BERT config (lane-dense small shapes) ----
VOCAB = 64
MAX_POS = 16
HIDDEN = 256            # multiple of 128 -> lane-dense residual stream
NUM_HEADS = 2
HEAD_DIM = HIDDEN // NUM_HEADS   # 128 -> head slices are full, aligned vregs
NUM_LAYERS = 2
INTERMEDIATE = 512      # 4x hidden, multiple of 128
N_CLASSES = 3
N_CLASSES_PAD = 128     # lane-dense padded logits; sliced to N_CLASSES in the wrapper
LN_EPS = 1e-12
ATTN_SCALE = 1.0 / (HEAD_DIM ** 0.5)


# ------------------------- in-kernel helpers -------------------------

def _ln(x, g, b):
    mu = jnp.mean(x, axis=-1, keepdims=True)
    var = jnp.mean(jnp.square(x - mu), axis=-1, keepdims=True)
    return (x - mu) * jax.lax.rsqrt(var + jnp.float32(LN_EPS)) * g + b


def _gelu(x):  # exact erf-based GELU (matches BERT)
    return 0.5 * x * (1.0 + jax.lax.erf(x * jnp.float32(0.7071067811865476)))


# ------------------------- Pallas kernels -------------------------

def _embed_ln_kernel(we_ref, pt_ref, g_ref, b_ref, o_ref):
    # fused: word_emb + (pos_emb + type_emb) followed by LayerNorm
    x = we_ref[0] + pt_ref[...]                                   # [S, H]
    o_ref[0] = _ln(x, g_ref[...], b_ref[...]).astype(o_ref.dtype)


def embed_layernorm(word_tok, pos_type, gamma, beta):
    B, S, H = word_tok.shape
    return pl.pallas_call(
        _embed_ln_kernel,
        out_shape=jax.ShapeDtypeStruct((B, S, H), jnp.float32),
        grid=(B,),
        in_specs=[
            pl.BlockSpec((1, S, H), lambda b: (b, 0, 0)),
            pl.BlockSpec((S, H), lambda b: (0, 0)),
            pl.BlockSpec((1, H), lambda b: (0, 0)),
            pl.BlockSpec((1, H), lambda b: (0, 0)),
        ],
        out_specs=pl.BlockSpec((1, S, H), lambda b: (b, 0, 0)),
        compiler_params=pltpu.CompilerParams(dimension_semantics=("parallel",)),
    )(word_tok, pos_type, gamma, beta)


def _encoder_layer_kernel(x_ref, mask_ref, wqkv_ref, bqkv_ref, wo_ref, bo_ref,
                          ln1g_ref, ln1b_ref, w1_ref, b1_ref, w2_ref, b2_ref,
                          ln2g_ref, ln2b_ref, o_ref, *, nh, dh):
    x = x_ref[0]                                                  # [S, H]  (one batch item)
    hd = nh * dh

    # fused QKV projection: one MXU call [S,H] x [H,3H]
    qkv = jnp.dot(x, wqkv_ref[...], preferred_element_type=jnp.float32) + bqkv_ref[...]

    # additive attention mask built in-kernel: [1, S]
    add_mask = (1.0 - mask_ref[0]) * jnp.float32(-1e9)

    # per-head attention; residual stream stays in [S, H], head_dim = 128 lanes
    heads = []
    for h in range(nh):
        q = qkv[:, h * dh:(h + 1) * dh]                           # [S, D]
        k = qkv[:, hd + h * dh:hd + (h + 1) * dh]                 # [S, D]
        v = qkv[:, 2 * hd + h * dh:2 * hd + (h + 1) * dh]         # [S, D]
        # contract on last dim of both (no in-kernel transpose)
        s = jax.lax.dot_general(q, k, (((1,), (1,)), ((), ())),
                                preferred_element_type=jnp.float32)
        s = s * jnp.float32(ATTN_SCALE) + add_mask                # [S, S]
        s = s - jnp.max(s, axis=-1, keepdims=True)
        p = jnp.exp(s)
        p = p / jnp.sum(p, axis=-1, keepdims=True)
        heads.append(jnp.dot(p, v, preferred_element_type=jnp.float32))
    attn = jnp.concatenate(heads, axis=1)                         # [S, H]

    # output projection + fused residual + LayerNorm
    a = jnp.dot(attn, wo_ref[...], preferred_element_type=jnp.float32) + bo_ref[...]
    h1 = _ln(x + a, ln1g_ref[...], ln1b_ref[...])

    # FFN (GELU) + fused residual + LayerNorm
    f = jnp.dot(h1, w1_ref[...], preferred_element_type=jnp.float32) + b1_ref[...]
    f = _gelu(f)
    f = jnp.dot(f, w2_ref[...], preferred_element_type=jnp.float32) + b2_ref[...]
    o_ref[0] = _ln(h1 + f, ln2g_ref[...], ln2b_ref[...]).astype(o_ref.dtype)


def encoder_layer(x, mask3, lp):
    B, S, H = x.shape
    I = lp["w1"].shape[1]

    def full(shape):
        return pl.BlockSpec(shape, lambda b: (0,) * len(shape))

    return pl.pallas_call(
        functools.partial(_encoder_layer_kernel, nh=NUM_HEADS, dh=HEAD_DIM),
        out_shape=jax.ShapeDtypeStruct((B, S, H), jnp.float32),
        grid=(B,),
        in_specs=[
            pl.BlockSpec((1, S, H), lambda b: (b, 0, 0)),          # residual stream
            pl.BlockSpec((1, 1, S), lambda b: (b, 0, 0)),          # attention mask
            full((H, 3 * H)), full((1, 3 * H)),                    # fused QKV
            full((H, H)), full((1, H)),                            # attn output proj
            full((1, H)), full((1, H)),                            # LN1
            full((H, I)), full((1, I)),                            # FFN up
            full((I, H)), full((1, H)),                            # FFN down
            full((1, H)), full((1, H)),                            # LN2
        ],
        out_specs=pl.BlockSpec((1, S, H), lambda b: (b, 0, 0)),
        compiler_params=pltpu.CompilerParams(dimension_semantics=("parallel",)),
    )(x, mask3, lp["wqkv"], lp["bqkv"], lp["wo"], lp["bo"],
      lp["ln1_g"], lp["ln1_b"], lp["w1"], lp["b1"],
      lp["w2"], lp["b2"], lp["ln2_g"], lp["ln2_b"])


def _head_kernel(x_ref, wp_ref, bp_ref, wc_ref, bc_ref, o_ref, *, batch):
    # fused: CLS gather + pooler (tanh) + dropout(identity at inference) + classifier
    wp = wp_ref[...]
    bp = bp_ref[...]
    wc = wc_ref[...]
    bc = bc_ref[...]
    for b in range(batch):                                        # tiny static unroll
        cls = x_ref[b][0:1, :]                                    # [1, H] CLS token of item b
        pooled = jnp.tanh(jnp.dot(cls, wp, preferred_element_type=jnp.float32) + bp)
        # nn.Dropout(p=0.3) is identity at inference.
        logits = jnp.dot(pooled, wc, preferred_element_type=jnp.float32) + bc
        o_ref[pl.ds(b, 1), :] = logits.astype(o_ref.dtype)        # lane-dense padded store


def pooler_classifier(hidden, wp, bp, wc_pad, bc_pad):
    B, S, H = hidden.shape
    C = wc_pad.shape[1]
    return pl.pallas_call(
        functools.partial(_head_kernel, batch=B),
        out_shape=jax.ShapeDtypeStruct((B, C), jnp.float32),
        grid=(1,),
        in_specs=[
            pl.BlockSpec((B, S, H), lambda i: (0, 0, 0)),
            pl.BlockSpec((H, H), lambda i: (0, 0)),
            pl.BlockSpec((1, H), lambda i: (0, 0)),
            pl.BlockSpec((H, C), lambda i: (0, 0)),
            pl.BlockSpec((1, C), lambda i: (0, 0)),
        ],
        out_specs=pl.BlockSpec((B, C), lambda i: (0, 0)),
    )(hidden, wp, bp, wc_pad, bc_pad)


# ------------------------- parameters -------------------------

def init_params(key):
    keys = iter(jax.random.split(key, 8 + 8 * NUM_LAYERS))

    def nrm(shape):
        return 0.02 * jax.random.normal(next(keys), shape, jnp.float32)

    params = {
        "word_emb": nrm((VOCAB, HIDDEN)),
        "pos_emb": nrm((MAX_POS, HIDDEN)),
        "type_emb": nrm((2, HIDDEN)),
        "emb_ln_g": jnp.ones((1, HIDDEN), jnp.float32),
        "emb_ln_b": jnp.zeros((1, HIDDEN), jnp.float32),
        "layers": [],
        # All weights stored pre-transposed to [in, out]; classifier padded to 128 lanes.
        "wp": nrm((HIDDEN, HIDDEN)), "bp": jnp.zeros((1, HIDDEN), jnp.float32),
    }
    wc = nrm((HIDDEN, N_CLASSES))
    params["wc_pad"] = jnp.zeros((HIDDEN, N_CLASSES_PAD), jnp.float32).at[:, :N_CLASSES].set(wc)
    params["bc_pad"] = jnp.zeros((1, N_CLASSES_PAD), jnp.float32)

    for _ in range(NUM_LAYERS):
        params["layers"].append({
            "wqkv": nrm((HIDDEN, 3 * HIDDEN)), "bqkv": jnp.zeros((1, 3 * HIDDEN), jnp.float32),
            "wo": nrm((HIDDEN, HIDDEN)), "bo": jnp.zeros((1, HIDDEN), jnp.float32),
            "ln1_g": jnp.ones((1, HIDDEN), jnp.float32), "ln1_b": jnp.zeros((1, HIDDEN), jnp.float32),
            "w1": nrm((HIDDEN, INTERMEDIATE)), "b1": jnp.zeros((1, INTERMEDIATE), jnp.float32),
            "w2": nrm((INTERMEDIATE, HIDDEN)), "b2": jnp.zeros((1, HIDDEN), jnp.float32),
            "ln2_g": jnp.ones((1, HIDDEN), jnp.float32), "ln2_b": jnp.zeros((1, HIDDEN), jnp.float32),
        })
    return params


# ------------------------- forward pass -------------------------

def sentiment_classifier_forward(params, input_ids, attention_mask):
    B, S = input_ids.shape

    # Embedding gathers (plain-JAX glue); add + LayerNorm fused in a Pallas kernel.
    word = params["word_emb"][input_ids]                                   # [B, S, H]
    pos_type = params["pos_emb"][:S] + params["type_emb"][0][None, :]      # [S, H] (token_type 0)
    x = embed_layernorm(word, pos_type, params["emb_ln_g"], params["emb_ln_b"])

    mask3 = attention_mask.astype(jnp.float32).reshape(B, 1, S)            # raw mask; additive form built in-kernel

    for lp in params["layers"]:
        x = encoder_layer(x, mask3, lp)                                    # one fused kernel per layer

    logits_pad = pooler_classifier(x, params["wp"], params["bp"],
                                   params["wc_pad"], params["bc_pad"])     # [B, 128]
    return logits_pad[:, :N_CLASSES]                                       # slice padded lanes -> [B, 3]


# ------------------------- main -------------------------

if __name__ == "__main__":
    key = jax.random.PRNGKey(0)
    params = init_params(key)

    B, S = 2, 8
    input_ids = jax.random.randint(jax.random.fold_in(key, 123), (B, S), 0, VOCAB, dtype=jnp.int32)
    attention_mask = jnp.ones((B, S), dtype=jnp.int32)

    logits = jax.jit(sentiment_classifier_forward)(params, input_ids, attention_mask)
    logits = jax.block_until_ready(logits)
    assert logits.shape == (B, N_CLASSES)
    assert logits.dtype == jnp.float32
    print("KERNEL_OK")
</pallas_src>

<mosaic_0001>
module attributes {stable_mosaic.version = 11 : i64} {
  func.func @_embed_ln_kernel(%arg0: i32, %arg1: memref<1x8x256xf32, #tpu.memory_space<vmem>>, %arg2: memref<8x256xf32, #tpu.memory_space<vmem>>, %arg3: memref<1x256xf32, #tpu.memory_space<vmem>>, %arg4: memref<1x256xf32, #tpu.memory_space<vmem>>, %arg5: memref<1x8x256xf32, #tpu.memory_space<vmem>>) attributes {dimension_semantics = [#tpu.dimension_semantics<parallel>], iteration_bounds = array<i64: 2>, scalar_prefetch = 0 : i64, scratch_operands = 0 : i64, tpu.core_type = #tpu.core_type<tc>, window_params = [{transform_indices = @transform_0, window_bounds = array<i64: 1, 8, 256>}, {pipeline_mode = #tpu.pipeline_mode<synchronous>, transform_indices = @transform_1, window_bounds = array<i64: 8, 256>}, {pipeline_mode = #tpu.pipeline_mode<synchronous>, transform_indices = @transform_2, window_bounds = array<i64: 1, 256>}, {pipeline_mode = #tpu.pipeline_mode<synchronous>, transform_indices = @transform_3, window_bounds = array<i64: 1, 256>}, {transform_indices = @transform_4, window_bounds = array<i64: 1, 8, 256>}]} {
    %c0 = arith.constant 0 : index
    %c0_0 = arith.constant 0 : index
    %c0_1 = arith.constant 0 : index
    %0 = vector.load %arg1[%c0, %c0_0, %c0_1] : memref<1x8x256xf32, #tpu.memory_space<vmem>>, vector<1x8x256xf32>
    %1 = vector.shape_cast %0 : vector<1x8x256xf32> to vector<8x256xf32>
    %c0_2 = arith.constant 0 : index
    %c0_3 = arith.constant 0 : index
    %2 = vector.load %arg2[%c0_2, %c0_3] : memref<8x256xf32, #tpu.memory_space<vmem>>, vector<8x256xf32>
    %3 = arith.addf %1, %2 : vector<8x256xf32>
    %c0_4 = arith.constant 0 : index
    %c0_5 = arith.constant 0 : index
    %4 = vector.load %arg3[%c0_4, %c0_5] : memref<1x256xf32, #tpu.memory_space<vmem>>, vector<1x256xf32>
    %c0_6 = arith.constant 0 : index
    %c0_7 = arith.constant 0 : index
    %5 = vector.load %arg4[%c0_6, %c0_7] : memref<1x256xf32, #tpu.memory_space<vmem>>, vector<1x256xf32>
    %cst = arith.constant dense<0.000000e+00> : vector<8xf32>
    %6 = vector.multi_reduction <add>, %3, %cst [1] : vector<8x256xf32> to vector<8xf32>
    %7 = vector.shape_cast %6 : vector<8xf32> to vector<8x1xf32>
    %cst_8 = arith.constant 2.560000e+02 : f32
    %8 = vector.broadcast %cst_8 : f32 to vector<8x1xf32>
    %9 = arith.divf %7, %8 : vector<8x1xf32>
    %10 = vector.broadcast %9 : vector<8x1xf32> to vector<8x256xf32>
    %11 = arith.subf %3, %10 : vector<8x256xf32>
    %12 = arith.mulf %11, %11 : vector<8x256xf32>
    %cst_9 = arith.constant dense<0.000000e+00> : vector<8xf32>
    %13 = vector.multi_reduction <add>, %12, %cst_9 [1] : vector<8x256xf32> to vector<8xf32>
    %14 = vector.shape_cast %13 : vector<8xf32> to vector<8x1xf32>
    %cst_10 = arith.constant 2.560000e+02 : f32
    %15 = vector.broadcast %cst_10 : f32 to vector<8x1xf32>
    %16 = arith.divf %14, %15 : vector<8x1xf32>
    %17 = vector.broadcast %9 : vector<8x1xf32> to vector<8x256xf32>
    %18 = arith.subf %3, %17 : vector<8x256xf32>
    %cst_11 = arith.constant 9.99999996E-13 : f32
    %19 = vector.broadcast %cst_11 : f32 to vector<8x1xf32>
    %20 = arith.addf %16, %19 : vector<8x1xf32>
    %21 = math.rsqrt %20 : vector<8x1xf32>
    %22 = vector.broadcast %21 : vector<8x1xf32> to vector<8x256xf32>
    %23 = arith.mulf %18, %22 : vector<8x256xf32>
    %24 = vector.broadcast %4 : vector<1x256xf32> to vector<8x256xf32>
    %25 = arith.mulf %23, %24 : vector<8x256xf32>
    %26 = vector.broadcast %5 : vector<1x256xf32> to vector<8x256xf32>
    %27 = arith.addf %25, %26 : vector<8x256xf32>
    %c0_12 = arith.constant 0 : index
    %c0_13 = arith.constant 0 : index
    %c0_14 = arith.constant 0 : index
    %28 = vector.load %arg5[%c0_12, %c0_13, %c0_14] : memref<1x8x256xf32, #tpu.memory_space<vmem>>, vector<1x8x256xf32>
    %29 = vector.shape_cast %28 : vector<1x8x256xf32> to vector<8x256xf32>
    %30 = vector.shape_cast %27 : vector<8x256xf32> to vector<1x8x256xf32>
    tpu.vector_store %arg5[%c0_12, %c0_13, %c0_14], %30 {strides = array<i32>} : memref<1x8x256xf32, #tpu.memory_space<vmem>>, vector<1x8x256xf32>,
    return
  }
  func.func @transform_0(%arg0: i32) -> (i32, i32, i32) {
    %c0_i32 = arith.constant 0 : i32
    %c0_i32_0 = arith.constant 0 : i32
    %c0_i32_1 = arith.constant 0 : i32
    return %arg0, %c0_i32, %c0_i32_0 : i32, i32, i32
  }
  func.func @transform_1(%arg0: i32) -> (i32, i32) {
    %c0_i32 = arith.constant 0 : i32
    %c0_i32_0 = arith.constant 0 : i32
    %c0_i32_1 = arith.constant 0 : i32
    return %c0_i32, %c0_i32_0 : i32, i32
  }
  func.func @transform_2(%arg0: i32) -> (i32, i32) {
    %c0_i32 = arith.constant 0 : i32
    %c0_i32_0 = arith.constant 0 : i32
    %c0_i32_1 = arith.constant 0 : i32
    return %c0_i32, %c0_i32_0 : i32, i32
  }
  func.func @transform_3(%arg0: i32) -> (i32, i32) {
    %c0_i32 = arith.constant 0 : i32
    %c0_i32_0 = arith.constant 0 : i32
    %c0_i32_1 = arith.constant 0 : i32
    return %c0_i32, %c0_i32_0 : i32, i32
  }
  func.func @transform_4(%arg0: i32) -> (i32, i32, i32) {
    %c0_i32 = arith.constant 0 : i32
    %c0_i32_0 = arith.constant 0 : i32
    %c0_i32_1 = arith.constant 0 : i32
    return %arg0, %c0_i32, %c0_i32_0 : i32, i32, i32
  }
}

module attributes {stable_mosaic.version = 11 : i64} {
  func.func @_encoder_layer_kernel(%arg0: i32, %arg1: memref<1x8x256xf32, #tpu.memory_space<vmem>>, %arg2: memref<1x1x8xf32, #tpu.memory_space<vmem>>, %arg3: memref<256x768xf32, #tpu.memory_space<vmem>>, %arg4: memref<1x768xf32, #tpu.memory_space<vmem>>, %arg5: memref<256x256xf32, #tpu.memory_space<vmem>>, %arg6: memref<1x256xf32, #tpu.memory_space<vmem>>, %arg7: memref<1x256xf32, #tpu.memory_space<vmem>>, %arg8: memref<1x256xf32, #tpu.memory_space<vmem>>, %arg9: memref<256x512xf32, #tpu.memory_space<vmem>>, %arg10: memref<1x512xf32, #tpu.memory_space<vmem>>, %arg11: memref<512x256xf32, #tpu.memory_space<vmem>>, %arg12: memref<1x256xf32, #tpu.memory_space<vmem>>, %arg13: memref<1x256xf32, #tpu.memory_space<vmem>>, %arg14: memref<1x256xf32, #tpu.memory_space<vmem>>, %arg15: memref<1x8x256xf32, #tpu.memory_space<vmem>>) attributes {dimension_semantics = [#tpu.dimension_semantics<parallel>], iteration_bounds = array<i64: 2>, scalar_prefetch = 0 : i64, scratch_operands = 0 : i64, tpu.core_type = #tpu.core_type<tc>, window_params = [{transform_indices = @transform_0, window_bounds = array<i64: 1, 8, 256>}, {transform_indices = @transform_1, window_bounds = array<i64: 1, 1, 8>}, {pipeline_mode = #tpu.pipeline_mode<synchronous>, transform_indices = @transform_2, window_bounds = array<i64: 256, 768>}, {pipeline_mode = #tpu.pipeline_mode<synchronous>, transform_indices = @transform_3, window_bounds = array<i64: 1, 768>}, {pipeline_mode = #tpu.pipeline_mode<synchronous>, transform_indices = @transform_4, window_bounds = array<i64: 256, 256>}, {pipeline_mode = #tpu.pipeline_mode<synchronous>, transform_indices = @transform_5, window_bounds = array<i64: 1, 256>}, {pipeline_mode = #tpu.pipeline_mode<synchronous>, transform_indices = @transform_6, window_bounds = array<i64: 1, 256>}, {pipeline_mode = #tpu.pipeline_mode<synchronous>, transform_indices = @transform_7, window_bounds = array<i64: 1, 256>}, {pipeline_mode = #tpu.pipeline_mode<synchronous>, transform_indices = @transform_8, window_bounds = array<i64: 256, 512>}, {pipeline_mode = #tpu.pipeline_mode<synchronous>, transform_indices = @transform_9, window_bounds = array<i64: 1, 512>}, {pipeline_mode = #tpu.pipeline_mode<synchronous>, transform_indices = @transform_10, window_bounds = array<i64: 512, 256>}, {pipeline_mode = #tpu.pipeline_mode<synchronous>, transform_indices = @transform_11, window_bounds = array<i64: 1, 256>}, {pipeline_mode = #tpu.pipeline_mode<synchronous>, transform_indices = @transform_12, window_bounds = array<i64: 1, 256>}, {pipeline_mode = #tpu.pipeline_mode<synchronous>, transform_indices = @transform_13, window_bounds = array<i64: 1, 256>}, {transform_indices = @transform_14, window_bounds = array<i64: 1, 8, 256>}]} {
    %c0 = arith.constant 0 : index
    %c0_0 = arith.constant 0 : index
    %c0_1 = arith.constant 0 : index
    %0 = vector.load %arg1[%c0, %c0_0, %c0_1] : memref<1x8x256xf32, #tpu.memory_space<vmem>>, vector<1x8x256xf32>
    %1 = vector.shape_cast %0 : vector<1x8x256xf32> to vector<8x256xf32>
    %c0_2 = arith.constant 0 : index
    %c0_3 = arith.constant 0 : index
    %2 = vector.load %arg3[%c0_2, %c0_3] : memref<256x768xf32, #tpu.memory_space<vmem>>, vector<256x768xf32>
    %cst = arith.constant dense<0.000000e+00> : vector<8x768xf32>
    %3 = tpu.matmul %1, %2, %cst {dimension_numbers = #tpu.dot_dimension_numbers<[1], [0], [0], [1], [0, 0, 1, 1], [], []>} : vector<8x256xf32>, vector<256x768xf32>, vector<8x768xf32> -> vector<8x768xf32>
    %c0_4 = arith.constant 0 : index
    %c0_5 = arith.constant 0 : index
    %4 = vector.load %arg4[%c0_4, %c0_5] : memref<1x768xf32, #tpu.memory_space<vmem>>, vector<1x768xf32>
    %5 = vector.broadcast %4 : vector<1x768xf32> to vector<8x768xf32>
    %6 = arith.addf %3, %5 : vector<8x768xf32>
    %c0_6 = arith.constant 0 : index
    %c0_7 = arith.constant 0 : index
    %c0_8 = arith.constant 0 : index
    %7 = vector.load %arg2[%c0_6, %c0_7, %c0_8] : memref<1x1x8xf32, #tpu.memory_space<vmem>>, vector<1x1x8xf32>
    %8 = vector.shape_cast %7 : vector<1x1x8xf32> to vector<1x8xf32>
    %cst_9 = arith.constant 1.000000e+00 : f32
    %9 = vector.broadcast %cst_9 : f32 to vector<1x8xf32>
    %10 = arith.subf %9, %8 : vector<1x8xf32>
    %cst_10 = arith.constant -1.000000e+09 : f32
    %11 = vector.broadcast %cst_10 : f32 to vector<1x8xf32>
    %12 = arith.mulf %10, %11 : vector<1x8xf32>
    %13 = vector.extract_strided_slice %6 {offsets = [0, 0], sizes = [8, 128], strides = [1, 1]} : vector<8x768xf32> to vector<8x128xf32>
    %14 = vector.extract_strided_slice %6 {offsets = [0, 256], sizes = [8, 128], strides = [1, 1]} : vector<8x768xf32> to vector<8x128xf32>
    %15 = vector.extract_strided_slice %6 {offsets = [0, 512], sizes = [8, 128], strides = [1, 1]} : vector<8x768xf32> to vector<8x128xf32>
    %cst_11 = arith.constant dense<0.000000e+00> : vector<8x8xf32>
    %16 = tpu.matmul %13, %14, %cst_11 {dimension_numbers = #tpu.dot_dimension_numbers<[1], [1], [0], [0], [0, 0, 1, 0], [], []>} : vector<8x128xf32>, vector<8x128xf32>, vector<8x8xf32> -> vector<8x8xf32>
    %cst_12 = arith.constant 0.0883883461 : f32
    %17 = vector.broadcast %cst_12 : f32 to vector<8x8xf32>
    %18 = arith.mulf %16, %17 : vector<8x8xf32>
    %19 = vector.broadcast %12 : vector<1x8xf32> to vector<8x8xf32>
    %20 = arith.addf %18, %19 : vector<8x8xf32>
    %cst_13 = arith.constant dense<0xFF800000> : vector<8xf32>
    %21 = vector.multi_reduction <maximumf>, %20, %cst_13 [1] : vector<8x8xf32> to vector<8xf32>
    %22 = vector.shape_cast %21 : vector<8xf32> to vector<8x1xf32>
    %23 = vector.broadcast %22 : vector<8x1xf32> to vector<8x8xf32>
    %24 = arith.subf %20, %23 : vector<8x8xf32>
    %25 = math.exp %24 : vector<8x8xf32>
    %cst_14 = arith.constant dense<0.000000e+00> : vector<8xf32>
    %26 = vector.multi_reduction <add>, %25, %cst_14 [1] : vector<8x8xf32> to vector<8xf32>
    %27 = vector.shape_cast %26 : vector<8xf32> to vector<8x1xf32>
    %28 = vector.broadcast %27 : vector<8x1xf32> to vector<8x8xf32>
    %29 = arith.divf %25, %28 : vector<8x8xf32>
    %cst_15 = arith.constant dense<0.000000e+00> : vector<8x128xf32>
    %30 = tpu.matmul %29, %15, %cst_15 {dimension_numbers = #tpu.dot_dimension_numbers<[1], [0], [0], [1], [0, 0, 1, 1], [], []>} : vector<8x8xf32>, vector<8x128xf32>, vector<8x128xf32> -> vector<8x128xf32>
    %31 = vector.extract_strided_slice %6 {offsets = [0, 128], sizes = [8, 128], strides = [1, 1]} : vector<8x768xf32> to vector<8x128xf32>
    %32 = vector.extract_strided_slice %6 {offsets = [0, 384], sizes = [8, 128], strides = [1, 1]} : vector<8x768xf32> to vector<8x128xf32>
    %33 = vector.extract_strided_slice %6 {offsets = [0, 640], sizes = [8, 128], strides = [1, 1]} : vector<8x768xf32> to vector<8x128xf32>
    %cst_16 = arith.constant dense<0.000000e+00> : vector<8x8xf32>
    %34 = tpu.matmul %31, %32, %cst_16 {dimension_numbers = #tpu.dot_dimension_numbers<[1], [1], [0], [0], [0, 0, 1, 0], [], []>} : vector<8x128xf32>, vector<8x128xf32>, vector<8x8xf32> -> vector<8x8xf32>
    %cst_17 = arith.constant 0.0883883461 : f32
    %35 = vector.broadcast %cst_17 : f32 to vector<8x8xf32>
    %36 = arith.mulf %34, %35 : vector<8x8xf32>
    %37 = vector.broadcast %12 : vector<1x8xf32> to vector<8x8xf32>
    %38 = arith.addf %36, %37 : vector<8x8xf32>
    %cst_18 = arith.constant dense<0xFF800000> : vector<8xf32>
    %39 = vector.multi_reduction <maximumf>, %38, %cst_18 [1] : vector<8x8xf32> to vector<8xf32>
    %40 = vector.shape_cast %39 : vector<8xf32> to vector<8x1xf32>
    %41 = vector.broadcast %40 : vector<8x1xf32> to vector<8x8xf32>
    %42 = arith.subf %38, %41 : vector<8x8xf32>
    %43 = math.exp %42 : vector<8x8xf32>
    %cst_19 = arith.constant dense<0.000000e+00> : vector<8xf32>
    %44 = vector.multi_reduction <add>, %43, %cst_19 [1] : vector<8x8xf32> to vector<8xf32>
    %45 = vector.shape_cast %44 : vector<8xf32> to vector<8x1xf32>
    %46 = vector.broadcast %45 : vector<8x1xf32> to vector<8x8xf32>
    %47 = arith.divf %43, %46 : vector<8x8xf32>
    %cst_20 = arith.constant dense<0.000000e+00> : vector<8x128xf32>
    %48 = tpu.matmul %47, %33, %cst_20 {dimension_numbers = #tpu.dot_dimension_numbers<[1], [0], [0], [1], [0, 0, 1, 1], [], []>} : vector<8x8xf32>, vector<8x128xf32>, vector<8x128xf32> -> vector<8x128xf32>
    %49 = tpu.concatenate %30, %48 in 1 : vector<8x128xf32>, vector<8x128xf32> -> vector<8x256xf32>
    %c0_21 = arith.constant 0 : index
    %c0_22 = arith.constant 0 : index
    %50 = vector.load %arg5[%c0_21, %c0_22] : memref<256x256xf32, #tpu.memory_space<vmem>>, vector<256x256xf32>
    %cst_23 = arith.constant dense<0.000000e+00> : vector<8x256xf32>
    %51 = tpu.matmul %49, %50, %cst_23 {dimension_numbers = #tpu.dot_dimension_numbers<[1], [0], [0], [1], [0, 0, 1, 1], [], []>} : vector<8x256xf32>, vector<256x256xf32>, vector<8x256xf32> -> vector<8x256xf32>
    %c0_24 = arith.constant 0 : index
    %c0_25 = arith.constant 0 : index
    %52 = vector.load %arg6[%c0_24, %c0_25] : memref<1x256xf32, #tpu.memory_space<vmem>>, vector<1x256xf32>
    %53 = vector.broadcast %52 : vector<1x256xf32> to vector<8x256xf32>
    %54 = arith.addf %51, %53 : vector<8x256xf32>
    %55 = arith.addf %1, %54 : vector<8x256xf32>
    %c0_26 = arith.constant 0 : index
    %c0_27 = arith.constant 0 : index
    %56 = vector.load %arg7[%c0_26, %c0_27] : memref<1x256xf32, #tpu.memory_space<vmem>>, vector<1x256xf32>
    %c0_28 = arith.constant 0 : index
    %c0_29 = arith.constant 0 : index
    %57 = vector.load %arg8[%c0_28, %c0_29] : memref<1x256xf32, #tpu.memory_space<vmem>>, vector<1x256xf32>
    %cst_30 = arith.constant dense<0.000000e+00> : vector<8xf32>
    %58 = vector.multi_reduction <add>, %55, %cst_30 [1] : vector<8x256xf32> to vector<8xf32>
    %59 = vector.shape_cast %58 : vector<8xf32> to vector<8x1xf32>
    %cst_31 = arith.constant 2.560000e+02 : f32
    %60 = vector.broadcast %cst_31 : f32 to vector<8x1xf32>
    %61 = arith.divf %59, %60 : vector<8x1xf32>
    %62 = vector.broadcast %61 : vector<8x1xf32> to vector<8x256xf32>
    %63 = arith.subf %55, %62 : vector<8x256xf32>
    %64 = arith.mulf %63, %63 : vector<8x256xf32>
    %cst_32 = arith.constant dense<0.000000e+00> : vector<8xf32>
    %65 = vector.multi_reduction <add>, %64, %cst_32 [1] : vector<8x256xf32> to vector<8xf32>
    %66 = vector.shape_cast %65 : vector<8xf32> to vector<8x1xf32>
    %cst_33 = arith.constant 2.560000e+02 : f32
    %67 = vector.broadcast %cst_33 : f32 to vector<8x1xf32>
    %68 = arith.divf %66, %67 : vector<8x1xf32>
    %69 = vector.broadcast %61 : vector<8x1xf32> to vector<8x256xf32>
    %70 = arith.subf %55, %69 : vector<8x256xf32>
    %cst_34 = arith.constant 9.99999996E-13 : f32
    %71 = vector.broadcast %cst_34 : f32 to vector<8x1xf32>
    %72 = arith.addf %68, %71 : vector<8x1xf32>
    %73 = math.rsqrt %72 : vector<8x1xf32>
    %74 = vector.broadcast %73 : vector<8x1xf32> to vector<8x256xf32>
    %75 = arith.mulf %70, %74 : vector<8x256xf32>
    %76 = vector.broadcast %56 : vector<1x256xf32> to vector<8x256xf32>
    %77 = arith.mulf %75, %76 : vector<8x256xf32>
    %78 = vector.broadcast %57 : vector<1x256xf32> to vector<8x256xf32>
    %79 = arith.addf %77, %78 : vector<8x256xf32>
    %c0_35 = arith.constant 0 : index
    %c0_36 = arith.constant 0 : index
    %80 = vector.load %arg9[%c0_35, %c0_36] : memref<256x512xf32, #tpu.memory_space<vmem>>, vector<256x512xf32>
    %cst_37 = arith.constant dense<0.000000e+00> : vector<8x512xf32>
    %81 = tpu.matmul %79, %80, %cst_37 {dimension_numbers = #tpu.dot_dimension_numbers<[1], [0], [0], [1], [0, 0, 1, 1], [], []>} : vector<8x256xf32>, vector<256x512xf32>, vector<8x512xf32> -> vector<8x512xf32>
    %c0_38 = arith.constant 0 : index
    %c0_39 = arith.constant 0 : index
    %82 = vector.load %arg10[%c0_38, %c0_39] : memref<1x512xf32, #tpu.memory_space<vmem>>, vector<1x512xf32>
    %83 = vector.broadcast %82 : vector<1x512xf32> to vector<8x512xf32>
    %84 = arith.addf %81, %83 : vector<8x512xf32>
    %cst_40 = arith.constant 5.000000e-01 : f32
    %85 = vector.broadcast %cst_40 : f32 to vector<8x512xf32>
    %86 = arith.mulf %85, %84 : vector<8x512xf32>
    %cst_41 = arith.constant 0.707106769 : f32
    %87 = vector.broadcast %cst_41 : f32 to vector<8x512xf32>
    %88 = arith.mulf %84, %87 : vector<8x512xf32>
    %89 = math.erf %88 : vector<8x512xf32>
    %cst_42 = arith.constant 1.000000e+00 : f32
    %90 = vector.broadcast %cst_42 : f32 to vector<8x512xf32>
    %91 = arith.addf %90, %89 : vector<8x512xf32>
    %92 = arith.mulf %86, %91 : vector<8x512xf32>
    %c0_43 = arith.constant 0 : index
    %c0_44 = arith.constant 0 : index
    %93 = vector.load %arg11[%c0_43, %c0_44] : memref<512x256xf32, #tpu.memory_space<vmem>>, vector<512x256xf32>
    %cst_45 = arith.constant dense<0.000000e+00> : vector<8x256xf32>
    %94 = tpu.matmul %92, %93, %cst_45 {dimension_numbers = #tpu.dot_dimension_numbers<[1], [0], [0], [1], [0, 0, 1, 1], [], []>} : vector<8x512xf32>, vector<512x256xf32>, vector<8x256xf32> -> vector<8x256xf32>
    %c0_46 = arith.constant 0 : index
    %c0_47 = arith.constant 0 : index
    %95 = vector.load %arg12[%c0_46, %c0_47] : memref<1x256xf32, #tpu.memory_space<vmem>>, vector<1x256xf32>
    %96 = vector.broadcast %95 : vector<1x256xf32> to vector<8x256xf32>
    %97 = arith.addf %94, %96 : vector<8x256xf32>
    %98 = arith.addf %79, %97 : vector<8x256xf32>
    %c0_48 = arith.constant 0 : index
    %c0_49 = arith.constant 0 : index
    %99 = vector.load %arg13[%c0_48, %c0_49] : memref<1x256xf32, #tpu.memory_space<vmem>>, vector<1x256xf32>
    %c0_50 = arith.constant 0 : index
    %c0_51 = arith.constant 0 : index
    %100 = vector.load %arg14[%c0_50, %c0_51] : memref<1x256xf32, #tpu.memory_space<vmem>>, vector<1x256xf32>
    %cst_52 = arith.constant dense<0.000000e+00> : vector<8xf32>
    %101 = vector.multi_reduction <add>, %98, %cst_52 [1] : vector<8x256xf32> to vector<8xf32>
    %102 = vector.shape_cast %101 : vector<8xf32> to vector<8x1xf32>
    %cst_53 = arith.constant 2.560000e+02 : f32
    %103 = vector.broadcast %cst_53 : f32 to vector<8x1xf32>
    %104 = arith.divf %102, %103 : vector<8x1xf32>
    %105 = vector.broadcast %104 : vector<8x1xf32> to vector<8x256xf32>
    %106 = arith.subf %98, %105 : vector<8x256xf32>
    %107 = arith.mulf %106, %106 : vector<8x256xf32>
    %cst_54 = arith.constant dense<0.000000e+00> : vector<8xf32>
    %108 = vector.multi_reduction <add>, %107, %cst_54 [1] : vector<8x256xf32> to vector<8xf32>
    %109 = vector.shape_cast %108 : vector<8xf32> to vector<8x1xf32>
    %cst_55 = arith.constant 2.560000e+02 : f32
    %110 = vector.broadcast %cst_55 : f32 to vector<8x1xf32>
    %111 = arith.divf %109, %110 : vector<8x1xf32>
    %112 = vector.broadcast %104 : vector<8x1xf32> to vector<8x256xf32>
    %113 = arith.subf %98, %112 : vector<8x256xf32>
    %cst_56 = arith.constant 9.99999996E-13 : f32
    %114 = vector.broadcast %cst_56 : f32 to vector<8x1xf32>
    %115 = arith.addf %111, %114 : vector<8x1xf32>
    %116 = math.rsqrt %115 : vector<8x1xf32>
    %117 = vector.broadcast %116 : vector<8x1xf32> to vector<8x256xf32>
    %118 = arith.mulf %113, %117 : vector<8x256xf32>
    %119 = vector.broadcast %99 : vector<1x256xf32> to vector<8x256xf32>
    %120 = arith.mulf %118, %119 : vector<8x256xf32>
    %121 = vector.broadcast %100 : vector<1x256xf32> to vector<8x256xf32>
    %122 = arith.addf %120, %121 : vector<8x256xf32>
    %c0_57 = arith.constant 0 : index
    %c0_58 = arith.constant 0 : index
    %c0_59 = arith.constant 0 : index
    %123 = vector.load %arg15[%c0_57, %c0_58, %c0_59] : memref<1x8x256xf32, #tpu.memory_space<vmem>>, vector<1x8x256xf32>
    %124 = vector.shape_cast %123 : vector<1x8x256xf32> to vector<8x256xf32>
    %125 = vector.shape_cast %122 : vector<8x256xf32> to vector<1x8x256xf32>
    tpu.vector_store %arg15[%c0_57, %c0_58, %c0_59], %125 {strides = array<i32>} : memref<1x8x256xf32, #tpu.memory_space<vmem>>, vector<1x8x256xf32>,
    return
  }
  func.func @transform_0(%arg0: i32) -> (i32, i32, i32) {
    %c0_i32 = arith.constant 0 : i32
    %c0_i32_0 = arith.constant 0 : i32
    %c0_i32_1 = arith.constant 0 : i32
    return %arg0, %c0_i32, %c0_i32_0 : i32, i32, i32
  }
  func.func @transform_1(%arg0: i32) -> (i32, i32, i32) {
    %c0_i32 = arith.constant 0 : i32
    %c0_i32_0 = arith.constant 0 : i32
    %c0_i32_1 = arith.constant 0 : i32
    return %arg0, %c0_i32, %c0_i32_0 : i32, i32, i32
  }
  func.func @transform_2(%arg0: i32) -> (i32, i32) {
    %c0_i32 = arith.constant 0 : i32
    %c0_i32_0 = arith.constant 0 : i32
    %c0_i32_1 = arith.constant 0 : i32
    return %c0_i32, %c0_i32_0 : i32, i32
  }
  func.func @transform_3(%arg0: i32) -> (i32, i32) {
    %c0_i32 = arith.constant 0 : i32
    %c0_i32_0 = arith.constant 0 : i32
    %c0_i32_1 = arith.constant 0 : i32
    return %c0_i32, %c0_i32_0 : i32, i32
  }
  func.func @transform_4(%arg0: i32) -> (i32, i32) {
    %c0_i32 = arith.constant 0 : i32
    %c0_i32_0 = arith.constant 0 : i32
    %c0_i32_1 = arith.constant 0 : i32
    return %c0_i32, %c0_i32_0 : i32, i32
  }
  func.func @transform_5(%arg0: i32) -> (i32, i32) {
    %c0_i32 = arith.constant 0 : i32
    %c0_i32_0 = arith.constant 0 : i32
    %c0_i32_1 = arith.constant 0 : i32
    return %c0_i32, %c0_i32_0 : i32, i32
  }
  func.func @transform_6(%arg0: i32) -> (i32, i32) {
    %c0_i32 = arith.constant 0 : i32
    %c0_i32_0 = arith.constant 0 : i32
    %c0_i32_1 = arith.constant 0 : i32
    return %c0_i32, %c0_i32_0 : i32, i32
  }
  func.func @transform_7(%arg0: i32) -> (i32, i32) {
    %c0_i32 = arith.constant 0 : i32
    %c0_i32_0 = arith.constant 0 : i32
    %c0_i32_1 = arith.constant 0 : i32
    return %c0_i32, %c0_i32_0 : i32, i32
  }
  func.func @transform_8(%arg0: i32) -> (i32, i32) {
    %c0_i32 = arith.constant 0 : i32
    %c0_i32_0 = arith.constant 0 : i32
    %c0_i32_1 = arith.constant 0 : i32
    return %c0_i32, %c0_i32_0 : i32, i32
  }
  func.func @transform_9(%arg0: i32) -> (i32, i32) {
    %c0_i32 = arith.constant 0 : i32
    %c0_i32_0 = arith.constant 0 : i32
    %c0_i32_1 = arith.constant 0 : i32
    return %c0_i32, %c0_i32_0 : i32, i32
  }
  func.func @transform_10(%arg0: i32) -> (i32, i32) {
    %c0_i32 = arith.constant 0 : i32
    %c0_i32_0 = arith.constant 0 : i32
    %c0_i32_1 = arith.constant 0 : i32
    return %c0_i32, %c0_i32_0 : i32, i32
  }
  func.func @transform_11(%arg0: i32) -> (i32, i32) {
    %c0_i32 = arith.constant 0 : i32
    %c0_i32_0 = arith.constant 0 : i32
    %c0_i32_1 = arith.constant 0 : i32
    return %c0_i32, %c0_i32_0 : i32, i32
  }
  func.func @transform_12(%arg0: i32) -> (i32, i32) {
    %c0_i32 = arith.constant 0 : i32
    %c0_i32_0 = arith.constant 0 : i32
    %c0_i32_1 = arith.constant 0 : i32
    return %c0_i32, %c0_i32_0 : i32, i32
  }
  func.func @transform_13(%arg0: i32) -> (i32, i32) {
    %c0_i32 = arith.constant 0 : i32
    %c0_i32_0 = arith.constant 0 : i32
    %c0_i32_1 = arith.constant 0 : i32
    return %c0_i32, %c0_i32_0 : i32, i32
  }
  func.func @transform_14(%arg0: i32) -> (i32, i32, i32) {
    %c0_i32 = arith.constant 0 : i32
    %c0_i32_0 = arith.constant 0 : i32
    %c0_i32_1 = arith.constant 0 : i32
    return %arg0, %c0_i32, %c0_i32_0 : i32, i32, i32
  }
}

module attributes {stable_mosaic.version = 11 : i64} {
  func.func @_head_kernel(%arg0: i32, %arg1: memref<2x8x256xf32, #tpu.memory_space<vmem>>, %arg2: memref<256x256xf32, #tpu.memory_space<vmem>>, %arg3: memref<1x256xf32, #tpu.memory_space<vmem>>, %arg4: memref<256x128xf32, #tpu.memory_space<vmem>>, %arg5: memref<1x128xf32, #tpu.memory_space<vmem>>, %arg6: memref<2x128xf32, #tpu.memory_space<vmem>>) attributes {dimension_semantics = [#tpu.dimension_semantics<arbitrary>], iteration_bounds = array<i64: 1>, scalar_prefetch = 0 : i64, scratch_operands = 0 : i64, tpu.core_type = #tpu.core_type<tc>, window_params = [{pipeline_mode = #tpu.pipeline_mode<synchronous>, transform_indices = @transform_0, window_bounds = array<i64: 2, 8, 256>}, {pipeline_mode = #tpu.pipeline_mode<synchronous>, transform_indices = @transform_1, window_bounds = array<i64: 256, 256>}, {pipeline_mode = #tpu.pipeline_mode<synchronous>, transform_indices = @transform_2, window_bounds = array<i64: 1, 256>}, {pipeline_mode = #tpu.pipeline_mode<synchronous>, transform_indices = @transform_3, window_bounds = array<i64: 256, 128>}, {pipeline_mode = #tpu.pipeline_mode<synchronous>, transform_indices = @transform_4, window_bounds = array<i64: 1, 128>}, {pipeline_mode = #tpu.pipeline_mode<synchronous>, transform_indices = @transform_5, window_bounds = array<i64: 2, 128>}]} {
    %c0 = arith.constant 0 : index
    %c0_0 = arith.constant 0 : index
    %0 = vector.load %arg2[%c0, %c0_0] : memref<256x256xf32, #tpu.memory_space<vmem>>, vector<256x256xf32>
    %c0_1 = arith.constant 0 : index
    %c0_2 = arith.constant 0 : index
    %1 = vector.load %arg3[%c0_1, %c0_2] : memref<1x256xf32, #tpu.memory_space<vmem>>, vector<1x256xf32>
    %c0_3 = arith.constant 0 : index
    %c0_4 = arith.constant 0 : index
    %2 = vector.load %arg4[%c0_3, %c0_4] : memref<256x128xf32, #tpu.memory_space<vmem>>, vector<256x128xf32>
    %c0_5 = arith.constant 0 : index
    %c0_6 = arith.constant 0 : index
    %3 = vector.load %arg5[%c0_5, %c0_6] : memref<1x128xf32, #tpu.memory_space<vmem>>, vector<1x128xf32>
    %c0_7 = arith.constant 0 : index
    %c0_8 = arith.constant 0 : index
    %c0_9 = arith.constant 0 : index
    %4 = vector.load %arg1[%c0_7, %c0_8, %c0_9] : memref<2x8x256xf32, #tpu.memory_space<vmem>>, vector<1x8x256xf32>
    %5 = vector.shape_cast %4 : vector<1x8x256xf32> to vector<8x256xf32>
    %6 = vector.extract_strided_slice %5 {offsets = [0, 0], sizes = [1, 256], strides = [1, 1]} : vector<8x256xf32> to vector<1x256xf32>
    %cst = arith.constant dense<0.000000e+00> : vector<1x256xf32>
    %7 = tpu.matmul %6, %0, %cst {dimension_numbers = #tpu.dot_dimension_numbers<[1], [0], [0], [1], [0, 0, 1, 1], [], []>} : vector<1x256xf32>, vector<256x256xf32>, vector<1x256xf32> -> vector<1x256xf32>
    %8 = arith.addf %7, %1 : vector<1x256xf32>
    %9 = math.tanh %8 : vector<1x256xf32>
    %cst_10 = arith.constant dense<0.000000e+00> : vector<1x128xf32>
    %10 = tpu.matmul %9, %2, %cst_10 {dimension_numbers = #tpu.dot_dimension_numbers<[1], [0], [0], [1], [0, 0, 1, 1], [], []>} : vector<1x256xf32>, vector<256x128xf32>, vector<1x128xf32> -> vector<1x128xf32>
    %11 = arith.addf %10, %3 : vector<1x128xf32>
    %c0_11 = arith.constant 0 : index
    %c0_12 = arith.constant 0 : index
    %12 = vector.load %arg6[%c0_11, %c0_12] : memref<2x128xf32, #tpu.memory_space<vmem>>, vector<1x128xf32>
    tpu.vector_store %arg6[%c0_11, %c0_12], %11 {strides = array<i32>} : memref<2x128xf32, #tpu.memory_space<vmem>>, vector<1x128xf32>,
    %c1 = arith.constant 1 : index
    %c0_13 = arith.constant 0 : index
    %c0_14 = arith.constant 0 : index
    %13 = vector.load %arg1[%c1, %c0_13, %c0_14] : memref<2x8x256xf32, #tpu.memory_space<vmem>>, vector<1x8x256xf32>
    %14 = vector.shape_cast %13 : vector<1x8x256xf32> to vector<8x256xf32>
    %15 = vector.extract_strided_slice %14 {offsets = [0, 0], sizes = [1, 256], strides = [1, 1]} : vector<8x256xf32> to vector<1x256xf32>
    %cst_15 = arith.constant dense<0.000000e+00> : vector<1x256xf32>
    %16 = tpu.matmul %15, %0, %cst_15 {dimension_numbers = #tpu.dot_dimension_numbers<[1], [0], [0], [1], [0, 0, 1, 1], [], []>} : vector<1x256xf32>, vector<256x256xf32>, vector<1x256xf32> -> vector<1x256xf32>
    %17 = arith.addf %16, %1 : vector<1x256xf32>
    %18 = math.tanh %17 : vector<1x256xf32>
    %cst_16 = arith.constant dense<0.000000e+00> : vector<1x128xf32>
    %19 = tpu.matmul %18, %2, %cst_16 {dimension_numbers = #tpu.dot_dimension_numbers<[1], [0], [0], [1], [0, 0, 1, 1], [], []>} : vector<1x256xf32>, vector<256x128xf32>, vector<1x128xf32> -> vector<1x128xf32>
    %20 = arith.addf %19, %3 : vector<1x128xf32>
    %c1_17 = arith.constant 1 : index
    %c0_18 = arith.constant 0 : index
    %21 = vector.load %arg6[%c1_17, %c0_18] : memref<2x128xf32, #tpu.memory_space<vmem>>, vector<1x128xf32>
    tpu.vector_store %arg6[%c1_17, %c0_18], %20 {strides = array<i32>} : memref<2x128xf32, #tpu.memory_space<vmem>>, vector<1x128xf32>,
    return
  }
  func.func @transform_0(%arg0: i32) -> (i32, i32, i32) {
    %c0_i32 = arith.constant 0 : i32
    %c0_i32_0 = arith.constant 0 : i32
    %c0_i32_1 = arith.constant 0 : i32
    %c0_i32_2 = arith.constant 0 : i32
    return %c0_i32, %c0_i32_0, %c0_i32_1 : i32, i32, i32
  }
  func.func @transform_1(%arg0: i32) -> (i32, i32) {
    %c0_i32 = arith.constant 0 : i32
    %c0_i32_0 = arith.constant 0 : i32
    %c0_i32_1 = arith.constant 0 : i32
    return %c0_i32, %c0_i32_0 : i32, i32
  }
  func.func @transform_2(%arg0: i32) -> (i32, i32) {
    %c0_i32 = arith.constant 0 : i32
    %c0_i32_0 = arith.constant 0 : i32
    %c0_i32_1 = arith.constant 0 : i32
    return %c0_i32, %c0_i32_0 : i32, i32
  }
  func.func @transform_3(%arg0: i32) -> (i32, i32) {
    %c0_i32 = arith.constant 0 : i32
    %c0_i32_0 = arith.constant 0 : i32
    %c0_i32_1 = arith.constant 0 : i32
    return %c0_i32, %c0_i32_0 : i32, i32
  }
  func.func @transform_4(%arg0: i32) -> (i32, i32) {
    %c0_i32 = arith.constant 0 : i32
    %c0_i32_0 = arith.constant 0 : i32
    %c0_i32_1 = arith.constant 0 : i32
    return %c0_i32, %c0_i32_0 : i32, i32
  }
  func.func @transform_5(%arg0: i32) -> (i32, i32) {
    %c0_i32 = arith.constant 0 : i32
    %c0_i32_0 = arith.constant 0 : i32
    %c0_i32_1 = arith.constant 0 : i32
    return %c0_i32, %c0_i32_0 : i32, i32
  }
}

module attributes {stable_mosaic.version = 11 : i64} {
  func.func @_encoder_layer_kernel(%arg0: i32, %arg1: memref<1x8x256xf32, #tpu.memory_space<vmem>>, %arg2: memref<1x1x8xf32, #tpu.memory_space<vmem>>, %arg3: memref<256x768xf32, #tpu.memory_space<vmem>>, %arg4: memref<1x768xf32, #tpu.memory_space<vmem>>, %arg5: memref<256x256xf32, #tpu.memory_space<vmem>>, %arg6: memref<1x256xf32, #tpu.memory_space<vmem>>, %arg7: memref<1x256xf32, #tpu.memory_space<vmem>>, %arg8: memref<1x256xf32, #tpu.memory_space<vmem>>, %arg9: memref<256x512xf32, #tpu.memory_space<vmem>>, %arg10: memref<1x512xf32, #tpu.memory_space<vmem>>, %arg11: memref<512x256xf32, #tpu.memory_space<vmem>>, %arg12: memref<1x256xf32, #tpu.memory_space<vmem>>, %arg13: memref<1x256xf32, #tpu.memory_space<vmem>>, %arg14: memref<1x256xf32, #tpu.memory_space<vmem>>, %arg15: memref<1x8x256xf32, #tpu.memory_space<vmem>>) attributes {dimension_semantics = [#tpu.dimension_semantics<parallel>], iteration_bounds = array<i64: 2>, scalar_prefetch = 0 : i64, scratch_operands = 0 : i64, tpu.core_type = #tpu.core_type<tc>, window_params = [{transform_indices = @transform_0, window_bounds = array<i64: 1, 8, 256>}, {transform_indices = @transform_1, window_bounds = array<i64: 1, 1, 8>}, {pipeline_mode = #tpu.pipeline_mode<synchronous>, transform_indices = @transform_2, window_bounds = array<i64: 256, 768>}, {pipeline_mode = #tpu.pipeline_mode<synchronous>, transform_indices = @transform_3, window_bounds = array<i64: 1, 768>}, {pipeline_mode = #tpu.pipeline_mode<synchronous>, transform_indices = @transform_4, window_bounds = array<i64: 256, 256>}, {pipeline_mode = #tpu.pipeline_mode<synchronous>, transform_indices = @transform_5, window_bounds = array<i64: 1, 256>}, {pipeline_mode = #tpu.pipeline_mode<synchronous>, transform_indices = @transform_6, window_bounds = array<i64: 1, 256>}, {pipeline_mode = #tpu.pipeline_mode<synchronous>, transform_indices = @transform_7, window_bounds = array<i64: 1, 256>}, {pipeline_mode = #tpu.pipeline_mode<synchronous>, transform_indices = @transform_8, window_bounds = array<i64: 256, 512>}, {pipeline_mode = #tpu.pipeline_mode<synchronous>, transform_indices = @transform_9, window_bounds = array<i64: 1, 512>}, {pipeline_mode = #tpu.pipeline_mode<synchronous>, transform_indices = @transform_10, window_bounds = array<i64: 512, 256>}, {pipeline_mode = #tpu.pipeline_mode<synchronous>, transform_indices = @transform_11, window_bounds = array<i64: 1, 256>}, {pipeline_mode = #tpu.pipeline_mode<synchronous>, transform_indices = @transform_12, window_bounds = array<i64: 1, 256>}, {pipeline_mode = #tpu.pipeline_mode<synchronous>, transform_indices = @transform_13, window_bounds = array<i64: 1, 256>}, {transform_indices = @transform_14, window_bounds = array<i64: 1, 8, 256>}]} {
    %c0 = arith.constant 0 : index
    %c0_0 = arith.constant 0 : index
    %c0_1 = arith.constant 0 : index
    %0 = vector.load %arg1[%c0, %c0_0, %c0_1] : memref<1x8x256xf32, #tpu.memory_space<vmem>>, vector<1x8x256xf32>
    %1 = vector.shape_cast %0 : vector<1x8x256xf32> to vector<8x256xf32>
    %c0_2 = arith.constant 0 : index
    %c0_3 = arith.constant 0 : index
    %2 = vector.load %arg3[%c0_2, %c0_3] : memref<256x768xf32, #tpu.memory_space<vmem>>, vector<256x768xf32>
    %cst = arith.constant dense<0.000000e+00> : vector<8x768xf32>
    %3 = tpu.matmul %1, %2, %cst {dimension_numbers = #tpu.dot_dimension_numbers<[1], [0], [0], [1], [0, 0, 1, 1], [], []>} : vector<8x256xf32>, vector<256x768xf32>, vector<8x768xf32> -> vector<8x768xf32>
    %c0_4 = arith.constant 0 : index
    %c0_5 = arith.constant 0 : index
    %4 = vector.load %arg4[%c0_4, %c0_5] : memref<1x768xf32, #tpu.memory_space<vmem>>, vector<1x768xf32>
    %5 = vector.broadcast %4 : vector<1x768xf32> to vector<8x768xf32>
    %6 = arith.addf %3, %5 : vector<8x768xf32>
    %c0_6 = arith.constant 0 : index
    %c0_7 = arith.constant 0 : index
    %c0_8 = arith.constant 0 : index
    %7 = vector.load %arg2[%c0_6, %c0_7, %c0_8] : memref<1x1x8xf32, #tpu.memory_space<vmem>>, vector<1x1x8xf32>
    %8 = vector.shape_cast %7 : vector<1x1x8xf32> to vector<1x8xf32>
    %cst_9 = arith.constant 1.000000e+00 : f32
    %9 = vector.broadcast %cst_9 : f32 to vector<1x8xf32>
    %10 = arith.subf %9, %8 : vector<1x8xf32>
    %cst_10 = arith.constant -1.000000e+09 : f32
    %11 = vector.broadcast %cst_10 : f32 to vector<1x8xf32>
    %12 = arith.mulf %10, %11 : vector<1x8xf32>
    %13 = vector.extract_strided_slice %6 {offsets = [0, 0], sizes = [8, 128], strides = [1, 1]} : vector<8x768xf32> to vector<8x128xf32>
    %14 = vector.extract_strided_slice %6 {offsets = [0, 256], sizes = [8, 128], strides = [1, 1]} : vector<8x768xf32> to vector<8x128xf32>
    %15 = vector.extract_strided_slice %6 {offsets = [0, 512], sizes = [8, 128], strides = [1, 1]} : vector<8x768xf32> to vector<8x128xf32>
    %cst_11 = arith.constant dense<0.000000e+00> : vector<8x8xf32>
    %16 = tpu.matmul %13, %14, %cst_11 {dimension_numbers = #tpu.dot_dimension_numbers<[1], [1], [0], [0], [0, 0, 1, 0], [], []>} : vector<8x128xf32>, vector<8x128xf32>, vector<8x8xf32> -> vector<8x8xf32>
    %cst_12 = arith.constant 0.0883883461 : f32
    %17 = vector.broadcast %cst_12 : f32 to vector<8x8xf32>
    %18 = arith.mulf %16, %17 : vector<8x8xf32>
    %19 = vector.broadcast %12 : vector<1x8xf32> to vector<8x8xf32>
    %20 = arith.addf %18, %19 : vector<8x8xf32>
    %cst_13 = arith.constant dense<0xFF800000> : vector<8xf32>
    %21 = vector.multi_reduction <maximumf>, %20, %cst_13 [1] : vector<8x8xf32> to vector<8xf32>
    %22 = vector.shape_cast %21 : vector<8xf32> to vector<8x1xf32>
    %23 = vector.broadcast %22 : vector<8x1xf32> to vector<8x8xf32>
    %24 = arith.subf %20, %23 : vector<8x8xf32>
    %25 = math.exp %24 : vector<8x8xf32>
    %cst_14 = arith.constant dense<0.000000e+00> : vector<8xf32>
    %26 = vector.multi_reduction <add>, %25, %cst_14 [1] : vector<8x8xf32> to vector<8xf32>
    %27 = vector.shape_cast %26 : vector<8xf32> to vector<8x1xf32>
    %28 = vector.broadcast %27 : vector<8x1xf32> to vector<8x8xf32>
    %29 = arith.divf %25, %28 : vector<8x8xf32>
    %cst_15 = arith.constant dense<0.000000e+00> : vector<8x128xf32>
    %30 = tpu.matmul %29, %15, %cst_15 {dimension_numbers = #tpu.dot_dimension_numbers<[1], [0], [0], [1], [0, 0, 1, 1], [], []>} : vector<8x8xf32>, vector<8x128xf32>, vector<8x128xf32> -> vector<8x128xf32>
    %31 = vector.extract_strided_slice %6 {offsets = [0, 128], sizes = [8, 128], strides = [1, 1]} : vector<8x768xf32> to vector<8x128xf32>
    %32 = vector.extract_strided_slice %6 {offsets = [0, 384], sizes = [8, 128], strides = [1, 1]} : vector<8x768xf32> to vector<8x128xf32>
    %33 = vector.extract_strided_slice %6 {offsets = [0, 640], sizes = [8, 128], strides = [1, 1]} : vector<8x768xf32> to vector<8x128xf32>
    %cst_16 = arith.constant dense<0.000000e+00> : vector<8x8xf32>
    %34 = tpu.matmul %31, %32, %cst_16 {dimension_numbers = #tpu.dot_dimension_numbers<[1], [1], [0], [0], [0, 0, 1, 0], [], []>} : vector<8x128xf32>, vector<8x128xf32>, vector<8x8xf32> -> vector<8x8xf32>
    %cst_17 = arith.constant 0.0883883461 : f32
    %35 = vector.broadcast %cst_17 : f32 to vector<8x8xf32>
    %36 = arith.mulf %34, %35 : vector<8x8xf32>
    %37 = vector.broadcast %12 : vector<1x8xf32> to vector<8x8xf32>
    %38 = arith.addf %36, %37 : vector<8x8xf32>
    %cst_18 = arith.constant dense<0xFF800000> : vector<8xf32>
    %39 = vector.multi_reduction <maximumf>, %38, %cst_18 [1] : vector<8x8xf32> to vector<8xf32>
    %40 = vector.shape_cast %39 : vector<8xf32> to vector<8x1xf32>
    %41 = vector.broadcast %40 : vector<8x1xf32> to vector<8x8xf32>
    %42 = arith.subf %38, %41 : vector<8x8xf32>
    %43 = math.exp %42 : vector<8x8xf32>
    %cst_19 = arith.constant dense<0.000000e+00> : vector<8xf32>
    %44 = vector.multi_reduction <add>, %43, %cst_19 [1] : vector<8x8xf32> to vector<8xf32>
    %45 = vector.shape_cast %44 : vector<8xf32> to vector<8x1xf32>
    %46 = vector.broadcast %45 : vector<8x1xf32> to vector<8x8xf32>
    %47 = arith.divf %43, %46 : vector<8x8xf32>
    %cst_20 = arith.constant dense<0.000000e+00> : vector<8x128xf32>
    %48 = tpu.matmul %47, %33, %cst_20 {dimension_numbers = #tpu.dot_dimension_numbers<[1], [0], [0], [1], [0, 0, 1, 1], [], []>} : vector<8x8xf32>, vector<8x128xf32>, vector<8x128xf32> -> vector<8x128xf32>
    %49 = tpu.concatenate %30, %48 in 1 : vector<8x128xf32>, vector<8x128xf32> -> vector<8x256xf32>
    %c0_21 = arith.constant 0 : index
    %c0_22 = arith.constant 0 : index
    %50 = vector.load %arg5[%c0_21, %c0_22] : memref<256x256xf32, #tpu.memory_space<vmem>>, vector<256x256xf32>
    %cst_23 = arith.constant dense<0.000000e+00> : vector<8x256xf32>
    %51 = tpu.matmul %49, %50, %cst_23 {dimension_numbers = #tpu.dot_dimension_numbers<[1], [0], [0], [1], [0, 0, 1, 1], [], []>} : vector<8x256xf32>, vector<256x256xf32>, vector<8x256xf32> -> vector<8x256xf32>
    %c0_24 = arith.constant 0 : index
    %c0_25 = arith.constant 0 : index
    %52 = vector.load %arg6[%c0_24, %c0_25] : memref<1x256xf32, #tpu.memory_space<vmem>>, vector<1x256xf32>
    %53 = vector.broadcast %52 : vector<1x256xf32> to vector<8x256xf32>
    %54 = arith.addf %51, %53 : vector<8x256xf32>
    %55 = arith.addf %1, %54 : vector<8x256xf32>
    %c0_26 = arith.constant 0 : index
    %c0_27 = arith.constant 0 : index
    %56 = vector.load %arg7[%c0_26, %c0_27] : memref<1x256xf32, #tpu.memory_space<vmem>>, vector<1x256xf32>
    %c0_28 = arith.constant 0 : index
    %c0_29 = arith.constant 0 : index
    %57 = vector.load %arg8[%c0_28, %c0_29] : memref<1x256xf32, #tpu.memory_space<vmem>>, vector<1x256xf32>
    %cst_30 = arith.constant dense<0.000000e+00> : vector<8xf32>
    %58 = vector.multi_reduction <add>, %55, %cst_30 [1] : vector<8x256xf32> to vector<8xf32>
    %59 = vector.shape_cast %58 : vector<8xf32> to vector<8x1xf32>
    %cst_31 = arith.constant 2.560000e+02 : f32
    %60 = vector.broadcast %cst_31 : f32 to vector<8x1xf32>
    %61 = arith.divf %59, %60 : vector<8x1xf32>
    %62 = vector.broadcast %61 : vector<8x1xf32> to vector<8x256xf32>
    %63 = arith.subf %55, %62 : vector<8x256xf32>
    %64 = arith.mulf %63, %63 : vector<8x256xf32>
    %cst_32 = arith.constant dense<0.000000e+00> : vector<8xf32>
    %65 = vector.multi_reduction <add>, %64, %cst_32 [1] : vector<8x256xf32> to vector<8xf32>
    %66 = vector.shape_cast %65 : vector<8xf32> to vector<8x1xf32>
    %cst_33 = arith.constant 2.560000e+02 : f32
    %67 = vector.broadcast %cst_33 : f32 to vector<8x1xf32>
    %68 = arith.divf %66, %67 : vector<8x1xf32>
    %69 = vector.broadcast %61 : vector<8x1xf32> to vector<8x256xf32>
    %70 = arith.subf %55, %69 : vector<8x256xf32>
    %cst_34 = arith.constant 9.99999996E-13 : f32
    %71 = vector.broadcast %cst_34 : f32 to vector<8x1xf32>
    %72 = arith.addf %68, %71 : vector<8x1xf32>
    %73 = math.rsqrt %72 : vector<8x1xf32>
    %74 = vector.broadcast %73 : vector<8x1xf32> to vector<8x256xf32>
    %75 = arith.mulf %70, %74 : vector<8x256xf32>
    %76 = vector.broadcast %56 : vector<1x256xf32> to vector<8x256xf32>
    %77 = arith.mulf %75, %76 : vector<8x256xf32>
    %78 = vector.broadcast %57 : vector<1x256xf32> to vector<8x256xf32>
    %79 = arith.addf %77, %78 : vector<8x256xf32>
    %c0_35 = arith.constant 0 : index
    %c0_36 = arith.constant 0 : index
    %80 = vector.load %arg9[%c0_35, %c0_36] : memref<256x512xf32, #tpu.memory_space<vmem>>, vector<256x512xf32>
    %cst_37 = arith.constant dense<0.000000e+00> : vector<8x512xf32>
    %81 = tpu.matmul %79, %80, %cst_37 {dimension_numbers = #tpu.dot_dimension_numbers<[1], [0], [0], [1], [0, 0, 1, 1], [], []>} : vector<8x256xf32>, vector<256x512xf32>, vector<8x512xf32> -> vector<8x512xf32>
    %c0_38 = arith.constant 0 : index
    %c0_39 = arith.constant 0 : index
    %82 = vector.load %arg10[%c0_38, %c0_39] : memref<1x512xf32, #tpu.memory_space<vmem>>, vector<1x512xf32>
    %83 = vector.broadcast %82 : vector<1x512xf32> to vector<8x512xf32>
    %84 = arith.addf %81, %83 : vector<8x512xf32>
    %cst_40 = arith.constant 5.000000e-01 : f32
    %85 = vector.broadcast %cst_40 : f32 to vector<8x512xf32>
    %86 = arith.mulf %85, %84 : vector<8x512xf32>
    %cst_41 = arith.constant 0.707106769 : f32
    %87 = vector.broadcast %cst_41 : f32 to vector<8x512xf32>
    %88 = arith.mulf %84, %87 : vector<8x512xf32>
    %89 = math.erf %88 : vector<8x512xf32>
    %cst_42 = arith.constant 1.000000e+00 : f32
    %90 = vector.broadcast %cst_42 : f32 to vector<8x512xf32>
    %91 = arith.addf %90, %89 : vector<8x512xf32>
    %92 = arith.mulf %86, %91 : vector<8x512xf32>
    %c0_43 = arith.constant 0 : index
    %c0_44 = arith.constant 0 : index
    %93 = vector.load %arg11[%c0_43, %c0_44] : memref<512x256xf32, #tpu.memory_space<vmem>>, vector<512x256xf32>
    %cst_45 = arith.constant dense<0.000000e+00> : vector<8x256xf32>
    %94 = tpu.matmul %92, %93, %cst_45 {dimension_numbers = #tpu.dot_dimension_numbers<[1], [0], [0], [1], [0, 0, 1, 1], [], []>} : vector<8x512xf32>, vector<512x256xf32>, vector<8x256xf32> -> vector<8x256xf32>
    %c0_46 = arith.constant 0 : index
    %c0_47 = arith.constant 0 : index
    %95 = vector.load %arg12[%c0_46, %c0_47] : memref<1x256xf32, #tpu.memory_space<vmem>>, vector<1x256xf32>
    %96 = vector.broadcast %95 : vector<1x256xf32> to vector<8x256xf32>
    %97 = arith.addf %94, %96 : vector<8x256xf32>
    %98 = arith.addf %79, %97 : vector<8x256xf32>
    %c0_48 = arith.constant 0 : index
    %c0_49 = arith.constant 0 : index
    %99 = vector.load %arg13[%c0_48, %c0_49] : memref<1x256xf32, #tpu.memory_space<vmem>>, vector<1x256xf32>
    %c0_50 = arith.constant 0 : index
    %c0_51 = arith.constant 0 : index
    %100 = vector.load %arg14[%c0_50, %c0_51] : memref<1x256xf32, #tpu.memory_space<vmem>>, vector<1x256xf32>
    %cst_52 = arith.constant dense<0.000000e+00> : vector<8xf32>
    %101 = vector.multi_reduction <add>, %98, %cst_52 [1] : vector<8x256xf32> to vector<8xf32>
    %102 = vector.shape_cast %101 : vector<8xf32> to vector<8x1xf32>
    %cst_53 = arith.constant 2.560000e+02 : f32
    %103 = vector.broadcast %cst_53 : f32 to vector<8x1xf32>
    %104 = arith.divf %102, %103 : vector<8x1xf32>
    %105 = vector.broadcast %104 : vector<8x1xf32> to vector<8x256xf32>
    %106 = arith.subf %98, %105 : vector<8x256xf32>
    %107 = arith.mulf %106, %106 : vector<8x256xf32>
    %cst_54 = arith.constant dense<0.000000e+00> : vector<8xf32>
    %108 = vector.multi_reduction <add>, %107, %cst_54 [1] : vector<8x256xf32> to vector<8xf32>
    %109 = vector.shape_cast %108 : vector<8xf32> to vector<8x1xf32>
    %cst_55 = arith.constant 2.560000e+02 : f32
    %110 = vector.broadcast %cst_55 : f32 to vector<8x1xf32>
    %111 = arith.divf %109, %110 : vector<8x1xf32>
    %112 = vector.broadcast %104 : vector<8x1xf32> to vector<8x256xf32>
    %113 = arith.subf %98, %112 : vector<8x256xf32>
    %cst_56 = arith.constant 9.99999996E-13 : f32
    %114 = vector.broadcast %cst_56 : f32 to vector<8x1xf32>
    %115 = arith.addf %111, %114 : vector<8x1xf32>
    %116 = math.rsqrt %115 : vector<8x1xf32>
    %117 = vector.broadcast %116 : vector<8x1xf32> to vector<8x256xf32>
    %118 = arith.mulf %113, %117 : vector<8x256xf32>
    %119 = vector.broadcast %99 : vector<1x256xf32> to vector<8x256xf32>
    %120 = arith.mulf %118, %119 : vector<8x256xf32>
    %121 = vector.broadcast %100 : vector<1x256xf32> to vector<8x256xf32>
    %122 = arith.addf %120, %121 : vector<8x256xf32>
    %c0_57 = arith.constant 0 : index
    %c0_58 = arith.constant 0 : index
    %c0_59 = arith.constant 0 : index
    %123 = vector.load %arg15[%c0_57, %c0_58, %c0_59] : memref<1x8x256xf32, #tpu.memory_space<vmem>>, vector<1x8x256xf32>
    %124 = vector.shape_cast %123 : vector<1x8x256xf32> to vector<8x256xf32>
    %125 = vector.shape_cast %122 : vector<8x256xf32> to vector<1x8x256xf32>
    tpu.vector_store %arg15[%c0_57, %c0_58, %c0_59], %125 {strides = array<i32>} : memref<1x8x256xf32, #tpu.memory_space<vmem>>, vector<1x8x256xf32>,
    return
  }
  func.func @transform_0(%arg0: i32) -> (i32, i32, i32) {
    %c0_i32 = arith.constant 0 : i32
    %c0_i32_0 = arith.constant 0 : i32
    %c0_i32_1 = arith.constant 0 : i32
    return %arg0, %c0_i32, %c0_i32_0 : i32, i32, i32
  }
  func.func @transform_1(%arg0: i32) -> (i32, i32, i32) {
    %c0_i32 = arith.constant 0 : i32
    %c0_i32_0 = arith.constant 0 : i32
    %c0_i32_1 = arith.constant 0 : i32
    return %arg0, %c0_i32, %c0_i32_0 : i32, i32, i32
  }
  func.func @transform_2(%arg0: i32) -> (i32, i32) {
    %c0_i32 = arith.constant 0 : i32
    %c0_i32_0 = arith.constant 0 : i32
    %c0_i32_1 = arith.constant 0 : i32
    return %c0_i32, %c0_i32_0 : i32, i32
  }
  func.func @transform_3(%arg0: i32) -> (i32, i32) {
    %c0_i32 = arith.constant 0 : i32
    %c0_i32_0 = arith.constant 0 : i32
    %c0_i32_1 = arith.constant 0 : i32
    return %c0_i32, %c0_i32_0 : i32, i32
  }
  func.func @transform_4(%arg0: i32) -> (i32, i32) {
    %c0_i32 = arith.constant 0 : i32
    %c0_i32_0 = arith.constant 0 : i32
    %c0_i32_1 = arith.constant 0 : i32
    return %c0_i32, %c0_i32_0 : i32, i32
  }
  func.func @transform_5(%arg0: i32) -> (i32, i32) {
    %c0_i32 = arith.constant 0 : i32
    %c0_i32_0 = arith.constant 0 : i32
    %c0_i32_1 = arith.constant 0 : i32
    return %c0_i32, %c0_i32_0 : i32, i32
  }
  func.func @transform_6(%arg0: i32) -> (i32, i32) {
    %c0_i32 = arith.constant 0 : i32
    %c0_i32_0 = arith.constant 0 : i32
    %c0_i32_1 = arith.constant 0 : i32
    return %c0_i32, %c0_i32_0 : i32, i32
  }
  func.func @transform_7(%arg0: i32) -> (i32, i32) {
    %c0_i32 = arith.constant 0 : i32
    %c0_i32_0 = arith.constant 0 : i32
    %c0_i32_1 = arith.constant 0 : i32
    return %c0_i32, %c0_i32_0 : i32, i32
  }
  func.func @transform_8(%arg0: i32) -> (i32, i32) {
    %c0_i32 = arith.constant 0 : i32
    %c0_i32_0 = arith.constant 0 : i32
    %c0_i32_1 = arith.constant 0 : i32
    return %c0_i32, %c0_i32_0 : i32, i32
  }
  func.func @transform_9(%arg0: i32) -> (i32, i32) {
    %c0_i32 = arith.constant 0 : i32
    %c0_i32_0 = arith.constant 0 : i32
    %c0_i32_1 = arith.constant 0 : i32
    return %c0_i32, %c0_i32_0 : i32, i32
  }
  func.func @transform_10(%arg0: i32) -> (i32, i32) {
    %c0_i32 = arith.constant 0 : i32
    %c0_i32_0 = arith.constant 0 : i32
    %c0_i32_1 = arith.constant 0 : i32
    return %c0_i32, %c0_i32_0 : i32, i32
  }
  func.func @transform_11(%arg0: i32) -> (i32, i32) {
    %c0_i32 = arith.constant 0 : i32
    %c0_i32_0 = arith.constant 0 : i32
    %c0_i32_1 = arith.constant 0 : i32
    return %c0_i32, %c0_i32_0 : i32, i32
  }
  func.func @transform_12(%arg0: i32) -> (i32, i32) {
    %c0_i32 = arith.constant 0 : i32
    %c0_i32_0 = arith.constant 0 : i32
    %c0_i32_1 = arith.constant 0 : i32
    return %c0_i32, %c0_i32_0 : i32, i32
  }
  func.func @transform_13(%arg0: i32) -> (i32, i32) {
    %c0_i32 = arith.constant 0 : i32
    %c0_i32_0 = arith.constant 0 : i32
    %c0_i32_1 = arith.constant 0 : i32
    return %c0_i32, %c0_i32_0 : i32, i32
  }
  func.func @transform_14(%arg0: i32) -> (i32, i32, i32) {
    %c0_i32 = arith.constant 0 : i32
    %c0_i32_0 = arith.constant 0 : i32
    %c0_i32_1 = arith.constant 0 : i32
    return %arg0, %c0_i32, %c0_i32_0 : i32, i32, i32
  }
}

</mosaic_0001>

<llo_original>
// kernel: sentiment_classifier_forward.4
$region0: #{sentiment_classifier_forward.4}
  #allocation0 [shape = 'u32[]', space=smem, size = 0x4, offset = 0x4, fixed_abs, tag = 'smem constant byte address 0x4 - core index']
  #allocation1 [shape = 'u32[144,128]{1,0:T(1,128)}', space=vmem, size = 0x12000, scoped, tag = 'internal scratch']
  %s0 = inlined_call_operand.vmem [shape: f32[2,8,256], index: 0, kind: input, shape index: {}]
  %s1 = inlined_call_operand.vmem [shape: f32[8,256], index: 1, kind: input, shape index: {}]
  %s2 = inlined_call_operand.vmem [shape: f32[1,256], index: 2, kind: input, shape index: {}]
  %s3 = inlined_call_operand.hbm [shape: f32[1,256], index: 3, kind: input, shape index: {}]
  %s4 = inlined_call_operand.vmem [shape: f32[2,8,256], index: 4, kind: output, shape index: {}]
  %s5 = sld [smem:[#allocation0]]
  $region53: #{sentiment_classifier_forward.4} parent=0
    _
  %s7 = ssub.s32 1, %s5
  %s8 = scalar_select 0, %s7, %s5
  $region1: #{sentiment_classifier_forward.4} parent=0
    #allocation2 [shape = 'u8[1024]{0}', space=vmem, size = 0x400, scoped, tag = 'input window, operand 3, single buffered']
    #allocation3 [shape = 's32[2]{0}', space=sflag, size = 0x8, scoped, tag = 'scoped memory for sentiment_classifier_forward.4']
    %9 = vsyncpa [#allocation3], 0
    loop: start=0, step=1, limit=4
    $region2: #{sentiment_classifier_forward.4} parent=1 // loop_pre_header
      _
    $region3: #{sentiment_classifier_forward.4} parent=1 // loop_header
      %s11 = sphi 0, %s15
      %p12 = scmp.ge.s32.totalorder %s11, 4
      %s21 = sphi 0, %s23
      %s24 = sphi 0, %s21
      %s25 = sphi 0, %s24
      %s41 = sphi 0, %s25
      %s45 = sphi 0, %s45
      %s47 = sphi 0, %s45
      %s48 = sphi 0, %s47
      %s62 = sphi 0, %s48
      %s66 = sphi 0, %s66
      %s68 = sphi 0, %s66
      %s69 = sphi 0, %s68
      %s83 = sphi 0, %s69
      %s87 = sphi 0, %s87
      %s89 = sphi 0, %s87
      %s90 = sphi 0, %s89
      %s104 = sphi 0, %s90
      %s110 = sphi 0, %s112
      %s113 = sphi 0, %s110
      %s114 = sphi 0, %s113
      %s130 = sphi 0, %s114
    $region4: #{sentiment_classifier_forward.4} parent=1 // loop_header_branch
      %14 = sbr.rel (%p12) target = $region8
    $region5: #{sentiment_classifier_forward.4} parent=1 // loop_body
      %s16 = ssub.s32 %s11, 1
      %s17 = ssub.s32 %s11, 2
      %s18 = sadd.s32 %s11, 1
      %s19 = ssub.s32 %s11, %s18
      %p20 = scmp.eq.s32.totalorder %s19, 0
      %s22 = sadd.s32 %s21, 1
      %s23 = scalar_select %p20, %s21, %s22
      %p26 = pneg %p20
      %p27 = scmp.eq.s32.totalorder %s11, 1
      %p28 = por %p26, %p27
      %p29 = scmp.ne.s32.totalorder %s21, %s24
      %p30 = scmp.eq.s32.totalorder %s11, 0
      %p31 = por %p29, %p30
      %p32 = scmp.ne.s32.totalorder %s21, %s24
      %p33 = scmp.eq.s32.totalorder %s16, 1
      %p34 = por %p32, %p33
      %p35 = scmp.ne.s32.totalorder %s24, %s25
      %p36 = scmp.eq.s32.totalorder %s16, 0
      %p37 = por %p35, %p36
      %p38 = scmp.ne.s32.totalorder %s24, %s25
      %p39 = scmp.eq.s32.totalorder %s17, 1
      %p40 = por %p38, %p39
      %p42 = scmp.ne.s32.totalorder %s25, %s41
      %p43 = scmp.eq.s32.totalorder %s17, 0
      %p44 = por %p42, %p43
      %s46 = sadd.s32 %s45, 1
      %p49 = scmp.eq.s32.totalorder %s11, 1
      %p50 = scmp.ne.s32.totalorder %s45, %s47
      %p51 = scmp.eq.s32.totalorder %s11, 0
      %p52 = por %p50, %p51
      %p53 = scmp.ne.s32.totalorder %s45, %s47
      %p54 = scmp.eq.s32.totalorder %s16, 1
      %p55 = por %p53, %p54
      %p56 = scmp.ne.s32.totalorder %s47, %s48
      %p57 = scmp.eq.s32.totalorder %s16, 0
      %p58 = por %p56, %p57
      %p59 = scmp.ne.s32.totalorder %s47, %s48
      %p60 = scmp.eq.s32.totalorder %s17, 1
      %p61 = por %p59, %p60
      %p63 = scmp.ne.s32.totalorder %s48, %s62
      %p64 = scmp.eq.s32.totalorder %s17, 0
      %p65 = por %p63, %p64
      %s67 = sadd.s32 %s66, 1
      %p70 = scmp.eq.s32.totalorder %s11, 1
      %p71 = scmp.ne.s32.totalorder %s66, %s68
      %p72 = scmp.eq.s32.totalorder %s11, 0
      %p73 = por %p71, %p72
      %p74 = scmp.ne.s32.totalorder %s66, %s68
      %p75 = scmp.eq.s32.totalorder %s16, 1
      %p76 = por %p74, %p75
      %p77 = scmp.ne.s32.totalorder %s68, %s69
      %p78 = scmp.eq.s32.totalorder %s16, 0
      %p79 = por %p77, %p78
      %p80 = scmp.ne.s32.totalorder %s68, %s69
      %p81 = scmp.eq.s32.totalorder %s17, 1
      %p82 = por %p80, %p81
      %p84 = scmp.ne.s32.totalorder %s69, %s83
      %p85 = scmp.eq.s32.totalorder %s17, 0
      %p86 = por %p84, %p85
      %s88 = sadd.s32 %s87, 1
      %p91 = scmp.eq.s32.totalorder %s11, 1
      %p92 = scmp.ne.s32.totalorder %s87, %s89
      %p93 = scmp.eq.s32.totalorder %s11, 0
      %p94 = por %p92, %p93
      %p95 = scmp.ne.s32.totalorder %s87, %s89
      %p96 = scmp.eq.s32.totalorder %s16, 1
      %p97 = por %p95, %p96
      %p98 = scmp.ne.s32.totalorder %s89, %s90
      %p99 = scmp.eq.s32.totalorder %s16, 0
      %p100 = por %p98, %p99
      %p101 = scmp.ne.s32.totalorder %s89, %s90
      %p102 = scmp.eq.s32.totalorder %s17, 1
      %p103 = por %p101, %p102
      %p105 = scmp.ne.s32.totalorder %s90, %s104
      %p106 = scmp.eq.s32.totalorder %s17, 0
      %p107 = por %p105, %p106
      %s108 = ssub.s32 %s11, %s18
      %p109 = scmp.eq.s32.totalorder %s108, 0
      %s111 = sadd.s32 %s110, 1
      %s112 = scalar_select %p109, %s110, %s111
      %p115 = pneg %p109
      %p116 = scmp.eq.s32.totalorder %s11, 1
      %p117 = por %p115, %p116
      %p118 = scmp.ne.s32.totalorder %s110, %s113
      %p119 = scmp.eq.s32.totalorder %s11, 0
      %p120 = por %p118, %p119
      %p121 = scmp.ne.s32.totalorder %s110, %s113
      %p122 = scmp.eq.s32.totalorder %s16, 1
      %p123 = por %p121, %p122
      %p124 = scmp.ne.s32.totalorder %s113, %s114
      %p125 = scmp.eq.s32.totalorder %s16, 0
      %p126 = por %p124, %p125
      %p127 = scmp.ne.s32.totalorder %s113, %s114
      %p128 = scmp.eq.s32.totalorder %s17, 1
      %p129 = por %p127, %p128
      %p131 = scmp.ne.s32.totalorder %s114, %s130
      %p132 = scmp.eq.s32.totalorder %s17, 0
      %p133 = por %p131, %p132
      %p134 = scmp.le.s32.totalorder 1, %s11
      %p135 = scmp.lt.s32.totalorder %s11, 3
      %p136 = pnand %p134, %p135
      %p137 = pneg %p136
      // Predicated region
      $region9: #{sentiment_classifier_forward.4} parent=5 // pred_check
        _
      $region10: #{sentiment_classifier_forward.4} parent=5 // pred_check_branch
        %139 = sbr.rel (%p136) target = $region12
      $region11: #{sentiment_classifier_forward.4} parent=5 // pred_region
        %s140 = ssub.s32 %s11, 1
        // Predicated region
        $region13: #{sentiment_classifier_forward.4} parent=11 // pred_check
          %p141 = pneg %p58
        $region14: #{sentiment_classifier_forward.4} parent=11 // pred_check_branch
          %143 = sbr.rel (%p141) target = $region16
        $region15: #{sentiment_classifier_forward.4} parent=11 // pred_region
          _
        $region16: #{sentiment_classifier_forward.4} parent=11 // pred_fallthru
          _
        // Predicated region
        $region17: #{sentiment_classifier_forward.4} parent=11 // pred_check
          %p144 = pneg %p79
        $region18: #{sentiment_classifier_forward.4} parent=11 // pred_check_branch
          %146 = sbr.rel (%p144) target = $region20
        $region19: #{sentiment_classifier_forward.4} parent=11 // pred_region
          _
        $region20: #{sentiment_classifier_forward.4} parent=11 // pred_fallthru
          _
        // Predicated region
        $region21: #{sentiment_classifier_forward.4} parent=11 // pred_check
          %p147 = pneg %p100
        $region22: #{sentiment_classifier_forward.4} parent=11 // pred_check_branch
          %149 = sbr.rel (%p147) target = $region24
        $region23: #{sentiment_classifier_forward.4} parent=11 // pred_region
          %s151 = ssub.s32 32, 32
          %152 = vsyncadd [#allocation3], %s151
          %s154 = sshll.u32 [#allocation2], 4
          %s155 = int_to_ptr.vmem [resolvable:$true] %s154
          %157 = dma.hbm_to_vmem [thread:$0]  %s3, 32, %s155, [#allocation3]
        $region24: #{sentiment_classifier_forward.4} parent=11 // pred_fallthru
          _
      $region12: #{sentiment_classifier_forward.4} parent=5 // pred_fallthru
        _
      %p158 = scmp.lt.s32.totalorder %s11, 2
      // Predicated region
      $region25: #{sentiment_classifier_forward.4} parent=5 // pred_check
        %p159 = pneg %p158
      $region26: #{sentiment_classifier_forward.4} parent=5 // pred_check_branch
        %161 = sbr.rel (%p159) target = $region28
      $region27: #{sentiment_classifier_forward.4} parent=5 // pred_region
        // Predicated region
        $region29: #{sentiment_classifier_forward.4} parent=27 // pred_check
          %p162 = pneg %p31
        $region30: #{sentiment_classifier_forward.4} parent=27 // pred_check_branch
          %164 = sbr.rel (%p162) target = $region32
        $region31: #{sentiment_classifier_forward.4} parent=27 // pred_region
          %p165 = scmp.lt.s32.totalorder %s11, 1
          %s166 = scalar_select %p165, %s11, 1
          %s167 = smul.addr %s166, 2
          %s168 = smul.addr %s167, 8
          %s169 = scalar_lea.vmem %s0, %s168
        $region32: #{sentiment_classifier_forward.4} parent=27 // pred_fallthru
          _
      $region28: #{sentiment_classifier_forward.4} parent=5 // pred_fallthru
        _
      %p170 = scmp.le.s32.totalorder 1, %s11
      %p171 = scmp.lt.s32.totalorder %s11, 3
      %p172 = pnand %p170, %p171
      %p173 = pneg %p172
      // Predicated region
      $region33: #{sentiment_classifier_forward.4} parent=5 // pred_check
        _
      $region34: #{sentiment_classifier_forward.4} parent=5 // pred_check_branch
        %175 = sbr.rel (%p172) target = $region36
      $region35: #{sentiment_classifier_forward.4} parent=5 // pred_region
        %s176 = ssub.s32 %s11, 1
        // Predicated region
        $region37: #{sentiment_classifier_forward.4} parent=35 // pred_check
          %p177 = pneg %p100
        $region38: #{sentiment_classifier_forward.4} parent=35 // pred_check_branch
          %179 = sbr.rel (%p177) target = $region40
        $region39: #{sentiment_classifier_forward.4} parent=35 // pred_region
          %180 = dma.done [#allocation3], 32
        $region40: #{sentiment_classifier_forward.4} parent=35 // pred_fallthru
          _
        %p181 = scmp.lt.s32.totalorder %s16, 1
        %s182 = scalar_select %p181, %s16, 1
        %s183 = smul.addr %s182, 2
        %s184 = smul.addr %s183, 8
        %s185 = scalar_lea.vmem %s0, %s184
        %p186 = pneg %p37
        %p187 = pneg %p34
        %p188 = pneg %p58
        %p189 = pneg %p55
        %p190 = pneg %p79
        %p191 = pneg %p76
        %p192 = pneg %p100
        %p193 = pneg %p97
        %p194 = pneg %p126
        %p195 = pneg %p123
        %p196 = scmp.lt.s32.totalorder %s16, 1
        %s197 = scalar_select %p196, %s16, 1
        %s198 = smul.addr %s197, 2
        %s199 = smul.addr %s198, 8
        %s200 = scalar_lea.vmem %s4, %s199
        %p201 = scmp.lt.s32.totalorder %s16, 1
        %s202 = scalar_select %p201, %s16, 1
        %s203 = smul.addr %s202, 2
        %s204 = smul.addr %s203, 8
        %s205 = scalar_lea.vmem %s0, %s204
        %p206 = scmp.lt.s32.totalorder %s16, 1
        %s207 = scalar_select %p206, %s16, 1
        %s208 = smul.addr %s207, 2
        %s209 = smul.addr %s208, 8
        %s210 = scalar_lea.vmem %s4, %s209
        %v211 = vld [vmem:[%s205] sm:$0xff]
        %v212 = vld [vmem:[%s205 + $0x8] sm:$0xff]
        %v213 = vld [vmem:[%s1] sm:$0xff]
        %v214 = vld [vmem:[%s1 + $0x8] sm:$0xff]
        %v215 = vadd.f32 %v211, %v213
        %v216 = vadd.f32 %v212, %v214
        %v217 = vld [vmem:[%s2] sm:$0x3]
        %v218 = vld [vmem:[#allocation2] sm:$0x3]
        %v219 = vadd.f32 %v215, %v216
        %220 = vadd.xlane.f32.xlu0 %v219
        %v221 = vpop.xlane.xlu0 %220
        %v222 = vrcp.pop 256.0
        %v223 = vmul.f32 %v221, %v222
        %v224 = vsub.f32 %v215, %v223
        %v225 = vsub.f32 %v216, %v223
        %v226 = vmul.f32 %v224, %v224
        %v227 = vmul.f32 %v225, %v225
        %v228 = vadd.f32 %v226, %v227
        %229 = vadd.xlane.f32.xlu0 %v228
        %v230 = vpop.xlane.xlu0 %229
        %v231 = vmul.f32 %v230, %v222
        %v232 = vadd.f32 %v231, 1e-12
        %v233 = vrsqrt.pop %v232
        %v234 = vmul.f32 %v224, %v233
        %v235 = vmul.f32 %v225, %v233
        %v237 = vlaneseq
        %v238 = vshrl.u32 %v237, 7
        %v239 = vsub.s32 0, %v238
        %v240 = vrot.slane %v217, %v239
        %v241 = vlaneseq
        %v242 = vshrl.u32 %v241, 7
        %v243 = vsub.s32 1, %v242
        %v244 = vrot.slane %v217, %v243
        %v247 = vmul.f32 %v234, %v240
        %v248 = vmul.f32 %v235, %v244
        %v250 = vlaneseq
        %v251 = vshrl.u32 %v250, 7
        %v252 = vsub.s32 0, %v251
        %v253 = vrot.slane %v218, %v252
        %v254 = vlaneseq
        %v255 = vshrl.u32 %v254, 7
        %v256 = vsub.s32 1, %v255
        %v257 = vrot.slane %v218, %v256
        %v260 = vadd.f32 %v247, %v253
        %v261 = vadd.f32 %v248, %v257
        %262 = vst [vmem:[%s210] sm:$0xff] %v260
        %263 = vst [vmem:[%s210 + $0x8] sm:$0xff] %v261
        %p264 = scmp.lt.s32.totalorder %s16, 1
        %s265 = scalar_select %p264, %s16, 1
        %s266 = smul.addr %s265, 2
        %s267 = smul.addr %s266, 8
        %s268 = scalar_lea.vmem %s4, %s267
        // Predicated region
        $region41: #{sentiment_classifier_forward.4} parent=35 // pred_check
          %p269 = pneg %p123
        $region42: #{sentiment_classifier_forward.4} parent=35 // pred_check_branch
          %271 = sbr.rel (%p269) target = $region44
        $region43: #{sentiment_classifier_forward.4} parent=35 // pred_region
          _
        $region44: #{sentiment_classifier_forward.4} parent=35 // pred_fallthru
          _
      $region36: #{sentiment_classifier_forward.4} parent=5 // pred_fallthru
        _
      %p272 = scmp.le.s32.totalorder 2, %s11
      // Predicated region
      $region45: #{sentiment_classifier_forward.4} parent=5 // pred_check
        %p273 = pneg %p272
      $region46: #{sentiment_classifier_forward.4} parent=5 // pred_check_branch
        %275 = sbr.rel (%p273) target = $region48
      $region47: #{sentiment_classifier_forward.4} parent=5 // pred_region
        %s276 = ssub.s32 %s11, 2
        // Predicated region
        $region49: #{sentiment_classifier_forward.4} parent=47 // pred_check
          %p277 = pneg %p129
        $region50: #{sentiment_classifier_forward.4} parent=47 // pred_check_branch
          %279 = sbr.rel (%p277) target = $region52
        $region51: #{sentiment_classifier_forward.4} parent=47 // pred_region
          %p280 = scmp.lt.s32.totalorder %s17, 1
          %s281 = scalar_select %p280, %s17, 1
          %s282 = smul.addr %s281, 2
          %s283 = smul.addr %s282, 8
          %s284 = scalar_lea.vmem %s4, %s283
        $region52: #{sentiment_classifier_forward.4} parent=47 // pred_fallthru
          _
      $region48: #{sentiment_classifier_forward.4} parent=5 // pred_fallthru
        _
    $region6: #{sentiment_classifier_forward.4} parent=1 // loop_footer
      %s15 = sadd.s32 1, %s11
    $region7: #{sentiment_classifier_forward.4} parent=1 // loop_footer_branch
      %10 = sbr.rel target = $region3
    $region8: #{sentiment_classifier_forward.4} parent=1 // loop_exit
      _
    %285 = vsyncpa [#allocation3], 1
    %s286 = scalar_lea.sflag [#allocation3], 1
    %287 = vsyncpa %s286, 1

// kernel: sentiment_classifier_forward.7
$region0: #{sentiment_classifier_forward.7}
  #allocation0 [shape = 'u32[]', space=smem, size = 0x4, offset = 0x4, fixed_abs, tag = 'smem constant byte address 0x4 - core index']
  #allocation1 [shape = 'u32[144,128]{1,0:T(1,128)}', space=vmem, size = 0x12000, scoped, tag = 'internal scratch']
  %s0 = inlined_call_operand.vmem [shape: f32[2,8,256], index: 0, kind: input, shape index: {}]
  %s1 = inlined_call_operand.vmem [shape: f32[256,256], index: 1, kind: input, shape index: {}]
  %s2 = inlined_call_operand.vmem [shape: f32[1,256], index: 2, kind: input, shape index: {}]
  %s3 = inlined_call_operand.vmem [shape: f32[256,128], index: 3, kind: input, shape index: {}]
  %s4 = inlined_call_operand.vmem [shape: f32[1,128], index: 4, kind: input, shape index: {}]
  %s5 = inlined_call_operand.hbm [shape: f32[2,128], index: 5, kind: output, shape index: {}]
  %s6 = sld [smem:[#allocation0]]
  $region30: #{sentiment_classifier_forward.7} parent=0
    _
  %s8 = ssub.s32 1, %s6
  %s9 = scalar_select 0, %s8, %s6
  $region1: #{sentiment_classifier_forward.7} parent=0
    #allocation2 [shape = 'u8[1024]{0}', space=vmem, size = 0x400, scoped, tag = 'output window, operand 0, single buffered']
    #allocation3 [shape = 's32[1]{0}', space=sflag, size = 0x4, scoped, tag = 'scoped memory for sentiment_classifier_forward.7']
    %10 = vsyncpa [#allocation3], 0
    // Predicated region
    $region2: #{sentiment_classifier_forward.7} parent=1 // pred_check
      _
    $region3: #{sentiment_classifier_forward.7} parent=1 // pred_check_branch
      %12 = sbr.rel (0) target = $region5
    $region4: #{sentiment_classifier_forward.7} parent=1 // pred_region
      _
    $region5: #{sentiment_classifier_forward.7} parent=1 // pred_fallthru
      _
    // Predicated region
    $region6: #{sentiment_classifier_forward.7} parent=1 // pred_check
      _
    $region7: #{sentiment_classifier_forward.7} parent=1 // pred_check_branch
      %14 = sbr.rel (0) target = $region9
    $region8: #{sentiment_classifier_forward.7} parent=1 // pred_region
      _
    $region9: #{sentiment_classifier_forward.7} parent=1 // pred_fallthru
      _
    // Predicated region
    $region10: #{sentiment_classifier_forward.7} parent=1 // pred_check
      _
    $region11: #{sentiment_classifier_forward.7} parent=1 // pred_check_branch
      %16 = sbr.rel (0) target = $region13
    $region12: #{sentiment_classifier_forward.7} parent=1 // pred_region
      _
    $region13: #{sentiment_classifier_forward.7} parent=1 // pred_fallthru
      _
    // Predicated region
    $region14: #{sentiment_classifier_forward.7} parent=1 // pred_check
      _
    $region15: #{sentiment_classifier_forward.7} parent=1 // pred_check_branch
      %18 = sbr.rel (0) target = $region17
    $region16: #{sentiment_classifier_forward.7} parent=1 // pred_region
      _
    $region17: #{sentiment_classifier_forward.7} parent=1 // pred_fallthru
      _
    // Predicated region
    $region18: #{sentiment_classifier_forward.7} parent=1 // pred_check
      _
    $region19: #{sentiment_classifier_forward.7} parent=1 // pred_check_branch
      %20 = sbr.rel (0) target = $region21
    $region20: #{sentiment_classifier_forward.7} parent=1 // pred_region
      _
    $region21: #{sentiment_classifier_forward.7} parent=1 // pred_fallthru
      _
    %v21 = vld [vmem:[%s1] sm:$0xff]
    %v22 = vld [vmem:[%s1 + $0x8] sm:$0xff]
    %v23 = vld [vmem:[%s1 + $0x10] sm:$0xff]
    %v24 = vld [vmem:[%s1 + $0x18] sm:$0xff]
    %v25 = vld [vmem:[%s1 + $0x20] sm:$0xff]
    %v26 = vld [vmem:[%s1 + $0x28] sm:$0xff]
    %v27 = vld [vmem:[%s1 + $0x30] sm:$0xff]
    %v28 = vld [vmem:[%s1 + $0x38] sm:$0xff]
    %v29 = vld [vmem:[%s1 + $0x40] sm:$0xff]
    %v30 = vld [vmem:[%s1 + $0x48] sm:$0xff]
    %v31 = vld [vmem:[%s1 + $0x50] sm:$0xff]
    %v32 = vld [vmem:[%s1 + $0x58] sm:$0xff]
    %v33 = vld [vmem:[%s1 + $0x60] sm:$0xff]
    %v34 = vld [vmem:[%s1 + $0x68] sm:$0xff]
    %v35 = vld [vmem:[%s1 + $0x70] sm:$0xff]
    %v36 = vld [vmem:[%s1 + $0x78] sm:$0xff]
    %v37 = vld [vmem:[%s1 + $0x80] sm:$0xff]
    %v38 = vld [vmem:[%s1 + $0x88] sm:$0xff]
    %v39 = vld [vmem:[%s1 + $0x90] sm:$0xff]
    %v40 = vld [vmem:[%s1 + $0x98] sm:$0xff]
    %v41 = vld [vmem:[%s1 + $0xa0] sm:$0xff]
    %v42 = vld [vmem:[%s1 + $0xa8] sm:$0xff]
    %v43 = vld [vmem:[%s1 + $0xb0] sm:$0xff]
    %v44 = vld [vmem:[%s1 + $0xb8] sm:$0xff]
    %v45 = vld [vmem:[%s1 + $0xc0] sm:$0xff]
    %v46 = vld [vmem:[%s1 + $0xc8] sm:$0xff]
    %v47 = vld [vmem:[%s1 + $0xd0] sm:$0xff]
    %v48 = vld [vmem:[%s1 + $0xd8] sm:$0xff]
    %v49 = vld [vmem:[%s1 + $0xe0] sm:$0xff]
    %v50 = vld [vmem:[%s1 + $0xe8] sm:$0xff]
    %v51 = vld [vmem:[%s1 + $0xf0] sm:$0xff]
    %v52 = vld [vmem:[%s1 + $0xf8] sm:$0xff]
    %v53 = vld [vmem:[%s1 + $0x100] sm:$0xff]
    %v54 = vld [vmem:[%s1 + $0x108] sm:$0xff]
    %v55 = vld [vmem:[%s1 + $0x110] sm:$0xff]
    %v56 = vld [vmem:[%s1 + $0x118] sm:$0xff]
    %v57 = vld [vmem:[%s1 + $0x120] sm:$0xff]
    %v58 = vld [vmem:[%s1 + $0x128] sm:$0xff]
    %v59 = vld [vmem:[%s1 + $0x130] sm:$0xff]
    %v60 = vld [vmem:[%s1 + $0x138] sm:$0xff]
    %v61 = vld [vmem:[%s1 + $0x140] sm:$0xff]
    %v62 = vld [vmem:[%s1 + $0x148] sm:$0xff]
    %v63 = vld [vmem:[%s1 + $0x150] sm:$0xff]
    %v64 = vld [vmem:[%s1 + $0x158] sm:$0xff]
    %v65 = vld [vmem:[%s1 + $0x160] sm:$0xff]
    %v66 = vld [vmem:[%s1 + $0x168] sm:$0xff]
    %v67 = vld [vmem:[%s1 + $0x170] sm:$0xff]
    %v68 = vld [vmem:[%s1 + $0x178] sm:$0xff]
    %v69 = vld [vmem:[%s1 + $0x180] sm:$0xff]
    %v70 = vld [vmem:[%s1 + $0x188] sm:$0xff]
    %v71 = vld [vmem:[%s1 + $0x190] sm:$0xff]
    %v72 = vld [vmem:[%s1 + $0x198] sm:$0xff]
    %v73 = vld [vmem:[%s1 + $0x1a0] sm:$0xff]
    %v74 = vld [vmem:[%s1 + $0x1a8] sm:$0xff]
    %v75 = vld [vmem:[%s1 + $0x1b0] sm:$0xff]
    %v76 = vld [vmem:[%s1 + $0x1b8] sm:$0xff]
    %v77 = vld [vmem:[%s1 + $0x1c0] sm:$0xff]
    %v78 = vld [vmem:[%s1 + $0x1c8] sm:$0xff]
    %v79 = vld [vmem:[%s1 + $0x1d0] sm:$0xff]
    %v80 = vld [vmem:[%s1 + $0x1d8] sm:$0xff]
    %v81 = vld [vmem:[%s1 + $0x1e0] sm:$0xff]
    %v82 = vld [vmem:[%s1 + $0x1e8] sm:$0xff]
    %v83 = vld [vmem:[%s1 + $0x1f0] sm:$0xff]
    %v84 = vld [vmem:[%s1 + $0x1f8] sm:$0xff]
    %v85 = vld [vmem:[%s2] sm:$0x3]
    %v86 = vld [vmem:[%s3] sm:$0xff]
    %v87 = vld [vmem:[%s3 + $0x8] sm:$0xff]
    %v88 = vld [vmem:[%s3 + $0x10] sm:$0xff]
    %v89 = vld [vmem:[%s3 + $0x18] sm:$0xff]
    %v90 = vld [vmem:[%s3 + $0x20] sm:$0xff]
    %v91 = vld [vmem:[%s3 + $0x28] sm:$0xff]
    %v92 = vld [vmem:[%s3 + $0x30] sm:$0xff]
    %v93 = vld [vmem:[%s3 + $0x38] sm:$0xff]
    %v94 = vld [vmem:[%s3 + $0x40] sm:$0xff]
    %v95 = vld [vmem:[%s3 + $0x48] sm:$0xff]
    %v96 = vld [vmem:[%s3 + $0x50] sm:$0xff]
    %v97 = vld [vmem:[%s3 + $0x58] sm:$0xff]
    %v98 = vld [vmem:[%s3 + $0x60] sm:$0xff]
    %v99 = vld [vmem:[%s3 + $0x68] sm:$0xff]
    %v100 = vld [vmem:[%s3 + $0x70] sm:$0xff]
    %v101 = vld [vmem:[%s3 + $0x78] sm:$0xff]
    %v102 = vld [vmem:[%s3 + $0x80] sm:$0xff]
    %v103 = vld [vmem:[%s3 + $0x88] sm:$0xff]
    %v104 = vld [vmem:[%s3 + $0x90] sm:$0xff]
    %v105 = vld [vmem:[%s3 + $0x98] sm:$0xff]
    %v106 = vld [vmem:[%s3 + $0xa0] sm:$0xff]
    %v107 = vld [vmem:[%s3 + $0xa8] sm:$0xff]
    %v108 = vld [vmem:[%s3 + $0xb0] sm:$0xff]
    %v109 = vld [vmem:[%s3 + $0xb8] sm:$0xff]
    %v110 = vld [vmem:[%s3 + $0xc0] sm:$0xff]
    %v111 = vld [vmem:[%s3 + $0xc8] sm:$0xff]
    %v112 = vld [vmem:[%s3 + $0xd0] sm:$0xff]
    %v113 = vld [vmem:[%s3 + $0xd8] sm:$0xff]
    %v114 = vld [vmem:[%s3 + $0xe0] sm:$0xff]
    %v115 = vld [vmem:[%s3 + $0xe8] sm:$0xff]
    %v116 = vld [vmem:[%s3 + $0xf0] sm:$0xff]
    %v117 = vld [vmem:[%s3 + $0xf8] sm:$0xff]
    %v118 = vld [vmem:[%s4] sm:$0x1]
    %v119 = vld [vmem:[%s0] sm:$0xff]
    %v120 = vld [vmem:[%s0 + $0x8] sm:$0xff]
    %v122 = vlaneseq
    %v123 = vshrl.u32 %v122, 7
    %v124 = vsub.s32 0, %v123
    %v125 = vrot.slane %v85, %v124
    %v126 = vlaneseq
    %v127 = vshrl.u32 %v126, 7
    %v128 = vsub.s32 1, %v127
    %v129 = vrot.slane %v85, %v128
    %132 = vmatprep.subr.mxu0 %v22
    %133 = vmatpush1.msra.mxu0 %v21
    %134 = vmatprep.subr.mxu0 %v24
    %135 = vmatpush1.msra.mxu0 %v23
    %136 = vmatprep.subr.mxu0 %v26
    %137 = vmatpush1.msra.mxu0 %v25
    %138 = vmatprep.subr.mxu0 %v28
    %139 = vmatpush1.msra.mxu0 %v27
    %140 = vmatprep.subr.mxu0 %v30
    %141 = vmatpush1.msra.mxu0 %v29
    %142 = vmatprep.subr.mxu0 %v32
    %143 = vmatpush1.msra.mxu0 %v31
    %144 = vmatprep.subr.mxu0 %v34
    %145 = vmatpush1.msra.mxu0 %v33
    %146 = vmatprep.subr.mxu0 %v36
    %147 = vmatpush1.msra.mxu0 %v35
    %148 = vmatprep.subr.mxu0 %v38
    %149 = vmatpush1.msra.mxu0 %v37
    %150 = vmatprep.subr.mxu0 %v40
    %151 = vmatpush1.msra.mxu0 %v39
    %152 = vmatprep.subr.mxu0 %v42
    %153 = vmatpush1.msra.mxu0 %v41
    %154 = vmatprep.subr.mxu0 %v44
    %155 = vmatpush1.msra.mxu0 %v43
    %156 = vmatprep.subr.mxu0 %v46
    %157 = vmatpush1.msra.mxu0 %v45
    %158 = vmatprep.subr.mxu0 %v48
    %159 = vmatpush1.msra.mxu0 %v47
    %160 = vmatprep.subr.mxu0 %v50
    %161 = vmatpush1.msra.mxu0 %v49
    %162 = vmatprep.subr.mxu0 %v52
    %163 = vmatpush1.msra.mxu0 %v51
    %164 = vmatprep.subr.mxu0 %v54
    %165 = vmatpush1.msra.mxu0 %v53
    %166 = vmatprep.subr.mxu0 %v56
    %167 = vmatpush1.msra.mxu0 %v55
    %168 = vmatprep.subr.mxu0 %v58
    %169 = vmatpush1.msra.mxu0 %v57
    %170 = vmatprep.subr.mxu0 %v60
    %171 = vmatpush1.msra.mxu0 %v59
    %172 = vmatprep.subr.mxu0 %v62
    %173 = vmatpush1.msra.mxu0 %v61
    %174 = vmatprep.subr.mxu0 %v64
    %175 = vmatpush1.msra.mxu0 %v63
    %176 = vmatprep.subr.mxu0 %v66
    %177 = vmatpush1.msra.mxu0 %v65
    %178 = vmatprep.subr.mxu0 %v68
    %179 = vmatpush1.msra.mxu0 %v67
    %180 = vmatprep.subr.mxu0 %v70
    %181 = vmatpush1.msra.mxu0 %v69
    %182 = vmatprep.subr.mxu0 %v72
    %183 = vmatpush1.msra.mxu0 %v71
    %184 = vmatprep.subr.mxu0 %v74
    %185 = vmatpush1.msra.mxu0 %v73
    %186 = vmatprep.subr.mxu0 %v76
    %187 = vmatpush1.msra.mxu0 %v75
    %188 = vmatprep.subr.mxu0 %v78
    %189 = vmatpush1.msra.mxu0 %v77
    %190 = vmatprep.subr.mxu0 %v80
    %191 = vmatpush1.msra.mxu0 %v79
    %192 = vmatprep.subr.mxu0 %v82
    %193 = vmatpush1.msra.mxu0 %v81
    %194 = vmatprep.subr.mxu0 %v84
    %195 = vmatpush1.msra.mxu0 %v83
    %196 = vmatprep.mubr.f32.mxu0 %v120
    %197 = vmatmul.mubr.f32.gmra.mrb[0].mxu0 %v119
    %v198 = vpop.f32.mrb[0].mxu0
    %v199 = vadd.f32 %v125, %v198
    %v200 = vpop.f32.mrb[0].mxu0
    %v201 = vadd.f32 %v129, %v200
    %202 = vdwg.mxu0
    %v203 = vtanh.pop %v199
    %v204 = vtanh.pop %v201
    %205 = vmatprep.subr.mxu0 0.0
    %206 = vmatpush1.msra.mxu0 %v86
    %207 = vmatprep.subr.mxu0 0.0
    %208 = vmatpush1.msra.mxu0 %v87
    %209 = vmatprep.subr.mxu0 0.0
    %210 = vmatpush1.msra.mxu0 %v88
    %211 = vmatprep.subr.mxu0 0.0
    %212 = vmatpush1.msra.mxu0 %v89
    %213 = vmatprep.subr.mxu0 0.0
    %214 = vmatpush1.msra.mxu0 %v90
    %215 = vmatprep.subr.mxu0 0.0
    %216 = vmatpush1.msra.mxu0 %v91
    %217 = vmatprep.subr.mxu0 0.0
    %218 = vmatpush1.msra.mxu0 %v92
    %219 = vmatprep.subr.mxu0 0.0
    %220 = vmatpush1.msra.mxu0 %v93
    %221 = vmatprep.subr.mxu0 0.0
    %222 = vmatpush1.msra.mxu0 %v94
    %223 = vmatprep.subr.mxu0 0.0
    %224 = vmatpush1.msra.mxu0 %v95
    %225 = vmatprep.subr.mxu0 0.0
    %226 = vmatpush1.msra.mxu0 %v96
    %227 = vmatprep.subr.mxu0 0.0
    %228 = vmatpush1.msra.mxu0 %v97
    %229 = vmatprep.subr.mxu0 0.0
    %230 = vmatpush1.msra.mxu0 %v98
    %231 = vmatprep.subr.mxu0 0.0
    %232 = vmatpush1.msra.mxu0 %v99
    %233 = vmatprep.subr.mxu0 0.0
    %234 = vmatpush1.msra.mxu0 %v100
    %235 = vmatprep.subr.mxu0 0.0
    %236 = vmatpush1.msra.mxu0 %v101
    %237 = vmatprep.subr.mxu0 0.0
    %238 = vmatpush1.msra.mxu0 %v102
    %239 = vmatprep.subr.mxu0 0.0
    %240 = vmatpush1.msra.mxu0 %v103
    %241 = vmatprep.subr.mxu0 0.0
    %242 = vmatpush1.msra.mxu0 %v104
    %243 = vmatprep.subr.mxu0 0.0
    %244 = vmatpush1.msra.mxu0 %v105
    %245 = vmatprep.subr.mxu0 0.0
    %246 = vmatpush1.msra.mxu0 %v106
    %247 = vmatprep.subr.mxu0 0.0
    %248 = vmatpush1.msra.mxu0 %v107
    %249 = vmatprep.subr.mxu0 0.0
    %250 = vmatpush1.msra.mxu0 %v108
    %251 = vmatprep.subr.mxu0 0.0
    %252 = vmatpush1.msra.mxu0 %v109
    %253 = vmatprep.subr.mxu0 0.0
    %254 = vmatpush1.msra.mxu0 %v110
    %255 = vmatprep.subr.mxu0 0.0
    %256 = vmatpush1.msra.mxu0 %v111
    %257 = vmatprep.subr.mxu0 0.0
    %258 = vmatpush1.msra.mxu0 %v112
    %259 = vmatprep.subr.mxu0 0.0
    %260 = vmatpush1.msra.mxu0 %v113
    %261 = vmatprep.subr.mxu0 0.0
    %262 = vmatpush1.msra.mxu0 %v114
    %263 = vmatprep.subr.mxu0 0.0
    %264 = vmatpush1.msra.mxu0 %v115
    %265 = vmatprep.subr.mxu0 0.0
    %266 = vmatpush1.msra.mxu0 %v116
    %267 = vmatprep.subr.mxu0 0.0
    %268 = vmatpush1.msra.mxu0 %v117
    %269 = vmatprep.mubr.f32.mxu0 %v204
    %270 = vmatmul.mubr.f32.gmra.mrb[0].mxu0 %v203
    %v271 = vpop.f32.mrb[0].mxu0
    %v272 = vadd.f32 %v118, %v271
    %v273 = vpop.f32.mrb[0].mxu0
    %274 = vdwg.mxu0
    %275 = vst [vmem:[#allocation2] sm:$0x1] %v272
    %s276 = scalar_lea.vmem %s0, 16
    %v277 = vld [vmem:[%s276] sm:$0xff]
    %v278 = vld [vmem:[%s276 + $0x8] sm:$0xff]
    %279 = vmatprep.subr.mxu0 %v22
    %280 = vmatpush1.msra.mxu0 %v21
    %281 = vmatprep.subr.mxu0 %v24
    %282 = vmatpush1.msra.mxu0 %v23
    %283 = vmatprep.subr.mxu0 %v26
    %284 = vmatpush1.msra.mxu0 %v25
    %285 = vmatprep.subr.mxu0 %v28
    %286 = vmatpush1.msra.mxu0 %v27
    %287 = vmatprep.subr.mxu0 %v30
    %288 = vmatpush1.msra.mxu0 %v29
    %289 = vmatprep.subr.mxu0 %v32
    %290 = vmatpush1.msra.mxu0 %v31
    %291 = vmatprep.subr.mxu0 %v34
    %292 = vmatpush1.msra.mxu0 %v33
    %293 = vmatprep.subr.mxu0 %v36
    %294 = vmatpush1.msra.mxu0 %v35
    %295 = vmatprep.subr.mxu0 %v38
    %296 = vmatpush1.msra.mxu0 %v37
    %297 = vmatprep.subr.mxu0 %v40
    %298 = vmatpush1.msra.mxu0 %v39
    %299 = vmatprep.subr.mxu0 %v42
    %300 = vmatpush1.msra.mxu0 %v41
    %301 = vmatprep.subr.mxu0 %v44
    %302 = vmatpush1.msra.mxu0 %v43
    %303 = vmatprep.subr.mxu0 %v46
    %304 = vmatpush1.msra.mxu0 %v45
    %305 = vmatprep.subr.mxu0 %v48
    %306 = vmatpush1.msra.mxu0 %v47
    %307 = vmatprep.subr.mxu0 %v50
    %308 = vmatpush1.msra.mxu0 %v49
    %309 = vmatprep.subr.mxu0 %v52
    %310 = vmatpush1.msra.mxu0 %v51
    %311 = vmatprep.subr.mxu0 %v54
    %312 = vmatpush1.msra.mxu0 %v53
    %313 = vmatprep.subr.mxu0 %v56
    %314 = vmatpush1.msra.mxu0 %v55
    %315 = vmatprep.subr.mxu0 %v58
    %316 = vmatpush1.msra.mxu0 %v57
    %317 = vmatprep.subr.mxu0 %v60
    %318 = vmatpush1.msra.mxu0 %v59
    %319 = vmatprep.subr.mxu0 %v62
    %320 = vmatpush1.msra.mxu0 %v61
    %321 = vmatprep.subr.mxu0 %v64
    %322 = vmatpush1.msra.mxu0 %v63
    %323 = vmatprep.subr.mxu0 %v66
    %324 = vmatpush1.msra.mxu0 %v65
    %325 = vmatprep.subr.mxu0 %v68
    %326 = vmatpush1.msra.mxu0 %v67
    %327 = vmatprep.subr.mxu0 %v70
    %328 = vmatpush1.msra.mxu0 %v69
    %329 = vmatprep.subr.mxu0 %v72
    %330 = vmatpush1.msra.mxu0 %v71
    %331 = vmatprep.subr.mxu0 %v74
    %332 = vmatpush1.msra.mxu0 %v73
    %333 = vmatprep.subr.mxu0 %v76
    %334 = vmatpush1.msra.mxu0 %v75
    %335 = vmatprep.subr.mxu0 %v78
    %336 = vmatpush1.msra.mxu0 %v77
    %337 = vmatprep.subr.mxu0 %v80
    %338 = vmatpush1.msra.mxu0 %v79
    %339 = vmatprep.subr.mxu0 %v82
    %340 = vmatpush1.msra.mxu0 %v81
    %341 = vmatprep.subr.mxu0 %v84
    %342 = vmatpush1.msra.mxu0 %v83
    %343 = vmatprep.mubr.f32.mxu0 %v278
    %344 = vmatmul.mubr.f32.gmra.mrb[0].mxu0 %v277
    %v345 = vpop.f32.mrb[0].mxu0
    %v346 = vadd.f32 %v125, %v345
    %v347 = vpop.f32.mrb[0].mxu0
    %v348 = vadd.f32 %v129, %v347
    %349 = vdwg.mxu0
    %v350 = vtanh.pop %v346
    %v351 = vtanh.pop %v348
    %352 = vmatprep.subr.mxu0 0.0
    %353 = vmatpush1.msra.mxu0 %v86
    %354 = vmatprep.subr.mxu0 0.0
    %355 = vmatpush1.msra.mxu0 %v87
    %356 = vmatprep.subr.mxu0 0.0
    %357 = vmatpush1.msra.mxu0 %v88
    %358 = vmatprep.subr.mxu0 0.0
    %359 = vmatpush1.msra.mxu0 %v89
    %360 = vmatprep.subr.mxu0 0.0
    %361 = vmatpush1.msra.mxu0 %v90
    %362 = vmatprep.subr.mxu0 0.0
    %363 = vmatpush1.msra.mxu0 %v91
    %364 = vmatprep.subr.mxu0 0.0
    %365 = vmatpush1.msra.mxu0 %v92
    %366 = vmatprep.subr.mxu0 0.0
    %367 = vmatpush1.msra.mxu0 %v93
    %368 = vmatprep.subr.mxu0 0.0
    %369 = vmatpush1.msra.mxu0 %v94
    %370 = vmatprep.subr.mxu0 0.0
    %371 = vmatpush1.msra.mxu0 %v95
    %372 = vmatprep.subr.mxu0 0.0
    %373 = vmatpush1.msra.mxu0 %v96
    %374 = vmatprep.subr.mxu0 0.0
    %375 = vmatpush1.msra.mxu0 %v97
    %376 = vmatprep.subr.mxu0 0.0
    %377 = vmatpush1.msra.mxu0 %v98
    %378 = vmatprep.subr.mxu0 0.0
    %379 = vmatpush1.msra.mxu0 %v99
    %380 = vmatprep.subr.mxu0 0.0
    %381 = vmatpush1.msra.mxu0 %v100
    %382 = vmatprep.subr.mxu0 0.0
    %383 = vmatpush1.msra.mxu0 %v101
    %384 = vmatprep.subr.mxu0 0.0
    %385 = vmatpush1.msra.mxu0 %v102
    %386 = vmatprep.subr.mxu0 0.0
    %387 = vmatpush1.msra.mxu0 %v103
    %388 = vmatprep.subr.mxu0 0.0
    %389 = vmatpush1.msra.mxu0 %v104
    %390 = vmatprep.subr.mxu0 0.0
    %391 = vmatpush1.msra.mxu0 %v105
    %392 = vmatprep.subr.mxu0 0.0
    %393 = vmatpush1.msra.mxu0 %v106
    %394 = vmatprep.subr.mxu0 0.0
    %395 = vmatpush1.msra.mxu0 %v107
    %396 = vmatprep.subr.mxu0 0.0
    %397 = vmatpush1.msra.mxu0 %v108
    %398 = vmatprep.subr.mxu0 0.0
    %399 = vmatpush1.msra.mxu0 %v109
    %400 = vmatprep.subr.mxu0 0.0
    %401 = vmatpush1.msra.mxu0 %v110
    %402 = vmatprep.subr.mxu0 0.0
    %403 = vmatpush1.msra.mxu0 %v111
    %404 = vmatprep.subr.mxu0 0.0
    %405 = vmatpush1.msra.mxu0 %v112
    %406 = vmatprep.subr.mxu0 0.0
    %407 = vmatpush1.msra.mxu0 %v113
    %408 = vmatprep.subr.mxu0 0.0
    %409 = vmatpush1.msra.mxu0 %v114
    %410 = vmatprep.subr.mxu0 0.0
    %411 = vmatpush1.msra.mxu0 %v115
    %412 = vmatprep.subr.mxu0 0.0
    %413 = vmatpush1.msra.mxu0 %v116
    %414 = vmatprep.subr.mxu0 0.0
    %415 = vmatpush1.msra.mxu0 %v117
    %416 = vmatprep.mubr.f32.mxu0 %v351
    %417 = vmatmul.mubr.f32.gmra.mrb[0].mxu0 %v350
    %v418 = vpop.f32.mrb[0].mxu0
    %v419 = vadd.f32 %v118, %v418
    %v420 = vpop.f32.mrb[0].mxu0
    %421 = vdwg.mxu0
    %422 = vst [vmem:[#allocation2 + $0x1] sm:$0x1] %v419
    // Predicated region
    $region22: #{sentiment_classifier_forward.7} parent=1 // pred_check
      _
    $region23: #{sentiment_classifier_forward.7} parent=1 // pred_check_branch
      %424 = sbr.rel (0) target = $region25
    $region24: #{sentiment_classifier_forward.7} parent=1 // pred_region
      %s426 = ssub.s32 32, 32
      %427 = vsyncadd [#allocation3], %s426
      %s429 = sshll.u32 [#allocation2], 4
      %s430 = int_to_ptr.vmem [resolvable:$true] %s429
      %432 = dma.vmem_to_hbm [thread:$0]  %s430, 32, %s5, [#allocation3]
    $region25: #{sentiment_classifier_forward.7} parent=1 // pred_fallthru
      _
    // Predicated region
    $region26: #{sentiment_classifier_forward.7} parent=1 // pred_check
      _
    $region27: #{sentiment_classifier_forward.7} parent=1 // pred_check_branch
      %434 = sbr.rel (0) target = $region29
    $region28: #{sentiment_classifier_forward.7} parent=1 // pred_region
      %435 = dma.done [#allocation3], 32
    $region29: #{sentiment_classifier_forward.7} parent=1 // pred_fallthru
      _
    %436 = vsyncpa [#allocation3], 1

// kernel: sentiment_classifier_forward.5
$region0: #{sentiment_classifier_forward.5}
  #allocation0 [shape = 'u32[]', space=smem, size = 0x4, offset = 0x4, fixed_abs, tag = 'smem constant byte address 0x4 - core index']
  #allocation1 [shape = 'u32[144,128]{1,0:T(1,128)}', space=vmem, size = 0x12000, scoped, tag = 'internal scratch']
  %s0 = inlined_call_operand.vmem [shape: f32[2,8,256], index: 0, kind: input, shape index: {}]
  %s1 = inlined_call_operand.vmem [shape: f32[2,1,8], index: 1, kind: input, shape index: {}]
  %s2 = inlined_call_operand.hbm [shape: f32[256,768], index: 2, kind: input, shape index: {}]
  %s3 = inlined_call_operand.hbm [shape: f32[1,768], index: 3, kind: input, shape index: {}]
  %s4 = inlined_call_operand.vmem [shape: f32[256,256], index: 4, kind: input, shape index: {}]
  %s5 = inlined_call_operand.hbm [shape: f32[1,256], index: 5, kind: input, shape index: {}]
  %s6 = inlined_call_operand.hbm [shape: f32[1,256], index: 6, kind: input, shape index: {}]
  %s7 = inlined_call_operand.hbm [shape: f32[1,256], index: 7, kind: input, shape index: {}]
  %s8 = inlined_call_operand.hbm [shape: f32[256,512], index: 8, kind: input, shape index: {}]
  %s9 = inlined_call_operand.vmem [shape: f32[1,512], index: 9, kind: input, shape index: {}]
  %s10 = inlined_call_operand.hbm [shape: f32[512,256], index: 10, kind: input, shape index: {}]
  %s11 = inlined_call_operand.hbm [shape: f32[1,256], index: 11, kind: input, shape index: {}]
  %s12 = inlined_call_operand.hbm [shape: f32[1,256], index: 12, kind: input, shape index: {}]
  %s13 = inlined_call_operand.hbm [shape: f32[1,256], index: 13, kind: input, shape index: {}]
  %s14 = inlined_call_operand.vmem [shape: f32[2,8,256], index: 14, kind: output, shape index: {}]
  %s15 = sld [smem:[#allocation0]]
  $region129: #{sentiment_classifier_forward.5} parent=0
    _
  %s17 = ssub.s32 1, %s15
  %s18 = scalar_select 0, %s17, %s15
  $region1: #{sentiment_classifier_forward.5} parent=0
    #allocation2 [shape = 'u8[786432]{0}', space=vmem, size = 0xc0000, scoped, tag = 'input window, operand 2, single buffered']
    #allocation3 [shape = 's32[2]{0}', space=sflag, size = 0x8, scoped, tag = 'scoped memory for sentiment_classifier_forward.5']
    #allocation4 [shape = 'u8[3072]{0}', space=vmem, size = 0xc00, scoped, tag = 'input window, operand 3, single buffered']
    #allocation5 [shape = 's32[1]{0}', space=sflag, size = 0x4, scoped, tag = 'scoped memory for sentiment_classifier_forward.5']
    #allocation6 [shape = 'u8[1024]{0}', space=vmem, size = 0x400, scoped, tag = 'input window, operand 5, single buffered']
    #allocation7 [shape = 'u8[1024]{0}', space=vmem, size = 0x400, scoped, tag = 'input window, operand 6, single buffered']
    #allocation8 [shape = 's32[1]{0}', space=sflag, size = 0x4, scoped, tag = 'scoped memory for sentiment_classifier_forward.5']
    #allocation9 [shape = 'u8[1024]{0}', space=vmem, size = 0x400, scoped, tag = 'input window, operand 7, single buffered']
    #allocation10 [shape = 'u8[524288]{0}', space=vmem, size = 0x80000, scoped, tag = 'input window, operand 8, single buffered']
    #allocation11 [shape = 's32[1]{0}', space=sflag, size = 0x4, scoped, tag = 'scoped memory for sentiment_classifier_forward.5']
    #allocation12 [shape = 'u8[524288]{0}', space=vmem, size = 0x80000, scoped, tag = 'input window, operand 10, single buffered']
    #allocation13 [shape = 'u8[1024]{0}', space=vmem, size = 0x400, scoped, tag = 'input window, operand 11, single buffered']
    #allocation14 [shape = 's32[1]{0}', space=sflag, size = 0x4, scoped, tag = 'scoped memory for sentiment_classifier_forward.5']
    #allocation15 [shape = 'u8[1024]{0}', space=vmem, size = 0x400, scoped, tag = 'input window, operand 12, single buffered']
    #allocation16 [shape = 'u8[1024]{0}', space=vmem, size = 0x400, scoped, tag = 'input window, operand 13, single buffered']
    #allocation17 [shape = 's32[1]{0}', space=sflag, size = 0x4, scoped, tag = 'scoped memory for sentiment_classifier_forward.5']
    %19 = vsyncpa [#allocation3], 0
    %20 = vsyncpa [#allocation5], 0
    %21 = vsyncpa [#allocation8], 0
    %22 = vsyncpa [#allocation11], 0
    %23 = vsyncpa [#allocation14], 0
    %24 = vsyncpa [#allocation17], 0
    loop: start=0, step=1, limit=4
    $region2: #{sentiment_classifier_forward.5} parent=1 // loop_pre_header
      _
    $region3: #{sentiment_classifier_forward.5} parent=1 // loop_header
      %s26 = sphi 0, %s30
      %p27 = scmp.ge.s32.totalorder %s26, 4
      %s36 = sphi 0, %s38
      %s39 = sphi 0, %s36
      %s40 = sphi 0, %s39
      %s56 = sphi 0, %s40
      %s62 = sphi 0, %s64
      %s65 = sphi 0, %s62
      %s66 = sphi 0, %s65
      %s82 = sphi 0, %s66
      %s86 = sphi 0, %s86
      %s88 = sphi 0, %s86
      %s89 = sphi 0, %s88
      %s103 = sphi 0, %s89
      %s107 = sphi 0, %s107
      %s109 = sphi 0, %s107
      %s110 = sphi 0, %s109
      %s124 = sphi 0, %s110
      %s128 = sphi 0, %s128
      %s130 = sphi 0, %s128
      %s131 = sphi 0, %s130
      %s145 = sphi 0, %s131
      %s149 = sphi 0, %s149
      %s151 = sphi 0, %s149
      %s152 = sphi 0, %s151
      %s166 = sphi 0, %s152
      %s170 = sphi 0, %s170
      %s172 = sphi 0, %s170
      %s173 = sphi 0, %s172
      %s187 = sphi 0, %s173
      %s191 = sphi 0, %s191
      %s193 = sphi 0, %s191
      %s194 = sphi 0, %s193
      %s208 = sphi 0, %s194
      %s212 = sphi 0, %s212
      %s214 = sphi 0, %s212
      %s215 = sphi 0, %s214
      %s229 = sphi 0, %s215
      %s233 = sphi 0, %s233
      %s235 = sphi 0, %s233
      %s236 = sphi 0, %s235
      %s250 = sphi 0, %s236
      %s254 = sphi 0, %s254
      %s256 = sphi 0, %s254
      %s257 = sphi 0, %s256
      %s271 = sphi 0, %s257
      %s275 = sphi 0, %s275
      %s277 = sphi 0, %s275
      %s278 = sphi 0, %s277
      %s292 = sphi 0, %s278
      %s296 = sphi 0, %s296
      %s298 = sphi 0, %s296
      %s299 = sphi 0, %s298
      %s313 = sphi 0, %s299
      %s317 = sphi 0, %s317
      %s319 = sphi 0, %s317
      %s320 = sphi 0, %s319
      %s334 = sphi 0, %s320
      %s340 = sphi 0, %s342
      %s343 = sphi 0, %s340
      %s344 = sphi 0, %s343
      %s360 = sphi 0, %s344
    $region4: #{sentiment_classifier_forward.5} parent=1 // loop_header_branch
      %29 = sbr.rel (%p27) target = $region8
    $region5: #{sentiment_classifier_forward.5} parent=1 // loop_body
      %s31 = ssub.s32 %s26, 1
      %s32 = ssub.s32 %s26, 2
      %s33 = sadd.s32 %s26, 1
      %s34 = ssub.s32 %s26, %s33
      %p35 = scmp.eq.s32.totalorder %s34, 0
      %s37 = sadd.s32 %s36, 1
      %s38 = scalar_select %p35, %s36, %s37
      %p41 = pneg %p35
      %p42 = scmp.eq.s32.totalorder %s26, 1
      %p43 = por %p41, %p42
      %p44 = scmp.ne.s32.totalorder %s36, %s39
      %p45 = scmp.eq.s32.totalorder %s26, 0
      %p46 = por %p44, %p45
      %p47 = scmp.ne.s32.totalorder %s36, %s39
      %p48 = scmp.eq.s32.totalorder %s31, 1
      %p49 = por %p47, %p48
      %p50 = scmp.ne.s32.totalorder %s39, %s40
      %p51 = scmp.eq.s32.totalorder %s31, 0
      %p52 = por %p50, %p51
      %p53 = scmp.ne.s32.totalorder %s39, %s40
      %p54 = scmp.eq.s32.totalorder %s32, 1
      %p55 = por %p53, %p54
      %p57 = scmp.ne.s32.totalorder %s40, %s56
      %p58 = scmp.eq.s32.totalorder %s32, 0
      %p59 = por %p57, %p58
      %s60 = ssub.s32 %s26, %s33
      %p61 = scmp.eq.s32.totalorder %s60, 0
      %s63 = sadd.s32 %s62, 1
      %s64 = scalar_select %p61, %s62, %s63
      %p67 = pneg %p61
      %p68 = scmp.eq.s32.totalorder %s26, 1
      %p69 = por %p67, %p68
      %p70 = scmp.ne.s32.totalorder %s62, %s65
      %p71 = scmp.eq.s32.totalorder %s26, 0
      %p72 = por %p70, %p71
      %p73 = scmp.ne.s32.totalorder %s62, %s65
      %p74 = scmp.eq.s32.totalorder %s31, 1
      %p75 = por %p73, %p74
      %p76 = scmp.ne.s32.totalorder %s65, %s66
      %p77 = scmp.eq.s32.totalorder %s31, 0
      %p78 = por %p76, %p77
      %p79 = scmp.ne.s32.totalorder %s65, %s66
      %p80 = scmp.eq.s32.totalorder %s32, 1
      %p81 = por %p79, %p80
      %p83 = scmp.ne.s32.totalorder %s66, %s82
      %p84 = scmp.eq.s32.totalorder %s32, 0
      %p85 = por %p83, %p84
      %s87 = sadd.s32 %s86, 1
      %p90 = scmp.eq.s32.totalorder %s26, 1
      %p91 = scmp.ne.s32.totalorder %s86, %s88
      %p92 = scmp.eq.s32.totalorder %s26, 0
      %p93 = por %p91, %p92
      %p94 = scmp.ne.s32.totalorder %s86, %s88
      %p95 = scmp.eq.s32.totalorder %s31, 1
      %p96 = por %p94, %p95
      %p97 = scmp.ne.s32.totalorder %s88, %s89
      %p98 = scmp.eq.s32.totalorder %s31, 0
      %p99 = por %p97, %p98
      %p100 = scmp.ne.s32.totalorder %s88, %s89
      %p101 = scmp.eq.s32.totalorder %s32, 1
      %p102 = por %p100, %p101
      %p104 = scmp.ne.s32.totalorder %s89, %s103
      %p105 = scmp.eq.s32.totalorder %s32, 0
      %p106 = por %p104, %p105
      %s108 = sadd.s32 %s107, 1
      %p111 = scmp.eq.s32.totalorder %s26, 1
      %p112 = scmp.ne.s32.totalorder %s107, %s109
      %p113 = scmp.eq.s32.totalorder %s26, 0
      %p114 = por %p112, %p113
      %p115 = scmp.ne.s32.totalorder %s107, %s109
      %p116 = scmp.eq.s32.totalorder %s31, 1
      %p117 = por %p115, %p116
      %p118 = scmp.ne.s32.totalorder %s109, %s110
      %p119 = scmp.eq.s32.totalorder %s31, 0
      %p120 = por %p118, %p119
      %p121 = scmp.ne.s32.totalorder %s109, %s110
      %p122 = scmp.eq.s32.totalorder %s32, 1
      %p123 = por %p121, %p122
      %p125 = scmp.ne.s32.totalorder %s110, %s124
      %p126 = scmp.eq.s32.totalorder %s32, 0
      %p127 = por %p125, %p126
      %s129 = sadd.s32 %s128, 1
      %p132 = scmp.eq.s32.totalorder %s26, 1
      %p133 = scmp.ne.s32.totalorder %s128, %s130
      %p134 = scmp.eq.s32.totalorder %s26, 0
      %p135 = por %p133, %p134
      %p136 = scmp.ne.s32.totalorder %s128, %s130
      %p137 = scmp.eq.s32.totalorder %s31, 1
      %p138 = por %p136, %p137
      %p139 = scmp.ne.s32.totalorder %s130, %s131
      %p140 = scmp.eq.s32.totalorder %s31, 0
      %p141 = por %p139, %p140
      %p142 = scmp.ne.s32.totalorder %s130, %s131
      %p143 = scmp.eq.s32.totalorder %s32, 1
      %p144 = por %p142, %p143
      %p146 = scmp.ne.s32.totalorder %s131, %s145
      %p147 = scmp.eq.s32.totalorder %s32, 0
      %p148 = por %p146, %p147
      %s150 = sadd.s32 %s149, 1
      %p153 = scmp.eq.s32.totalorder %s26, 1
      %p154 = scmp.ne.s32.totalorder %s149, %s151
      %p155 = scmp.eq.s32.totalorder %s26, 0
      %p156 = por %p154, %p155
      %p157 = scmp.ne.s32.totalorder %s149, %s151
      %p158 = scmp.eq.s32.totalorder %s31, 1
      %p159 = por %p157, %p158
      %p160 = scmp.ne.s32.totalorder %s151, %s152
      %p161 = scmp.eq.s32.totalorder %s31, 0
      %p162 = por %p160, %p161
      %p163 = scmp.ne.s32.totalorder %s151, %s152
      %p164 = scmp.eq.s32.totalorder %s32, 1
      %p165 = por %p163, %p164
      %p167 = scmp.ne.s32.totalorder %s152, %s166
      %p168 = scmp.eq.s32.totalorder %s32, 0
      %p169 = por %p167, %p168
      %s171 = sadd.s32 %s170, 1
      %p174 = scmp.eq.s32.totalorder %s26, 1
      %p175 = scmp.ne.s32.totalorder %s170, %s172
      %p176 = scmp.eq.s32.totalorder %s26, 0
      %p177 = por %p175, %p176
      %p178 = scmp.ne.s32.totalorder %s170, %s172
      %p179 = scmp.eq.s32.totalorder %s31, 1
      %p180 = por %p178, %p179
      %p181 = scmp.ne.s32.totalorder %s172, %s173
      %p182 = scmp.eq.s32.totalorder %s31, 0
      %p183 = por %p181, %p182
      %p184 = scmp.ne.s32.totalorder %s172, %s173
      %p185 = scmp.eq.s32.totalorder %s32, 1
      %p186 = por %p184, %p185
      %p188 = scmp.ne.s32.totalorder %s173, %s187
      %p189 = scmp.eq.s32.totalorder %s32, 0
      %p190 = por %p188, %p189
      %s192 = sadd.s32 %s191, 1
      %p195 = scmp.eq.s32.totalorder %s26, 1
      %p196 = scmp.ne.s32.totalorder %s191, %s193
      %p197 = scmp.eq.s32.totalorder %s26, 0
      %p198 = por %p196, %p197
      %p199 = scmp.ne.s32.totalorder %s191, %s193
      %p200 = scmp.eq.s32.totalorder %s31, 1
      %p201 = por %p199, %p200
      %p202 = scmp.ne.s32.totalorder %s193, %s194
      %p203 = scmp.eq.s32.totalorder %s31, 0
      %p204 = por %p202, %p203
      %p205 = scmp.ne.s32.totalorder %s193, %s194
      %p206 = scmp.eq.s32.totalorder %s32, 1
      %p207 = por %p205, %p206
      %p209 = scmp.ne.s32.totalorder %s194, %s208
      %p210 = scmp.eq.s32.totalorder %s32, 0
      %p211 = por %p209, %p210
      %s213 = sadd.s32 %s212, 1
      %p216 = scmp.eq.s32.totalorder %s26, 1
      %p217 = scmp.ne.s32.totalorder %s212, %s214
      %p218 = scmp.eq.s32.totalorder %s26, 0
      %p219 = por %p217, %p218
      %p220 = scmp.ne.s32.totalorder %s212, %s214
      %p221 = scmp.eq.s32.totalorder %s31, 1
      %p222 = por %p220, %p221
      %p223 = scmp.ne.s32.totalorder %s214, %s215
      %p224 = scmp.eq.s32.totalorder %s31, 0
      %p225 = por %p223, %p224
      %p226 = scmp.ne.s32.totalorder %s214, %s215
      %p227 = scmp.eq.s32.totalorder %s32, 1
      %p228 = por %p226, %p227
      %p230 = scmp.ne.s32.totalorder %s215, %s229
      %p231 = scmp.eq.s32.totalorder %s32, 0
      %p232 = por %p230, %p231
      %s234 = sadd.s32 %s233, 1
      %p237 = scmp.eq.s32.totalorder %s26, 1
      %p238 = scmp.ne.s32.totalorder %s233, %s235
      %p239 = scmp.eq.s32.totalorder %s26, 0
      %p240 = por %p238, %p239
      %p241 = scmp.ne.s32.totalorder %s233, %s235
      %p242 = scmp.eq.s32.totalorder %s31, 1
      %p243 = por %p241, %p242
      %p244 = scmp.ne.s32.totalorder %s235, %s236
      %p245 = scmp.eq.s32.totalorder %s31, 0
      %p246 = por %p244, %p245
      %p247 = scmp.ne.s32.totalorder %s235, %s236
      %p248 = scmp.eq.s32.totalorder %s32, 1
      %p249 = por %p247, %p248
      %p251 = scmp.ne.s32.totalorder %s236, %s250
      %p252 = scmp.eq.s32.totalorder %s32, 0
      %p253 = por %p251, %p252
      %s255 = sadd.s32 %s254, 1
      %p258 = scmp.eq.s32.totalorder %s26, 1
      %p259 = scmp.ne.s32.totalorder %s254, %s256
      %p260 = scmp.eq.s32.totalorder %s26, 0
      %p261 = por %p259, %p260
      %p262 = scmp.ne.s32.totalorder %s254, %s256
      %p263 = scmp.eq.s32.totalorder %s31, 1
      %p264 = por %p262, %p263
      %p265 = scmp.ne.s32.totalorder %s256, %s257
      %p266 = scmp.eq.s32.totalorder %s31, 0
      %p267 = por %p265, %p266
      %p268 = scmp.ne.s32.totalorder %s256, %s257
      %p269 = scmp.eq.s32.totalorder %s32, 1
      %p270 = por %p268, %p269
      %p272 = scmp.ne.s32.totalorder %s257, %s271
      %p273 = scmp.eq.s32.totalorder %s32, 0
      %p274 = por %p272, %p273
      %s276 = sadd.s32 %s275, 1
      %p279 = scmp.eq.s32.totalorder %s26, 1
      %p280 = scmp.ne.s32.totalorder %s275, %s277
      %p281 = scmp.eq.s32.totalorder %s26, 0
      %p282 = por %p280, %p281
      %p283 = scmp.ne.s32.totalorder %s275, %s277
      %p284 = scmp.eq.s32.totalorder %s31, 1
      %p285 = por %p283, %p284
      %p286 = scmp.ne.s32.totalorder %s277, %s278
      %p287 = scmp.eq.s32.totalorder %s31, 0
      %p288 = por %p286, %p287
      %p289 = scmp.ne.s32.totalorder %s277, %s278
      %p290 = scmp.eq.s32.totalorder %s32, 1
      %p291 = por %p289, %p290
      %p293 = scmp.ne.s32.totalorder %s278, %s292
      %p294 = scmp.eq.s32.totalorder %s32, 0
      %p295 = por %p293, %p294
      %s297 = sadd.s32 %s296, 1
      %p300 = scmp.eq.s32.totalorder %s26, 1
      %p301 = scmp.ne.s32.totalorder %s296, %s298
      %p302 = scmp.eq.s32.totalorder %s26, 0
      %p303 = por %p301, %p302
      %p304 = scmp.ne.s32.totalorder %s296, %s298
      %p305 = scmp.eq.s32.totalorder %s31, 1
      %p306 = por %p304, %p305
      %p307 = scmp.ne.s32.totalorder %s298, %s299
      %p308 = scmp.eq.s32.totalorder %s31, 0
      %p309 = por %p307, %p308
      %p310 = scmp.ne.s32.totalorder %s298, %s299
      %p311 = scmp.eq.s32.totalorder %s32, 1
      %p312 = por %p310, %p311
      %p314 = scmp.ne.s32.totalorder %s299, %s313
      %p315 = scmp.eq.s32.totalorder %s32, 0
      %p316 = por %p314, %p315
      %s318 = sadd.s32 %s317, 1
      %p321 = scmp.eq.s32.totalorder %s26, 1
      %p322 = scmp.ne.s32.totalorder %s317, %s319
      %p323 = scmp.eq.s32.totalorder %s26, 0
      %p324 = por %p322, %p323
      %p325 = scmp.ne.s32.totalorder %s317, %s319
      %p326 = scmp.eq.s32.totalorder %s31, 1
      %p327 = por %p325, %p326
      %p328 = scmp.ne.s32.totalorder %s319, %s320
      %p329 = scmp.eq.s32.totalorder %s31, 0
      %p330 = por %p328, %p329
      %p331 = scmp.ne.s32.totalorder %s319, %s320
      %p332 = scmp.eq.s32.totalorder %s32, 1
      %p333 = por %p331, %p332
      %p335 = scmp.ne.s32.totalorder %s320, %s334
      %p336 = scmp.eq.s32.totalorder %s32, 0
      %p337 = por %p335, %p336
      %s338 = ssub.s32 %s26, %s33
      %p339 = scmp.eq.s32.totalorder %s338, 0
      %s341 = sadd.s32 %s340, 1
      %s342 = scalar_select %p339, %s340, %s341
      %p345 = pneg %p339
      %p346 = scmp.eq.s32.totalorder %s26, 1
      %p347 = por %p345, %p346
      %p348 = scmp.ne.s32.totalorder %s340, %s343
      %p349 = scmp.eq.s32.totalorder %s26, 0
      %p350 = por %p348, %p349
      %p351 = scmp.ne.s32.totalorder %s340, %s343
      %p352 = scmp.eq.s32.totalorder %s31, 1
      %p353 = por %p351, %p352
      %p354 = scmp.ne.s32.totalorder %s343, %s344
      %p355 = scmp.eq.s32.totalorder %s31, 0
      %p356 = por %p354, %p355
      %p357 = scmp.ne.s32.totalorder %s343, %s344
      %p358 = scmp.eq.s32.totalorder %s32, 1
      %p359 = por %p357, %p358
      %p361 = scmp.ne.s32.totalorder %s344, %s360
      %p362 = scmp.eq.s32.totalorder %s32, 0
      %p363 = por %p361, %p362
      %p364 = scmp.le.s32.totalorder 1, %s26
      %p365 = scmp.lt.s32.totalorder %s26, 3
      %p366 = pnand %p364, %p365
      %p367 = pneg %p366
      // Predicated region
      $region9: #{sentiment_classifier_forward.5} parent=5 // pred_check
        _
      $region10: #{sentiment_classifier_forward.5} parent=5 // pred_check_branch
        %369 = sbr.rel (%p366) target = $region12
      $region11: #{sentiment_classifier_forward.5} parent=5 // pred_region
        %s370 = ssub.s32 %s26, 1
        // Predicated region
        $region13: #{sentiment_classifier_forward.5} parent=11 // pred_check
          %p371 = pneg %p99
        $region14: #{sentiment_classifier_forward.5} parent=11 // pred_check_branch
          %373 = sbr.rel (%p371) target = $region16
        $region15: #{sentiment_classifier_forward.5} parent=11 // pred_region
          %s375 = ssub.s32 24576, 24576
          %376 = vsyncadd [#allocation3], %s375
          %s377 = sshll.u32 [#allocation2], 4
          %s378 = int_to_ptr.vmem [resolvable:$true] %s377
          %383 = dma.hbm_to_vmem [thread:$0]  %s2, 24576, %s378, [#allocation3], 768, 768, 48
        $region16: #{sentiment_classifier_forward.5} parent=11 // pred_fallthru
          _
        // Predicated region
        $region17: #{sentiment_classifier_forward.5} parent=11 // pred_check
          %p384 = pneg %p120
        $region18: #{sentiment_classifier_forward.5} parent=11 // pred_check_branch
          %386 = sbr.rel (%p384) target = $region20
        $region19: #{sentiment_classifier_forward.5} parent=11 // pred_region
          %s388 = ssub.s32 96, 96
          %389 = vsyncadd [#allocation5], %s388
          %s391 = sshll.u32 [#allocation4], 4
          %s392 = int_to_ptr.vmem [resolvable:$true] %s391
          %394 = dma.hbm_to_vmem [thread:$0]  %s3, 96, %s392, [#allocation5]
        $region20: #{sentiment_classifier_forward.5} parent=11 // pred_fallthru
          _
        // Predicated region
        $region21: #{sentiment_classifier_forward.5} parent=11 // pred_check
          %p395 = pneg %p141
        $region22: #{sentiment_classifier_forward.5} parent=11 // pred_check_branch
          %397 = sbr.rel (%p395) target = $region24
        $region23: #{sentiment_classifier_forward.5} parent=11 // pred_region
          _
        $region24: #{sentiment_classifier_forward.5} parent=11 // pred_fallthru
          _
        // Predicated region
        $region25: #{sentiment_classifier_forward.5} parent=11 // pred_check
          %p398 = pneg %p162
        $region26: #{sentiment_classifier_forward.5} parent=11 // pred_check_branch
          %400 = sbr.rel (%p398) target = $region28
        $region27: #{sentiment_classifier_forward.5} parent=11 // pred_region
          %s402 = ssub.s32 32, 32
          %403 = vsyncadd [#allocation5], %s402
          %s405 = sshll.u32 [#allocation6], 4
          %s406 = int_to_ptr.vmem [resolvable:$true] %s405
          %408 = dma.hbm_to_vmem [thread:$0]  %s5, 32, %s406, [#allocation5]
        $region28: #{sentiment_classifier_forward.5} parent=11 // pred_fallthru
          _
        // Predicated region
        $region29: #{sentiment_classifier_forward.5} parent=11 // pred_check
          %p409 = pneg %p183
        $region30: #{sentiment_classifier_forward.5} parent=11 // pred_check_branch
          %411 = sbr.rel (%p409) target = $region32
        $region31: #{sentiment_classifier_forward.5} parent=11 // pred_region
          %s413 = ssub.s32 32, 32
          %414 = vsyncadd [#allocation8], %s413
          %s416 = sshll.u32 [#allocation7], 4
          %s417 = int_to_ptr.vmem [resolvable:$true] %s416
          %419 = dma.hbm_to_vmem [thread:$0]  %s6, 32, %s417, [#allocation8]
        $region32: #{sentiment_classifier_forward.5} parent=11 // pred_fallthru
          _
        // Predicated region
        $region33: #{sentiment_classifier_forward.5} parent=11 // pred_check
          %p420 = pneg %p204
        $region34: #{sentiment_classifier_forward.5} parent=11 // pred_check_branch
          %422 = sbr.rel (%p420) target = $region36
        $region35: #{sentiment_classifier_forward.5} parent=11 // pred_region
          %s424 = ssub.s32 32, 32
          %425 = vsyncadd [#allocation8], %s424
          %s427 = sshll.u32 [#allocation9], 4
          %s428 = int_to_ptr.vmem [resolvable:$true] %s427
          %430 = dma.hbm_to_vmem [thread:$0]  %s7, 32, %s428, [#allocation8]
        $region36: #{sentiment_classifier_forward.5} parent=11 // pred_fallthru
          _
        // Predicated region
        $region37: #{sentiment_classifier_forward.5} parent=11 // pred_check
          %p431 = pneg %p225
        $region38: #{sentiment_classifier_forward.5} parent=11 // pred_check_branch
          %433 = sbr.rel (%p431) target = $region40
        $region39: #{sentiment_classifier_forward.5} parent=11 // pred_region
          %s435 = ssub.s32 16384, 16384
          %436 = vsyncadd [#allocation11], %s435
          %s437 = sshll.u32 [#allocation10], 4
          %s438 = int_to_ptr.vmem [resolvable:$true] %s437
          %443 = dma.hbm_to_vmem [thread:$0]  %s8, 16384, %s438, [#allocation11], 512, 512, 32
        $region40: #{sentiment_classifier_forward.5} parent=11 // pred_fallthru
          _
        // Predicated region
        $region41: #{sentiment_classifier_forward.5} parent=11 // pred_check
          %p444 = pneg %p246
        $region42: #{sentiment_classifier_forward.5} parent=11 // pred_check_branch
          %446 = sbr.rel (%p444) target = $region44
        $region43: #{sentiment_classifier_forward.5} parent=11 // pred_region
          _
        $region44: #{sentiment_classifier_forward.5} parent=11 // pred_fallthru
          _
        // Predicated region
        $region45: #{sentiment_classifier_forward.5} parent=11 // pred_check
          %p447 = pneg %p267
        $region46: #{sentiment_classifier_forward.5} parent=11 // pred_check_branch
          %449 = sbr.rel (%p447) target = $region48
        $region47: #{sentiment_classifier_forward.5} parent=11 // pred_region
          %s451 = ssub.s32 16384, 16384
          %452 = vsyncadd [#allocation11], %s451
          %s453 = sshll.u32 [#allocation12], 4
          %s454 = int_to_ptr.vmem [resolvable:$true] %s453
          %459 = dma.hbm_to_vmem [thread:$0]  %s10, 16384, %s454, [#allocation11], 256, 256, 16
        $region48: #{sentiment_classifier_forward.5} parent=11 // pred_fallthru
          _
        // Predicated region
        $region49: #{sentiment_classifier_forward.5} parent=11 // pred_check
          %p460 = pneg %p288
        $region50: #{sentiment_classifier_forward.5} parent=11 // pred_check_branch
          %462 = sbr.rel (%p460) target = $region52
        $region51: #{sentiment_classifier_forward.5} parent=11 // pred_region
          %s464 = ssub.s32 32, 32
          %465 = vsyncadd [#allocation14], %s464
          %s467 = sshll.u32 [#allocation13], 4
          %s468 = int_to_ptr.vmem [resolvable:$true] %s467
          %470 = dma.hbm_to_vmem [thread:$0]  %s11, 32, %s468, [#allocation14]
        $region52: #{sentiment_classifier_forward.5} parent=11 // pred_fallthru
          _
        // Predicated region
        $region53: #{sentiment_classifier_forward.5} parent=11 // pred_check
          %p471 = pneg %p309
        $region54: #{sentiment_classifier_forward.5} parent=11 // pred_check_branch
          %473 = sbr.rel (%p471) target = $region56
        $region55: #{sentiment_classifier_forward.5} parent=11 // pred_region
          %s475 = ssub.s32 32, 32
          %476 = vsyncadd [#allocation14], %s475
          %s478 = sshll.u32 [#allocation15], 4
          %s479 = int_to_ptr.vmem [resolvable:$true] %s478
          %481 = dma.hbm_to_vmem [thread:$0]  %s12, 32, %s479, [#allocation14]
        $region56: #{sentiment_classifier_forward.5} parent=11 // pred_fallthru
          _
        // Predicated region
        $region57: #{sentiment_classifier_forward.5} parent=11 // pred_check
          %p482 = pneg %p330
        $region58: #{sentiment_classifier_forward.5} parent=11 // pred_check_branch
          %484 = sbr.rel (%p482) target = $region60
        $region59: #{sentiment_classifier_forward.5} parent=11 // pred_region
          %s486 = ssub.s32 32, 32
          %487 = vsyncadd [#allocation17], %s486
          %s489 = sshll.u32 [#allocation16], 4
          %s490 = int_to_ptr.vmem [resolvable:$true] %s489
          %492 = dma.hbm_to_vmem [thread:$0]  %s13, 32, %s490, [#allocation17]
        $region60: #{sentiment_classifier_forward.5} parent=11 // pred_fallthru
          _
      $region12: #{sentiment_classifier_forward.5} parent=5 // pred_fallthru
        _
      %p493 = scmp.lt.s32.totalorder %s26, 2
      // Predicated region
      $region61: #{sentiment_classifier_forward.5} parent=5 // pred_check
        %p494 = pneg %p493
      $region62: #{sentiment_classifier_forward.5} parent=5 // pred_check_branch
        %496 = sbr.rel (%p494) target = $region64
      $region63: #{sentiment_classifier_forward.5} parent=5 // pred_region
        // Predicated region
        $region65: #{sentiment_classifier_forward.5} parent=63 // pred_check
          %p497 = pneg %p46
        $region66: #{sentiment_classifier_forward.5} parent=63 // pred_check_branch
          %499 = sbr.rel (%p497) target = $region68
        $region67: #{sentiment_classifier_forward.5} parent=63 // pred_region
          %p500 = scmp.lt.s32.totalorder %s26, 1
          %s501 = scalar_select %p500, %s26, 1
          %s502 = smul.addr %s501, 2
          %s503 = smul.addr %s502, 8
          %s504 = scalar_lea.vmem %s0, %s503
        $region68: #{sentiment_classifier_forward.5} parent=63 // pred_fallthru
          _
        // Predicated region
        $region69: #{sentiment_classifier_forward.5} parent=63 // pred_check
          %p505 = pneg %p72
        $region70: #{sentiment_classifier_forward.5} parent=63 // pred_check_branch
          %507 = sbr.rel (%p505) target = $region72
        $region71: #{sentiment_classifier_forward.5} parent=63 // pred_region
          %p508 = scmp.lt.s32.totalorder %s26, 1
          %s509 = scalar_select %p508, %s26, 1
          %s510 = scalar_lea.vmem %s1, %s509
        $region72: #{sentiment_classifier_forward.5} parent=63 // pred_fallthru
          _
      $region64: #{sentiment_classifier_forward.5} parent=5 // pred_fallthru
        _
      %p511 = scmp.le.s32.totalorder 1, %s26
      %p512 = scmp.lt.s32.totalorder %s26, 3
      %p513 = pnand %p511, %p512
      %p514 = pneg %p513
      // Predicated region
      $region73: #{sentiment_classifier_forward.5} parent=5 // pred_check
        _
      $region74: #{sentiment_classifier_forward.5} parent=5 // pred_check_branch
        %516 = sbr.rel (%p513) target = $region76
      $region75: #{sentiment_classifier_forward.5} parent=5 // pred_region
        %s517 = ssub.s32 %s26, 1
        // Predicated region
        $region77: #{sentiment_classifier_forward.5} parent=75 // pred_check
          %p518 = pneg %p99
        $region78: #{sentiment_classifier_forward.5} parent=75 // pred_check_branch
          %520 = sbr.rel (%p518) target = $region80
        $region79: #{sentiment_classifier_forward.5} parent=75 // pred_region
          %521 = dma.done [#allocation3], 24576
        $region80: #{sentiment_classifier_forward.5} parent=75 // pred_fallthru
          _
        // Predicated region
        $region81: #{sentiment_classifier_forward.5} parent=75 // pred_check
          %p522 = pneg %p120
        $region82: #{sentiment_classifier_forward.5} parent=75 // pred_check_branch
          %524 = sbr.rel (%p522) target = $region84
        $region83: #{sentiment_classifier_forward.5} parent=75 // pred_region
          %525 = dma.done [#allocation5], 96
        $region84: #{sentiment_classifier_forward.5} parent=75 // pred_fallthru
          _
        // Predicated region
        $region85: #{sentiment_classifier_forward.5} parent=75 // pred_check
          %p526 = pneg %p162
        $region86: #{sentiment_classifier_forward.5} parent=75 // pred_check_branch
          %528 = sbr.rel (%p526) target = $region88
        $region87: #{sentiment_classifier_forward.5} parent=75 // pred_region
          %529 = dma.done [#allocation5], 32
        $region88: #{sentiment_classifier_forward.5} parent=75 // pred_fallthru
          _
        // Predicated region
        $region89: #{sentiment_classifier_forward.5} parent=75 // pred_check
          %p530 = pneg %p183
        $region90: #{sentiment_classifier_forward.5} parent=75 // pred_check_branch
          %532 = sbr.rel (%p530) target = $region92
        $region91: #{sentiment_classifier_forward.5} parent=75 // pred_region
          %533 = dma.done [#allocation8], 32
        $region92: #{sentiment_classifier_forward.5} parent=75 // pred_fallthru
          _
        // Predicated region
        $region93: #{sentiment_classifier_forward.5} parent=75 // pred_check
          %p534 = pneg %p204
        $region94: #{sentiment_classifier_forward.5} parent=75 // pred_check_branch
          %536 = sbr.rel (%p534) target = $region96
        $region95: #{sentiment_classifier_forward.5} parent=75 // pred_region
          %537 = dma.done [#allocation8], 32
        $region96: #{sentiment_classifier_forward.5} parent=75 // pred_fallthru
          _
        // Predicated region
        $region97: #{sentiment_classifier_forward.5} parent=75 // pred_check
          %p538 = pneg %p225
        $region98: #{sentiment_classifier_forward.5} parent=75 // pred_check_branch
          %540 = sbr.rel (%p538) target = $region100
        $region99: #{sentiment_classifier_forward.5} parent=75 // pred_region
          %541 = dma.done [#allocation11], 16384
        $region100: #{sentiment_classifier_forward.5} parent=75 // pred_fallthru
          _
        // Predicated region
        $region101: #{sentiment_classifier_forward.5} parent=75 // pred_check
          %p542 = pneg %p267
        $region102: #{sentiment_classifier_forward.5} parent=75 // pred_check_branch
          %544 = sbr.rel (%p542) target = $region104
        $region103: #{sentiment_classifier_forward.5} parent=75 // pred_region
          %545 = dma.done [#allocation11], 16384
        $region104: #{sentiment_classifier_forward.5} parent=75 // pred_fallthru
          _
        // Predicated region
        $region105: #{sentiment_classifier_forward.5} parent=75 // pred_check
          %p546 = pneg %p288
        $region106: #{sentiment_classifier_forward.5} parent=75 // pred_check_branch
          %548 = sbr.rel (%p546) target = $region108
        $region107: #{sentiment_classifier_forward.5} parent=75 // pred_region
          %549 = dma.done [#allocation14], 32
        $region108: #{sentiment_classifier_forward.5} parent=75 // pred_fallthru
          _
        // Predicated region
        $region109: #{sentiment_classifier_forward.5} parent=75 // pred_check
          %p550 = pneg %p309
        $region110: #{sentiment_classifier_forward.5} parent=75 // pred_check_branch
          %552 = sbr.rel (%p550) target = $region112
        $region111: #{sentiment_classifier_forward.5} parent=75 // pred_region
          %553 = dma.done [#allocation14], 32
        $region112: #{sentiment_classifier_forward.5} parent=75 // pred_fallthru
          _
        // Predicated region
        $region113: #{sentiment_classifier_forward.5} parent=75 // pred_check
          %p554 = pneg %p330
        $region114: #{sentiment_classifier_forward.5} parent=75 // pred_check_branch
          %556 = sbr.rel (%p554) target = $region116
        $region115: #{sentiment_classifier_forward.5} parent=75 // pred_region
          %557 = dma.done [#allocation17], 32
        $region116: #{sentiment_classifier_forward.5} parent=75 // pred_fallthru
          _
        %p558 = scmp.lt.s32.totalorder %s31, 1
        %s559 = scalar_select %p558, %s31, 1
        %s560 = smul.addr %s559, 2
        %s561 = smul.addr %s560, 8
        %s562 = scalar_lea.vmem %s0, %s561
        %p563 = pneg %p52
        %p564 = pneg %p49
        %p565 = scmp.lt.s32.totalorder %s31, 1
        %s566 = scalar_select %p565, %s31, 1
        %s567 = scalar_lea.vmem %s1, %s566
        %p568 = pneg %p78
        %p569 = pneg %p75
        %p570 = pneg %p99
        %p571 = pneg %p96
        %p572 = pneg %p120
        %p573 = pneg %p117
        %p574 = pneg %p141
        %p575 = pneg %p138
        %p576 = pneg %p162
        %p577 = pneg %p159
        %p578 = pneg %p183
        %p579 = pneg %p180
        %p580 = pneg %p204
        %p581 = pneg %p201
        %p582 = pneg %p225
        %p583 = pneg %p222
        %p584 = pneg %p246
        %p585 = pneg %p243
        %p586 = pneg %p267
        %p587 = pneg %p264
        %p588 = pneg %p288
        %p589 = pneg %p285
        %p590 = pneg %p309
        %p591 = pneg %p306
        %p592 = pneg %p330
        %p593 = pneg %p327
        %p594 = pneg %p356
        %p595 = pneg %p353
        %p596 = scmp.lt.s32.totalorder %s31, 1
        %s597 = scalar_select %p596, %s31, 1
        %s598 = smul.addr %s597, 2
        %s599 = smul.addr %s598, 8
        %s600 = scalar_lea.vmem %s14, %s599
        %p601 = scmp.lt.s32.totalorder %s31, 1
        %s602 = scalar_select %p601, %s31, 1
        %s603 = smul.addr %s602, 2
        %s604 = smul.addr %s603, 8
        %s605 = scalar_lea.vmem %s0, %s604
        %p606 = scmp.lt.s32.totalorder %s31, 1
        %s607 = scalar_select %p606, %s31, 1
        %s608 = scalar_lea.vmem %s1, %s607
        %p609 = scmp.lt.s32.totalorder %s31, 1
        %s610 = scalar_select %p609, %s31, 1
        %s611 = smul.addr %s610, 2
        %s612 = smul.addr %s611, 8
        %s613 = scalar_lea.vmem %s14, %s612
        %v614 = vld [vmem:[%s605] sm:$0xff]
        %v615 = vld [vmem:[%s605 + $0x8] sm:$0xff]
        %v616 = vld [vmem:[#allocation2] sm:$0xff]
        %v617 = vld [vmem:[#allocation2 + $0x8] sm:$0xff]
        %v618 = vld [vmem:[#allocation2 + $0x10] sm:$0xff]
        %v619 = vld [vmem:[#allocation2 + $0x18] sm:$0xff]
        %v620 = vld [vmem:[#allocation2 + $0x20] sm:$0xff]
        %v621 = vld [vmem:[#allocation2 + $0x28] sm:$0xff]
        %v622 = vld [vmem:[#allocation2 + $0x30] sm:$0xff]
        %v623 = vld [vmem:[#allocation2 + $0x38] sm:$0xff]
        %v624 = vld [vmem:[#allocation2 + $0x40] sm:$0xff]
        %v625 = vld [vmem:[#allocation2 + $0x48] sm:$0xff]
        %v626 = vld [vmem:[#allocation2 + $0x50] sm:$0xff]
        %v627 = vld [vmem:[#allocation2 + $0x58] sm:$0xff]
        %v628 = vld [vmem:[#allocation2 + $0x60] sm:$0xff]
        %v629 = vld [vmem:[#allocation2 + $0x68] sm:$0xff]
        %v630 = vld [vmem:[#allocation2 + $0x70] sm:$0xff]
        %v631 = vld [vmem:[#allocation2 + $0x78] sm:$0xff]
        %v632 = vld [vmem:[#allocation2 + $0x80] sm:$0xff]
        %v633 = vld [vmem:[#allocation2 + $0x88] sm:$0xff]
        %v634 = vld [vmem:[#allocation2 + $0x90] sm:$0xff]
        %v635 = vld [vmem:[#allocation2 + $0x98] sm:$0xff]
        %v636 = vld [vmem:[#allocation2 + $0xa0] sm:$0xff]
        %v637 = vld [vmem:[#allocation2 + $0xa8] sm:$0xff]
        %v638 = vld [vmem:[#allocation2 + $0xb0] sm:$0xff]
        %v639 = vld [vmem:[#allocation2 + $0xb8] sm:$0xff]
        %v640 = vld [vmem:[#allocation2 + $0xc0] sm:$0xff]
        %v641 = vld [vmem:[#allocation2 + $0xc8] sm:$0xff]
        %v642 = vld [vmem:[#allocation2 + $0xd0] sm:$0xff]
        %v643 = vld [vmem:[#allocation2 + $0xd8] sm:$0xff]
        %v644 = vld [vmem:[#allocation2 + $0xe0] sm:$0xff]
        %v645 = vld [vmem:[#allocation2 + $0xe8] sm:$0xff]
        %v646 = vld [vmem:[#allocation2 + $0xf0] sm:$0xff]
        %v647 = vld [vmem:[#allocation2 + $0xf8] sm:$0xff]
        %v648 = vld [vmem:[#allocation2 + $0x100] sm:$0xff]
        %v649 = vld [vmem:[#allocation2 + $0x108] sm:$0xff]
        %v650 = vld [vmem:[#allocation2 + $0x110] sm:$0xff]
        %v651 = vld [vmem:[#allocation2 + $0x118] sm:$0xff]
        %v652 = vld [vmem:[#allocation2 + $0x120] sm:$0xff]
        %v653 = vld [vmem:[#allocation2 + $0x128] sm:$0xff]
        %v654 = vld [vmem:[#allocation2 + $0x130] sm:$0xff]
        %v655 = vld [vmem:[#allocation2 + $0x138] sm:$0xff]
        %v656 = vld [vmem:[#allocation2 + $0x140] sm:$0xff]
        %v657 = vld [vmem:[#allocation2 + $0x148] sm:$0xff]
        %v658 = vld [vmem:[#allocation2 + $0x150] sm:$0xff]
        %v659 = vld [vmem:[#allocation2 + $0x158] sm:$0xff]
        %v660 = vld [vmem:[#allocation2 + $0x160] sm:$0xff]
        %v661 = vld [vmem:[#allocation2 + $0x168] sm:$0xff]
        %v662 = vld [vmem:[#allocation2 + $0x170] sm:$0xff]
        %v663 = vld [vmem:[#allocation2 + $0x178] sm:$0xff]
        %v664 = vld [vmem:[#allocation2 + $0x180] sm:$0xff]
        %v665 = vld [vmem:[#allocation2 + $0x188] sm:$0xff]
        %v666 = vld [vmem:[#allocation2 + $0x190] sm:$0xff]
        %v667 = vld [vmem:[#allocation2 + $0x198] sm:$0xff]
        %v668 = vld [vmem:[#allocation2 + $0x1a0] sm:$0xff]
        %v669 = vld [vmem:[#allocation2 + $0x1a8] sm:$0xff]
        %v670 = vld [vmem:[#allocation2 + $0x1b0] sm:$0xff]
        %v671 = vld [vmem:[#allocation2 + $0x1b8] sm:$0xff]
        %v672 = vld [vmem:[#allocation2 + $0x1c0] sm:$0xff]
        %v673 = vld [vmem:[#allocation2 + $0x1c8] sm:$0xff]
        %v674 = vld [vmem:[#allocation2 + $0x1d0] sm:$0xff]
        %v675 = vld [vmem:[#allocation2 + $0x1d8] sm:$0xff]
        %v676 = vld [vmem:[#allocation2 + $0x1e0] sm:$0xff]
        %v677 = vld [vmem:[#allocation2 + $0x1e8] sm:$0xff]
        %v678 = vld [vmem:[#allocation2 + $0x1f0] sm:$0xff]
        %v679 = vld [vmem:[#allocation2 + $0x1f8] sm:$0xff]
        %v680 = vld [vmem:[#allocation2 + $0x200] sm:$0xff]
        %v681 = vld [vmem:[#allocation2 + $0x208] sm:$0xff]
        %v682 = vld [vmem:[#allocation2 + $0x210] sm:$0xff]
        %v683 = vld [vmem:[#allocation2 + $0x218] sm:$0xff]
        %v684 = vld [vmem:[#allocation2 + $0x220] sm:$0xff]
        %v685 = vld [vmem:[#allocation2 + $0x228] sm:$0xff]
        %v686 = vld [vmem:[#allocation2 + $0x230] sm:$0xff]
        %v687 = vld [vmem:[#allocation2 + $0x238] sm:$0xff]
        %v688 = vld [vmem:[#allocation2 + $0x240] sm:$0xff]
        %v689 = vld [vmem:[#allocation2 + $0x248] sm:$0xff]
        %v690 = vld [vmem:[#allocation2 + $0x250] sm:$0xff]
        %v691 = vld [vmem:[#allocation2 + $0x258] sm:$0xff]
        %v692 = vld [vmem:[#allocation2 + $0x260] sm:$0xff]
        %v693 = vld [vmem:[#allocation2 + $0x268] sm:$0xff]
        %v694 = vld [vmem:[#allocation2 + $0x270] sm:$0xff]
        %v695 = vld [vmem:[#allocation2 + $0x278] sm:$0xff]
        %v696 = vld [vmem:[#allocation2 + $0x280] sm:$0xff]
        %v697 = vld [vmem:[#allocation2 + $0x288] sm:$0xff]
        %v698 = vld [vmem:[#allocation2 + $0x290] sm:$0xff]
        %v699 = vld [vmem:[#allocation2 + $0x298] sm:$0xff]
        %v700 = vld [vmem:[#allocation2 + $0x2a0] sm:$0xff]
        %v701 = vld [vmem:[#allocation2 + $0x2a8] sm:$0xff]
        %v702 = vld [vmem:[#allocation2 + $0x2b0] sm:$0xff]
        %v703 = vld [vmem:[#allocation2 + $0x2b8] sm:$0xff]
        %v704 = vld [vmem:[#allocation2 + $0x2c0] sm:$0xff]
        %v705 = vld [vmem:[#allocation2 + $0x2c8] sm:$0xff]
        %v706 = vld [vmem:[#allocation2 + $0x2d0] sm:$0xff]
        %v707 = vld [vmem:[#allocation2 + $0x2d8] sm:$0xff]
        %v708 = vld [vmem:[#allocation2 + $0x2e0] sm:$0xff]
        %v709 = vld [vmem:[#allocation2 + $0x2e8] sm:$0xff]
        %v710 = vld [vmem:[#allocation2 + $0x2f0] sm:$0xff]
        %v711 = vld [vmem:[#allocation2 + $0x2f8] sm:$0xff]
        %v712 = vld [vmem:[#allocation2 + $0x300] sm:$0xff]
        %v713 = vld [vmem:[#allocation2 + $0x308] sm:$0xff]
        %v714 = vld [vmem:[#allocation2 + $0x310] sm:$0xff]
        %v715 = vld [vmem:[#allocation2 + $0x318] sm:$0xff]
        %v716 = vld [vmem:[#allocation2 + $0x320] sm:$0xff]
        %v717 = vld [vmem:[#allocation2 + $0x328] sm:$0xff]
        %v718 = vld [vmem:[#allocation2 + $0x330] sm:$0xff]
        %v719 = vld [vmem:[#allocation2 + $0x338] sm:$0xff]
        %v720 = vld [vmem:[#allocation2 + $0x340] sm:$0xff]
        %v721 = vld [vmem:[#allocation2 + $0x348] sm:$0xff]
        %v722 = vld [vmem:[#allocation2 + $0x350] sm:$0xff]
        %v723 = vld [vmem:[#allocation2 + $0x358] sm:$0xff]
        %v724 = vld [vmem:[#allocation2 + $0x360] sm:$0xff]
        %v725 = vld [vmem:[#allocation2 + $0x368] sm:$0xff]
        %v726 = vld [vmem:[#allocation2 + $0x370] sm:$0xff]
        %v727 = vld [vmem:[#allocation2 + $0x378] sm:$0xff]
        %v728 = vld [vmem:[#allocation2 + $0x380] sm:$0xff]
        %v729 = vld [vmem:[#allocation2 + $0x388] sm:$0xff]
        %v730 = vld [vmem:[#allocation2 + $0x390] sm:$0xff]
        %v731 = vld [vmem:[#allocation2 + $0x398] sm:$0xff]
        %v732 = vld [vmem:[#allocation2 + $0x3a0] sm:$0xff]
        %v733 = vld [vmem:[#allocation2 + $0x3a8] sm:$0xff]
        %v734 = vld [vmem:[#allocation2 + $0x3b0] sm:$0xff]
        %v735 = vld [vmem:[#allocation2 + $0x3b8] sm:$0xff]
        %v736 = vld [vmem:[#allocation2 + $0x3c0] sm:$0xff]
        %v737 = vld [vmem:[#allocation2 + $0x3c8] sm:$0xff]
        %v738 = vld [vmem:[#allocation2 + $0x3d0] sm:$0xff]
        %v739 = vld [vmem:[#allocation2 + $0x3d8] sm:$0xff]
        %v740 = vld [vmem:[#allocation2 + $0x3e0] sm:$0xff]
        %v741 = vld [vmem:[#allocation2 + $0x3e8] sm:$0xff]
        %v742 = vld [vmem:[#allocation2 + $0x3f0] sm:$0xff]
        %v743 = vld [vmem:[#allocation2 + $0x3f8] sm:$0xff]
        %v744 = vld [vmem:[#allocation2 + $0x400] sm:$0xff]
        %v745 = vld [vmem:[#allocation2 + $0x408] sm:$0xff]
        %v746 = vld [vmem:[#allocation2 + $0x410] sm:$0xff]
        %v747 = vld [vmem:[#allocation2 + $0x418] sm:$0xff]
        %v748 = vld [vmem:[#allocation2 + $0x420] sm:$0xff]
        %v749 = vld [vmem:[#allocation2 + $0x428] sm:$0xff]
        %v750 = vld [vmem:[#allocation2 + $0x430] sm:$0xff]
        %v751 = vld [vmem:[#allocation2 + $0x438] sm:$0xff]
        %v752 = vld [vmem:[#allocation2 + $0x440] sm:$0xff]
        %v753 = vld [vmem:[#allocation2 + $0x448] sm:$0xff]
        %v754 = vld [vmem:[#allocation2 + $0x450] sm:$0xff]
        %v755 = vld [vmem:[#allocation2 + $0x458] sm:$0xff]
        %v756 = vld [vmem:[#allocation2 + $0x460] sm:$0xff]
        %v757 = vld [vmem:[#allocation2 + $0x468] sm:$0xff]
        %v758 = vld [vmem:[#allocation2 + $0x470] sm:$0xff]
        %v759 = vld [vmem:[#allocation2 + $0x478] sm:$0xff]
        %v760 = vld [vmem:[#allocation2 + $0x480] sm:$0xff]
        %v761 = vld [vmem:[#allocation2 + $0x488] sm:$0xff]
        %v762 = vld [vmem:[#allocation2 + $0x490] sm:$0xff]
        %v763 = vld [vmem:[#allocation2 + $0x498] sm:$0xff]
        %v764 = vld [vmem:[#allocation2 + $0x4a0] sm:$0xff]
        %v765 = vld [vmem:[#allocation2 + $0x4a8] sm:$0xff]
        %v766 = vld [vmem:[#allocation2 + $0x4b0] sm:$0xff]
        %v767 = vld [vmem:[#allocation2 + $0x4b8] sm:$0xff]
        %v768 = vld [vmem:[#allocation2 + $0x4c0] sm:$0xff]
        %v769 = vld [vmem:[#allocation2 + $0x4c8] sm:$0xff]
        %v770 = vld [vmem:[#allocation2 + $0x4d0] sm:$0xff]
        %v771 = vld [vmem:[#allocation2 + $0x4d8] sm:$0xff]
        %v772 = vld [vmem:[#allocation2 + $0x4e0] sm:$0xff]
        %v773 = vld [vmem:[#allocation2 + $0x4e8] sm:$0xff]
        %v774 = vld [vmem:[#allocation2 + $0x4f0] sm:$0xff]
        %v775 = vld [vmem:[#allocation2 + $0x4f8] sm:$0xff]
        %v776 = vld [vmem:[#allocation2 + $0x500] sm:$0xff]
        %v777 = vld [vmem:[#allocation2 + $0x508] sm:$0xff]
        %v778 = vld [vmem:[#allocation2 + $0x510] sm:$0xff]
        %v779 = vld [vmem:[#allocation2 + $0x518] sm:$0xff]
        %v780 = vld [vmem:[#allocation2 + $0x520] sm:$0xff]
        %v781 = vld [vmem:[#allocation2 + $0x528] sm:$0xff]
        %v782 = vld [vmem:[#allocation2 + $0x530] sm:$0xff]
        %v783 = vld [vmem:[#allocation2 + $0x538] sm:$0xff]
        %v784 = vld [vmem:[#allocation2 + $0x540] sm:$0xff]
        %v785 = vld [vmem:[#allocation2 + $0x548] sm:$0xff]
        %v786 = vld [vmem:[#allocation2 + $0x550] sm:$0xff]
        %v787 = vld [vmem:[#allocation2 + $0x558] sm:$0xff]
        %v788 = vld [vmem:[#allocation2 + $0x560] sm:$0xff]
        %v789 = vld [vmem:[#allocation2 + $0x568] sm:$0xff]
        %v790 = vld [vmem:[#allocation2 + $0x570] sm:$0xff]
        %v791 = vld [vmem:[#allocation2 + $0x578] sm:$0xff]
        %v792 = vld [vmem:[#allocation2 + $0x580] sm:$0xff]
        %v793 = vld [vmem:[#allocation2 + $0x588] sm:$0xff]
        %v794 = vld [vmem:[#allocation2 + $0x590] sm:$0xff]
        %v795 = vld [vmem:[#allocation2 + $0x598] sm:$0xff]
        %v796 = vld [vmem:[#allocation2 + $0x5a0] sm:$0xff]
        %v797 = vld [vmem:[#allocation2 + $0x5a8] sm:$0xff]
        %v798 = vld [vmem:[#allocation2 + $0x5b0] sm:$0xff]
        %v799 = vld [vmem:[#allocation2 + $0x5b8] sm:$0xff]
        %v800 = vld [vmem:[#allocation2 + $0x5c0] sm:$0xff]
        %v801 = vld [vmem:[#allocation2 + $0x5c8] sm:$0xff]
        %v802 = vld [vmem:[#allocation2 + $0x5d0] sm:$0xff]
        %v803 = vld [vmem:[#allocation2 + $0x5d8] sm:$0xff]
        %v804 = vld [vmem:[#allocation2 + $0x5e0] sm:$0xff]
        %v805 = vld [vmem:[#allocation2 + $0x5e8] sm:$0xff]
        %v806 = vld [vmem:[#allocation2 + $0x5f0] sm:$0xff]
        %v807 = vld [vmem:[#allocation2 + $0x5f8] sm:$0xff]
        %v808 = vld [vmem:[#allocation4] sm:$0x3f]
        %v810 = vlaneseq
        %v811 = vshrl.u32 %v810, 7
        %v812 = vsub.s32 0, %v811
        %v813 = vrot.slane %v808, %v812
        %v814 = vlaneseq
        %v815 = vshrl.u32 %v814, 7
        %v816 = vsub.s32 1, %v815
        %v817 = vrot.slane %v808, %v816
        %v818 = vlaneseq
        %v819 = vshrl.u32 %v818, 7
        %v820 = vsub.s32 2, %v819
        %v821 = vrot.slane %v808, %v820
        %v822 = vlaneseq
        %v823 = vshrl.u32 %v822, 7
        %v824 = vsub.s32 3, %v823
        %v825 = vrot.slane %v808, %v824
        %v826 = vlaneseq
        %v827 = vshrl.u32 %v826, 7
        %v828 = vsub.s32 4, %v827
        %v829 = vrot.slane %v808, %v828
        %v830 = vlaneseq
        %v831 = vshrl.u32 %v830, 7
        %v832 = vsub.s32 5, %v831
        %v833 = vrot.slane %v808, %v832
        %840 = vmatprep.subr.mxu0 %v617
        %841 = vmatpush1.msra.mxu0 %v616
        %842 = vmatprep.subr.mxu0 %v623
        %843 = vmatpush1.msra.mxu0 %v622
        %844 = vmatprep.subr.mxu0 %v629
        %845 = vmatpush1.msra.mxu0 %v628
        %846 = vmatprep.subr.mxu0 %v635
        %847 = vmatpush1.msra.mxu0 %v634
        %848 = vmatprep.subr.mxu0 %v641
        %849 = vmatpush1.msra.mxu0 %v640
        %850 = vmatprep.subr.mxu0 %v647
        %851 = vmatpush1.msra.mxu0 %v646
        %852 = vmatprep.subr.mxu0 %v653
        %853 = vmatpush1.msra.mxu0 %v652
        %854 = vmatprep.subr.mxu0 %v659
        %855 = vmatpush1.msra.mxu0 %v658
        %856 = vmatprep.subr.mxu0 %v665
        %857 = vmatpush1.msra.mxu0 %v664
        %858 = vmatprep.subr.mxu0 %v671
        %859 = vmatpush1.msra.mxu0 %v670
        %860 = vmatprep.subr.mxu0 %v677
        %861 = vmatpush1.msra.mxu0 %v676
        %862 = vmatprep.subr.mxu0 %v683
        %863 = vmatpush1.msra.mxu0 %v682
        %864 = vmatprep.subr.mxu0 %v689
        %865 = vmatpush1.msra.mxu0 %v688
        %866 = vmatprep.subr.mxu0 %v695
        %867 = vmatpush1.msra.mxu0 %v694
        %868 = vmatprep.subr.mxu0 %v701
        %869 = vmatpush1.msra.mxu0 %v700
        %870 = vmatprep.subr.mxu0 %v707
        %871 = vmatpush1.msra.mxu0 %v706
        %872 = vmatprep.subr.mxu0 %v713
        %873 = vmatpush1.msra.mxu0 %v712
        %874 = vmatprep.subr.mxu0 %v719
        %875 = vmatpush1.msra.mxu0 %v718
        %876 = vmatprep.subr.mxu0 %v725
        %877 = vmatpush1.msra.mxu0 %v724
        %878 = vmatprep.subr.mxu0 %v731
        %879 = vmatpush1.msra.mxu0 %v730
        %880 = vmatprep.subr.mxu0 %v737
        %881 = vmatpush1.msra.mxu0 %v736
        %882 = vmatprep.subr.mxu0 %v743
        %883 = vmatpush1.msra.mxu0 %v742
        %884 = vmatprep.subr.mxu0 %v749
        %885 = vmatpush1.msra.mxu0 %v748
        %886 = vmatprep.subr.mxu0 %v755
        %887 = vmatpush1.msra.mxu0 %v754
        %888 = vmatprep.subr.mxu0 %v761
        %889 = vmatpush1.msra.mxu0 %v760
        %890 = vmatprep.subr.mxu0 %v767
        %891 = vmatpush1.msra.mxu0 %v766
        %892 = vmatprep.subr.mxu0 %v773
        %893 = vmatpush1.msra.mxu0 %v772
        %894 = vmatprep.subr.mxu0 %v779
        %895 = vmatpush1.msra.mxu0 %v778
        %896 = vmatprep.subr.mxu0 %v785
        %897 = vmatpush1.msra.mxu0 %v784
        %898 = vmatprep.subr.mxu0 %v791
        %899 = vmatpush1.msra.mxu0 %v790
        %900 = vmatprep.subr.mxu0 %v797
        %901 = vmatpush1.msra.mxu0 %v796
        %902 = vmatprep.subr.mxu0 %v803
        %903 = vmatpush1.msra.mxu0 %v802
        %904 = vmatprep.mubr.f32.mxu0 %v615
        %905 = vmatmul.mubr.f32.gmra.mrb[0].mxu0 %v614
        %v906 = vpop.f32.mrb[0].mxu0
        %v907 = vadd.f32 %v813, %v906
        %v908 = vpop.f32.mrb[0].mxu0
        %v909 = vadd.f32 %v817, %v908
        %910 = vdwg.mxu0
        %911 = vmatprep.subr.mxu0 %v619
        %912 = vmatpush1.msra.mxu0 %v618
        %913 = vmatprep.subr.mxu0 %v625
        %914 = vmatpush1.msra.mxu0 %v624
        %915 = vmatprep.subr.mxu0 %v631
        %916 = vmatpush1.msra.mxu0 %v630
        %917 = vmatprep.subr.mxu0 %v637
        %918 = vmatpush1.msra.mxu0 %v636
        %919 = vmatprep.subr.mxu0 %v643
        %920 = vmatpush1.msra.mxu0 %v642
        %921 = vmatprep.subr.mxu0 %v649
        %922 = vmatpush1.msra.mxu0 %v648
        %923 = vmatprep.subr.mxu0 %v655
        %924 = vmatpush1.msra.mxu0 %v654
        %925 = vmatprep.subr.mxu0 %v661
        %926 = vmatpush1.msra.mxu0 %v660
        %927 = vmatprep.subr.mxu0 %v667
        %928 = vmatpush1.msra.mxu0 %v666
        %929 = vmatprep.subr.mxu0 %v673
        %930 = vmatpush1.msra.mxu0 %v672
        %931 = vmatprep.subr.mxu0 %v679
        %932 = vmatpush1.msra.mxu0 %v678
        %933 = vmatprep.subr.mxu0 %v685
        %934 = vmatpush1.msra.mxu0 %v684
        %935 = vmatprep.subr.mxu0 %v691
        %936 = vmatpush1.msra.mxu0 %v690
        %937 = vmatprep.subr.mxu0 %v697
        %938 = vmatpush1.msra.mxu0 %v696
        %939 = vmatprep.subr.mxu0 %v703
        %940 = vmatpush1.msra.mxu0 %v702
        %941 = vmatprep.subr.mxu0 %v709
        %942 = vmatpush1.msra.mxu0 %v708
        %943 = vmatprep.subr.mxu0 %v715
        %944 = vmatpush1.msra.mxu0 %v714
        %945 = vmatprep.subr.mxu0 %v721
        %946 = vmatpush1.msra.mxu0 %v720
        %947 = vmatprep.subr.mxu0 %v727
        %948 = vmatpush1.msra.mxu0 %v726
        %949 = vmatprep.subr.mxu0 %v733
        %950 = vmatpush1.msra.mxu0 %v732
        %951 = vmatprep.subr.mxu0 %v739
        %952 = vmatpush1.msra.mxu0 %v738
        %953 = vmatprep.subr.mxu0 %v745
        %954 = vmatpush1.msra.mxu0 %v744
        %955 = vmatprep.subr.mxu0 %v751
        %956 = vmatpush1.msra.mxu0 %v750
        %957 = vmatprep.subr.mxu0 %v757
        %958 = vmatpush1.msra.mxu0 %v756
        %959 = vmatprep.subr.mxu0 %v763
        %960 = vmatpush1.msra.mxu0 %v762
        %961 = vmatprep.subr.mxu0 %v769
        %962 = vmatpush1.msra.mxu0 %v768
        %963 = vmatprep.subr.mxu0 %v775
        %964 = vmatpush1.msra.mxu0 %v774
        %965 = vmatprep.subr.mxu0 %v781
        %966 = vmatpush1.msra.mxu0 %v780
        %967 = vmatprep.subr.mxu0 %v787
        %968 = vmatpush1.msra.mxu0 %v786
        %969 = vmatprep.subr.mxu0 %v793
        %970 = vmatpush1.msra.mxu0 %v792
        %971 = vmatprep.subr.mxu0 %v799
        %972 = vmatpush1.msra.mxu0 %v798
        %973 = vmatprep.subr.mxu0 %v805
        %974 = vmatpush1.msra.mxu0 %v804
        %975 = vmatprep.mubr.f32.mxu0 %v615
        %976 = vmatmul.mubr.f32.gmra.mrb[0].mxu0 %v614
        %v977 = vpop.f32.mrb[0].mxu0
        %v978 = vadd.f32 %v821, %v977
        %v979 = vpop.f32.mrb[0].mxu0
        %v980 = vadd.f32 %v825, %v979
        %981 = vdwg.mxu0
        %982 = vmatprep.subr.mxu0 %v621
        %983 = vmatpush1.msra.mxu0 %v620
        %984 = vmatprep.subr.mxu0 %v627
        %985 = vmatpush1.msra.mxu0 %v626
        %986 = vmatprep.subr.mxu0 %v633
        %987 = vmatpush1.msra.mxu0 %v632
        %988 = vmatprep.subr.mxu0 %v639
        %989 = vmatpush1.msra.mxu0 %v638
        %990 = vmatprep.subr.mxu0 %v645
        %991 = vmatpush1.msra.mxu0 %v644
        %992 = vmatprep.subr.mxu0 %v651
        %993 = vmatpush1.msra.mxu0 %v650
        %994 = vmatprep.subr.mxu0 %v657
        %995 = vmatpush1.msra.mxu0 %v656
        %996 = vmatprep.subr.mxu0 %v663
        %997 = vmatpush1.msra.mxu0 %v662
        %998 = vmatprep.subr.mxu0 %v669
        %999 = vmatpush1.msra.mxu0 %v668
        %1000 = vmatprep.subr.mxu0 %v675
        %1001 = vmatpush1.msra.mxu0 %v674
        %1002 = vmatprep.subr.mxu0 %v681
        %1003 = vmatpush1.msra.mxu0 %v680
        %1004 = vmatprep.subr.mxu0 %v687
        %1005 = vmatpush1.msra.mxu0 %v686
        %1006 = vmatprep.subr.mxu0 %v693
        %1007 = vmatpush1.msra.mxu0 %v692
        %1008 = vmatprep.subr.mxu0 %v699
        %1009 = vmatpush1.msra.mxu0 %v698
        %1010 = vmatprep.subr.mxu0 %v705
        %1011 = vmatpush1.msra.mxu0 %v704
        %1012 = vmatprep.subr.mxu0 %v711
        %1013 = vmatpush1.msra.mxu0 %v710
        %1014 = vmatprep.subr.mxu0 %v717
        %1015 = vmatpush1.msra.mxu0 %v716
        %1016 = vmatprep.subr.mxu0 %v723
        %1017 = vmatpush1.msra.mxu0 %v722
        %1018 = vmatprep.subr.mxu0 %v729
        %1019 = vmatpush1.msra.mxu0 %v728
        %1020 = vmatprep.subr.mxu0 %v735
        %1021 = vmatpush1.msra.mxu0 %v734
        %1022 = vmatprep.subr.mxu0 %v741
        %1023 = vmatpush1.msra.mxu0 %v740
        %1024 = vmatprep.subr.mxu0 %v747
        %1025 = vmatpush1.msra.mxu0 %v746
        %1026 = vmatprep.subr.mxu0 %v753
        %1027 = vmatpush1.msra.mxu0 %v752
        %1028 = vmatprep.subr.mxu0 %v759
        %1029 = vmatpush1.msra.mxu0 %v758
        %1030 = vmatprep.subr.mxu0 %v765
        %1031 = vmatpush1.msra.mxu0 %v764
        %1032 = vmatprep.subr.mxu0 %v771
        %1033 = vmatpush1.msra.mxu0 %v770
        %1034 = vmatprep.subr.mxu0 %v777
        %1035 = vmatpush1.msra.mxu0 %v776
        %1036 = vmatprep.subr.mxu0 %v783
        %1037 = vmatpush1.msra.mxu0 %v782
        %1038 = vmatprep.subr.mxu0 %v789
        %1039 = vmatpush1.msra.mxu0 %v788
        %1040 = vmatprep.subr.mxu0 %v795
        %1041 = vmatpush1.msra.mxu0 %v794
        %1042 = vmatprep.subr.mxu0 %v801
        %1043 = vmatpush1.msra.mxu0 %v800
        %1044 = vmatprep.subr.mxu0 %v807
        %1045 = vmatpush1.msra.mxu0 %v806
        %1046 = vmatprep.mubr.f32.mxu0 %v615
        %1047 = vmatmul.mubr.f32.gmra.mrb[0].mxu0 %v614
        %v1048 = vpop.f32.mrb[0].mxu0
        %v1049 = vadd.f32 %v829, %v1048
        %v1050 = vpop.f32.mrb[0].mxu0
        %v1051 = vadd.f32 %v833, %v1050
        %1052 = vdwg.mxu0
        %v1053 = vld [vmem:[%s608] sm:$0x1]
        %v1054 = vsub.f32 1.0, %v1053
        %v1055 = vmul.f32 %v1054, -1e+09
        %1056 = vmatprep.subr.mxu0 0.0
        %1057 = vmatpush1.xpose.msra.mxu0 %v978
        %1058 = vmatprep.subr.mxu0 0.0
        %1059 = vmatpush1.xpose.msra.mxu0 0.0
        %1060 = vmatprep.subr.mxu0 0.0
        %1061 = vmatpush1.xpose.msra.mxu0 0.0
        %1062 = vmatprep.subr.mxu0 0.0
        %1063 = vmatpush1.xpose.msra.mxu0 0.0
        %1064 = vmatprep.subr.mxu0 0.0
        %1065 = vmatpush1.xpose.msra.mxu0 0.0
        %1066 = vmatprep.subr.mxu0 0.0
        %1067 = vmatpush1.xpose.msra.mxu0 0.0
        %1068 = vmatprep.subr.mxu0 0.0
        %1069 = vmatpush1.xpose.msra.mxu0 0.0
        %1070 = vmatprep.subr.mxu0 0.0
        %1071 = vmatpush1.xpose.msra.mxu0 0.0
        %1072 = vmatprep.subr.mxu0 0.0
        %1073 = vmatpush1.xpose.msra.mxu0 0.0
        %1074 = vmatprep.subr.mxu0 0.0
        %1075 = vmatpush1.xpose.msra.mxu0 0.0
        %1076 = vmatprep.subr.mxu0 0.0
        %1077 = vmatpush1.xpose.msra.mxu0 0.0
        %1078 = vmatprep.subr.mxu0 0.0
        %1079 = vmatpush1.xpose.msra.mxu0 0.0
        %1080 = vmatprep.subr.mxu0 0.0
        %1081 = vmatpush1.xpose.msra.mxu0 0.0
        %1082 = vmatprep.subr.mxu0 0.0
        %1083 = vmatpush1.xpose.msra.mxu0 0.0
        %1084 = vmatprep.subr.mxu0 0.0
        %1085 = vmatpush1.xpose.msra.mxu0 0.0
        %1086 = vmatprep.subr.mxu0 0.0
        %1087 = vmatpush1.xpose.msra.mxu0 0.0
        %1088 = vmatprep.subr.mxu0 0.0
        %1089 = vmatpush1.xpose.msra.mxu0 0.0
        %1090 = vmatprep.subr.mxu0 0.0
        %1091 = vmatpush1.xpose.msra.mxu0 0.0
        %1092 = vmatprep.subr.mxu0 0.0
        %1093 = vmatpush1.xpose.msra.mxu0 0.0
        %1094 = vmatprep.subr.mxu0 0.0
        %1095 = vmatpush1.xpose.msra.mxu0 0.0
        %1096 = vmatprep.subr.mxu0 0.0
        %1097 = vmatpush1.xpose.msra.mxu0 0.0
        %1098 = vmatprep.subr.mxu0 0.0
        %1099 = vmatpush1.xpose.msra.mxu0 0.0
        %1100 = vmatprep.subr.mxu0 0.0
        %1101 = vmatpush1.xpose.msra.mxu0 0.0
        %1102 = vmatprep.subr.mxu0 0.0
        %1103 = vmatpush1.xpose.msra.mxu0 0.0
        %1104 = vmatprep.subr.mxu0 0.0
        %1105 = vmatpush1.xpose.msra.mxu0 0.0
        %1106 = vmatprep.subr.mxu0 0.0
        %1107 = vmatpush1.xpose.msra.mxu0 0.0
        %1108 = vmatprep.subr.mxu0 0.0
        %1109 = vmatpush1.xpose.msra.mxu0 0.0
        %1110 = vmatprep.subr.mxu0 0.0
        %1111 = vmatpush1.xpose.msra.mxu0 0.0
        %1112 = vmatprep.subr.mxu0 0.0
        %1113 = vmatpush1.xpose.msra.mxu0 0.0
        %1114 = vmatprep.subr.mxu0 0.0
        %1115 = vmatpush1.xpose.msra.mxu0 0.0
        %1116 = vmatprep.subr.mxu0 0.0
        %1117 = vmatpush1.xpose.msra.mxu0 0.0
        %1118 = vmatprep.subr.mxu0 0.0
        %1119 = vmatpush1.xpose.msra.mxu0 0.0
        %1120 = vmatprep.mubr.f32.mxu0 0.0
        %1121 = vmatmul.mubr.f32.gmra.mrb[0].mxu0 %v907
        %v1122 = vpop.f32.mrb[0].mxu0
        %v1123 = vadd.f32 0.0, %v1122
        %v1124 = vpop.f32.mrb[0].mxu0
        %1125 = vdwg.mxu0
        %v1126 = vmul.f32 %v1123, 0.088388346
        %v1128 = vlaneseq
        %v1129 = vshrl.u32 %v1128, 7
        %v1130 = vsub.s32 0, %v1129
        %v1131 = vrot.slane %v1055, %v1130
        %v1133 = vadd.f32 %v1126, %v1131
        %vm1134 = vcmask 64512
        %v1135 = vsel %vm1134, %v1133, -inf
        %1136 = vmax.xlane.f32.xlu0 %v1135
        %v1137 = vpop.xlane.xlu0 %1136
        %v1138 = vsub.f32 %v1133, %v1137
        %v1139 = vmul.f32 %v1138, 1.442695
        %v1140 = vpow.pop %v1139
        %v1141 = vsel %vm1134, %v1140, 0.0
        %1142 = vadd.xlane.f32.xlu0 %v1141
        %v1143 = vpop.xlane.xlu0 %1142
        %v1144 = vrcp.pop %v1143
        %v1145 = vmul.f32 %v1140, %v1144
        %v1147 = vsel %vm1134, %v1145, 0
        %1149 = vmatprep.subr.mxu0 0.0
        %1150 = vmatpush1.msra.mxu0 %v1049
        %1151 = vmatprep.subr.mxu0 0.0
        %1152 = vmatpush1.msra.mxu0 0.0
        %1153 = vmatprep.subr.mxu0 0.0
        %1154 = vmatpush1.msra.mxu0 0.0
        %1155 = vmatprep.subr.mxu0 0.0
        %1156 = vmatpush1.msra.mxu0 0.0
        %1157 = vmatprep.subr.mxu0 0.0
        %1158 = vmatpush1.msra.mxu0 0.0
        %1159 = vmatprep.subr.mxu0 0.0
        %1160 = vmatpush1.msra.mxu0 0.0
        %1161 = vmatprep.subr.mxu0 0.0
        %1162 = vmatpush1.msra.mxu0 0.0
        %1163 = vmatprep.subr.mxu0 0.0
        %1164 = vmatpush1.msra.mxu0 0.0
        %1165 = vmatprep.subr.mxu0 0.0
        %1166 = vmatpush1.msra.mxu0 0.0
        %1167 = vmatprep.subr.mxu0 0.0
        %1168 = vmatpush1.msra.mxu0 0.0
        %1169 = vmatprep.subr.mxu0 0.0
        %1170 = vmatpush1.msra.mxu0 0.0
        %1171 = vmatprep.subr.mxu0 0.0
        %1172 = vmatpush1.msra.mxu0 0.0
        %1173 = vmatprep.subr.mxu0 0.0
        %1174 = vmatpush1.msra.mxu0 0.0
        %1175 = vmatprep.subr.mxu0 0.0
        %1176 = vmatpush1.msra.mxu0 0.0
        %1177 = vmatprep.subr.mxu0 0.0
        %1178 = vmatpush1.msra.mxu0 0.0
        %1179 = vmatprep.subr.mxu0 0.0
        %1180 = vmatpush1.msra.mxu0 0.0
        %1181 = vmatprep.subr.mxu0 0.0
        %1182 = vmatpush1.msra.mxu0 0.0
        %1183 = vmatprep.subr.mxu0 0.0
        %1184 = vmatpush1.msra.mxu0 0.0
        %1185 = vmatprep.subr.mxu0 0.0
        %1186 = vmatpush1.msra.mxu0 0.0
        %1187 = vmatprep.subr.mxu0 0.0
        %1188 = vmatpush1.msra.mxu0 0.0
        %1189 = vmatprep.subr.mxu0 0.0
        %1190 = vmatpush1.msra.mxu0 0.0
        %1191 = vmatprep.subr.mxu0 0.0
        %1192 = vmatpush1.msra.mxu0 0.0
        %1193 = vmatprep.subr.mxu0 0.0
        %1194 = vmatpush1.msra.mxu0 0.0
        %1195 = vmatprep.subr.mxu0 0.0
        %1196 = vmatpush1.msra.mxu0 0.0
        %1197 = vmatprep.subr.mxu0 0.0
        %1198 = vmatpush1.msra.mxu0 0.0
        %1199 = vmatprep.subr.mxu0 0.0
        %1200 = vmatpush1.msra.mxu0 0.0
        %1201 = vmatprep.subr.mxu0 0.0
        %1202 = vmatpush1.msra.mxu0 0.0
        %1203 = vmatprep.subr.mxu0 0.0
        %1204 = vmatpush1.msra.mxu0 0.0
        %1205 = vmatprep.subr.mxu0 0.0
        %1206 = vmatpush1.msra.mxu0 0.0
        %1207 = vmatprep.subr.mxu0 0.0
        %1208 = vmatpush1.msra.mxu0 0.0
        %1209 = vmatprep.subr.mxu0 0.0
        %1210 = vmatpush1.msra.mxu0 0.0
        %1211 = vmatprep.subr.mxu0 0.0
        %1212 = vmatpush1.msra.mxu0 0.0
        %1213 = vmatprep.mubr.f32.mxu0 0.0
        %1214 = vmatmul.mubr.f32.gmra.mrb[0].mxu0 %v1147
        %v1215 = vpop.f32.mrb[0].mxu0
        %v1216 = vadd.f32 0.0, %v1215
        %v1217 = vpop.f32.mrb[0].mxu0
        %1218 = vdwg.mxu0
        %1219 = vmatprep.subr.mxu0 0.0
        %1220 = vmatpush1.xpose.msra.mxu0 %v980
        %1221 = vmatprep.subr.mxu0 0.0
        %1222 = vmatpush1.xpose.msra.mxu0 0.0
        %1223 = vmatprep.subr.mxu0 0.0
        %1224 = vmatpush1.xpose.msra.mxu0 0.0
        %1225 = vmatprep.subr.mxu0 0.0
        %1226 = vmatpush1.xpose.msra.mxu0 0.0
        %1227 = vmatprep.subr.mxu0 0.0
        %1228 = vmatpush1.xpose.msra.mxu0 0.0
        %1229 = vmatprep.subr.mxu0 0.0
        %1230 = vmatpush1.xpose.msra.mxu0 0.0
        %1231 = vmatprep.subr.mxu0 0.0
        %1232 = vmatpush1.xpose.msra.mxu0 0.0
        %1233 = vmatprep.subr.mxu0 0.0
        %1234 = vmatpush1.xpose.msra.mxu0 0.0
        %1235 = vmatprep.subr.mxu0 0.0
        %1236 = vmatpush1.xpose.msra.mxu0 0.0
        %1237 = vmatprep.subr.mxu0 0.0
        %1238 = vmatpush1.xpose.msra.mxu0 0.0
        %1239 = vmatprep.subr.mxu0 0.0
        %1240 = vmatpush1.xpose.msra.mxu0 0.0
        %1241 = vmatprep.subr.mxu0 0.0
        %1242 = vmatpush1.xpose.msra.mxu0 0.0
        %1243 = vmatprep.subr.mxu0 0.0
        %1244 = vmatpush1.xpose.msra.mxu0 0.0
        %1245 = vmatprep.subr.mxu0 0.0
        %1246 = vmatpush1.xpose.msra.mxu0 0.0
        %1247 = vmatprep.subr.mxu0 0.0
        %1248 = vmatpush1.xpose.msra.mxu0 0.0
        %1249 = vmatprep.subr.mxu0 0.0
        %1250 = vmatpush1.xpose.msra.mxu0 0.0
        %1251 = vmatprep.subr.mxu0 0.0
        %1252 = vmatpush1.xpose.msra.mxu0 0.0
        %1253 = vmatprep.subr.mxu0 0.0
        %1254 = vmatpush1.xpose.msra.mxu0 0.0
        %1255 = vmatprep.subr.mxu0 0.0
        %1256 = vmatpush1.xpose.msra.mxu0 0.0
        %1257 = vmatprep.subr.mxu0 0.0
        %1258 = vmatpush1.xpose.msra.mxu0 0.0
        %1259 = vmatprep.subr.mxu0 0.0
        %1260 = vmatpush1.xpose.msra.mxu0 0.0
        %1261 = vmatprep.subr.mxu0 0.0
        %1262 = vmatpush1.xpose.msra.mxu0 0.0
        %1263 = vmatprep.subr.mxu0 0.0
        %1264 = vmatpush1.xpose.msra.mxu0 0.0
        %1265 = vmatprep.subr.mxu0 0.0
        %1266 = vmatpush1.xpose.msra.mxu0 0.0
        %1267 = vmatprep.subr.mxu0 0.0
        %1268 = vmatpush1.xpose.msra.mxu0 0.0
        %1269 = vmatprep.subr.mxu0 0.0
        %1270 = vmatpush1.xpose.msra.mxu0 0.0
        %1271 = vmatprep.subr.mxu0 0.0
        %1272 = vmatpush1.xpose.msra.mxu0 0.0
        %1273 = vmatprep.subr.mxu0 0.0
        %1274 = vmatpush1.xpose.msra.mxu0 0.0
        %1275 = vmatprep.subr.mxu0 0.0
        %1276 = vmatpush1.xpose.msra.mxu0 0.0
        %1277 = vmatprep.subr.mxu0 0.0
        %1278 = vmatpush1.xpose.msra.mxu0 0.0
        %1279 = vmatprep.subr.mxu0 0.0
        %1280 = vmatpush1.xpose.msra.mxu0 0.0
        %1281 = vmatprep.subr.mxu0 0.0
        %1282 = vmatpush1.xpose.msra.mxu0 0.0
        %1283 = vmatprep.mubr.f32.mxu0 0.0
        %1284 = vmatmul.mubr.f32.gmra.mrb[0].mxu0 %v909
        %v1285 = vpop.f32.mrb[0].mxu0
        %v1286 = vadd.f32 0.0, %v1285
        %v1287 = vpop.f32.mrb[0].mxu0
        %1288 = vdwg.mxu0
        %v1289 = vmul.f32 %v1286, 0.088388346
        %v1290 = vadd.f32 %v1289, %v1131
        %v1291 = vsel %vm1134, %v1290, -inf
        %1292 = vmax.xlane.f32.xlu0 %v1291
        %v1293 = vpop.xlane.xlu0 %1292
        %v1294 = vsub.f32 %v1290, %v1293
        %v1295 = vmul.f32 %v1294, 1.442695
        %v1296 = vpow.pop %v1295
        %v1297 = vsel %vm1134, %v1296, 0.0
        %1298 = vadd.xlane.f32.xlu0 %v1297
        %v1299 = vpop.xlane.xlu0 %1298
        %v1300 = vrcp.pop %v1299
        %v1301 = vmul.f32 %v1296, %v1300
        %v1303 = vsel %vm1134, %v1301, 0
        %1305 = vmatprep.subr.mxu0 0.0
        %1306 = vmatpush1.msra.mxu0 %v1051
        %1307 = vmatprep.subr.mxu0 0.0
        %1308 = vmatpush1.msra.mxu0 0.0
        %1309 = vmatprep.subr.mxu0 0.0
        %1310 = vmatpush1.msra.mxu0 0.0
        %1311 = vmatprep.subr.mxu0 0.0
        %1312 = vmatpush1.msra.mxu0 0.0
        %1313 = vmatprep.subr.mxu0 0.0
        %1314 = vmatpush1.msra.mxu0 0.0
        %1315 = vmatprep.subr.mxu0 0.0
        %1316 = vmatpush1.msra.mxu0 0.0
        %1317 = vmatprep.subr.mxu0 0.0
        %1318 = vmatpush1.msra.mxu0 0.0
        %1319 = vmatprep.subr.mxu0 0.0
        %1320 = vmatpush1.msra.mxu0 0.0
        %1321 = vmatprep.subr.mxu0 0.0
        %1322 = vmatpush1.msra.mxu0 0.0
        %1323 = vmatprep.subr.mxu0 0.0
        %1324 = vmatpush1.msra.mxu0 0.0
        %1325 = vmatprep.subr.mxu0 0.0
        %1326 = vmatpush1.msra.mxu0 0.0
        %1327 = vmatprep.subr.mxu0 0.0
        %1328 = vmatpush1.msra.mxu0 0.0
        %1329 = vmatprep.subr.mxu0 0.0
        %1330 = vmatpush1.msra.mxu0 0.0
        %1331 = vmatprep.subr.mxu0 0.0
        %1332 = vmatpush1.msra.mxu0 0.0
        %1333 = vmatprep.subr.mxu0 0.0
        %1334 = vmatpush1.msra.mxu0 0.0
        %1335 = vmatprep.subr.mxu0 0.0
        %1336 = vmatpush1.msra.mxu0 0.0
        %1337 = vmatprep.subr.mxu0 0.0
        %1338 = vmatpush1.msra.mxu0 0.0
        %1339 = vmatprep.subr.mxu0 0.0
        %1340 = vmatpush1.msra.mxu0 0.0
        %1341 = vmatprep.subr.mxu0 0.0
        %1342 = vmatpush1.msra.mxu0 0.0
        %1343 = vmatprep.subr.mxu0 0.0
        %1344 = vmatpush1.msra.mxu0 0.0
        %1345 = vmatprep.subr.mxu0 0.0
        %1346 = vmatpush1.msra.mxu0 0.0
        %1347 = vmatprep.subr.mxu0 0.0
        %1348 = vmatpush1.msra.mxu0 0.0
        %1349 = vmatprep.subr.mxu0 0.0
        %1350 = vmatpush1.msra.mxu0 0.0
        %1351 = vmatprep.subr.mxu0 0.0
        %1352 = vmatpush1.msra.mxu0 0.0
        %1353 = vmatprep.subr.mxu0 0.0
        %1354 = vmatpush1.msra.mxu0 0.0
        %1355 = vmatprep.subr.mxu0 0.0
        %1356 = vmatpush1.msra.mxu0 0.0
        %1357 = vmatprep.subr.mxu0 0.0
        %1358 = vmatpush1.msra.mxu0 0.0
        %1359 = vmatprep.subr.mxu0 0.0
        %1360 = vmatpush1.msra.mxu0 0.0
        %1361 = vmatprep.subr.mxu0 0.0
        %1362 = vmatpush1.msra.mxu0 0.0
        %1363 = vmatprep.subr.mxu0 0.0
        %1364 = vmatpush1.msra.mxu0 0.0
        %1365 = vmatprep.subr.mxu0 0.0
        %1366 = vmatpush1.msra.mxu0 0.0
        %1367 = vmatprep.subr.mxu0 0.0
        %1368 = vmatpush1.msra.mxu0 0.0
        %1369 = vmatprep.mubr.f32.mxu0 0.0
        %1370 = vmatmul.mubr.f32.gmra.mrb[0].mxu0 %v1303
        %v1371 = vpop.f32.mrb[0].mxu0
        %v1372 = vadd.f32 0.0, %v1371
        %v1373 = vpop.f32.mrb[0].mxu0
        %1374 = vdwg.mxu0
        %v1375 = vld [vmem:[%s4] sm:$0xff]
        %v1376 = vld [vmem:[%s4 + $0x8] sm:$0xff]
        %v1377 = vld [vmem:[%s4 + $0x10] sm:$0xff]
        %v1378 = vld [vmem:[%s4 + $0x18] sm:$0xff]
        %v1379 = vld [vmem:[%s4 + $0x20] sm:$0xff]
        %v1380 = vld [vmem:[%s4 + $0x28] sm:$0xff]
        %v1381 = vld [vmem:[%s4 + $0x30] sm:$0xff]
        %v1382 = vld [vmem:[%s4 + $0x38] sm:$0xff]
        %v1383 = vld [vmem:[%s4 + $0x40] sm:$0xff]
        %v1384 = vld [vmem:[%s4 + $0x48] sm:$0xff]
        %v1385 = vld [vmem:[%s4 + $0x50] sm:$0xff]
        %v1386 = vld [vmem:[%s4 + $0x58] sm:$0xff]
        %v1387 = vld [vmem:[%s4 + $0x60] sm:$0xff]
        %v1388 = vld [vmem:[%s4 + $0x68] sm:$0xff]
        %v1389 = vld [vmem:[%s4 + $0x70] sm:$0xff]
        %v1390 = vld [vmem:[%s4 + $0x78] sm:$0xff]
        %v1391 = vld [vmem:[%s4 + $0x80] sm:$0xff]
        %v1392 = vld [vmem:[%s4 + $0x88] sm:$0xff]
        %v1393 = vld [vmem:[%s4 + $0x90] sm:$0xff]
        %v1394 = vld [vmem:[%s4 + $0x98] sm:$0xff]
        %v1395 = vld [vmem:[%s4 + $0xa0] sm:$0xff]
        %v1396 = vld [vmem:[%s4 + $0xa8] sm:$0xff]
        %v1397 = vld [vmem:[%s4 + $0xb0] sm:$0xff]
        %v1398 = vld [vmem:[%s4 + $0xb8] sm:$0xff]
        %v1399 = vld [vmem:[%s4 + $0xc0] sm:$0xff]
        %v1400 = vld [vmem:[%s4 + $0xc8] sm:$0xff]
        %v1401 = vld [vmem:[%s4 + $0xd0] sm:$0xff]
        %v1402 = vld [vmem:[%s4 + $0xd8] sm:$0xff]
        %v1403 = vld [vmem:[%s4 + $0xe0] sm:$0xff]
        %v1404 = vld [vmem:[%s4 + $0xe8] sm:$0xff]
        %v1405 = vld [vmem:[%s4 + $0xf0] sm:$0xff]
        %v1406 = vld [vmem:[%s4 + $0xf8] sm:$0xff]
        %v1407 = vld [vmem:[%s4 + $0x100] sm:$0xff]
        %v1408 = vld [vmem:[%s4 + $0x108] sm:$0xff]
        %v1409 = vld [vmem:[%s4 + $0x110] sm:$0xff]
        %v1410 = vld [vmem:[%s4 + $0x118] sm:$0xff]
        %v1411 = vld [vmem:[%s4 + $0x120] sm:$0xff]
        %v1412 = vld [vmem:[%s4 + $0x128] sm:$0xff]
        %v1413 = vld [vmem:[%s4 + $0x130] sm:$0xff]
        %v1414 = vld [vmem:[%s4 + $0x138] sm:$0xff]
        %v1415 = vld [vmem:[%s4 + $0x140] sm:$0xff]
        %v1416 = vld [vmem:[%s4 + $0x148] sm:$0xff]
        %v1417 = vld [vmem:[%s4 + $0x150] sm:$0xff]
        %v1418 = vld [vmem:[%s4 + $0x158] sm:$0xff]
        %v1419 = vld [vmem:[%s4 + $0x160] sm:$0xff]
        %v1420 = vld [vmem:[%s4 + $0x168] sm:$0xff]
        %v1421 = vld [vmem:[%s4 + $0x170] sm:$0xff]
        %v1422 = vld [vmem:[%s4 + $0x178] sm:$0xff]
        %v1423 = vld [vmem:[%s4 + $0x180] sm:$0xff]
        %v1424 = vld [vmem:[%s4 + $0x188] sm:$0xff]
        %v1425 = vld [vmem:[%s4 + $0x190] sm:$0xff]
        %v1426 = vld [vmem:[%s4 + $0x198] sm:$0xff]
        %v1427 = vld [vmem:[%s4 + $0x1a0] sm:$0xff]
        %v1428 = vld [vmem:[%s4 + $0x1a8] sm:$0xff]
        %v1429 = vld [vmem:[%s4 + $0x1b0] sm:$0xff]
        %v1430 = vld [vmem:[%s4 + $0x1b8] sm:$0xff]
        %v1431 = vld [vmem:[%s4 + $0x1c0] sm:$0xff]
        %v1432 = vld [vmem:[%s4 + $0x1c8] sm:$0xff]
        %v1433 = vld [vmem:[%s4 + $0x1d0] sm:$0xff]
        %v1434 = vld [vmem:[%s4 + $0x1d8] sm:$0xff]
        %v1435 = vld [vmem:[%s4 + $0x1e0] sm:$0xff]
        %v1436 = vld [vmem:[%s4 + $0x1e8] sm:$0xff]
        %v1437 = vld [vmem:[%s4 + $0x1f0] sm:$0xff]
        %v1438 = vld [vmem:[%s4 + $0x1f8] sm:$0xff]
        %v1439 = vld [vmem:[#allocation6] sm:$0x3]
        %v1441 = vlaneseq
        %v1442 = vshrl.u32 %v1441, 7
        %v1443 = vsub.s32 0, %v1442
        %v1444 = vrot.slane %v1439, %v1443
        %v1445 = vlaneseq
        %v1446 = vshrl.u32 %v1445, 7
        %v1447 = vsub.s32 1, %v1446
        %v1448 = vrot.slane %v1439, %v1447
        %1451 = vmatprep.subr.mxu0 %v1376
        %1452 = vmatpush1.msra.mxu0 %v1375
        %1453 = vmatprep.subr.mxu0 %v1378
        %1454 = vmatpush1.msra.mxu0 %v1377
        %1455 = vmatprep.subr.mxu0 %v1380
        %1456 = vmatpush1.msra.mxu0 %v1379
        %1457 = vmatprep.subr.mxu0 %v1382
        %1458 = vmatpush1.msra.mxu0 %v1381
        %1459 = vmatprep.subr.mxu0 %v1384
        %1460 = vmatpush1.msra.mxu0 %v1383
        %1461 = vmatprep.subr.mxu0 %v1386
        %1462 = vmatpush1.msra.mxu0 %v1385
        %1463 = vmatprep.subr.mxu0 %v1388
        %1464 = vmatpush1.msra.mxu0 %v1387
        %1465 = vmatprep.subr.mxu0 %v1390
        %1466 = vmatpush1.msra.mxu0 %v1389
        %1467 = vmatprep.subr.mxu0 %v1392
        %1468 = vmatpush1.msra.mxu0 %v1391
        %1469 = vmatprep.subr.mxu0 %v1394
        %1470 = vmatpush1.msra.mxu0 %v1393
        %1471 = vmatprep.subr.mxu0 %v1396
        %1472 = vmatpush1.msra.mxu0 %v1395
        %1473 = vmatprep.subr.mxu0 %v1398
        %1474 = vmatpush1.msra.mxu0 %v1397
        %1475 = vmatprep.subr.mxu0 %v1400
        %1476 = vmatpush1.msra.mxu0 %v1399
        %1477 = vmatprep.subr.mxu0 %v1402
        %1478 = vmatpush1.msra.mxu0 %v1401
        %1479 = vmatprep.subr.mxu0 %v1404
        %1480 = vmatpush1.msra.mxu0 %v1403
        %1481 = vmatprep.subr.mxu0 %v1406
        %1482 = vmatpush1.msra.mxu0 %v1405
        %1483 = vmatprep.subr.mxu0 %v1408
        %1484 = vmatpush1.msra.mxu0 %v1407
        %1485 = vmatprep.subr.mxu0 %v1410
        %1486 = vmatpush1.msra.mxu0 %v1409
        %1487 = vmatprep.subr.mxu0 %v1412
        %1488 = vmatpush1.msra.mxu0 %v1411
        %1489 = vmatprep.subr.mxu0 %v1414
        %1490 = vmatpush1.msra.mxu0 %v1413
        %1491 = vmatprep.subr.mxu0 %v1416
        %1492 = vmatpush1.msra.mxu0 %v1415
        %1493 = vmatprep.subr.mxu0 %v1418
        %1494 = vmatpush1.msra.mxu0 %v1417
        %1495 = vmatprep.subr.mxu0 %v1420
        %1496 = vmatpush1.msra.mxu0 %v1419
        %1497 = vmatprep.subr.mxu0 %v1422
        %1498 = vmatpush1.msra.mxu0 %v1421
        %1499 = vmatprep.subr.mxu0 %v1424
        %1500 = vmatpush1.msra.mxu0 %v1423
        %1501 = vmatprep.subr.mxu0 %v1426
        %1502 = vmatpush1.msra.mxu0 %v1425
        %1503 = vmatprep.subr.mxu0 %v1428
        %1504 = vmatpush1.msra.mxu0 %v1427
        %1505 = vmatprep.subr.mxu0 %v1430
        %1506 = vmatpush1.msra.mxu0 %v1429
        %1507 = vmatprep.subr.mxu0 %v1432
        %1508 = vmatpush1.msra.mxu0 %v1431
        %1509 = vmatprep.subr.mxu0 %v1434
        %1510 = vmatpush1.msra.mxu0 %v1433
        %1511 = vmatprep.subr.mxu0 %v1436
        %1512 = vmatpush1.msra.mxu0 %v1435
        %1513 = vmatprep.subr.mxu0 %v1438
        %1514 = vmatpush1.msra.mxu0 %v1437
        %1515 = vmatprep.mubr.f32.mxu0 %v1372
        %1516 = vmatmul.mubr.f32.gmra.mrb[0].mxu0 %v1216
        %v1517 = vpop.f32.mrb[0].mxu0
        %v1518 = vadd.f32 %v1444, %v1517
        %v1519 = vpop.f32.mrb[0].mxu0
        %v1520 = vadd.f32 %v1448, %v1519
        %1521 = vdwg.mxu0
        %v1522 = vadd.f32 %v614, %v1518
        %v1523 = vadd.f32 %v615, %v1520
        %v1524 = vld [vmem:[#allocation7] sm:$0x3]
        %v1525 = vld [vmem:[#allocation9] sm:$0x3]
        %v1526 = vadd.f32 %v1522, %v1523
        %1527 = vadd.xlane.f32.xlu0 %v1526
        %v1528 = vpop.xlane.xlu0 %1527
        %v1529 = vrcp.pop 256.0
        %v1530 = vmul.f32 %v1528, %v1529
        %v1531 = vsub.f32 %v1522, %v1530
        %v1532 = vsub.f32 %v1523, %v1530
        %v1533 = vmul.f32 %v1531, %v1531
        %v1534 = vmul.f32 %v1532, %v1532
        %v1535 = vadd.f32 %v1533, %v1534
        %1536 = vadd.xlane.f32.xlu0 %v1535
        %v1537 = vpop.xlane.xlu0 %1536
        %v1538 = vmul.f32 %v1537, %v1529
        %v1539 = vadd.f32 %v1538, 1e-12
        %v1540 = vrsqrt.pop %v1539
        %v1541 = vmul.f32 %v1531, %v1540
        %v1542 = vmul.f32 %v1532, %v1540
        %v1544 = vlaneseq
        %v1545 = vshrl.u32 %v1544, 7
        %v1546 = vsub.s32 0, %v1545
        %v1547 = vrot.slane %v1524, %v1546
        %v1548 = vlaneseq
        %v1549 = vshrl.u32 %v1548, 7
        %v1550 = vsub.s32 1, %v1549
        %v1551 = vrot.slane %v1524, %v1550
        %v1554 = vmul.f32 %v1541, %v1547
        %v1555 = vmul.f32 %v1542, %v1551
        %v1557 = vlaneseq
        %v1558 = vshrl.u32 %v1557, 7
        %v1559 = vsub.s32 0, %v1558
        %v1560 = vrot.slane %v1525, %v1559
        %v1561 = vlaneseq
        %v1562 = vshrl.u32 %v1561, 7
        %v1563 = vsub.s32 1, %v1562
        %v1564 = vrot.slane %v1525, %v1563
        %v1567 = vadd.f32 %v1554, %v1560
        %v1568 = vadd.f32 %v1555, %v1564
        %v1569 = vld [vmem:[#allocation10] sm:$0xff]
        %v1570 = vld [vmem:[#allocation10 + $0x8] sm:$0xff]
        %v1571 = vld [vmem:[#allocation10 + $0x10] sm:$0xff]
        %v1572 = vld [vmem:[#allocation10 + $0x18] sm:$0xff]
        %v1573 = vld [vmem:[#allocation10 + $0x20] sm:$0xff]
        %v1574 = vld [vmem:[#allocation10 + $0x28] sm:$0xff]
        %v1575 = vld [vmem:[#allocation10 + $0x30] sm:$0xff]
        %v1576 = vld [vmem:[#allocation10 + $0x38] sm:$0xff]
        %v1577 = vld [vmem:[#allocation10 + $0x40] sm:$0xff]
        %v1578 = vld [vmem:[#allocation10 + $0x48] sm:$0xff]
        %v1579 = vld [vmem:[#allocation10 + $0x50] sm:$0xff]
        %v1580 = vld [vmem:[#allocation10 + $0x58] sm:$0xff]
        %v1581 = vld [vmem:[#allocation10 + $0x60] sm:$0xff]
        %v1582 = vld [vmem:[#allocation10 + $0x68] sm:$0xff]
        %v1583 = vld [vmem:[#allocation10 + $0x70] sm:$0xff]
        %v1584 = vld [vmem:[#allocation10 + $0x78] sm:$0xff]
        %v1585 = vld [vmem:[#allocation10 + $0x80] sm:$0xff]
        %v1586 = vld [vmem:[#allocation10 + $0x88] sm:$0xff]
        %v1587 = vld [vmem:[#allocation10 + $0x90] sm:$0xff]
        %v1588 = vld [vmem:[#allocation10 + $0x98] sm:$0xff]
        %v1589 = vld [vmem:[#allocation10 + $0xa0] sm:$0xff]
        %v1590 = vld [vmem:[#allocation10 + $0xa8] sm:$0xff]
        %v1591 = vld [vmem:[#allocation10 + $0xb0] sm:$0xff]
        %v1592 = vld [vmem:[#allocation10 + $0xb8] sm:$0xff]
        %v1593 = vld [vmem:[#allocation10 + $0xc0] sm:$0xff]
        %v1594 = vld [vmem:[#allocation10 + $0xc8] sm:$0xff]
        %v1595 = vld [vmem:[#allocation10 + $0xd0] sm:$0xff]
        %v1596 = vld [vmem:[#allocation10 + $0xd8] sm:$0xff]
        %v1597 = vld [vmem:[#allocation10 + $0xe0] sm:$0xff]
        %v1598 = vld [vmem:[#allocation10 + $0xe8] sm:$0xff]
        %v1599 = vld [vmem:[#allocation10 + $0xf0] sm:$0xff]
        %v1600 = vld [vmem:[#allocation10 + $0xf8] sm:$0xff]
        %v1601 = vld [vmem:[#allocation10 + $0x100] sm:$0xff]
        %v1602 = vld [vmem:[#allocation10 + $0x108] sm:$0xff]
        %v1603 = vld [vmem:[#allocation10 + $0x110] sm:$0xff]
        %v1604 = vld [vmem:[#allocation10 + $0x118] sm:$0xff]
        %v1605 = vld [vmem:[#allocation10 + $0x120] sm:$0xff]
        %v1606 = vld [vmem:[#allocation10 + $0x128] sm:$0xff]
        %v1607 = vld [vmem:[#allocation10 + $0x130] sm:$0xff]
        %v1608 = vld [vmem:[#allocation10 + $0x138] sm:$0xff]
        %v1609 = vld [vmem:[#allocation10 + $0x140] sm:$0xff]
        %v1610 = vld [vmem:[#allocation10 + $0x148] sm:$0xff]
        %v1611 = vld [vmem:[#allocation10 + $0x150] sm:$0xff]
        %v1612 = vld [vmem:[#allocation10 + $0x158] sm:$0xff]
        %v1613 = vld [vmem:[#allocation10 + $0x160] sm:$0xff]
        %v1614 = vld [vmem:[#allocation10 + $0x168] sm:$0xff]
        %v1615 = vld [vmem:[#allocation10 + $0x170] sm:$0xff]
        %v1616 = vld [vmem:[#allocation10 + $0x178] sm:$0xff]
        %v1617 = vld [vmem:[#allocation10 + $0x180] sm:$0xff]
        %v1618 = vld [vmem:[#allocation10 + $0x188] sm:$0xff]
        %v1619 = vld [vmem:[#allocation10 + $0x190] sm:$0xff]
        %v1620 = vld [vmem:[#allocation10 + $0x198] sm:$0xff]
        %v1621 = vld [vmem:[#allocation10 + $0x1a0] sm:$0xff]
        %v1622 = vld [vmem:[#allocation10 + $0x1a8] sm:$0xff]
        %v1623 = vld [vmem:[#allocation10 + $0x1b0] sm:$0xff]
        %v1624 = vld [vmem:[#allocation10 + $0x1b8] sm:$0xff]
        %v1625 = vld [vmem:[#allocation10 + $0x1c0] sm:$0xff]
        %v1626 = vld [vmem:[#allocation10 + $0x1c8] sm:$0xff]
        %v1627 = vld [vmem:[#allocation10 + $0x1d0] sm:$0xff]
        %v1628 = vld [vmem:[#allocation10 + $0x1d8] sm:$0xff]
        %v1629 = vld [vmem:[#allocation10 + $0x1e0] sm:$0xff]
        %v1630 = vld [vmem:[#allocation10 + $0x1e8] sm:$0xff]
        %v1631 = vld [vmem:[#allocation10 + $0x1f0] sm:$0xff]
        %v1632 = vld [vmem:[#allocation10 + $0x1f8] sm:$0xff]
        %v1633 = vld [vmem:[#allocation10 + $0x200] sm:$0xff]
        %v1634 = vld [vmem:[#allocation10 + $0x208] sm:$0xff]
        %v1635 = vld [vmem:[#allocation10 + $0x210] sm:$0xff]
        %v1636 = vld [vmem:[#allocation10 + $0x218] sm:$0xff]
        %v1637 = vld [vmem:[#allocation10 + $0x220] sm:$0xff]
        %v1638 = vld [vmem:[#allocation10 + $0x228] sm:$0xff]
        %v1639 = vld [vmem:[#allocation10 + $0x230] sm:$0xff]
        %v1640 = vld [vmem:[#allocation10 + $0x238] sm:$0xff]
        %v1641 = vld [vmem:[#allocation10 + $0x240] sm:$0xff]
        %v1642 = vld [vmem:[#allocation10 + $0x248] sm:$0xff]
        %v1643 = vld [vmem:[#allocation10 + $0x250] sm:$0xff]
        %v1644 = vld [vmem:[#allocation10 + $0x258] sm:$0xff]
        %v1645 = vld [vmem:[#allocation10 + $0x260] sm:$0xff]
        %v1646 = vld [vmem:[#allocation10 + $0x268] sm:$0xff]
        %v1647 = vld [vmem:[#allocation10 + $0x270] sm:$0xff]
        %v1648 = vld [vmem:[#allocation10 + $0x278] sm:$0xff]
        %v1649 = vld [vmem:[#allocation10 + $0x280] sm:$0xff]
        %v1650 = vld [vmem:[#allocation10 + $0x288] sm:$0xff]
        %v1651 = vld [vmem:[#allocation10 + $0x290] sm:$0xff]
        %v1652 = vld [vmem:[#allocation10 + $0x298] sm:$0xff]
        %v1653 = vld [vmem:[#allocation10 + $0x2a0] sm:$0xff]
        %v1654 = vld [vmem:[#allocation10 + $0x2a8] sm:$0xff]
        %v1655 = vld [vmem:[#allocation10 + $0x2b0] sm:$0xff]
        %v1656 = vld [vmem:[#allocation10 + $0x2b8] sm:$0xff]
        %v1657 = vld [vmem:[#allocation10 + $0x2c0] sm:$0xff]
        %v1658 = vld [vmem:[#allocation10 + $0x2c8] sm:$0xff]
        %v1659 = vld [vmem:[#allocation10 + $0x2d0] sm:$0xff]
        %v1660 = vld [vmem:[#allocation10 + $0x2d8] sm:$0xff]
        %v1661 = vld [vmem:[#allocation10 + $0x2e0] sm:$0xff]
        %v1662 = vld [vmem:[#allocation10 + $0x2e8] sm:$0xff]
        %v1663 = vld [vmem:[#allocation10 + $0x2f0] sm:$0xff]
        %v1664 = vld [vmem:[#allocation10 + $0x2f8] sm:$0xff]
        %v1665 = vld [vmem:[#allocation10 + $0x300] sm:$0xff]
        %v1666 = vld [vmem:[#allocation10 + $0x308] sm:$0xff]
        %v1667 = vld [vmem:[#allocation10 + $0x310] sm:$0xff]
        %v1668 = vld [vmem:[#allocation10 + $0x318] sm:$0xff]
        %v1669 = vld [vmem:[#allocation10 + $0x320] sm:$0xff]
        %v1670 = vld [vmem:[#allocation10 + $0x328] sm:$0xff]
        %v1671 = vld [vmem:[#allocation10 + $0x330] sm:$0xff]
        %v1672 = vld [vmem:[#allocation10 + $0x338] sm:$0xff]
        %v1673 = vld [vmem:[#allocation10 + $0x340] sm:$0xff]
        %v1674 = vld [vmem:[#allocation10 + $0x348] sm:$0xff]
        %v1675 = vld [vmem:[#allocation10 + $0x350] sm:$0xff]
        %v1676 = vld [vmem:[#allocation10 + $0x358] sm:$0xff]
        %v1677 = vld [vmem:[#allocation10 + $0x360] sm:$0xff]
        %v1678 = vld [vmem:[#allocation10 + $0x368] sm:$0xff]
        %v1679 = vld [vmem:[#allocation10 + $0x370] sm:$0xff]
        %v1680 = vld [vmem:[#allocation10 + $0x378] sm:$0xff]
        %v1681 = vld [vmem:[#allocation10 + $0x380] sm:$0xff]
        %v1682 = vld [vmem:[#allocation10 + $0x388] sm:$0xff]
        %v1683 = vld [vmem:[#allocation10 + $0x390] sm:$0xff]
        %v1684 = vld [vmem:[#allocation10 + $0x398] sm:$0xff]
        %v1685 = vld [vmem:[#allocation10 + $0x3a0] sm:$0xff]
        %v1686 = vld [vmem:[#allocation10 + $0x3a8] sm:$0xff]
        %v1687 = vld [vmem:[#allocation10 + $0x3b0] sm:$0xff]
        %v1688 = vld [vmem:[#allocation10 + $0x3b8] sm:$0xff]
        %v1689 = vld [vmem:[#allocation10 + $0x3c0] sm:$0xff]
        %v1690 = vld [vmem:[#allocation10 + $0x3c8] sm:$0xff]
        %v1691 = vld [vmem:[#allocation10 + $0x3d0] sm:$0xff]
        %v1692 = vld [vmem:[#allocation10 + $0x3d8] sm:$0xff]
        %v1693 = vld [vmem:[#allocation10 + $0x3e0] sm:$0xff]
        %v1694 = vld [vmem:[#allocation10 + $0x3e8] sm:$0xff]
        %v1695 = vld [vmem:[#allocation10 + $0x3f0] sm:$0xff]
        %v1696 = vld [vmem:[#allocation10 + $0x3f8] sm:$0xff]
        %v1697 = vld [vmem:[%s9] sm:$0xf]
        %v1699 = vlaneseq
        %v1700 = vshrl.u32 %v1699, 7
        %v1701 = vsub.s32 0, %v1700
        %v1702 = vrot.slane %v1697, %v1701
        %v1703 = vlaneseq
        %v1704 = vshrl.u32 %v1703, 7
        %v1705 = vsub.s32 1, %v1704
        %v1706 = vrot.slane %v1697, %v1705
        %v1707 = vlaneseq
        %v1708 = vshrl.u32 %v1707, 7
        %v1709 = vsub.s32 2, %v1708
        %v1710 = vrot.slane %v1697, %v1709
        %v1711 = vlaneseq
        %v1712 = vshrl.u32 %v1711, 7
        %v1713 = vsub.s32 3, %v1712
        %v1714 = vrot.slane %v1697, %v1713
        %1719 = vmatprep.subr.mxu0 %v1570
        %1720 = vmatpush1.msra.mxu0 %v1569
        %1721 = vmatprep.subr.mxu0 %v1574
        %1722 = vmatpush1.msra.mxu0 %v1573
        %1723 = vmatprep.subr.mxu0 %v1578
        %1724 = vmatpush1.msra.mxu0 %v1577
        %1725 = vmatprep.subr.mxu0 %v1582
        %1726 = vmatpush1.msra.mxu0 %v1581
        %1727 = vmatprep.subr.mxu0 %v1586
        %1728 = vmatpush1.msra.mxu0 %v1585
        %1729 = vmatprep.subr.mxu0 %v1590
        %1730 = vmatpush1.msra.mxu0 %v1589
        %1731 = vmatprep.subr.mxu0 %v1594
        %1732 = vmatpush1.msra.mxu0 %v1593
        %1733 = vmatprep.subr.mxu0 %v1598
        %1734 = vmatpush1.msra.mxu0 %v1597
        %1735 = vmatprep.subr.mxu0 %v1602
        %1736 = vmatpush1.msra.mxu0 %v1601
        %1737 = vmatprep.subr.mxu0 %v1606
        %1738 = vmatpush1.msra.mxu0 %v1605
        %1739 = vmatprep.subr.mxu0 %v1610
        %1740 = vmatpush1.msra.mxu0 %v1609
        %1741 = vmatprep.subr.mxu0 %v1614
        %1742 = vmatpush1.msra.mxu0 %v1613
        %1743 = vmatprep.subr.mxu0 %v1618
        %1744 = vmatpush1.msra.mxu0 %v1617
        %1745 = vmatprep.subr.mxu0 %v1622
        %1746 = vmatpush1.msra.mxu0 %v1621
        %1747 = vmatprep.subr.mxu0 %v1626
        %1748 = vmatpush1.msra.mxu0 %v1625
        %1749 = vmatprep.subr.mxu0 %v1630
        %1750 = vmatpush1.msra.mxu0 %v1629
        %1751 = vmatprep.subr.mxu0 %v1634
        %1752 = vmatpush1.msra.mxu0 %v1633
        %1753 = vmatprep.subr.mxu0 %v1638
        %1754 = vmatpush1.msra.mxu0 %v1637
        %1755 = vmatprep.subr.mxu0 %v1642
        %1756 = vmatpush1.msra.mxu0 %v1641
        %1757 = vmatprep.subr.mxu0 %v1646
        %1758 = vmatpush1.msra.mxu0 %v1645
        %1759 = vmatprep.subr.mxu0 %v1650
        %1760 = vmatpush1.msra.mxu0 %v1649
        %1761 = vmatprep.subr.mxu0 %v1654
        %1762 = vmatpush1.msra.mxu0 %v1653
        %1763 = vmatprep.subr.mxu0 %v1658
        %1764 = vmatpush1.msra.mxu0 %v1657
        %1765 = vmatprep.subr.mxu0 %v1662
        %1766 = vmatpush1.msra.mxu0 %v1661
        %1767 = vmatprep.subr.mxu0 %v1666
        %1768 = vmatpush1.msra.mxu0 %v1665
        %1769 = vmatprep.subr.mxu0 %v1670
        %1770 = vmatpush1.msra.mxu0 %v1669
        %1771 = vmatprep.subr.mxu0 %v1674
        %1772 = vmatpush1.msra.mxu0 %v1673
        %1773 = vmatprep.subr.mxu0 %v1678
        %1774 = vmatpush1.msra.mxu0 %v1677
        %1775 = vmatprep.subr.mxu0 %v1682
        %1776 = vmatpush1.msra.mxu0 %v1681
        %1777 = vmatprep.subr.mxu0 %v1686
        %1778 = vmatpush1.msra.mxu0 %v1685
        %1779 = vmatprep.subr.mxu0 %v1690
        %1780 = vmatpush1.msra.mxu0 %v1689
        %1781 = vmatprep.subr.mxu0 %v1694
        %1782 = vmatpush1.msra.mxu0 %v1693
        %1783 = vmatprep.mubr.f32.mxu0 %v1568
        %1784 = vmatmul.mubr.f32.gmra.mrb[0].mxu0 %v1567
        %v1785 = vpop.f32.mrb[0].mxu0
        %v1786 = vadd.f32 %v1702, %v1785
        %v1787 = vpop.f32.mrb[0].mxu0
        %v1788 = vadd.f32 %v1706, %v1787
        %1789 = vdwg.mxu0
        %1790 = vmatprep.subr.mxu0 %v1572
        %1791 = vmatpush1.msra.mxu0 %v1571
        %1792 = vmatprep.subr.mxu0 %v1576
        %1793 = vmatpush1.msra.mxu0 %v1575
        %1794 = vmatprep.subr.mxu0 %v1580
        %1795 = vmatpush1.msra.mxu0 %v1579
        %1796 = vmatprep.subr.mxu0 %v1584
        %1797 = vmatpush1.msra.mxu0 %v1583
        %1798 = vmatprep.subr.mxu0 %v1588
        %1799 = vmatpush1.msra.mxu0 %v1587
        %1800 = vmatprep.subr.mxu0 %v1592
        %1801 = vmatpush1.msra.mxu0 %v1591
        %1802 = vmatprep.subr.mxu0 %v1596
        %1803 = vmatpush1.msra.mxu0 %v1595
        %1804 = vmatprep.subr.mxu0 %v1600
        %1805 = vmatpush1.msra.mxu0 %v1599
        %1806 = vmatprep.subr.mxu0 %v1604
        %1807 = vmatpush1.msra.mxu0 %v1603
        %1808 = vmatprep.subr.mxu0 %v1608
        %1809 = vmatpush1.msra.mxu0 %v1607
        %1810 = vmatprep.subr.mxu0 %v1612
        %1811 = vmatpush1.msra.mxu0 %v1611
        %1812 = vmatprep.subr.mxu0 %v1616
        %1813 = vmatpush1.msra.mxu0 %v1615
        %1814 = vmatprep.subr.mxu0 %v1620
        %1815 = vmatpush1.msra.mxu0 %v1619
        %1816 = vmatprep.subr.mxu0 %v1624
        %1817 = vmatpush1.msra.mxu0 %v1623
        %1818 = vmatprep.subr.mxu0 %v1628
        %1819 = vmatpush1.msra.mxu0 %v1627
        %1820 = vmatprep.subr.mxu0 %v1632
        %1821 = vmatpush1.msra.mxu0 %v1631
        %1822 = vmatprep.subr.mxu0 %v1636
        %1823 = vmatpush1.msra.mxu0 %v1635
        %1824 = vmatprep.subr.mxu0 %v1640
        %1825 = vmatpush1.msra.mxu0 %v1639
        %1826 = vmatprep.subr.mxu0 %v1644
        %1827 = vmatpush1.msra.mxu0 %v1643
        %1828 = vmatprep.subr.mxu0 %v1648
        %1829 = vmatpush1.msra.mxu0 %v1647
        %1830 = vmatprep.subr.mxu0 %v1652
        %1831 = vmatpush1.msra.mxu0 %v1651
        %1832 = vmatprep.subr.mxu0 %v1656
        %1833 = vmatpush1.msra.mxu0 %v1655
        %1834 = vmatprep.subr.mxu0 %v1660
        %1835 = vmatpush1.msra.mxu0 %v1659
        %1836 = vmatprep.subr.mxu0 %v1664
        %1837 = vmatpush1.msra.mxu0 %v1663
        %1838 = vmatprep.subr.mxu0 %v1668
        %1839 = vmatpush1.msra.mxu0 %v1667
        %1840 = vmatprep.subr.mxu0 %v1672
        %1841 = vmatpush1.msra.mxu0 %v1671
        %1842 = vmatprep.subr.mxu0 %v1676
        %1843 = vmatpush1.msra.mxu0 %v1675
        %1844 = vmatprep.subr.mxu0 %v1680
        %1845 = vmatpush1.msra.mxu0 %v1679
        %1846 = vmatprep.subr.mxu0 %v1684
        %1847 = vmatpush1.msra.mxu0 %v1683
        %1848 = vmatprep.subr.mxu0 %v1688
        %1849 = vmatpush1.msra.mxu0 %v1687
        %1850 = vmatprep.subr.mxu0 %v1692
        %1851 = vmatpush1.msra.mxu0 %v1691
        %1852 = vmatprep.subr.mxu0 %v1696
        %1853 = vmatpush1.msra.mxu0 %v1695
        %1854 = vmatprep.mubr.f32.mxu0 %v1568
        %1855 = vmatmul.mubr.f32.gmra.mrb[0].mxu0 %v1567
        %v1856 = vpop.f32.mrb[0].mxu0
        %v1857 = vadd.f32 %v1710, %v1856
        %v1858 = vpop.f32.mrb[0].mxu0
        %v1859 = vadd.f32 %v1714, %v1858
        %1860 = vdwg.mxu0
        %v1861 = vmul.f32 %v1786, 0.5
        %v1862 = vmul.f32 %v1788, 0.5
        %v1863 = vmul.f32 %v1857, 0.5
        %v1864 = vmul.f32 %v1859, 0.5
        %v1865 = vmul.f32 %v1786, 0.70710677
        %v1866 = vmul.f32 %v1788, 0.70710677
        %v1867 = vmul.f32 %v1857, 0.70710677
        %v1868 = vmul.f32 %v1859, 0.70710677
        %v1869 = verf.f32.pop %v1865
        %v1870 = verf.f32.pop %v1866
        %v1871 = verf.f32.pop %v1867
        %v1872 = verf.f32.pop %v1868
        %v1873 = vadd.f32 %v1869, 1.0
        %v1874 = vadd.f32 %v1870, 1.0
        %v1875 = vadd.f32 %v1871, 1.0
        %v1876 = vadd.f32 %v1872, 1.0
        %v1877 = vmul.f32 %v1861, %v1873
        %v1878 = vmul.f32 %v1862, %v1874
        %v1879 = vmul.f32 %v1863, %v1875
        %v1880 = vmul.f32 %v1864, %v1876
        %v1881 = vld [vmem:[#allocation12] sm:$0xff]
        %v1882 = vld [vmem:[#allocation12 + $0x8] sm:$0xff]
        %v1883 = vld [vmem:[#allocation12 + $0x10] sm:$0xff]
        %v1884 = vld [vmem:[#allocation12 + $0x18] sm:$0xff]
        %v1885 = vld [vmem:[#allocation12 + $0x20] sm:$0xff]
        %v1886 = vld [vmem:[#allocation12 + $0x28] sm:$0xff]
        %v1887 = vld [vmem:[#allocation12 + $0x30] sm:$0xff]
        %v1888 = vld [vmem:[#allocation12 + $0x38] sm:$0xff]
        %v1889 = vld [vmem:[#allocation12 + $0x40] sm:$0xff]
        %v1890 = vld [vmem:[#allocation12 + $0x48] sm:$0xff]
        %v1891 = vld [vmem:[#allocation12 + $0x50] sm:$0xff]
        %v1892 = vld [vmem:[#allocation12 + $0x58] sm:$0xff]
        %v1893 = vld [vmem:[#allocation12 + $0x60] sm:$0xff]
        %v1894 = vld [vmem:[#allocation12 + $0x68] sm:$0xff]
        %v1895 = vld [vmem:[#allocation12 + $0x70] sm:$0xff]
        %v1896 = vld [vmem:[#allocation12 + $0x78] sm:$0xff]
        %v1897 = vld [vmem:[#allocation12 + $0x80] sm:$0xff]
        %v1898 = vld [vmem:[#allocation12 + $0x88] sm:$0xff]
        %v1899 = vld [vmem:[#allocation12 + $0x90] sm:$0xff]
        %v1900 = vld [vmem:[#allocation12 + $0x98] sm:$0xff]
        %v1901 = vld [vmem:[#allocation12 + $0xa0] sm:$0xff]
        %v1902 = vld [vmem:[#allocation12 + $0xa8] sm:$0xff]
        %v1903 = vld [vmem:[#allocation12 + $0xb0] sm:$0xff]
        %v1904 = vld [vmem:[#allocation12 + $0xb8] sm:$0xff]
        %v1905 = vld [vmem:[#allocation12 + $0xc0] sm:$0xff]
        %v1906 = vld [vmem:[#allocation12 + $0xc8] sm:$0xff]
        %v1907 = vld [vmem:[#allocation12 + $0xd0] sm:$0xff]
        %v1908 = vld [vmem:[#allocation12 + $0xd8] sm:$0xff]
        %v1909 = vld [vmem:[#allocation12 + $0xe0] sm:$0xff]
        %v1910 = vld [vmem:[#allocation12 + $0xe8] sm:$0xff]
        %v1911 = vld [vmem:[#allocation12 + $0xf0] sm:$0xff]
        %v1912 = vld [vmem:[#allocation12 + $0xf8] sm:$0xff]
        %v1913 = vld [vmem:[#allocation12 + $0x100] sm:$0xff]
        %v1914 = vld [vmem:[#allocation12 + $0x108] sm:$0xff]
        %v1915 = vld [vmem:[#allocation12 + $0x110] sm:$0xff]
        %v1916 = vld [vmem:[#allocation12 + $0x118] sm:$0xff]
        %v1917 = vld [vmem:[#allocation12 + $0x120] sm:$0xff]
        %v1918 = vld [vmem:[#allocation12 + $0x128] sm:$0xff]
        %v1919 = vld [vmem:[#allocation12 + $0x130] sm:$0xff]
        %v1920 = vld [vmem:[#allocation12 + $0x138] sm:$0xff]
        %v1921 = vld [vmem:[#allocation12 + $0x140] sm:$0xff]
        %v1922 = vld [vmem:[#allocation12 + $0x148] sm:$0xff]
        %v1923 = vld [vmem:[#allocation12 + $0x150] sm:$0xff]
        %v1924 = vld [vmem:[#allocation12 + $0x158] sm:$0xff]
        %v1925 = vld [vmem:[#allocation12 + $0x160] sm:$0xff]
        %v1926 = vld [vmem:[#allocation12 + $0x168] sm:$0xff]
        %v1927 = vld [vmem:[#allocation12 + $0x170] sm:$0xff]
        %v1928 = vld [vmem:[#allocation12 + $0x178] sm:$0xff]
        %v1929 = vld [vmem:[#allocation12 + $0x180] sm:$0xff]
        %v1930 = vld [vmem:[#allocation12 + $0x188] sm:$0xff]
        %v1931 = vld [vmem:[#allocation12 + $0x190] sm:$0xff]
        %v1932 = vld [vmem:[#allocation12 + $0x198] sm:$0xff]
        %v1933 = vld [vmem:[#allocation12 + $0x1a0] sm:$0xff]
        %v1934 = vld [vmem:[#allocation12 + $0x1a8] sm:$0xff]
        %v1935 = vld [vmem:[#allocation12 + $0x1b0] sm:$0xff]
        %v1936 = vld [vmem:[#allocation12 + $0x1b8] sm:$0xff]
        %v1937 = vld [vmem:[#allocation12 + $0x1c0] sm:$0xff]
        %v1938 = vld [vmem:[#allocation12 + $0x1c8] sm:$0xff]
        %v1939 = vld [vmem:[#allocation12 + $0x1d0] sm:$0xff]
        %v1940 = vld [vmem:[#allocation12 + $0x1d8] sm:$0xff]
        %v1941 = vld [vmem:[#allocation12 + $0x1e0] sm:$0xff]
        %v1942 = vld [vmem:[#allocation12 + $0x1e8] sm:$0xff]
        %v1943 = vld [vmem:[#allocation12 + $0x1f0] sm:$0xff]
        %v1944 = vld [vmem:[#allocation12 + $0x1f8] sm:$0xff]
        %v1945 = vld [vmem:[#allocation12 + $0x200] sm:$0xff]
        %v1946 = vld [vmem:[#allocation12 + $0x208] sm:$0xff]
        %v1947 = vld [vmem:[#allocation12 + $0x210] sm:$0xff]
        %v1948 = vld [vmem:[#allocation12 + $0x218] sm:$0xff]
        %v1949 = vld [vmem:[#allocation12 + $0x220] sm:$0xff]
        %v1950 = vld [vmem:[#allocation12 + $0x228] sm:$0xff]
        %v1951 = vld [vmem:[#allocation12 + $0x230] sm:$0xff]
        %v1952 = vld [vmem:[#allocation12 + $0x238] sm:$0xff]
        %v1953 = vld [vmem:[#allocation12 + $0x240] sm:$0xff]
        %v1954 = vld [vmem:[#allocation12 + $0x248] sm:$0xff]
        %v1955 = vld [vmem:[#allocation12 + $0x250] sm:$0xff]
        %v1956 = vld [vmem:[#allocation12 + $0x258] sm:$0xff]
        %v1957 = vld [vmem:[#allocation12 + $0x260] sm:$0xff]
        %v1958 = vld [vmem:[#allocation12 + $0x268] sm:$0xff]
        %v1959 = vld [vmem:[#allocation12 + $0x270] sm:$0xff]
        %v1960 = vld [vmem:[#allocation12 + $0x278] sm:$0xff]
        %v1961 = vld [vmem:[#allocation12 + $0x280] sm:$0xff]
        %v1962 = vld [vmem:[#allocation12 + $0x288] sm:$0xff]
        %v1963 = vld [vmem:[#allocation12 + $0x290] sm:$0xff]
        %v1964 = vld [vmem:[#allocation12 + $0x298] sm:$0xff]
        %v1965 = vld [vmem:[#allocation12 + $0x2a0] sm:$0xff]
        %v1966 = vld [vmem:[#allocation12 + $0x2a8] sm:$0xff]
        %v1967 = vld [vmem:[#allocation12 + $0x2b0] sm:$0xff]
        %v1968 = vld [vmem:[#allocation12 + $0x2b8] sm:$0xff]
        %v1969 = vld [vmem:[#allocation12 + $0x2c0] sm:$0xff]
        %v1970 = vld [vmem:[#allocation12 + $0x2c8] sm:$0xff]
        %v1971 = vld [vmem:[#allocation12 + $0x2d0] sm:$0xff]
        %v1972 = vld [vmem:[#allocation12 + $0x2d8] sm:$0xff]
        %v1973 = vld [vmem:[#allocation12 + $0x2e0] sm:$0xff]
        %v1974 = vld [vmem:[#allocation12 + $0x2e8] sm:$0xff]
        %v1975 = vld [vmem:[#allocation12 + $0x2f0] sm:$0xff]
        %v1976 = vld [vmem:[#allocation12 + $0x2f8] sm:$0xff]
        %v1977 = vld [vmem:[#allocation12 + $0x300] sm:$0xff]
        %v1978 = vld [vmem:[#allocation12 + $0x308] sm:$0xff]
        %v1979 = vld [vmem:[#allocation12 + $0x310] sm:$0xff]
        %v1980 = vld [vmem:[#allocation12 + $0x318] sm:$0xff]
        %v1981 = vld [vmem:[#allocation12 + $0x320] sm:$0xff]
        %v1982 = vld [vmem:[#allocation12 + $0x328] sm:$0xff]
        %v1983 = vld [vmem:[#allocation12 + $0x330] sm:$0xff]
        %v1984 = vld [vmem:[#allocation12 + $0x338] sm:$0xff]
        %v1985 = vld [vmem:[#allocation12 + $0x340] sm:$0xff]
        %v1986 = vld [vmem:[#allocation12 + $0x348] sm:$0xff]
        %v1987 = vld [vmem:[#allocation12 + $0x350] sm:$0xff]
        %v1988 = vld [vmem:[#allocation12 + $0x358] sm:$0xff]
        %v1989 = vld [vmem:[#allocation12 + $0x360] sm:$0xff]
        %v1990 = vld [vmem:[#allocation12 + $0x368] sm:$0xff]
        %v1991 = vld [vmem:[#allocation12 + $0x370] sm:$0xff]
        %v1992 = vld [vmem:[#allocation12 + $0x378] sm:$0xff]
        %v1993 = vld [vmem:[#allocation12 + $0x380] sm:$0xff]
        %v1994 = vld [vmem:[#allocation12 + $0x388] sm:$0xff]
        %v1995 = vld [vmem:[#allocation12 + $0x390] sm:$0xff]
        %v1996 = vld [vmem:[#allocation12 + $0x398] sm:$0xff]
        %v1997 = vld [vmem:[#allocation12 + $0x3a0] sm:$0xff]
        %v1998 = vld [vmem:[#allocation12 + $0x3a8] sm:$0xff]
        %v1999 = vld [vmem:[#allocation12 + $0x3b0] sm:$0xff]
        %v2000 = vld [vmem:[#allocation12 + $0x3b8] sm:$0xff]
        %v2001 = vld [vmem:[#allocation12 + $0x3c0] sm:$0xff]
        %v2002 = vld [vmem:[#allocation12 + $0x3c8] sm:$0xff]
        %v2003 = vld [vmem:[#allocation12 + $0x3d0] sm:$0xff]
        %v2004 = vld [vmem:[#allocation12 + $0x3d8] sm:$0xff]
        %v2005 = vld [vmem:[#allocation12 + $0x3e0] sm:$0xff]
        %v2006 = vld [vmem:[#allocation12 + $0x3e8] sm:$0xff]
        %v2007 = vld [vmem:[#allocation12 + $0x3f0] sm:$0xff]
        %v2008 = vld [vmem:[#allocation12 + $0x3f8] sm:$0xff]
        %v2009 = vld [vmem:[#allocation13] sm:$0x3]
        %v2011 = vlaneseq
        %v2012 = vshrl.u32 %v2011, 7
        %v2013 = vsub.s32 0, %v2012
        %v2014 = vrot.slane %v2009, %v2013
        %v2015 = vlaneseq
        %v2016 = vshrl.u32 %v2015, 7
        %v2017 = vsub.s32 1, %v2016
        %v2018 = vrot.slane %v2009, %v2017
        %2021 = vmatprep.subr.mxu0 %v1882
        %2022 = vmatpush1.msra.mxu0 %v1881
        %2023 = vmatprep.subr.mxu0 %v1884
        %2024 = vmatpush1.msra.mxu0 %v1883
        %2025 = vmatprep.subr.mxu0 %v1886
        %2026 = vmatpush1.msra.mxu0 %v1885
        %2027 = vmatprep.subr.mxu0 %v1888
        %2028 = vmatpush1.msra.mxu0 %v1887
        %2029 = vmatprep.subr.mxu0 %v1890
        %2030 = vmatpush1.msra.mxu0 %v1889
        %2031 = vmatprep.subr.mxu0 %v1892
        %2032 = vmatpush1.msra.mxu0 %v1891
        %2033 = vmatprep.subr.mxu0 %v1894
        %2034 = vmatpush1.msra.mxu0 %v1893
        %2035 = vmatprep.subr.mxu0 %v1896
        %2036 = vmatpush1.msra.mxu0 %v1895
        %2037 = vmatprep.subr.mxu0 %v1898
        %2038 = vmatpush1.msra.mxu0 %v1897
        %2039 = vmatprep.subr.mxu0 %v1900
        %2040 = vmatpush1.msra.mxu0 %v1899
        %2041 = vmatprep.subr.mxu0 %v1902
        %2042 = vmatpush1.msra.mxu0 %v1901
        %2043 = vmatprep.subr.mxu0 %v1904
        %2044 = vmatpush1.msra.mxu0 %v1903
        %2045 = vmatprep.subr.mxu0 %v1906
        %2046 = vmatpush1.msra.mxu0 %v1905
        %2047 = vmatprep.subr.mxu0 %v1908
        %2048 = vmatpush1.msra.mxu0 %v1907
        %2049 = vmatprep.subr.mxu0 %v1910
        %2050 = vmatpush1.msra.mxu0 %v1909
        %2051 = vmatprep.subr.mxu0 %v1912
        %2052 = vmatpush1.msra.mxu0 %v1911
        %2053 = vmatprep.subr.mxu0 %v1914
        %2054 = vmatpush1.msra.mxu0 %v1913
        %2055 = vmatprep.subr.mxu0 %v1916
        %2056 = vmatpush1.msra.mxu0 %v1915
        %2057 = vmatprep.subr.mxu0 %v1918
        %2058 = vmatpush1.msra.mxu0 %v1917
        %2059 = vmatprep.subr.mxu0 %v1920
        %2060 = vmatpush1.msra.mxu0 %v1919
        %2061 = vmatprep.subr.mxu0 %v1922
        %2062 = vmatpush1.msra.mxu0 %v1921
        %2063 = vmatprep.subr.mxu0 %v1924
        %2064 = vmatpush1.msra.mxu0 %v1923
        %2065 = vmatprep.subr.mxu0 %v1926
        %2066 = vmatpush1.msra.mxu0 %v1925
        %2067 = vmatprep.subr.mxu0 %v1928
        %2068 = vmatpush1.msra.mxu0 %v1927
        %2069 = vmatprep.subr.mxu0 %v1930
        %2070 = vmatpush1.msra.mxu0 %v1929
        %2071 = vmatprep.subr.mxu0 %v1932
        %2072 = vmatpush1.msra.mxu0 %v1931
        %2073 = vmatprep.subr.mxu0 %v1934
        %2074 = vmatpush1.msra.mxu0 %v1933
        %2075 = vmatprep.subr.mxu0 %v1936
        %2076 = vmatpush1.msra.mxu0 %v1935
        %2077 = vmatprep.subr.mxu0 %v1938
        %2078 = vmatpush1.msra.mxu0 %v1937
        %2079 = vmatprep.subr.mxu0 %v1940
        %2080 = vmatpush1.msra.mxu0 %v1939
        %2081 = vmatprep.subr.mxu0 %v1942
        %2082 = vmatpush1.msra.mxu0 %v1941
        %2083 = vmatprep.subr.mxu0 %v1944
        %2084 = vmatpush1.msra.mxu0 %v1943
        %2085 = vmatprep.mubr.f32.mxu0 %v1878
        %2086 = vmatmul.mubr.f32.gmra.mrb[0].mxu0 %v1877
        %v2087 = vpop.f32.mrb[0].mxu0
        %v2088 = vadd.f32 %v2014, %v2087
        %v2089 = vpop.f32.mrb[0].mxu0
        %v2090 = vadd.f32 %v2018, %v2089
        %2091 = vdwg.mxu0
        %2092 = vmatprep.subr.mxu0 %v1946
        %2093 = vmatpush1.msra.mxu0 %v1945
        %2094 = vmatprep.subr.mxu0 %v1948
        %2095 = vmatpush1.msra.mxu0 %v1947
        %2096 = vmatprep.subr.mxu0 %v1950
        %2097 = vmatpush1.msra.mxu0 %v1949
        %2098 = vmatprep.subr.mxu0 %v1952
        %2099 = vmatpush1.msra.mxu0 %v1951
        %2100 = vmatprep.subr.mxu0 %v1954
        %2101 = vmatpush1.msra.mxu0 %v1953
        %2102 = vmatprep.subr.mxu0 %v1956
        %2103 = vmatpush1.msra.mxu0 %v1955
        %2104 = vmatprep.subr.mxu0 %v1958
        %2105 = vmatpush1.msra.mxu0 %v1957
        %2106 = vmatprep.subr.mxu0 %v1960
        %2107 = vmatpush1.msra.mxu0 %v1959
        %2108 = vmatprep.subr.mxu0 %v1962
        %2109 = vmatpush1.msra.mxu0 %v1961
        %2110 = vmatprep.subr.mxu0 %v1964
        %2111 = vmatpush1.msra.mxu0 %v1963
        %2112 = vmatprep.subr.mxu0 %v1966
        %2113 = vmatpush1.msra.mxu0 %v1965
        %2114 = vmatprep.subr.mxu0 %v1968
        %2115 = vmatpush1.msra.mxu0 %v1967
        %2116 = vmatprep.subr.mxu0 %v1970
        %2117 = vmatpush1.msra.mxu0 %v1969
        %2118 = vmatprep.subr.mxu0 %v1972
        %2119 = vmatpush1.msra.mxu0 %v1971
        %2120 = vmatprep.subr.mxu0 %v1974
        %2121 = vmatpush1.msra.mxu0 %v1973
        %2122 = vmatprep.subr.mxu0 %v1976
        %2123 = vmatpush1.msra.mxu0 %v1975
        %2124 = vmatprep.subr.mxu0 %v1978
        %2125 = vmatpush1.msra.mxu0 %v1977
        %2126 = vmatprep.subr.mxu0 %v1980
        %2127 = vmatpush1.msra.mxu0 %v1979
        %2128 = vmatprep.subr.mxu0 %v1982
        %2129 = vmatpush1.msra.mxu0 %v1981
        %2130 = vmatprep.subr.mxu0 %v1984
        %2131 = vmatpush1.msra.mxu0 %v1983
        %2132 = vmatprep.subr.mxu0 %v1986
        %2133 = vmatpush1.msra.mxu0 %v1985
        %2134 = vmatprep.subr.mxu0 %v1988
        %2135 = vmatpush1.msra.mxu0 %v1987
        %2136 = vmatprep.subr.mxu0 %v1990
        %2137 = vmatpush1.msra.mxu0 %v1989
        %2138 = vmatprep.subr.mxu0 %v1992
        %2139 = vmatpush1.msra.mxu0 %v1991
        %2140 = vmatprep.subr.mxu0 %v1994
        %2141 = vmatpush1.msra.mxu0 %v1993
        %2142 = vmatprep.subr.mxu0 %v1996
        %2143 = vmatpush1.msra.mxu0 %v1995
        %2144 = vmatprep.subr.mxu0 %v1998
        %2145 = vmatpush1.msra.mxu0 %v1997
        %2146 = vmatprep.subr.mxu0 %v2000
        %2147 = vmatpush1.msra.mxu0 %v1999
        %2148 = vmatprep.subr.mxu0 %v2002
        %2149 = vmatpush1.msra.mxu0 %v2001
        %2150 = vmatprep.subr.mxu0 %v2004
        %2151 = vmatpush1.msra.mxu0 %v2003
        %2152 = vmatprep.subr.mxu0 %v2006
        %2153 = vmatpush1.msra.mxu0 %v2005
        %2154 = vmatprep.subr.mxu0 %v2008
        %2155 = vmatpush1.msra.mxu0 %v2007
        %2156 = vmatprep.mubr.f32.mxu0 %v1880
        %2157 = vmatmul.mubr.f32.gmra.mrb[0].mxu0 %v1879
        %v2158 = vpop.f32.mrb[0].mxu0
        %v2159 = vadd.f32 %v2088, %v2158
        %v2160 = vpop.f32.mrb[0].mxu0
        %v2161 = vadd.f32 %v2090, %v2160
        %2162 = vdwg.mxu0
        %v2163 = vadd.f32 %v1567, %v2159
        %v2164 = vadd.f32 %v1568, %v2161
        %v2165 = vld [vmem:[#allocation15] sm:$0x3]
        %v2166 = vld [vmem:[#allocation16] sm:$0x3]
        %v2167 = vadd.f32 %v2163, %v2164
        %2168 = vadd.xlane.f32.xlu0 %v2167
        %v2169 = vpop.xlane.xlu0 %2168
        %v2170 = vmul.f32 %v2169, %v1529
        %v2171 = vsub.f32 %v2163, %v2170
        %v2172 = vsub.f32 %v2164, %v2170
        %v2173 = vmul.f32 %v2171, %v2171
        %v2174 = vmul.f32 %v2172, %v2172
        %v2175 = vadd.f32 %v2173, %v2174
        %2176 = vadd.xlane.f32.xlu0 %v2175
        %v2177 = vpop.xlane.xlu0 %2176
        %v2178 = vmul.f32 %v2177, %v1529
        %v2179 = vadd.f32 %v2178, 1e-12
        %v2180 = vrsqrt.pop %v2179
        %v2181 = vmul.f32 %v2171, %v2180
        %v2182 = vmul.f32 %v2172, %v2180
        %v2184 = vlaneseq
        %v2185 = vshrl.u32 %v2184, 7
        %v2186 = vsub.s32 0, %v2185
        %v2187 = vrot.slane %v2165, %v2186
        %v2188 = vlaneseq
        %v2189 = vshrl.u32 %v2188, 7
        %v2190 = vsub.s32 1, %v2189
        %v2191 = vrot.slane %v2165, %v2190
        %v2194 = vmul.f32 %v2181, %v2187
        %v2195 = vmul.f32 %v2182, %v2191
        %v2197 = vlaneseq
        %v2198 = vshrl.u32 %v2197, 7
        %v2199 = vsub.s32 0, %v2198
        %v2200 = vrot.slane %v2166, %v2199
        %v2201 = vlaneseq
        %v2202 = vshrl.u32 %v2201, 7
        %v2203 = vsub.s32 1, %v2202
        %v2204 = vrot.slane %v2166, %v2203
        %v2207 = vadd.f32 %v2194, %v2200
        %v2208 = vadd.f32 %v2195, %v2204
        %2209 = vst [vmem:[%s613] sm:$0xff] %v2207
        %2210 = vst [vmem:[%s613 + $0x8] sm:$0xff] %v2208
        %p2211 = scmp.lt.s32.totalorder %s31, 1
        %s2212 = scalar_select %p2211, %s31, 1
        %s2213 = smul.addr %s2212, 2
        %s2214 = smul.addr %s2213, 8
        %s2215 = scalar_lea.vmem %s14, %s2214
        // Predicated region
        $region117: #{sentiment_classifier_forward.5} parent=75 // pred_check
          %p2216 = pneg %p353
        $region118: #{sentiment_classifier_forward.5} parent=75 // pred_check_branch
          %2218 = sbr.rel (%p2216) target = $region120
        $region119: #{sentiment_classifier_forward.5} parent=75 // pred_region
          _
        $region120: #{sentiment_classifier_forward.5} parent=75 // pred_fallthru
          _
      $region76: #{sentiment_classifier_forward.5} parent=5 // pred_fallthru
        _
      %p2219 = scmp.le.s32.totalorder 2, %s26
      // Predicated region
      $region121: #{sentiment_classifier_forward.5} parent=5 // pred_check
        %p2220 = pneg %p2219
      $region122: #{sentiment_classifier_forward.5} parent=5 // pred_check_branch
        %2222 = sbr.rel (%p2220) target = $region124
      $region123: #{sentiment_classifier_forward.5} parent=5 // pred_region
        %s2223 = ssub.s32 %s26, 2
        // Predicated region
        $region125: #{sentiment_classifier_forward.5} parent=123 // pred_check
          %p2224 = pneg %p359
        $region126: #{sentiment_classifier_forward.5} parent=123 // pred_check_branch
          %2226 = sbr.rel (%p2224) target = $region128
        $region127: #{sentiment_classifier_forward.5} parent=123 // pred_region
          %p2227 = scmp.lt.s32.totalorder %s32, 1
          %s2228 = scalar_select %p2227, %s32, 1
          %s2229 = smul.addr %s2228, 2
          %s2230 = smul.addr %s2229, 8
          %s2231 = scalar_lea.vmem %s14, %s2230
        $region128: #{sentiment_classifier_forward.5} parent=123 // pred_fallthru
          _
      $region124: #{sentiment_classifier_forward.5} parent=5 // pred_fallthru
        _
    $region6: #{sentiment_classifier_forward.5} parent=1 // loop_footer
      %s30 = sadd.s32 1, %s26
    $region7: #{sentiment_classifier_forward.5} parent=1 // loop_footer_branch
      %25 = sbr.rel target = $region3
    $region8: #{sentiment_classifier_forward.5} parent=1 // loop_exit
      _
    %2232 = vsyncpa [#allocation3], 1
    %s2233 = scalar_lea.sflag [#allocation3], 1
    %2234 = vsyncpa %s2233, 1
    %2235 = vsyncpa [#allocation5], 1
    %2236 = vsyncpa [#allocation8], 1
    %2237 = vsyncpa [#allocation11], 1
    %2238 = vsyncpa [#allocation14], 1
    %2239 = vsyncpa [#allocation17], 1

// kernel: sentiment_classifier_forward.6
$region0: #{sentiment_classifier_forward.6}
  #allocation0 [shape = 'u32[]', space=smem, size = 0x4, offset = 0x4, fixed_abs, tag = 'smem constant byte address 0x4 - core index']
  #allocation1 [shape = 'u32[144,128]{1,0:T(1,128)}', space=vmem, size = 0x12000, scoped, tag = 'internal scratch']
  %s0 = inlined_call_operand.vmem [shape: f32[2,8,256], index: 0, kind: input, shape index: {}]
  %s1 = inlined_call_operand.vmem [shape: f32[2,1,8], index: 1, kind: input, shape index: {}]
  %s2 = inlined_call_operand.vmem [shape: f32[256,768], index: 2, kind: input, shape index: {}]
  %s3 = inlined_call_operand.vmem [shape: f32[1,768], index: 3, kind: input, shape index: {}]
  %s4 = inlined_call_operand.vmem [shape: f32[256,256], index: 4, kind: input, shape index: {}]
  %s5 = inlined_call_operand.vmem [shape: f32[1,256], index: 5, kind: input, shape index: {}]
  %s6 = inlined_call_operand.vmem [shape: f32[1,256], index: 6, kind: input, shape index: {}]
  %s7 = inlined_call_operand.vmem [shape: f32[1,256], index: 7, kind: input, shape index: {}]
  %s8 = inlined_call_operand.vmem [shape: f32[256,512], index: 8, kind: input, shape index: {}]
  %s9 = inlined_call_operand.vmem [shape: f32[1,512], index: 9, kind: input, shape index: {}]
  %s10 = inlined_call_operand.vmem [shape: f32[512,256], index: 10, kind: input, shape index: {}]
  %s11 = inlined_call_operand.vmem [shape: f32[1,256], index: 11, kind: input, shape index: {}]
  %s12 = inlined_call_operand.vmem [shape: f32[1,256], index: 12, kind: input, shape index: {}]
  %s13 = inlined_call_operand.vmem [shape: f32[1,256], index: 13, kind: input, shape index: {}]
  %s14 = inlined_call_operand.vmem [shape: f32[2,8,256], index: 14, kind: output, shape index: {}]
  %s15 = sld [smem:[#allocation0]]
  $region89: #{sentiment_classifier_forward.6} parent=0
    _
  %s17 = ssub.s32 1, %s15
  %s18 = scalar_select 0, %s17, %s15
  loop: start=0, step=1, limit=4
  $region2: #{sentiment_classifier_forward.6} parent=0 // loop_pre_header
    _
  $region3: #{sentiment_classifier_forward.6} parent=0 // loop_header
    %s20 = sphi 0, %s24
    %p21 = scmp.ge.s32.totalorder %s20, 4
    %s30 = sphi 0, %s32
    %s33 = sphi 0, %s30
    %s34 = sphi 0, %s33
    %s50 = sphi 0, %s34
    %s56 = sphi 0, %s58
    %s59 = sphi 0, %s56
    %s60 = sphi 0, %s59
    %s76 = sphi 0, %s60
    %s80 = sphi 0, %s80
    %s82 = sphi 0, %s80
    %s83 = sphi 0, %s82
    %s97 = sphi 0, %s83
    %s101 = sphi 0, %s101
    %s103 = sphi 0, %s101
    %s104 = sphi 0, %s103
    %s118 = sphi 0, %s104
    %s122 = sphi 0, %s122
    %s124 = sphi 0, %s122
    %s125 = sphi 0, %s124
    %s139 = sphi 0, %s125
    %s143 = sphi 0, %s143
    %s145 = sphi 0, %s143
    %s146 = sphi 0, %s145
    %s160 = sphi 0, %s146
    %s164 = sphi 0, %s164
    %s166 = sphi 0, %s164
    %s167 = sphi 0, %s166
    %s181 = sphi 0, %s167
    %s185 = sphi 0, %s185
    %s187 = sphi 0, %s185
    %s188 = sphi 0, %s187
    %s202 = sphi 0, %s188
    %s206 = sphi 0, %s206
    %s208 = sphi 0, %s206
    %s209 = sphi 0, %s208
    %s223 = sphi 0, %s209
    %s227 = sphi 0, %s227
    %s229 = sphi 0, %s227
    %s230 = sphi 0, %s229
    %s244 = sphi 0, %s230
    %s248 = sphi 0, %s248
    %s250 = sphi 0, %s248
    %s251 = sphi 0, %s250
    %s265 = sphi 0, %s251
    %s269 = sphi 0, %s269
    %s271 = sphi 0, %s269
    %s272 = sphi 0, %s271
    %s286 = sphi 0, %s272
    %s290 = sphi 0, %s290
    %s292 = sphi 0, %s290
    %s293 = sphi 0, %s292
    %s307 = sphi 0, %s293
    %s311 = sphi 0, %s311
    %s313 = sphi 0, %s311
    %s314 = sphi 0, %s313
    %s328 = sphi 0, %s314
    %s334 = sphi 0, %s336
    %s337 = sphi 0, %s334
    %s338 = sphi 0, %s337
    %s354 = sphi 0, %s338
  $region4: #{sentiment_classifier_forward.6} parent=0 // loop_header_branch
    %23 = sbr.rel (%p21) target = $region8
  $region5: #{sentiment_classifier_forward.6} parent=0 // loop_body
    %s25 = ssub.s32 %s20, 1
    %s26 = ssub.s32 %s20, 2
    %s27 = sadd.s32 %s20, 1
    %s28 = ssub.s32 %s20, %s27
    %p29 = scmp.eq.s32.totalorder %s28, 0
    %s31 = sadd.s32 %s30, 1
    %s32 = scalar_select %p29, %s30, %s31
    %p35 = pneg %p29
    %p36 = scmp.eq.s32.totalorder %s20, 1
    %p37 = por %p35, %p36
    %p38 = scmp.ne.s32.totalorder %s30, %s33
    %p39 = scmp.eq.s32.totalorder %s20, 0
    %p40 = por %p38, %p39
    %p41 = scmp.ne.s32.totalorder %s30, %s33
    %p42 = scmp.eq.s32.totalorder %s25, 1
    %p43 = por %p41, %p42
    %p44 = scmp.ne.s32.totalorder %s33, %s34
    %p45 = scmp.eq.s32.totalorder %s25, 0
    %p46 = por %p44, %p45
    %p47 = scmp.ne.s32.totalorder %s33, %s34
    %p48 = scmp.eq.s32.totalorder %s26, 1
    %p49 = por %p47, %p48
    %p51 = scmp.ne.s32.totalorder %s34, %s50
    %p52 = scmp.eq.s32.totalorder %s26, 0
    %p53 = por %p51, %p52
    %s54 = ssub.s32 %s20, %s27
    %p55 = scmp.eq.s32.totalorder %s54, 0
    %s57 = sadd.s32 %s56, 1
    %s58 = scalar_select %p55, %s56, %s57
    %p61 = pneg %p55
    %p62 = scmp.eq.s32.totalorder %s20, 1
    %p63 = por %p61, %p62
    %p64 = scmp.ne.s32.totalorder %s56, %s59
    %p65 = scmp.eq.s32.totalorder %s20, 0
    %p66 = por %p64, %p65
    %p67 = scmp.ne.s32.totalorder %s56, %s59
    %p68 = scmp.eq.s32.totalorder %s25, 1
    %p69 = por %p67, %p68
    %p70 = scmp.ne.s32.totalorder %s59, %s60
    %p71 = scmp.eq.s32.totalorder %s25, 0
    %p72 = por %p70, %p71
    %p73 = scmp.ne.s32.totalorder %s59, %s60
    %p74 = scmp.eq.s32.totalorder %s26, 1
    %p75 = por %p73, %p74
    %p77 = scmp.ne.s32.totalorder %s60, %s76
    %p78 = scmp.eq.s32.totalorder %s26, 0
    %p79 = por %p77, %p78
    %s81 = sadd.s32 %s80, 1
    %p84 = scmp.eq.s32.totalorder %s20, 1
    %p85 = scmp.ne.s32.totalorder %s80, %s82
    %p86 = scmp.eq.s32.totalorder %s20, 0
    %p87 = por %p85, %p86
    %p88 = scmp.ne.s32.totalorder %s80, %s82
    %p89 = scmp.eq.s32.totalorder %s25, 1
    %p90 = por %p88, %p89
    %p91 = scmp.ne.s32.totalorder %s82, %s83
    %p92 = scmp.eq.s32.totalorder %s25, 0
    %p93 = por %p91, %p92
    %p94 = scmp.ne.s32.totalorder %s82, %s83
    %p95 = scmp.eq.s32.totalorder %s26, 1
    %p96 = por %p94, %p95
    %p98 = scmp.ne.s32.totalorder %s83, %s97
    %p99 = scmp.eq.s32.totalorder %s26, 0
    %p100 = por %p98, %p99
    %s102 = sadd.s32 %s101, 1
    %p105 = scmp.eq.s32.totalorder %s20, 1
    %p106 = scmp.ne.s32.totalorder %s101, %s103
    %p107 = scmp.eq.s32.totalorder %s20, 0
    %p108 = por %p106, %p107
    %p109 = scmp.ne.s32.totalorder %s101, %s103
    %p110 = scmp.eq.s32.totalorder %s25, 1
    %p111 = por %p109, %p110
    %p112 = scmp.ne.s32.totalorder %s103, %s104
    %p113 = scmp.eq.s32.totalorder %s25, 0
    %p114 = por %p112, %p113
    %p115 = scmp.ne.s32.totalorder %s103, %s104
    %p116 = scmp.eq.s32.totalorder %s26, 1
    %p117 = por %p115, %p116
    %p119 = scmp.ne.s32.totalorder %s104, %s118
    %p120 = scmp.eq.s32.totalorder %s26, 0
    %p121 = por %p119, %p120
    %s123 = sadd.s32 %s122, 1
    %p126 = scmp.eq.s32.totalorder %s20, 1
    %p127 = scmp.ne.s32.totalorder %s122, %s124
    %p128 = scmp.eq.s32.totalorder %s20, 0
    %p129 = por %p127, %p128
    %p130 = scmp.ne.s32.totalorder %s122, %s124
    %p131 = scmp.eq.s32.totalorder %s25, 1
    %p132 = por %p130, %p131
    %p133 = scmp.ne.s32.totalorder %s124, %s125
    %p134 = scmp.eq.s32.totalorder %s25, 0
    %p135 = por %p133, %p134
    %p136 = scmp.ne.s32.totalorder %s124, %s125
    %p137 = scmp.eq.s32.totalorder %s26, 1
    %p138 = por %p136, %p137
    %p140 = scmp.ne.s32.totalorder %s125, %s139
    %p141 = scmp.eq.s32.totalorder %s26, 0
    %p142 = por %p140, %p141
    %s144 = sadd.s32 %s143, 1
    %p147 = scmp.eq.s32.totalorder %s20, 1
    %p148 = scmp.ne.s32.totalorder %s143, %s145
    %p149 = scmp.eq.s32.totalorder %s20, 0
    %p150 = por %p148, %p149
    %p151 = scmp.ne.s32.totalorder %s143, %s145
    %p152 = scmp.eq.s32.totalorder %s25, 1
    %p153 = por %p151, %p152
    %p154 = scmp.ne.s32.totalorder %s145, %s146
    %p155 = scmp.eq.s32.totalorder %s25, 0
    %p156 = por %p154, %p155
    %p157 = scmp.ne.s32.totalorder %s145, %s146
    %p158 = scmp.eq.s32.totalorder %s26, 1
    %p159 = por %p157, %p158
    %p161 = scmp.ne.s32.totalorder %s146, %s160
    %p162 = scmp.eq.s32.totalorder %s26, 0
    %p163 = por %p161, %p162
    %s165 = sadd.s32 %s164, 1
    %p168 = scmp.eq.s32.totalorder %s20, 1
    %p169 = scmp.ne.s32.totalorder %s164, %s166
    %p170 = scmp.eq.s32.totalorder %s20, 0
    %p171 = por %p169, %p170
    %p172 = scmp.ne.s32.totalorder %s164, %s166
    %p173 = scmp.eq.s32.totalorder %s25, 1
    %p174 = por %p172, %p173
    %p175 = scmp.ne.s32.totalorder %s166, %s167
    %p176 = scmp.eq.s32.totalorder %s25, 0
    %p177 = por %p175, %p176
    %p178 = scmp.ne.s32.totalorder %s166, %s167
    %p179 = scmp.eq.s32.totalorder %s26, 1
    %p180 = por %p178, %p179
    %p182 = scmp.ne.s32.totalorder %s167, %s181
    %p183 = scmp.eq.s32.totalorder %s26, 0
    %p184 = por %p182, %p183
    %s186 = sadd.s32 %s185, 1
    %p189 = scmp.eq.s32.totalorder %s20, 1
    %p190 = scmp.ne.s32.totalorder %s185, %s187
    %p191 = scmp.eq.s32.totalorder %s20, 0
    %p192 = por %p190, %p191
    %p193 = scmp.ne.s32.totalorder %s185, %s187
    %p194 = scmp.eq.s32.totalorder %s25, 1
    %p195 = por %p193, %p194
    %p196 = scmp.ne.s32.totalorder %s187, %s188
    %p197 = scmp.eq.s32.totalorder %s25, 0
    %p198 = por %p196, %p197
    %p199 = scmp.ne.s32.totalorder %s187, %s188
    %p200 = scmp.eq.s32.totalorder %s26, 1
    %p201 = por %p199, %p200
    %p203 = scmp.ne.s32.totalorder %s188, %s202
    %p204 = scmp.eq.s32.totalorder %s26, 0
    %p205 = por %p203, %p204
    %s207 = sadd.s32 %s206, 1
    %p210 = scmp.eq.s32.totalorder %s20, 1
    %p211 = scmp.ne.s32.totalorder %s206, %s208
    %p212 = scmp.eq.s32.totalorder %s20, 0
    %p213 = por %p211, %p212
    %p214 = scmp.ne.s32.totalorder %s206, %s208
    %p215 = scmp.eq.s32.totalorder %s25, 1
    %p216 = por %p214, %p215
    %p217 = scmp.ne.s32.totalorder %s208, %s209
    %p218 = scmp.eq.s32.totalorder %s25, 0
    %p219 = por %p217, %p218
    %p220 = scmp.ne.s32.totalorder %s208, %s209
    %p221 = scmp.eq.s32.totalorder %s26, 1
    %p222 = por %p220, %p221
    %p224 = scmp.ne.s32.totalorder %s209, %s223
    %p225 = scmp.eq.s32.totalorder %s26, 0
    %p226 = por %p224, %p225
    %s228 = sadd.s32 %s227, 1
    %p231 = scmp.eq.s32.totalorder %s20, 1
    %p232 = scmp.ne.s32.totalorder %s227, %s229
    %p233 = scmp.eq.s32.totalorder %s20, 0
    %p234 = por %p232, %p233
    %p235 = scmp.ne.s32.totalorder %s227, %s229
    %p236 = scmp.eq.s32.totalorder %s25, 1
    %p237 = por %p235, %p236
    %p238 = scmp.ne.s32.totalorder %s229, %s230
    %p239 = scmp.eq.s32.totalorder %s25, 0
    %p240 = por %p238, %p239
    %p241 = scmp.ne.s32.totalorder %s229, %s230
    %p242 = scmp.eq.s32.totalorder %s26, 1
    %p243 = por %p241, %p242
    %p245 = scmp.ne.s32.totalorder %s230, %s244
    %p246 = scmp.eq.s32.totalorder %s26, 0
    %p247 = por %p245, %p246
    %s249 = sadd.s32 %s248, 1
    %p252 = scmp.eq.s32.totalorder %s20, 1
    %p253 = scmp.ne.s32.totalorder %s248, %s250
    %p254 = scmp.eq.s32.totalorder %s20, 0
    %p255 = por %p253, %p254
    %p256 = scmp.ne.s32.totalorder %s248, %s250
    %p257 = scmp.eq.s32.totalorder %s25, 1
    %p258 = por %p256, %p257
    %p259 = scmp.ne.s32.totalorder %s250, %s251
    %p260 = scmp.eq.s32.totalorder %s25, 0
    %p261 = por %p259, %p260
    %p262 = scmp.ne.s32.totalorder %s250, %s251
    %p263 = scmp.eq.s32.totalorder %s26, 1
    %p264 = por %p262, %p263
    %p266 = scmp.ne.s32.totalorder %s251, %s265
    %p267 = scmp.eq.s32.totalorder %s26, 0
    %p268 = por %p266, %p267
    %s270 = sadd.s32 %s269, 1
    %p273 = scmp.eq.s32.totalorder %s20, 1
    %p274 = scmp.ne.s32.totalorder %s269, %s271
    %p275 = scmp.eq.s32.totalorder %s20, 0
    %p276 = por %p274, %p275
    %p277 = scmp.ne.s32.totalorder %s269, %s271
    %p278 = scmp.eq.s32.totalorder %s25, 1
    %p279 = por %p277, %p278
    %p280 = scmp.ne.s32.totalorder %s271, %s272
    %p281 = scmp.eq.s32.totalorder %s25, 0
    %p282 = por %p280, %p281
    %p283 = scmp.ne.s32.totalorder %s271, %s272
    %p284 = scmp.eq.s32.totalorder %s26, 1
    %p285 = por %p283, %p284
    %p287 = scmp.ne.s32.totalorder %s272, %s286
    %p288 = scmp.eq.s32.totalorder %s26, 0
    %p289 = por %p287, %p288
    %s291 = sadd.s32 %s290, 1
    %p294 = scmp.eq.s32.totalorder %s20, 1
    %p295 = scmp.ne.s32.totalorder %s290, %s292
    %p296 = scmp.eq.s32.totalorder %s20, 0
    %p297 = por %p295, %p296
    %p298 = scmp.ne.s32.totalorder %s290, %s292
    %p299 = scmp.eq.s32.totalorder %s25, 1
    %p300 = por %p298, %p299
    %p301 = scmp.ne.s32.totalorder %s292, %s293
    %p302 = scmp.eq.s32.totalorder %s25, 0
    %p303 = por %p301, %p302
    %p304 = scmp.ne.s32.totalorder %s292, %s293
    %p305 = scmp.eq.s32.totalorder %s26, 1
    %p306 = por %p304, %p305
    %p308 = scmp.ne.s32.totalorder %s293, %s307
    %p309 = scmp.eq.s32.totalorder %s26, 0
    %p310 = por %p308, %p309
    %s312 = sadd.s32 %s311, 1
    %p315 = scmp.eq.s32.totalorder %s20, 1
    %p316 = scmp.ne.s32.totalorder %s311, %s313
    %p317 = scmp.eq.s32.totalorder %s20, 0
    %p318 = por %p316, %p317
    %p319 = scmp.ne.s32.totalorder %s311, %s313
    %p320 = scmp.eq.s32.totalorder %s25, 1
    %p321 = por %p319, %p320
    %p322 = scmp.ne.s32.totalorder %s313, %s314
    %p323 = scmp.eq.s32.totalorder %s25, 0
    %p324 = por %p322, %p323
    %p325 = scmp.ne.s32.totalorder %s313, %s314
    %p326 = scmp.eq.s32.totalorder %s26, 1
    %p327 = por %p325, %p326
    %p329 = scmp.ne.s32.totalorder %s314, %s328
    %p330 = scmp.eq.s32.totalorder %s26, 0
    %p331 = por %p329, %p330
    %s332 = ssub.s32 %s20, %s27
    %p333 = scmp.eq.s32.totalorder %s332, 0
    %s335 = sadd.s32 %s334, 1
    %s336 = scalar_select %p333, %s334, %s335
    %p339 = pneg %p333
    %p340 = scmp.eq.s32.totalorder %s20, 1
    %p341 = por %p339, %p340
    %p342 = scmp.ne.s32.totalorder %s334, %s337
    %p343 = scmp.eq.s32.totalorder %s20, 0
    %p344 = por %p342, %p343
    %p345 = scmp.ne.s32.totalorder %s334, %s337
    %p346 = scmp.eq.s32.totalorder %s25, 1
    %p347 = por %p345, %p346
    %p348 = scmp.ne.s32.totalorder %s337, %s338
    %p349 = scmp.eq.s32.totalorder %s25, 0
    %p350 = por %p348, %p349
    %p351 = scmp.ne.s32.totalorder %s337, %s338
    %p352 = scmp.eq.s32.totalorder %s26, 1
    %p353 = por %p351, %p352
    %p355 = scmp.ne.s32.totalorder %s338, %s354
    %p356 = scmp.eq.s32.totalorder %s26, 0
    %p357 = por %p355, %p356
    %p358 = scmp.le.s32.totalorder 1, %s20
    %p359 = scmp.lt.s32.totalorder %s20, 3
    %p360 = pnand %p358, %p359
    %p361 = pneg %p360
    // Predicated region
    $region9: #{sentiment_classifier_forward.6} parent=5 // pred_check
      _
    $region10: #{sentiment_classifier_forward.6} parent=5 // pred_check_branch
      %363 = sbr.rel (%p360) target = $region12
    $region11: #{sentiment_classifier_forward.6} parent=5 // pred_region
      %s364 = ssub.s32 %s20, 1
      // Predicated region
      $region13: #{sentiment_classifier_forward.6} parent=11 // pred_check
        %p365 = pneg %p93
      $region14: #{sentiment_classifier_forward.6} parent=11 // pred_check_branch
        %367 = sbr.rel (%p365) target = $region16
      $region15: #{sentiment_classifier_forward.6} parent=11 // pred_region
        _
      $region16: #{sentiment_classifier_forward.6} parent=11 // pred_fallthru
        _
      // Predicated region
      $region17: #{sentiment_classifier_forward.6} parent=11 // pred_check
        %p368 = pneg %p114
      $region18: #{sentiment_classifier_forward.6} parent=11 // pred_check_branch
        %370 = sbr.rel (%p368) target = $region20
      $region19: #{sentiment_classifier_forward.6} parent=11 // pred_region
        _
      $region20: #{sentiment_classifier_forward.6} parent=11 // pred_fallthru
        _
      // Predicated region
      $region21: #{sentiment_classifier_forward.6} parent=11 // pred_check
        %p371 = pneg %p135
      $region22: #{sentiment_classifier_forward.6} parent=11 // pred_check_branch
        %373 = sbr.rel (%p371) target = $region24
      $region23: #{sentiment_classifier_forward.6} parent=11 // pred_region
        _
      $region24: #{sentiment_classifier_forward.6} parent=11 // pred_fallthru
        _
      // Predicated region
      $region25: #{sentiment_classifier_forward.6} parent=11 // pred_check
        %p374 = pneg %p156
      $region26: #{sentiment_classifier_forward.6} parent=11 // pred_check_branch
        %376 = sbr.rel (%p374) target = $region28
      $region27: #{sentiment_classifier_forward.6} parent=11 // pred_region
        _
      $region28: #{sentiment_classifier_forward.6} parent=11 // pred_fallthru
        _
      // Predicated region
      $region29: #{sentiment_classifier_forward.6} parent=11 // pred_check
        %p377 = pneg %p177
      $region30: #{sentiment_classifier_forward.6} parent=11 // pred_check_branch
        %379 = sbr.rel (%p377) target = $region32
      $region31: #{sentiment_classifier_forward.6} parent=11 // pred_region
        _
      $region32: #{sentiment_classifier_forward.6} parent=11 // pred_fallthru
        _
      // Predicated region
      $region33: #{sentiment_classifier_forward.6} parent=11 // pred_check
        %p380 = pneg %p198
      $region34: #{sentiment_classifier_forward.6} parent=11 // pred_check_branch
        %382 = sbr.rel (%p380) target = $region36
      $region35: #{sentiment_classifier_forward.6} parent=11 // pred_region
        _
      $region36: #{sentiment_classifier_forward.6} parent=11 // pred_fallthru
        _
      // Predicated region
      $region37: #{sentiment_classifier_forward.6} parent=11 // pred_check
        %p383 = pneg %p219
      $region38: #{sentiment_classifier_forward.6} parent=11 // pred_check_branch
        %385 = sbr.rel (%p383) target = $region40
      $region39: #{sentiment_classifier_forward.6} parent=11 // pred_region
        _
      $region40: #{sentiment_classifier_forward.6} parent=11 // pred_fallthru
        _
      // Predicated region
      $region41: #{sentiment_classifier_forward.6} parent=11 // pred_check
        %p386 = pneg %p240
      $region42: #{sentiment_classifier_forward.6} parent=11 // pred_check_branch
        %388 = sbr.rel (%p386) target = $region44
      $region43: #{sentiment_classifier_forward.6} parent=11 // pred_region
        _
      $region44: #{sentiment_classifier_forward.6} parent=11 // pred_fallthru
        _
      // Predicated region
      $region45: #{sentiment_classifier_forward.6} parent=11 // pred_check
        %p389 = pneg %p261
      $region46: #{sentiment_classifier_forward.6} parent=11 // pred_check_branch
        %391 = sbr.rel (%p389) target = $region48
      $region47: #{sentiment_classifier_forward.6} parent=11 // pred_region
        _
      $region48: #{sentiment_classifier_forward.6} parent=11 // pred_fallthru
        _
      // Predicated region
      $region49: #{sentiment_classifier_forward.6} parent=11 // pred_check
        %p392 = pneg %p282
      $region50: #{sentiment_classifier_forward.6} parent=11 // pred_check_branch
        %394 = sbr.rel (%p392) target = $region52
      $region51: #{sentiment_classifier_forward.6} parent=11 // pred_region
        _
      $region52: #{sentiment_classifier_forward.6} parent=11 // pred_fallthru
        _
      // Predicated region
      $region53: #{sentiment_classifier_forward.6} parent=11 // pred_check
        %p395 = pneg %p303
      $region54: #{sentiment_classifier_forward.6} parent=11 // pred_check_branch
        %397 = sbr.rel (%p395) target = $region56
      $region55: #{sentiment_classifier_forward.6} parent=11 // pred_region
        _
      $region56: #{sentiment_classifier_forward.6} parent=11 // pred_fallthru
        _
      // Predicated region
      $region57: #{sentiment_classifier_forward.6} parent=11 // pred_check
        %p398 = pneg %p324
      $region58: #{sentiment_classifier_forward.6} parent=11 // pred_check_branch
        %400 = sbr.rel (%p398) target = $region60
      $region59: #{sentiment_classifier_forward.6} parent=11 // pred_region
        _
      $region60: #{sentiment_classifier_forward.6} parent=11 // pred_fallthru
        _
    $region12: #{sentiment_classifier_forward.6} parent=5 // pred_fallthru
      _
    %p401 = scmp.lt.s32.totalorder %s20, 2
    // Predicated region
    $region61: #{sentiment_classifier_forward.6} parent=5 // pred_check
      %p402 = pneg %p401
    $region62: #{sentiment_classifier_forward.6} parent=5 // pred_check_branch
      %404 = sbr.rel (%p402) target = $region64
    $region63: #{sentiment_classifier_forward.6} parent=5 // pred_region
      // Predicated region
      $region65: #{sentiment_classifier_forward.6} parent=63 // pred_check
        %p405 = pneg %p40
      $region66: #{sentiment_classifier_forward.6} parent=63 // pred_check_branch
        %407 = sbr.rel (%p405) target = $region68
      $region67: #{sentiment_classifier_forward.6} parent=63 // pred_region
        %p408 = scmp.lt.s32.totalorder %s20, 1
        %s409 = scalar_select %p408, %s20, 1
        %s410 = smul.addr %s409, 2
        %s411 = smul.addr %s410, 8
        %s412 = scalar_lea.vmem %s0, %s411
      $region68: #{sentiment_classifier_forward.6} parent=63 // pred_fallthru
        _
      // Predicated region
      $region69: #{sentiment_classifier_forward.6} parent=63 // pred_check
        %p413 = pneg %p66
      $region70: #{sentiment_classifier_forward.6} parent=63 // pred_check_branch
        %415 = sbr.rel (%p413) target = $region72
      $region71: #{sentiment_classifier_forward.6} parent=63 // pred_region
        %p416 = scmp.lt.s32.totalorder %s20, 1
        %s417 = scalar_select %p416, %s20, 1
        %s418 = scalar_lea.vmem %s1, %s417
      $region72: #{sentiment_classifier_forward.6} parent=63 // pred_fallthru
        _
    $region64: #{sentiment_classifier_forward.6} parent=5 // pred_fallthru
      _
    %p419 = scmp.le.s32.totalorder 1, %s20
    %p420 = scmp.lt.s32.totalorder %s20, 3
    %p421 = pnand %p419, %p420
    %p422 = pneg %p421
    // Predicated region
    $region73: #{sentiment_classifier_forward.6} parent=5 // pred_check
      _
    $region74: #{sentiment_classifier_forward.6} parent=5 // pred_check_branch
      %424 = sbr.rel (%p421) target = $region76
    $region75: #{sentiment_classifier_forward.6} parent=5 // pred_region
      %s425 = ssub.s32 %s20, 1
      %p426 = scmp.lt.s32.totalorder %s25, 1
      %s427 = scalar_select %p426, %s25, 1
      %s428 = smul.addr %s427, 2
      %s429 = smul.addr %s428, 8
      %s430 = scalar_lea.vmem %s0, %s429
      %p431 = pneg %p46
      %p432 = pneg %p43
      %p433 = scmp.lt.s32.totalorder %s25, 1
      %s434 = scalar_select %p433, %s25, 1
      %s435 = scalar_lea.vmem %s1, %s434
      %p436 = pneg %p72
      %p437 = pneg %p69
      %p438 = pneg %p93
      %p439 = pneg %p90
      %p440 = pneg %p114
      %p441 = pneg %p111
      %p442 = pneg %p135
      %p443 = pneg %p132
      %p444 = pneg %p156
      %p445 = pneg %p153
      %p446 = pneg %p177
      %p447 = pneg %p174
      %p448 = pneg %p198
      %p449 = pneg %p195
      %p450 = pneg %p219
      %p451 = pneg %p216
      %p452 = pneg %p240
      %p453 = pneg %p237
      %p454 = pneg %p261
      %p455 = pneg %p258
      %p456 = pneg %p282
      %p457 = pneg %p279
      %p458 = pneg %p303
      %p459 = pneg %p300
      %p460 = pneg %p324
      %p461 = pneg %p321
      %p462 = pneg %p350
      %p463 = pneg %p347
      %p464 = scmp.lt.s32.totalorder %s25, 1
      %s465 = scalar_select %p464, %s25, 1
      %s466 = smul.addr %s465, 2
      %s467 = smul.addr %s466, 8
      %s468 = scalar_lea.vmem %s14, %s467
      %p469 = scmp.lt.s32.totalorder %s25, 1
      %s470 = scalar_select %p469, %s25, 1
      %s471 = smul.addr %s470, 2
      %s472 = smul.addr %s471, 8
      %s473 = scalar_lea.vmem %s0, %s472
      %p474 = scmp.lt.s32.totalorder %s25, 1
      %s475 = scalar_select %p474, %s25, 1
      %s476 = scalar_lea.vmem %s1, %s475
      %p477 = scmp.lt.s32.totalorder %s25, 1
      %s478 = scalar_select %p477, %s25, 1
      %s479 = smul.addr %s478, 2
      %s480 = smul.addr %s479, 8
      %s481 = scalar_lea.vmem %s14, %s480
      %v482 = vld [vmem:[%s473] sm:$0xff]
      %v483 = vld [vmem:[%s473 + $0x8] sm:$0xff]
      %v484 = vld [vmem:[%s2] sm:$0xff]
      %v485 = vld [vmem:[%s2 + $0x8] sm:$0xff]
      %v486 = vld [vmem:[%s2 + $0x10] sm:$0xff]
      %v487 = vld [vmem:[%s2 + $0x18] sm:$0xff]
      %v488 = vld [vmem:[%s2 + $0x20] sm:$0xff]
      %v489 = vld [vmem:[%s2 + $0x28] sm:$0xff]
      %v490 = vld [vmem:[%s2 + $0x30] sm:$0xff]
      %v491 = vld [vmem:[%s2 + $0x38] sm:$0xff]
      %v492 = vld [vmem:[%s2 + $0x40] sm:$0xff]
      %v493 = vld [vmem:[%s2 + $0x48] sm:$0xff]
      %v494 = vld [vmem:[%s2 + $0x50] sm:$0xff]
      %v495 = vld [vmem:[%s2 + $0x58] sm:$0xff]
      %v496 = vld [vmem:[%s2 + $0x60] sm:$0xff]
      %v497 = vld [vmem:[%s2 + $0x68] sm:$0xff]
      %v498 = vld [vmem:[%s2 + $0x70] sm:$0xff]
      %v499 = vld [vmem:[%s2 + $0x78] sm:$0xff]
      %v500 = vld [vmem:[%s2 + $0x80] sm:$0xff]
      %v501 = vld [vmem:[%s2 + $0x88] sm:$0xff]
      %v502 = vld [vmem:[%s2 + $0x90] sm:$0xff]
      %v503 = vld [vmem:[%s2 + $0x98] sm:$0xff]
      %v504 = vld [vmem:[%s2 + $0xa0] sm:$0xff]
      %v505 = vld [vmem:[%s2 + $0xa8] sm:$0xff]
      %v506 = vld [vmem:[%s2 + $0xb0] sm:$0xff]
      %v507 = vld [vmem:[%s2 + $0xb8] sm:$0xff]
      %v508 = vld [vmem:[%s2 + $0xc0] sm:$0xff]
      %v509 = vld [vmem:[%s2 + $0xc8] sm:$0xff]
      %v510 = vld [vmem:[%s2 + $0xd0] sm:$0xff]
      %v511 = vld [vmem:[%s2 + $0xd8] sm:$0xff]
      %v512 = vld [vmem:[%s2 + $0xe0] sm:$0xff]
      %v513 = vld [vmem:[%s2 + $0xe8] sm:$0xff]
      %v514 = vld [vmem:[%s2 + $0xf0] sm:$0xff]
      %v515 = vld [vmem:[%s2 + $0xf8] sm:$0xff]
      %v516 = vld [vmem:[%s2 + $0x100] sm:$0xff]
      %v517 = vld [vmem:[%s2 + $0x108] sm:$0xff]
      %v518 = vld [vmem:[%s2 + $0x110] sm:$0xff]
      %v519 = vld [vmem:[%s2 + $0x118] sm:$0xff]
      %v520 = vld [vmem:[%s2 + $0x120] sm:$0xff]
      %v521 = vld [vmem:[%s2 + $0x128] sm:$0xff]
      %v522 = vld [vmem:[%s2 + $0x130] sm:$0xff]
      %v523 = vld [vmem:[%s2 + $0x138] sm:$0xff]
      %v524 = vld [vmem:[%s2 + $0x140] sm:$0xff]
      %v525 = vld [vmem:[%s2 + $0x148] sm:$0xff]
      %v526 = vld [vmem:[%s2 + $0x150] sm:$0xff]
      %v527 = vld [vmem:[%s2 + $0x158] sm:$0xff]
      %v528 = vld [vmem:[%s2 + $0x160] sm:$0xff]
      %v529 = vld [vmem:[%s2 + $0x168] sm:$0xff]
      %v530 = vld [vmem:[%s2 + $0x170] sm:$0xff]
      %v531 = vld [vmem:[%s2 + $0x178] sm:$0xff]
      %v532 = vld [vmem:[%s2 + $0x180] sm:$0xff]
      %v533 = vld [vmem:[%s2 + $0x188] sm:$0xff]
      %v534 = vld [vmem:[%s2 + $0x190] sm:$0xff]
      %v535 = vld [vmem:[%s2 + $0x198] sm:$0xff]
      %v536 = vld [vmem:[%s2 + $0x1a0] sm:$0xff]
      %v537 = vld [vmem:[%s2 + $0x1a8] sm:$0xff]
      %v538 = vld [vmem:[%s2 + $0x1b0] sm:$0xff]
      %v539 = vld [vmem:[%s2 + $0x1b8] sm:$0xff]
      %v540 = vld [vmem:[%s2 + $0x1c0] sm:$0xff]
      %v541 = vld [vmem:[%s2 + $0x1c8] sm:$0xff]
      %v542 = vld [vmem:[%s2 + $0x1d0] sm:$0xff]
      %v543 = vld [vmem:[%s2 + $0x1d8] sm:$0xff]
      %v544 = vld [vmem:[%s2 + $0x1e0] sm:$0xff]
      %v545 = vld [vmem:[%s2 + $0x1e8] sm:$0xff]
      %v546 = vld [vmem:[%s2 + $0x1f0] sm:$0xff]
      %v547 = vld [vmem:[%s2 + $0x1f8] sm:$0xff]
      %v548 = vld [vmem:[%s2 + $0x200] sm:$0xff]
      %v549 = vld [vmem:[%s2 + $0x208] sm:$0xff]
      %v550 = vld [vmem:[%s2 + $0x210] sm:$0xff]
      %v551 = vld [vmem:[%s2 + $0x218] sm:$0xff]
      %v552 = vld [vmem:[%s2 + $0x220] sm:$0xff]
      %v553 = vld [vmem:[%s2 + $0x228] sm:$0xff]
      %v554 = vld [vmem:[%s2 + $0x230] sm:$0xff]
      %v555 = vld [vmem:[%s2 + $0x238] sm:$0xff]
      %v556 = vld [vmem:[%s2 + $0x240] sm:$0xff]
      %v557 = vld [vmem:[%s2 + $0x248] sm:$0xff]
      %v558 = vld [vmem:[%s2 + $0x250] sm:$0xff]
      %v559 = vld [vmem:[%s2 + $0x258] sm:$0xff]
      %v560 = vld [vmem:[%s2 + $0x260] sm:$0xff]
      %v561 = vld [vmem:[%s2 + $0x268] sm:$0xff]
      %v562 = vld [vmem:[%s2 + $0x270] sm:$0xff]
      %v563 = vld [vmem:[%s2 + $0x278] sm:$0xff]
      %v564 = vld [vmem:[%s2 + $0x280] sm:$0xff]
      %v565 = vld [vmem:[%s2 + $0x288] sm:$0xff]
      %v566 = vld [vmem:[%s2 + $0x290] sm:$0xff]
      %v567 = vld [vmem:[%s2 + $0x298] sm:$0xff]
      %v568 = vld [vmem:[%s2 + $0x2a0] sm:$0xff]
      %v569 = vld [vmem:[%s2 + $0x2a8] sm:$0xff]
      %v570 = vld [vmem:[%s2 + $0x2b0] sm:$0xff]
      %v571 = vld [vmem:[%s2 + $0x2b8] sm:$0xff]
      %v572 = vld [vmem:[%s2 + $0x2c0] sm:$0xff]
      %v573 = vld [vmem:[%s2 + $0x2c8] sm:$0xff]
      %v574 = vld [vmem:[%s2 + $0x2d0] sm:$0xff]
      %v575 = vld [vmem:[%s2 + $0x2d8] sm:$0xff]
      %v576 = vld [vmem:[%s2 + $0x2e0] sm:$0xff]
      %v577 = vld [vmem:[%s2 + $0x2e8] sm:$0xff]
      %v578 = vld [vmem:[%s2 + $0x2f0] sm:$0xff]
      %v579 = vld [vmem:[%s2 + $0x2f8] sm:$0xff]
      %v580 = vld [vmem:[%s2 + $0x300] sm:$0xff]
      %v581 = vld [vmem:[%s2 + $0x308] sm:$0xff]
      %v582 = vld [vmem:[%s2 + $0x310] sm:$0xff]
      %v583 = vld [vmem:[%s2 + $0x318] sm:$0xff]
      %v584 = vld [vmem:[%s2 + $0x320] sm:$0xff]
      %v585 = vld [vmem:[%s2 + $0x328] sm:$0xff]
      %v586 = vld [vmem:[%s2 + $0x330] sm:$0xff]
      %v587 = vld [vmem:[%s2 + $0x338] sm:$0xff]
      %v588 = vld [vmem:[%s2 + $0x340] sm:$0xff]
      %v589 = vld [vmem:[%s2 + $0x348] sm:$0xff]
      %v590 = vld [vmem:[%s2 + $0x350] sm:$0xff]
      %v591 = vld [vmem:[%s2 + $0x358] sm:$0xff]
      %v592 = vld [vmem:[%s2 + $0x360] sm:$0xff]
      %v593 = vld [vmem:[%s2 + $0x368] sm:$0xff]
      %v594 = vld [vmem:[%s2 + $0x370] sm:$0xff]
      %v595 = vld [vmem:[%s2 + $0x378] sm:$0xff]
      %v596 = vld [vmem:[%s2 + $0x380] sm:$0xff]
      %v597 = vld [vmem:[%s2 + $0x388] sm:$0xff]
      %v598 = vld [vmem:[%s2 + $0x390] sm:$0xff]
      %v599 = vld [vmem:[%s2 + $0x398] sm:$0xff]
      %v600 = vld [vmem:[%s2 + $0x3a0] sm:$0xff]
      %v601 = vld [vmem:[%s2 + $0x3a8] sm:$0xff]
      %v602 = vld [vmem:[%s2 + $0x3b0] sm:$0xff]
      %v603 = vld [vmem:[%s2 + $0x3b8] sm:$0xff]
      %v604 = vld [vmem:[%s2 + $0x3c0] sm:$0xff]
      %v605 = vld [vmem:[%s2 + $0x3c8] sm:$0xff]
      %v606 = vld [vmem:[%s2 + $0x3d0] sm:$0xff]
      %v607 = vld [vmem:[%s2 + $0x3d8] sm:$0xff]
      %v608 = vld [vmem:[%s2 + $0x3e0] sm:$0xff]
      %v609 = vld [vmem:[%s2 + $0x3e8] sm:$0xff]
      %v610 = vld [vmem:[%s2 + $0x3f0] sm:$0xff]
      %v611 = vld [vmem:[%s2 + $0x3f8] sm:$0xff]
      %v612 = vld [vmem:[%s2 + $0x400] sm:$0xff]
      %v613 = vld [vmem:[%s2 + $0x408] sm:$0xff]
      %v614 = vld [vmem:[%s2 + $0x410] sm:$0xff]
      %v615 = vld [vmem:[%s2 + $0x418] sm:$0xff]
      %v616 = vld [vmem:[%s2 + $0x420] sm:$0xff]
      %v617 = vld [vmem:[%s2 + $0x428] sm:$0xff]
      %v618 = vld [vmem:[%s2 + $0x430] sm:$0xff]
      %v619 = vld [vmem:[%s2 + $0x438] sm:$0xff]
      %v620 = vld [vmem:[%s2 + $0x440] sm:$0xff]
      %v621 = vld [vmem:[%s2 + $0x448] sm:$0xff]
      %v622 = vld [vmem:[%s2 + $0x450] sm:$0xff]
      %v623 = vld [vmem:[%s2 + $0x458] sm:$0xff]
      %v624 = vld [vmem:[%s2 + $0x460] sm:$0xff]
      %v625 = vld [vmem:[%s2 + $0x468] sm:$0xff]
      %v626 = vld [vmem:[%s2 + $0x470] sm:$0xff]
      %v627 = vld [vmem:[%s2 + $0x478] sm:$0xff]
      %v628 = vld [vmem:[%s2 + $0x480] sm:$0xff]
      %v629 = vld [vmem:[%s2 + $0x488] sm:$0xff]
      %v630 = vld [vmem:[%s2 + $0x490] sm:$0xff]
      %v631 = vld [vmem:[%s2 + $0x498] sm:$0xff]
      %v632 = vld [vmem:[%s2 + $0x4a0] sm:$0xff]
      %v633 = vld [vmem:[%s2 + $0x4a8] sm:$0xff]
      %v634 = vld [vmem:[%s2 + $0x4b0] sm:$0xff]
      %v635 = vld [vmem:[%s2 + $0x4b8] sm:$0xff]
      %v636 = vld [vmem:[%s2 + $0x4c0] sm:$0xff]
      %v637 = vld [vmem:[%s2 + $0x4c8] sm:$0xff]
      %v638 = vld [vmem:[%s2 + $0x4d0] sm:$0xff]
      %v639 = vld [vmem:[%s2 + $0x4d8] sm:$0xff]
      %v640 = vld [vmem:[%s2 + $0x4e0] sm:$0xff]
      %v641 = vld [vmem:[%s2 + $0x4e8] sm:$0xff]
      %v642 = vld [vmem:[%s2 + $0x4f0] sm:$0xff]
      %v643 = vld [vmem:[%s2 + $0x4f8] sm:$0xff]
      %v644 = vld [vmem:[%s2 + $0x500] sm:$0xff]
      %v645 = vld [vmem:[%s2 + $0x508] sm:$0xff]
      %v646 = vld [vmem:[%s2 + $0x510] sm:$0xff]
      %v647 = vld [vmem:[%s2 + $0x518] sm:$0xff]
      %v648 = vld [vmem:[%s2 + $0x520] sm:$0xff]
      %v649 = vld [vmem:[%s2 + $0x528] sm:$0xff]
      %v650 = vld [vmem:[%s2 + $0x530] sm:$0xff]
      %v651 = vld [vmem:[%s2 + $0x538] sm:$0xff]
      %v652 = vld [vmem:[%s2 + $0x540] sm:$0xff]
      %v653 = vld [vmem:[%s2 + $0x548] sm:$0xff]
      %v654 = vld [vmem:[%s2 + $0x550] sm:$0xff]
      %v655 = vld [vmem:[%s2 + $0x558] sm:$0xff]
      %v656 = vld [vmem:[%s2 + $0x560] sm:$0xff]
      %v657 = vld [vmem:[%s2 + $0x568] sm:$0xff]
      %v658 = vld [vmem:[%s2 + $0x570] sm:$0xff]
      %v659 = vld [vmem:[%s2 + $0x578] sm:$0xff]
      %v660 = vld [vmem:[%s2 + $0x580] sm:$0xff]
      %v661 = vld [vmem:[%s2 + $0x588] sm:$0xff]
      %v662 = vld [vmem:[%s2 + $0x590] sm:$0xff]
      %v663 = vld [vmem:[%s2 + $0x598] sm:$0xff]
      %v664 = vld [vmem:[%s2 + $0x5a0] sm:$0xff]
      %v665 = vld [vmem:[%s2 + $0x5a8] sm:$0xff]
      %v666 = vld [vmem:[%s2 + $0x5b0] sm:$0xff]
      %v667 = vld [vmem:[%s2 + $0x5b8] sm:$0xff]
      %v668 = vld [vmem:[%s2 + $0x5c0] sm:$0xff]
      %v669 = vld [vmem:[%s2 + $0x5c8] sm:$0xff]
      %v670 = vld [vmem:[%s2 + $0x5d0] sm:$0xff]
      %v671 = vld [vmem:[%s2 + $0x5d8] sm:$0xff]
      %v672 = vld [vmem:[%s2 + $0x5e0] sm:$0xff]
      %v673 = vld [vmem:[%s2 + $0x5e8] sm:$0xff]
      %v674 = vld [vmem:[%s2 + $0x5f0] sm:$0xff]
      %v675 = vld [vmem:[%s2 + $0x5f8] sm:$0xff]
      %v676 = vld [vmem:[%s3] sm:$0x3f]
      %v678 = vlaneseq
      %v679 = vshrl.u32 %v678, 7
      %v680 = vsub.s32 0, %v679
      %v681 = vrot.slane %v676, %v680
      %v682 = vlaneseq
      %v683 = vshrl.u32 %v682, 7
      %v684 = vsub.s32 1, %v683
      %v685 = vrot.slane %v676, %v684
      %v686 = vlaneseq
      %v687 = vshrl.u32 %v686, 7
      %v688 = vsub.s32 2, %v687
      %v689 = vrot.slane %v676, %v688
      %v690 = vlaneseq
      %v691 = vshrl.u32 %v690, 7
      %v692 = vsub.s32 3, %v691
      %v693 = vrot.slane %v676, %v692
      %v694 = vlaneseq
      %v695 = vshrl.u32 %v694, 7
      %v696 = vsub.s32 4, %v695
      %v697 = vrot.slane %v676, %v696
      %v698 = vlaneseq
      %v699 = vshrl.u32 %v698, 7
      %v700 = vsub.s32 5, %v699
      %v701 = vrot.slane %v676, %v700
      %708 = vmatprep.subr.mxu0 %v485
      %709 = vmatpush1.msra.mxu0 %v484
      %710 = vmatprep.subr.mxu0 %v491
      %711 = vmatpush1.msra.mxu0 %v490
      %712 = vmatprep.subr.mxu0 %v497
      %713 = vmatpush1.msra.mxu0 %v496
      %714 = vmatprep.subr.mxu0 %v503
      %715 = vmatpush1.msra.mxu0 %v502
      %716 = vmatprep.subr.mxu0 %v509
      %717 = vmatpush1.msra.mxu0 %v508
      %718 = vmatprep.subr.mxu0 %v515
      %719 = vmatpush1.msra.mxu0 %v514
      %720 = vmatprep.subr.mxu0 %v521
      %721 = vmatpush1.msra.mxu0 %v520
      %722 = vmatprep.subr.mxu0 %v527
      %723 = vmatpush1.msra.mxu0 %v526
      %724 = vmatprep.subr.mxu0 %v533
      %725 = vmatpush1.msra.mxu0 %v532
      %726 = vmatprep.subr.mxu0 %v539
      %727 = vmatpush1.msra.mxu0 %v538
      %728 = vmatprep.subr.mxu0 %v545
      %729 = vmatpush1.msra.mxu0 %v544
      %730 = vmatprep.subr.mxu0 %v551
      %731 = vmatpush1.msra.mxu0 %v550
      %732 = vmatprep.subr.mxu0 %v557
      %733 = vmatpush1.msra.mxu0 %v556
      %734 = vmatprep.subr.mxu0 %v563
      %735 = vmatpush1.msra.mxu0 %v562
      %736 = vmatprep.subr.mxu0 %v569
      %737 = vmatpush1.msra.mxu0 %v568
      %738 = vmatprep.subr.mxu0 %v575
      %739 = vmatpush1.msra.mxu0 %v574
      %740 = vmatprep.subr.mxu0 %v581
      %741 = vmatpush1.msra.mxu0 %v580
      %742 = vmatprep.subr.mxu0 %v587
      %743 = vmatpush1.msra.mxu0 %v586
      %744 = vmatprep.subr.mxu0 %v593
      %745 = vmatpush1.msra.mxu0 %v592
      %746 = vmatprep.subr.mxu0 %v599
      %747 = vmatpush1.msra.mxu0 %v598
      %748 = vmatprep.subr.mxu0 %v605
      %749 = vmatpush1.msra.mxu0 %v604
      %750 = vmatprep.subr.mxu0 %v611
      %751 = vmatpush1.msra.mxu0 %v610
      %752 = vmatprep.subr.mxu0 %v617
      %753 = vmatpush1.msra.mxu0 %v616
      %754 = vmatprep.subr.mxu0 %v623
      %755 = vmatpush1.msra.mxu0 %v622
      %756 = vmatprep.subr.mxu0 %v629
      %757 = vmatpush1.msra.mxu0 %v628
      %758 = vmatprep.subr.mxu0 %v635
      %759 = vmatpush1.msra.mxu0 %v634
      %760 = vmatprep.subr.mxu0 %v641
      %761 = vmatpush1.msra.mxu0 %v640
      %762 = vmatprep.subr.mxu0 %v647
      %763 = vmatpush1.msra.mxu0 %v646
      %764 = vmatprep.subr.mxu0 %v653
      %765 = vmatpush1.msra.mxu0 %v652
      %766 = vmatprep.subr.mxu0 %v659
      %767 = vmatpush1.msra.mxu0 %v658
      %768 = vmatprep.subr.mxu0 %v665
      %769 = vmatpush1.msra.mxu0 %v664
      %770 = vmatprep.subr.mxu0 %v671
      %771 = vmatpush1.msra.mxu0 %v670
      %772 = vmatprep.mubr.f32.mxu0 %v483
      %773 = vmatmul.mubr.f32.gmra.mrb[0].mxu0 %v482
      %v774 = vpop.f32.mrb[0].mxu0
      %v775 = vadd.f32 %v681, %v774
      %v776 = vpop.f32.mrb[0].mxu0
      %v777 = vadd.f32 %v685, %v776
      %778 = vdwg.mxu0
      %779 = vmatprep.subr.mxu0 %v487
      %780 = vmatpush1.msra.mxu0 %v486
      %781 = vmatprep.subr.mxu0 %v493
      %782 = vmatpush1.msra.mxu0 %v492
      %783 = vmatprep.subr.mxu0 %v499
      %784 = vmatpush1.msra.mxu0 %v498
      %785 = vmatprep.subr.mxu0 %v505
      %786 = vmatpush1.msra.mxu0 %v504
      %787 = vmatprep.subr.mxu0 %v511
      %788 = vmatpush1.msra.mxu0 %v510
      %789 = vmatprep.subr.mxu0 %v517
      %790 = vmatpush1.msra.mxu0 %v516
      %791 = vmatprep.subr.mxu0 %v523
      %792 = vmatpush1.msra.mxu0 %v522
      %793 = vmatprep.subr.mxu0 %v529
      %794 = vmatpush1.msra.mxu0 %v528
      %795 = vmatprep.subr.mxu0 %v535
      %796 = vmatpush1.msra.mxu0 %v534
      %797 = vmatprep.subr.mxu0 %v541
      %798 = vmatpush1.msra.mxu0 %v540
      %799 = vmatprep.subr.mxu0 %v547
      %800 = vmatpush1.msra.mxu0 %v546
      %801 = vmatprep.subr.mxu0 %v553
      %802 = vmatpush1.msra.mxu0 %v552
      %803 = vmatprep.subr.mxu0 %v559
      %804 = vmatpush1.msra.mxu0 %v558
      %805 = vmatprep.subr.mxu0 %v565
      %806 = vmatpush1.msra.mxu0 %v564
      %807 = vmatprep.subr.mxu0 %v571
      %808 = vmatpush1.msra.mxu0 %v570
      %809 = vmatprep.subr.mxu0 %v577
      %810 = vmatpush1.msra.mxu0 %v576
      %811 = vmatprep.subr.mxu0 %v583
      %812 = vmatpush1.msra.mxu0 %v582
      %813 = vmatprep.subr.mxu0 %v589
      %814 = vmatpush1.msra.mxu0 %v588
      %815 = vmatprep.subr.mxu0 %v595
      %816 = vmatpush1.msra.mxu0 %v594
      %817 = vmatprep.subr.mxu0 %v601
      %818 = vmatpush1.msra.mxu0 %v600
      %819 = vmatprep.subr.mxu0 %v607
      %820 = vmatpush1.msra.mxu0 %v606
      %821 = vmatprep.subr.mxu0 %v613
      %822 = vmatpush1.msra.mxu0 %v612
      %823 = vmatprep.subr.mxu0 %v619
      %824 = vmatpush1.msra.mxu0 %v618
      %825 = vmatprep.subr.mxu0 %v625
      %826 = vmatpush1.msra.mxu0 %v624
      %827 = vmatprep.subr.mxu0 %v631
      %828 = vmatpush1.msra.mxu0 %v630
      %829 = vmatprep.subr.mxu0 %v637
      %830 = vmatpush1.msra.mxu0 %v636
      %831 = vmatprep.subr.mxu0 %v643
      %832 = vmatpush1.msra.mxu0 %v642
      %833 = vmatprep.subr.mxu0 %v649
      %834 = vmatpush1.msra.mxu0 %v648
      %835 = vmatprep.subr.mxu0 %v655
      %836 = vmatpush1.msra.mxu0 %v654
      %837 = vmatprep.subr.mxu0 %v661
      %838 = vmatpush1.msra.mxu0 %v660
      %839 = vmatprep.subr.mxu0 %v667
      %840 = vmatpush1.msra.mxu0 %v666
      %841 = vmatprep.subr.mxu0 %v673
      %842 = vmatpush1.msra.mxu0 %v672
      %843 = vmatprep.mubr.f32.mxu0 %v483
      %844 = vmatmul.mubr.f32.gmra.mrb[0].mxu0 %v482
      %v845 = vpop.f32.mrb[0].mxu0
      %v846 = vadd.f32 %v689, %v845
      %v847 = vpop.f32.mrb[0].mxu0
      %v848 = vadd.f32 %v693, %v847
      %849 = vdwg.mxu0
      %850 = vmatprep.subr.mxu0 %v489
      %851 = vmatpush1.msra.mxu0 %v488
      %852 = vmatprep.subr.mxu0 %v495
      %853 = vmatpush1.msra.mxu0 %v494
      %854 = vmatprep.subr.mxu0 %v501
      %855 = vmatpush1.msra.mxu0 %v500
      %856 = vmatprep.subr.mxu0 %v507
      %857 = vmatpush1.msra.mxu0 %v506
      %858 = vmatprep.subr.mxu0 %v513
      %859 = vmatpush1.msra.mxu0 %v512
      %860 = vmatprep.subr.mxu0 %v519
      %861 = vmatpush1.msra.mxu0 %v518
      %862 = vmatprep.subr.mxu0 %v525
      %863 = vmatpush1.msra.mxu0 %v524
      %864 = vmatprep.subr.mxu0 %v531
      %865 = vmatpush1.msra.mxu0 %v530
      %866 = vmatprep.subr.mxu0 %v537
      %867 = vmatpush1.msra.mxu0 %v536
      %868 = vmatprep.subr.mxu0 %v543
      %869 = vmatpush1.msra.mxu0 %v542
      %870 = vmatprep.subr.mxu0 %v549
      %871 = vmatpush1.msra.mxu0 %v548
      %872 = vmatprep.subr.mxu0 %v555
      %873 = vmatpush1.msra.mxu0 %v554
      %874 = vmatprep.subr.mxu0 %v561
      %875 = vmatpush1.msra.mxu0 %v560
      %876 = vmatprep.subr.mxu0 %v567
      %877 = vmatpush1.msra.mxu0 %v566
      %878 = vmatprep.subr.mxu0 %v573
      %879 = vmatpush1.msra.mxu0 %v572
      %880 = vmatprep.subr.mxu0 %v579
      %881 = vmatpush1.msra.mxu0 %v578
      %882 = vmatprep.subr.mxu0 %v585
      %883 = vmatpush1.msra.mxu0 %v584
      %884 = vmatprep.subr.mxu0 %v591
      %885 = vmatpush1.msra.mxu0 %v590
      %886 = vmatprep.subr.mxu0 %v597
      %887 = vmatpush1.msra.mxu0 %v596
      %888 = vmatprep.subr.mxu0 %v603
      %889 = vmatpush1.msra.mxu0 %v602
      %890 = vmatprep.subr.mxu0 %v609
      %891 = vmatpush1.msra.mxu0 %v608
      %892 = vmatprep.subr.mxu0 %v615
      %893 = vmatpush1.msra.mxu0 %v614
      %894 = vmatprep.subr.mxu0 %v621
      %895 = vmatpush1.msra.mxu0 %v620
      %896 = vmatprep.subr.mxu0 %v627
      %897 = vmatpush1.msra.mxu0 %v626
      %898 = vmatprep.subr.mxu0 %v633
      %899 = vmatpush1.msra.mxu0 %v632
      %900 = vmatprep.subr.mxu0 %v639
      %901 = vmatpush1.msra.mxu0 %v638
      %902 = vmatprep.subr.mxu0 %v645
      %903 = vmatpush1.msra.mxu0 %v644
      %904 = vmatprep.subr.mxu0 %v651
      %905 = vmatpush1.msra.mxu0 %v650
      %906 = vmatprep.subr.mxu0 %v657
      %907 = vmatpush1.msra.mxu0 %v656
      %908 = vmatprep.subr.mxu0 %v663
      %909 = vmatpush1.msra.mxu0 %v662
      %910 = vmatprep.subr.mxu0 %v669
      %911 = vmatpush1.msra.mxu0 %v668
      %912 = vmatprep.subr.mxu0 %v675
      %913 = vmatpush1.msra.mxu0 %v674
      %914 = vmatprep.mubr.f32.mxu0 %v483
      %915 = vmatmul.mubr.f32.gmra.mrb[0].mxu0 %v482
      %v916 = vpop.f32.mrb[0].mxu0
      %v917 = vadd.f32 %v697, %v916
      %v918 = vpop.f32.mrb[0].mxu0
      %v919 = vadd.f32 %v701, %v918
      %920 = vdwg.mxu0
      %v921 = vld [vmem:[%s476] sm:$0x1]
      %v922 = vsub.f32 1.0, %v921
      %v923 = vmul.f32 %v922, -1e+09
      %924 = vmatprep.subr.mxu0 0.0
      %925 = vmatpush1.xpose.msra.mxu0 %v846
      %926 = vmatprep.subr.mxu0 0.0
      %927 = vmatpush1.xpose.msra.mxu0 0.0
      %928 = vmatprep.subr.mxu0 0.0
      %929 = vmatpush1.xpose.msra.mxu0 0.0
      %930 = vmatprep.subr.mxu0 0.0
      %931 = vmatpush1.xpose.msra.mxu0 0.0
      %932 = vmatprep.subr.mxu0 0.0
      %933 = vmatpush1.xpose.msra.mxu0 0.0
      %934 = vmatprep.subr.mxu0 0.0
      %935 = vmatpush1.xpose.msra.mxu0 0.0
      %936 = vmatprep.subr.mxu0 0.0
      %937 = vmatpush1.xpose.msra.mxu0 0.0
      %938 = vmatprep.subr.mxu0 0.0
      %939 = vmatpush1.xpose.msra.mxu0 0.0
      %940 = vmatprep.subr.mxu0 0.0
      %941 = vmatpush1.xpose.msra.mxu0 0.0
      %942 = vmatprep.subr.mxu0 0.0
      %943 = vmatpush1.xpose.msra.mxu0 0.0
      %944 = vmatprep.subr.mxu0 0.0
      %945 = vmatpush1.xpose.msra.mxu0 0.0
      %946 = vmatprep.subr.mxu0 0.0
      %947 = vmatpush1.xpose.msra.mxu0 0.0
      %948 = vmatprep.subr.mxu0 0.0
      %949 = vmatpush1.xpose.msra.mxu0 0.0
      %950 = vmatprep.subr.mxu0 0.0
      %951 = vmatpush1.xpose.msra.mxu0 0.0
      %952 = vmatprep.subr.mxu0 0.0
      %953 = vmatpush1.xpose.msra.mxu0 0.0
      %954 = vmatprep.subr.mxu0 0.0
      %955 = vmatpush1.xpose.msra.mxu0 0.0
      %956 = vmatprep.subr.mxu0 0.0
      %957 = vmatpush1.xpose.msra.mxu0 0.0
      %958 = vmatprep.subr.mxu0 0.0
      %959 = vmatpush1.xpose.msra.mxu0 0.0
      %960 = vmatprep.subr.mxu0 0.0
      %961 = vmatpush1.xpose.msra.mxu0 0.0
      %962 = vmatprep.subr.mxu0 0.0
      %963 = vmatpush1.xpose.msra.mxu0 0.0
      %964 = vmatprep.subr.mxu0 0.0
      %965 = vmatpush1.xpose.msra.mxu0 0.0
      %966 = vmatprep.subr.mxu0 0.0
      %967 = vmatpush1.xpose.msra.mxu0 0.0
      %968 = vmatprep.subr.mxu0 0.0
      %969 = vmatpush1.xpose.msra.mxu0 0.0
      %970 = vmatprep.subr.mxu0 0.0
      %971 = vmatpush1.xpose.msra.mxu0 0.0
      %972 = vmatprep.subr.mxu0 0.0
      %973 = vmatpush1.xpose.msra.mxu0 0.0
      %974 = vmatprep.subr.mxu0 0.0
      %975 = vmatpush1.xpose.msra.mxu0 0.0
      %976 = vmatprep.subr.mxu0 0.0
      %977 = vmatpush1.xpose.msra.mxu0 0.0
      %978 = vmatprep.subr.mxu0 0.0
      %979 = vmatpush1.xpose.msra.mxu0 0.0
      %980 = vmatprep.subr.mxu0 0.0
      %981 = vmatpush1.xpose.msra.mxu0 0.0
      %982 = vmatprep.subr.mxu0 0.0
      %983 = vmatpush1.xpose.msra.mxu0 0.0
      %984 = vmatprep.subr.mxu0 0.0
      %985 = vmatpush1.xpose.msra.mxu0 0.0
      %986 = vmatprep.subr.mxu0 0.0
      %987 = vmatpush1.xpose.msra.mxu0 0.0
      %988 = vmatprep.mubr.f32.mxu0 0.0
      %989 = vmatmul.mubr.f32.gmra.mrb[0].mxu0 %v775
      %v990 = vpop.f32.mrb[0].mxu0
      %v991 = vadd.f32 0.0, %v990
      %v992 = vpop.f32.mrb[0].mxu0
      %993 = vdwg.mxu0
      %v994 = vmul.f32 %v991, 0.088388346
      %v996 = vlaneseq
      %v997 = vshrl.u32 %v996, 7
      %v998 = vsub.s32 0, %v997
      %v999 = vrot.slane %v923, %v998
      %v1001 = vadd.f32 %v994, %v999
      %vm1002 = vcmask 64512
      %v1003 = vsel %vm1002, %v1001, -inf
      %1004 = vmax.xlane.f32.xlu0 %v1003
      %v1005 = vpop.xlane.xlu0 %1004
      %v1006 = vsub.f32 %v1001, %v1005
      %v1007 = vmul.f32 %v1006, 1.442695
      %v1008 = vpow.pop %v1007
      %v1009 = vsel %vm1002, %v1008, 0.0
      %1010 = vadd.xlane.f32.xlu0 %v1009
      %v1011 = vpop.xlane.xlu0 %1010
      %v1012 = vrcp.pop %v1011
      %v1013 = vmul.f32 %v1008, %v1012
      %v1015 = vsel %vm1002, %v1013, 0
      %1017 = vmatprep.subr.mxu0 0.0
      %1018 = vmatpush1.msra.mxu0 %v917
      %1019 = vmatprep.subr.mxu0 0.0
      %1020 = vmatpush1.msra.mxu0 0.0
      %1021 = vmatprep.subr.mxu0 0.0
      %1022 = vmatpush1.msra.mxu0 0.0
      %1023 = vmatprep.subr.mxu0 0.0
      %1024 = vmatpush1.msra.mxu0 0.0
      %1025 = vmatprep.subr.mxu0 0.0
      %1026 = vmatpush1.msra.mxu0 0.0
      %1027 = vmatprep.subr.mxu0 0.0
      %1028 = vmatpush1.msra.mxu0 0.0
      %1029 = vmatprep.subr.mxu0 0.0
      %1030 = vmatpush1.msra.mxu0 0.0
      %1031 = vmatprep.subr.mxu0 0.0
      %1032 = vmatpush1.msra.mxu0 0.0
      %1033 = vmatprep.subr.mxu0 0.0
      %1034 = vmatpush1.msra.mxu0 0.0
      %1035 = vmatprep.subr.mxu0 0.0
      %1036 = vmatpush1.msra.mxu0 0.0
      %1037 = vmatprep.subr.mxu0 0.0
      %1038 = vmatpush1.msra.mxu0 0.0
      %1039 = vmatprep.subr.mxu0 0.0
      %1040 = vmatpush1.msra.mxu0 0.0
      %1041 = vmatprep.subr.mxu0 0.0
      %1042 = vmatpush1.msra.mxu0 0.0
      %1043 = vmatprep.subr.mxu0 0.0
      %1044 = vmatpush1.msra.mxu0 0.0
      %1045 = vmatprep.subr.mxu0 0.0
      %1046 = vmatpush1.msra.mxu0 0.0
      %1047 = vmatprep.subr.mxu0 0.0
      %1048 = vmatpush1.msra.mxu0 0.0
      %1049 = vmatprep.subr.mxu0 0.0
      %1050 = vmatpush1.msra.mxu0 0.0
      %1051 = vmatprep.subr.mxu0 0.0
      %1052 = vmatpush1.msra.mxu0 0.0
      %1053 = vmatprep.subr.mxu0 0.0
      %1054 = vmatpush1.msra.mxu0 0.0
      %1055 = vmatprep.subr.mxu0 0.0
      %1056 = vmatpush1.msra.mxu0 0.0
      %1057 = vmatprep.subr.mxu0 0.0
      %1058 = vmatpush1.msra.mxu0 0.0
      %1059 = vmatprep.subr.mxu0 0.0
      %1060 = vmatpush1.msra.mxu0 0.0
      %1061 = vmatprep.subr.mxu0 0.0
      %1062 = vmatpush1.msra.mxu0 0.0
      %1063 = vmatprep.subr.mxu0 0.0
      %1064 = vmatpush1.msra.mxu0 0.0
      %1065 = vmatprep.subr.mxu0 0.0
      %1066 = vmatpush1.msra.mxu0 0.0
      %1067 = vmatprep.subr.mxu0 0.0
      %1068 = vmatpush1.msra.mxu0 0.0
      %1069 = vmatprep.subr.mxu0 0.0
      %1070 = vmatpush1.msra.mxu0 0.0
      %1071 = vmatprep.subr.mxu0 0.0
      %1072 = vmatpush1.msra.mxu0 0.0
      %1073 = vmatprep.subr.mxu0 0.0
      %1074 = vmatpush1.msra.mxu0 0.0
      %1075 = vmatprep.subr.mxu0 0.0
      %1076 = vmatpush1.msra.mxu0 0.0
      %1077 = vmatprep.subr.mxu0 0.0
      %1078 = vmatpush1.msra.mxu0 0.0
      %1079 = vmatprep.subr.mxu0 0.0
      %1080 = vmatpush1.msra.mxu0 0.0
      %1081 = vmatprep.mubr.f32.mxu0 0.0
      %1082 = vmatmul.mubr.f32.gmra.mrb[0].mxu0 %v1015
      %v1083 = vpop.f32.mrb[0].mxu0
      %v1084 = vadd.f32 0.0, %v1083
      %v1085 = vpop.f32.mrb[0].mxu0
      %1086 = vdwg.mxu0
      %1087 = vmatprep.subr.mxu0 0.0
      %1088 = vmatpush1.xpose.msra.mxu0 %v848
      %1089 = vmatprep.subr.mxu0 0.0
      %1090 = vmatpush1.xpose.msra.mxu0 0.0
      %1091 = vmatprep.subr.mxu0 0.0
      %1092 = vmatpush1.xpose.msra.mxu0 0.0
      %1093 = vmatprep.subr.mxu0 0.0
      %1094 = vmatpush1.xpose.msra.mxu0 0.0
      %1095 = vmatprep.subr.mxu0 0.0
      %1096 = vmatpush1.xpose.msra.mxu0 0.0
      %1097 = vmatprep.subr.mxu0 0.0
      %1098 = vmatpush1.xpose.msra.mxu0 0.0
      %1099 = vmatprep.subr.mxu0 0.0
      %1100 = vmatpush1.xpose.msra.mxu0 0.0
      %1101 = vmatprep.subr.mxu0 0.0
      %1102 = vmatpush1.xpose.msra.mxu0 0.0
      %1103 = vmatprep.subr.mxu0 0.0
      %1104 = vmatpush1.xpose.msra.mxu0 0.0
      %1105 = vmatprep.subr.mxu0 0.0
      %1106 = vmatpush1.xpose.msra.mxu0 0.0
      %1107 = vmatprep.subr.mxu0 0.0
      %1108 = vmatpush1.xpose.msra.mxu0 0.0
      %1109 = vmatprep.subr.mxu0 0.0
      %1110 = vmatpush1.xpose.msra.mxu0 0.0
      %1111 = vmatprep.subr.mxu0 0.0
      %1112 = vmatpush1.xpose.msra.mxu0 0.0
      %1113 = vmatprep.subr.mxu0 0.0
      %1114 = vmatpush1.xpose.msra.mxu0 0.0
      %1115 = vmatprep.subr.mxu0 0.0
      %1116 = vmatpush1.xpose.msra.mxu0 0.0
      %1117 = vmatprep.subr.mxu0 0.0
      %1118 = vmatpush1.xpose.msra.mxu0 0.0
      %1119 = vmatprep.subr.mxu0 0.0
      %1120 = vmatpush1.xpose.msra.mxu0 0.0
      %1121 = vmatprep.subr.mxu0 0.0
      %1122 = vmatpush1.xpose.msra.mxu0 0.0
      %1123 = vmatprep.subr.mxu0 0.0
      %1124 = vmatpush1.xpose.msra.mxu0 0.0
      %1125 = vmatprep.subr.mxu0 0.0
      %1126 = vmatpush1.xpose.msra.mxu0 0.0
      %1127 = vmatprep.subr.mxu0 0.0
      %1128 = vmatpush1.xpose.msra.mxu0 0.0
      %1129 = vmatprep.subr.mxu0 0.0
      %1130 = vmatpush1.xpose.msra.mxu0 0.0
      %1131 = vmatprep.subr.mxu0 0.0
      %1132 = vmatpush1.xpose.msra.mxu0 0.0
      %1133 = vmatprep.subr.mxu0 0.0
      %1134 = vmatpush1.xpose.msra.mxu0 0.0
      %1135 = vmatprep.subr.mxu0 0.0
      %1136 = vmatpush1.xpose.msra.mxu0 0.0
      %1137 = vmatprep.subr.mxu0 0.0
      %1138 = vmatpush1.xpose.msra.mxu0 0.0
      %1139 = vmatprep.subr.mxu0 0.0
      %1140 = vmatpush1.xpose.msra.mxu0 0.0
      %1141 = vmatprep.subr.mxu0 0.0
      %1142 = vmatpush1.xpose.msra.mxu0 0.0
      %1143 = vmatprep.subr.mxu0 0.0
      %1144 = vmatpush1.xpose.msra.mxu0 0.0
      %1145 = vmatprep.subr.mxu0 0.0
      %1146 = vmatpush1.xpose.msra.mxu0 0.0
      %1147 = vmatprep.subr.mxu0 0.0
      %1148 = vmatpush1.xpose.msra.mxu0 0.0
      %1149 = vmatprep.subr.mxu0 0.0
      %1150 = vmatpush1.xpose.msra.mxu0 0.0
      %1151 = vmatprep.mubr.f32.mxu0 0.0
      %1152 = vmatmul.mubr.f32.gmra.mrb[0].mxu0 %v777
      %v1153 = vpop.f32.mrb[0].mxu0
      %v1154 = vadd.f32 0.0, %v1153
      %v1155 = vpop.f32.mrb[0].mxu0
      %1156 = vdwg.mxu0
      %v1157 = vmul.f32 %v1154, 0.088388346
      %v1158 = vadd.f32 %v1157, %v999
      %v1159 = vsel %vm1002, %v1158, -inf
      %1160 = vmax.xlane.f32.xlu0 %v1159
      %v1161 = vpop.xlane.xlu0 %1160
      %v1162 = vsub.f32 %v1158, %v1161
      %v1163 = vmul.f32 %v1162, 1.442695
      %v1164 = vpow.pop %v1163
      %v1165 = vsel %vm1002, %v1164, 0.0
      %1166 = vadd.xlane.f32.xlu0 %v1165
      %v1167 = vpop.xlane.xlu0 %1166
      %v1168 = vrcp.pop %v1167
      %v1169 = vmul.f32 %v1164, %v1168
      %v1171 = vsel %vm1002, %v1169, 0
      %1173 = vmatprep.subr.mxu0 0.0
      %1174 = vmatpush1.msra.mxu0 %v919
      %1175 = vmatprep.subr.mxu0 0.0
      %1176 = vmatpush1.msra.mxu0 0.0
      %1177 = vmatprep.subr.mxu0 0.0
      %1178 = vmatpush1.msra.mxu0 0.0
      %1179 = vmatprep.subr.mxu0 0.0
      %1180 = vmatpush1.msra.mxu0 0.0
      %1181 = vmatprep.subr.mxu0 0.0
      %1182 = vmatpush1.msra.mxu0 0.0
      %1183 = vmatprep.subr.mxu0 0.0
      %1184 = vmatpush1.msra.mxu0 0.0
      %1185 = vmatprep.subr.mxu0 0.0
      %1186 = vmatpush1.msra.mxu0 0.0
      %1187 = vmatprep.subr.mxu0 0.0
      %1188 = vmatpush1.msra.mxu0 0.0
      %1189 = vmatprep.subr.mxu0 0.0
      %1190 = vmatpush1.msra.mxu0 0.0
      %1191 = vmatprep.subr.mxu0 0.0
      %1192 = vmatpush1.msra.mxu0 0.0
      %1193 = vmatprep.subr.mxu0 0.0
      %1194 = vmatpush1.msra.mxu0 0.0
      %1195 = vmatprep.subr.mxu0 0.0
      %1196 = vmatpush1.msra.mxu0 0.0
      %1197 = vmatprep.subr.mxu0 0.0
      %1198 = vmatpush1.msra.mxu0 0.0
      %1199 = vmatprep.subr.mxu0 0.0
      %1200 = vmatpush1.msra.mxu0 0.0
      %1201 = vmatprep.subr.mxu0 0.0
      %1202 = vmatpush1.msra.mxu0 0.0
      %1203 = vmatprep.subr.mxu0 0.0
      %1204 = vmatpush1.msra.mxu0 0.0
      %1205 = vmatprep.subr.mxu0 0.0
      %1206 = vmatpush1.msra.mxu0 0.0
      %1207 = vmatprep.subr.mxu0 0.0
      %1208 = vmatpush1.msra.mxu0 0.0
      %1209 = vmatprep.subr.mxu0 0.0
      %1210 = vmatpush1.msra.mxu0 0.0
      %1211 = vmatprep.subr.mxu0 0.0
      %1212 = vmatpush1.msra.mxu0 0.0
      %1213 = vmatprep.subr.mxu0 0.0
      %1214 = vmatpush1.msra.mxu0 0.0
      %1215 = vmatprep.subr.mxu0 0.0
      %1216 = vmatpush1.msra.mxu0 0.0
      %1217 = vmatprep.subr.mxu0 0.0
      %1218 = vmatpush1.msra.mxu0 0.0
      %1219 = vmatprep.subr.mxu0 0.0
      %1220 = vmatpush1.msra.mxu0 0.0
      %1221 = vmatprep.subr.mxu0 0.0
      %1222 = vmatpush1.msra.mxu0 0.0
      %1223 = vmatprep.subr.mxu0 0.0
      %1224 = vmatpush1.msra.mxu0 0.0
      %1225 = vmatprep.subr.mxu0 0.0
      %1226 = vmatpush1.msra.mxu0 0.0
      %1227 = vmatprep.subr.mxu0 0.0
      %1228 = vmatpush1.msra.mxu0 0.0
      %1229 = vmatprep.subr.mxu0 0.0
      %1230 = vmatpush1.msra.mxu0 0.0
      %1231 = vmatprep.subr.mxu0 0.0
      %1232 = vmatpush1.msra.mxu0 0.0
      %1233 = vmatprep.subr.mxu0 0.0
      %1234 = vmatpush1.msra.mxu0 0.0
      %1235 = vmatprep.subr.mxu0 0.0
      %1236 = vmatpush1.msra.mxu0 0.0
      %1237 = vmatprep.mubr.f32.mxu0 0.0
      %1238 = vmatmul.mubr.f32.gmra.mrb[0].mxu0 %v1171
      %v1239 = vpop.f32.mrb[0].mxu0
      %v1240 = vadd.f32 0.0, %v1239
      %v1241 = vpop.f32.mrb[0].mxu0
      %1242 = vdwg.mxu0
      %v1243 = vld [vmem:[%s4] sm:$0xff]
      %v1244 = vld [vmem:[%s4 + $0x8] sm:$0xff]
      %v1245 = vld [vmem:[%s4 + $0x10] sm:$0xff]
      %v1246 = vld [vmem:[%s4 + $0x18] sm:$0xff]
      %v1247 = vld [vmem:[%s4 + $0x20] sm:$0xff]
      %v1248 = vld [vmem:[%s4 + $0x28] sm:$0xff]
      %v1249 = vld [vmem:[%s4 + $0x30] sm:$0xff]
      %v1250 = vld [vmem:[%s4 + $0x38] sm:$0xff]
      %v1251 = vld [vmem:[%s4 + $0x40] sm:$0xff]
      %v1252 = vld [vmem:[%s4 + $0x48] sm:$0xff]
      %v1253 = vld [vmem:[%s4 + $0x50] sm:$0xff]
      %v1254 = vld [vmem:[%s4 + $0x58] sm:$0xff]
      %v1255 = vld [vmem:[%s4 + $0x60] sm:$0xff]
      %v1256 = vld [vmem:[%s4 + $0x68] sm:$0xff]
      %v1257 = vld [vmem:[%s4 + $0x70] sm:$0xff]
      %v1258 = vld [vmem:[%s4 + $0x78] sm:$0xff]
      %v1259 = vld [vmem:[%s4 + $0x80] sm:$0xff]
      %v1260 = vld [vmem:[%s4 + $0x88] sm:$0xff]
      %v1261 = vld [vmem:[%s4 + $0x90] sm:$0xff]
      %v1262 = vld [vmem:[%s4 + $0x98] sm:$0xff]
      %v1263 = vld [vmem:[%s4 + $0xa0] sm:$0xff]
      %v1264 = vld [vmem:[%s4 + $0xa8] sm:$0xff]
      %v1265 = vld [vmem:[%s4 + $0xb0] sm:$0xff]
      %v1266 = vld [vmem:[%s4 + $0xb8] sm:$0xff]
      %v1267 = vld [vmem:[%s4 + $0xc0] sm:$0xff]
      %v1268 = vld [vmem:[%s4 + $0xc8] sm:$0xff]
      %v1269 = vld [vmem:[%s4 + $0xd0] sm:$0xff]
      %v1270 = vld [vmem:[%s4 + $0xd8] sm:$0xff]
      %v1271 = vld [vmem:[%s4 + $0xe0] sm:$0xff]
      %v1272 = vld [vmem:[%s4 + $0xe8] sm:$0xff]
      %v1273 = vld [vmem:[%s4 + $0xf0] sm:$0xff]
      %v1274 = vld [vmem:[%s4 + $0xf8] sm:$0xff]
      %v1275 = vld [vmem:[%s4 + $0x100] sm:$0xff]
      %v1276 = vld [vmem:[%s4 + $0x108] sm:$0xff]
      %v1277 = vld [vmem:[%s4 + $0x110] sm:$0xff]
      %v1278 = vld [vmem:[%s4 + $0x118] sm:$0xff]
      %v1279 = vld [vmem:[%s4 + $0x120] sm:$0xff]
      %v1280 = vld [vmem:[%s4 + $0x128] sm:$0xff]
      %v1281 = vld [vmem:[%s4 + $0x130] sm:$0xff]
      %v1282 = vld [vmem:[%s4 + $0x138] sm:$0xff]
      %v1283 = vld [vmem:[%s4 + $0x140] sm:$0xff]
      %v1284 = vld [vmem:[%s4 + $0x148] sm:$0xff]
      %v1285 = vld [vmem:[%s4 + $0x150] sm:$0xff]
      %v1286 = vld [vmem:[%s4 + $0x158] sm:$0xff]
      %v1287 = vld [vmem:[%s4 + $0x160] sm:$0xff]
      %v1288 = vld [vmem:[%s4 + $0x168] sm:$0xff]
      %v1289 = vld [vmem:[%s4 + $0x170] sm:$0xff]
      %v1290 = vld [vmem:[%s4 + $0x178] sm:$0xff]
      %v1291 = vld [vmem:[%s4 + $0x180] sm:$0xff]
      %v1292 = vld [vmem:[%s4 + $0x188] sm:$0xff]
      %v1293 = vld [vmem:[%s4 + $0x190] sm:$0xff]
      %v1294 = vld [vmem:[%s4 + $0x198] sm:$0xff]
      %v1295 = vld [vmem:[%s4 + $0x1a0] sm:$0xff]
      %v1296 = vld [vmem:[%s4 + $0x1a8] sm:$0xff]
      %v1297 = vld [vmem:[%s4 + $0x1b0] sm:$0xff]
      %v1298 = vld [vmem:[%s4 + $0x1b8] sm:$0xff]
      %v1299 = vld [vmem:[%s4 + $0x1c0] sm:$0xff]
      %v1300 = vld [vmem:[%s4 + $0x1c8] sm:$0xff]
      %v1301 = vld [vmem:[%s4 + $0x1d0] sm:$0xff]
      %v1302 = vld [vmem:[%s4 + $0x1d8] sm:$0xff]
      %v1303 = vld [vmem:[%s4 + $0x1e0] sm:$0xff]
      %v1304 = vld [vmem:[%s4 + $0x1e8] sm:$0xff]
      %v1305 = vld [vmem:[%s4 + $0x1f0] sm:$0xff]
      %v1306 = vld [vmem:[%s4 + $0x1f8] sm:$0xff]
      %v1307 = vld [vmem:[%s5] sm:$0x3]
      %v1309 = vlaneseq
      %v1310 = vshrl.u32 %v1309, 7
      %v1311 = vsub.s32 0, %v1310
      %v1312 = vrot.slane %v1307, %v1311
      %v1313 = vlaneseq
      %v1314 = vshrl.u32 %v1313, 7
      %v1315 = vsub.s32 1, %v1314
      %v1316 = vrot.slane %v1307, %v1315
      %1319 = vmatprep.subr.mxu0 %v1244
      %1320 = vmatpush1.msra.mxu0 %v1243
      %1321 = vmatprep.subr.mxu0 %v1246
      %1322 = vmatpush1.msra.mxu0 %v1245
      %1323 = vmatprep.subr.mxu0 %v1248
      %1324 = vmatpush1.msra.mxu0 %v1247
      %1325 = vmatprep.subr.mxu0 %v1250
      %1326 = vmatpush1.msra.mxu0 %v1249
      %1327 = vmatprep.subr.mxu0 %v1252
      %1328 = vmatpush1.msra.mxu0 %v1251
      %1329 = vmatprep.subr.mxu0 %v1254
      %1330 = vmatpush1.msra.mxu0 %v1253
      %1331 = vmatprep.subr.mxu0 %v1256
      %1332 = vmatpush1.msra.mxu0 %v1255
      %1333 = vmatprep.subr.mxu0 %v1258
      %1334 = vmatpush1.msra.mxu0 %v1257
      %1335 = vmatprep.subr.mxu0 %v1260
      %1336 = vmatpush1.msra.mxu0 %v1259
      %1337 = vmatprep.subr.mxu0 %v1262
      %1338 = vmatpush1.msra.mxu0 %v1261
      %1339 = vmatprep.subr.mxu0 %v1264
      %1340 = vmatpush1.msra.mxu0 %v1263
      %1341 = vmatprep.subr.mxu0 %v1266
      %1342 = vmatpush1.msra.mxu0 %v1265
      %1343 = vmatprep.subr.mxu0 %v1268
      %1344 = vmatpush1.msra.mxu0 %v1267
      %1345 = vmatprep.subr.mxu0 %v1270
      %1346 = vmatpush1.msra.mxu0 %v1269
      %1347 = vmatprep.subr.mxu0 %v1272
      %1348 = vmatpush1.msra.mxu0 %v1271
      %1349 = vmatprep.subr.mxu0 %v1274
      %1350 = vmatpush1.msra.mxu0 %v1273
      %1351 = vmatprep.subr.mxu0 %v1276
      %1352 = vmatpush1.msra.mxu0 %v1275
      %1353 = vmatprep.subr.mxu0 %v1278
      %1354 = vmatpush1.msra.mxu0 %v1277
      %1355 = vmatprep.subr.mxu0 %v1280
      %1356 = vmatpush1.msra.mxu0 %v1279
      %1357 = vmatprep.subr.mxu0 %v1282
      %1358 = vmatpush1.msra.mxu0 %v1281
      %1359 = vmatprep.subr.mxu0 %v1284
      %1360 = vmatpush1.msra.mxu0 %v1283
      %1361 = vmatprep.subr.mxu0 %v1286
      %1362 = vmatpush1.msra.mxu0 %v1285
      %1363 = vmatprep.subr.mxu0 %v1288
      %1364 = vmatpush1.msra.mxu0 %v1287
      %1365 = vmatprep.subr.mxu0 %v1290
      %1366 = vmatpush1.msra.mxu0 %v1289
      %1367 = vmatprep.subr.mxu0 %v1292
      %1368 = vmatpush1.msra.mxu0 %v1291
      %1369 = vmatprep.subr.mxu0 %v1294
      %1370 = vmatpush1.msra.mxu0 %v1293
      %1371 = vmatprep.subr.mxu0 %v1296
      %1372 = vmatpush1.msra.mxu0 %v1295
      %1373 = vmatprep.subr.mxu0 %v1298
      %1374 = vmatpush1.msra.mxu0 %v1297
      %1375 = vmatprep.subr.mxu0 %v1300
      %1376 = vmatpush1.msra.mxu0 %v1299
      %1377 = vmatprep.subr.mxu0 %v1302
      %1378 = vmatpush1.msra.mxu0 %v1301
      %1379 = vmatprep.subr.mxu0 %v1304
      %1380 = vmatpush1.msra.mxu0 %v1303
      %1381 = vmatprep.subr.mxu0 %v1306
      %1382 = vmatpush1.msra.mxu0 %v1305
      %1383 = vmatprep.mubr.f32.mxu0 %v1240
      %1384 = vmatmul.mubr.f32.gmra.mrb[0].mxu0 %v1084
      %v1385 = vpop.f32.mrb[0].mxu0
      %v1386 = vadd.f32 %v1312, %v1385
      %v1387 = vpop.f32.mrb[0].mxu0
      %v1388 = vadd.f32 %v1316, %v1387
      %1389 = vdwg.mxu0
      %v1390 = vadd.f32 %v482, %v1386
      %v1391 = vadd.f32 %v483, %v1388
      %v1392 = vld [vmem:[%s6] sm:$0x3]
      %v1393 = vld [vmem:[%s7] sm:$0x3]
      %v1394 = vadd.f32 %v1390, %v1391
      %1395 = vadd.xlane.f32.xlu0 %v1394
      %v1396 = vpop.xlane.xlu0 %1395
      %v1397 = vrcp.pop 256.0
      %v1398 = vmul.f32 %v1396, %v1397
      %v1399 = vsub.f32 %v1390, %v1398
      %v1400 = vsub.f32 %v1391, %v1398
      %v1401 = vmul.f32 %v1399, %v1399
      %v1402 = vmul.f32 %v1400, %v1400
      %v1403 = vadd.f32 %v1401, %v1402
      %1404 = vadd.xlane.f32.xlu0 %v1403
      %v1405 = vpop.xlane.xlu0 %1404
      %v1406 = vmul.f32 %v1405, %v1397
      %v1407 = vadd.f32 %v1406, 1e-12
      %v1408 = vrsqrt.pop %v1407
      %v1409 = vmul.f32 %v1399, %v1408
      %v1410 = vmul.f32 %v1400, %v1408
      %v1412 = vlaneseq
      %v1413 = vshrl.u32 %v1412, 7
      %v1414 = vsub.s32 0, %v1413
      %v1415 = vrot.slane %v1392, %v1414
      %v1416 = vlaneseq
      %v1417 = vshrl.u32 %v1416, 7
      %v1418 = vsub.s32 1, %v1417
      %v1419 = vrot.slane %v1392, %v1418
      %v1422 = vmul.f32 %v1409, %v1415
      %v1423 = vmul.f32 %v1410, %v1419
      %v1425 = vlaneseq
      %v1426 = vshrl.u32 %v1425, 7
      %v1427 = vsub.s32 0, %v1426
      %v1428 = vrot.slane %v1393, %v1427
      %v1429 = vlaneseq
      %v1430 = vshrl.u32 %v1429, 7
      %v1431 = vsub.s32 1, %v1430
      %v1432 = vrot.slane %v1393, %v1431
      %v1435 = vadd.f32 %v1422, %v1428
      %v1436 = vadd.f32 %v1423, %v1432
      %v1437 = vld [vmem:[%s8] sm:$0xff]
      %v1438 = vld [vmem:[%s8 + $0x8] sm:$0xff]
      %v1439 = vld [vmem:[%s8 + $0x10] sm:$0xff]
      %v1440 = vld [vmem:[%s8 + $0x18] sm:$0xff]
      %v1441 = vld [vmem:[%s8 + $0x20] sm:$0xff]
      %v1442 = vld [vmem:[%s8 + $0x28] sm:$0xff]
      %v1443 = vld [vmem:[%s8 + $0x30] sm:$0xff]
      %v1444 = vld [vmem:[%s8 + $0x38] sm:$0xff]
      %v1445 = vld [vmem:[%s8 + $0x40] sm:$0xff]
      %v1446 = vld [vmem:[%s8 + $0x48] sm:$0xff]
      %v1447 = vld [vmem:[%s8 + $0x50] sm:$0xff]
      %v1448 = vld [vmem:[%s8 + $0x58] sm:$0xff]
      %v1449 = vld [vmem:[%s8 + $0x60] sm:$0xff]
      %v1450 = vld [vmem:[%s8 + $0x68] sm:$0xff]
      %v1451 = vld [vmem:[%s8 + $0x70] sm:$0xff]
      %v1452 = vld [vmem:[%s8 + $0x78] sm:$0xff]
      %v1453 = vld [vmem:[%s8 + $0x80] sm:$0xff]
      %v1454 = vld [vmem:[%s8 + $0x88] sm:$0xff]
      %v1455 = vld [vmem:[%s8 + $0x90] sm:$0xff]
      %v1456 = vld [vmem:[%s8 + $0x98] sm:$0xff]
      %v1457 = vld [vmem:[%s8 + $0xa0] sm:$0xff]
      %v1458 = vld [vmem:[%s8 + $0xa8] sm:$0xff]
      %v1459 = vld [vmem:[%s8 + $0xb0] sm:$0xff]
      %v1460 = vld [vmem:[%s8 + $0xb8] sm:$0xff]
      %v1461 = vld [vmem:[%s8 + $0xc0] sm:$0xff]
      %v1462 = vld [vmem:[%s8 + $0xc8] sm:$0xff]
      %v1463 = vld [vmem:[%s8 + $0xd0] sm:$0xff]
      %v1464 = vld [vmem:[%s8 + $0xd8] sm:$0xff]
      %v1465 = vld [vmem:[%s8 + $0xe0] sm:$0xff]
      %v1466 = vld [vmem:[%s8 + $0xe8] sm:$0xff]
      %v1467 = vld [vmem:[%s8 + $0xf0] sm:$0xff]
      %v1468 = vld [vmem:[%s8 + $0xf8] sm:$0xff]
      %v1469 = vld [vmem:[%s8 + $0x100] sm:$0xff]
      %v1470 = vld [vmem:[%s8 + $0x108] sm:$0xff]
      %v1471 = vld [vmem:[%s8 + $0x110] sm:$0xff]
      %v1472 = vld [vmem:[%s8 + $0x118] sm:$0xff]
      %v1473 = vld [vmem:[%s8 + $0x120] sm:$0xff]
      %v1474 = vld [vmem:[%s8 + $0x128] sm:$0xff]
      %v1475 = vld [vmem:[%s8 + $0x130] sm:$0xff]
      %v1476 = vld [vmem:[%s8 + $0x138] sm:$0xff]
      %v1477 = vld [vmem:[%s8 + $0x140] sm:$0xff]
      %v1478 = vld [vmem:[%s8 + $0x148] sm:$0xff]
      %v1479 = vld [vmem:[%s8 + $0x150] sm:$0xff]
      %v1480 = vld [vmem:[%s8 + $0x158] sm:$0xff]
      %v1481 = vld [vmem:[%s8 + $0x160] sm:$0xff]
      %v1482 = vld [vmem:[%s8 + $0x168] sm:$0xff]
      %v1483 = vld [vmem:[%s8 + $0x170] sm:$0xff]
      %v1484 = vld [vmem:[%s8 + $0x178] sm:$0xff]
      %v1485 = vld [vmem:[%s8 + $0x180] sm:$0xff]
      %v1486 = vld [vmem:[%s8 + $0x188] sm:$0xff]
      %v1487 = vld [vmem:[%s8 + $0x190] sm:$0xff]
      %v1488 = vld [vmem:[%s8 + $0x198] sm:$0xff]
      %v1489 = vld [vmem:[%s8 + $0x1a0] sm:$0xff]
      %v1490 = vld [vmem:[%s8 + $0x1a8] sm:$0xff]
      %v1491 = vld [vmem:[%s8 + $0x1b0] sm:$0xff]
      %v1492 = vld [vmem:[%s8 + $0x1b8] sm:$0xff]
      %v1493 = vld [vmem:[%s8 + $0x1c0] sm:$0xff]
      %v1494 = vld [vmem:[%s8 + $0x1c8] sm:$0xff]
      %v1495 = vld [vmem:[%s8 + $0x1d0] sm:$0xff]
      %v1496 = vld [vmem:[%s8 + $0x1d8] sm:$0xff]
      %v1497 = vld [vmem:[%s8 + $0x1e0] sm:$0xff]
      %v1498 = vld [vmem:[%s8 + $0x1e8] sm:$0xff]
      %v1499 = vld [vmem:[%s8 + $0x1f0] sm:$0xff]
      %v1500 = vld [vmem:[%s8 + $0x1f8] sm:$0xff]
      %v1501 = vld [vmem:[%s8 + $0x200] sm:$0xff]
      %v1502 = vld [vmem:[%s8 + $0x208] sm:$0xff]
      %v1503 = vld [vmem:[%s8 + $0x210] sm:$0xff]
      %v1504 = vld [vmem:[%s8 + $0x218] sm:$0xff]
      %v1505 = vld [vmem:[%s8 + $0x220] sm:$0xff]
      %v1506 = vld [vmem:[%s8 + $0x228] sm:$0xff]
      %v1507 = vld [vmem:[%s8 + $0x230] sm:$0xff]
      %v1508 = vld [vmem:[%s8 + $0x238] sm:$0xff]
      %v1509 = vld [vmem:[%s8 + $0x240] sm:$0xff]
      %v1510 = vld [vmem:[%s8 + $0x248] sm:$0xff]
      %v1511 = vld [vmem:[%s8 + $0x250] sm:$0xff]
      %v1512 = vld [vmem:[%s8 + $0x258] sm:$0xff]
      %v1513 = vld [vmem:[%s8 + $0x260] sm:$0xff]
      %v1514 = vld [vmem:[%s8 + $0x268] sm:$0xff]
      %v1515 = vld [vmem:[%s8 + $0x270] sm:$0xff]
      %v1516 = vld [vmem:[%s8 + $0x278] sm:$0xff]
      %v1517 = vld [vmem:[%s8 + $0x280] sm:$0xff]
      %v1518 = vld [vmem:[%s8 + $0x288] sm:$0xff]
      %v1519 = vld [vmem:[%s8 + $0x290] sm:$0xff]
      %v1520 = vld [vmem:[%s8 + $0x298] sm:$0xff]
      %v1521 = vld [vmem:[%s8 + $0x2a0] sm:$0xff]
      %v1522 = vld [vmem:[%s8 + $0x2a8] sm:$0xff]
      %v1523 = vld [vmem:[%s8 + $0x2b0] sm:$0xff]
      %v1524 = vld [vmem:[%s8 + $0x2b8] sm:$0xff]
      %v1525 = vld [vmem:[%s8 + $0x2c0] sm:$0xff]
      %v1526 = vld [vmem:[%s8 + $0x2c8] sm:$0xff]
      %v1527 = vld [vmem:[%s8 + $0x2d0] sm:$0xff]
      %v1528 = vld [vmem:[%s8 + $0x2d8] sm:$0xff]
      %v1529 = vld [vmem:[%s8 + $0x2e0] sm:$0xff]
      %v1530 = vld [vmem:[%s8 + $0x2e8] sm:$0xff]
      %v1531 = vld [vmem:[%s8 + $0x2f0] sm:$0xff]
      %v1532 = vld [vmem:[%s8 + $0x2f8] sm:$0xff]
      %v1533 = vld [vmem:[%s8 + $0x300] sm:$0xff]
      %v1534 = vld [vmem:[%s8 + $0x308] sm:$0xff]
      %v1535 = vld [vmem:[%s8 + $0x310] sm:$0xff]
      %v1536 = vld [vmem:[%s8 + $0x318] sm:$0xff]
      %v1537 = vld [vmem:[%s8 + $0x320] sm:$0xff]
      %v1538 = vld [vmem:[%s8 + $0x328] sm:$0xff]
      %v1539 = vld [vmem:[%s8 + $0x330] sm:$0xff]
      %v1540 = vld [vmem:[%s8 + $0x338] sm:$0xff]
      %v1541 = vld [vmem:[%s8 + $0x340] sm:$0xff]
      %v1542 = vld [vmem:[%s8 + $0x348] sm:$0xff]
      %v1543 = vld [vmem:[%s8 + $0x350] sm:$0xff]
      %v1544 = vld [vmem:[%s8 + $0x358] sm:$0xff]
      %v1545 = vld [vmem:[%s8 + $0x360] sm:$0xff]
      %v1546 = vld [vmem:[%s8 + $0x368] sm:$0xff]
      %v1547 = vld [vmem:[%s8 + $0x370] sm:$0xff]
      %v1548 = vld [vmem:[%s8 + $0x378] sm:$0xff]
      %v1549 = vld [vmem:[%s8 + $0x380] sm:$0xff]
      %v1550 = vld [vmem:[%s8 + $0x388] sm:$0xff]
      %v1551 = vld [vmem:[%s8 + $0x390] sm:$0xff]
      %v1552 = vld [vmem:[%s8 + $0x398] sm:$0xff]
      %v1553 = vld [vmem:[%s8 + $0x3a0] sm:$0xff]
      %v1554 = vld [vmem:[%s8 + $0x3a8] sm:$0xff]
      %v1555 = vld [vmem:[%s8 + $0x3b0] sm:$0xff]
      %v1556 = vld [vmem:[%s8 + $0x3b8] sm:$0xff]
      %v1557 = vld [vmem:[%s8 + $0x3c0] sm:$0xff]
      %v1558 = vld [vmem:[%s8 + $0x3c8] sm:$0xff]
      %v1559 = vld [vmem:[%s8 + $0x3d0] sm:$0xff]
      %v1560 = vld [vmem:[%s8 + $0x3d8] sm:$0xff]
      %v1561 = vld [vmem:[%s8 + $0x3e0] sm:$0xff]
      %v1562 = vld [vmem:[%s8 + $0x3e8] sm:$0xff]
      %v1563 = vld [vmem:[%s8 + $0x3f0] sm:$0xff]
      %v1564 = vld [vmem:[%s8 + $0x3f8] sm:$0xff]
      %v1565 = vld [vmem:[%s9] sm:$0xf]
      %v1567 = vlaneseq
      %v1568 = vshrl.u32 %v1567, 7
      %v1569 = vsub.s32 0, %v1568
      %v1570 = vrot.slane %v1565, %v1569
      %v1571 = vlaneseq
      %v1572 = vshrl.u32 %v1571, 7
      %v1573 = vsub.s32 1, %v1572
      %v1574 = vrot.slane %v1565, %v1573
      %v1575 = vlaneseq
      %v1576 = vshrl.u32 %v1575, 7
      %v1577 = vsub.s32 2, %v1576
      %v1578 = vrot.slane %v1565, %v1577
      %v1579 = vlaneseq
      %v1580 = vshrl.u32 %v1579, 7
      %v1581 = vsub.s32 3, %v1580
      %v1582 = vrot.slane %v1565, %v1581
      %1587 = vmatprep.subr.mxu0 %v1438
      %1588 = vmatpush1.msra.mxu0 %v1437
      %1589 = vmatprep.subr.mxu0 %v1442
      %1590 = vmatpush1.msra.mxu0 %v1441
      %1591 = vmatprep.subr.mxu0 %v1446
      %1592 = vmatpush1.msra.mxu0 %v1445
      %1593 = vmatprep.subr.mxu0 %v1450
      %1594 = vmatpush1.msra.mxu0 %v1449
      %1595 = vmatprep.subr.mxu0 %v1454
      %1596 = vmatpush1.msra.mxu0 %v1453
      %1597 = vmatprep.subr.mxu0 %v1458
      %1598 = vmatpush1.msra.mxu0 %v1457
      %1599 = vmatprep.subr.mxu0 %v1462
      %1600 = vmatpush1.msra.mxu0 %v1461
      %1601 = vmatprep.subr.mxu0 %v1466
      %1602 = vmatpush1.msra.mxu0 %v1465
      %1603 = vmatprep.subr.mxu0 %v1470
      %1604 = vmatpush1.msra.mxu0 %v1469
      %1605 = vmatprep.subr.mxu0 %v1474
      %1606 = vmatpush1.msra.mxu0 %v1473
      %1607 = vmatprep.subr.mxu0 %v1478
      %1608 = vmatpush1.msra.mxu0 %v1477
      %1609 = vmatprep.subr.mxu0 %v1482
      %1610 = vmatpush1.msra.mxu0 %v1481
      %1611 = vmatprep.subr.mxu0 %v1486
      %1612 = vmatpush1.msra.mxu0 %v1485
      %1613 = vmatprep.subr.mxu0 %v1490
      %1614 = vmatpush1.msra.mxu0 %v1489
      %1615 = vmatprep.subr.mxu0 %v1494
      %1616 = vmatpush1.msra.mxu0 %v1493
      %1617 = vmatprep.subr.mxu0 %v1498
      %1618 = vmatpush1.msra.mxu0 %v1497
      %1619 = vmatprep.subr.mxu0 %v1502
      %1620 = vmatpush1.msra.mxu0 %v1501
      %1621 = vmatprep.subr.mxu0 %v1506
      %1622 = vmatpush1.msra.mxu0 %v1505
      %1623 = vmatprep.subr.mxu0 %v1510
      %1624 = vmatpush1.msra.mxu0 %v1509
      %1625 = vmatprep.subr.mxu0 %v1514
      %1626 = vmatpush1.msra.mxu0 %v1513
      %1627 = vmatprep.subr.mxu0 %v1518
      %1628 = vmatpush1.msra.mxu0 %v1517
      %1629 = vmatprep.subr.mxu0 %v1522
      %1630 = vmatpush1.msra.mxu0 %v1521
      %1631 = vmatprep.subr.mxu0 %v1526
      %1632 = vmatpush1.msra.mxu0 %v1525
      %1633 = vmatprep.subr.mxu0 %v1530
      %1634 = vmatpush1.msra.mxu0 %v1529
      %1635 = vmatprep.subr.mxu0 %v1534
      %1636 = vmatpush1.msra.mxu0 %v1533
      %1637 = vmatprep.subr.mxu0 %v1538
      %1638 = vmatpush1.msra.mxu0 %v1537
      %1639 = vmatprep.subr.mxu0 %v1542
      %1640 = vmatpush1.msra.mxu0 %v1541
      %1641 = vmatprep.subr.mxu0 %v1546
      %1642 = vmatpush1.msra.mxu0 %v1545
      %1643 = vmatprep.subr.mxu0 %v1550
      %1644 = vmatpush1.msra.mxu0 %v1549
      %1645 = vmatprep.subr.mxu0 %v1554
      %1646 = vmatpush1.msra.mxu0 %v1553
      %1647 = vmatprep.subr.mxu0 %v1558
      %1648 = vmatpush1.msra.mxu0 %v1557
      %1649 = vmatprep.subr.mxu0 %v1562
      %1650 = vmatpush1.msra.mxu0 %v1561
      %1651 = vmatprep.mubr.f32.mxu0 %v1436
      %1652 = vmatmul.mubr.f32.gmra.mrb[0].mxu0 %v1435
      %v1653 = vpop.f32.mrb[0].mxu0
      %v1654 = vadd.f32 %v1570, %v1653
      %v1655 = vpop.f32.mrb[0].mxu0
      %v1656 = vadd.f32 %v1574, %v1655
      %1657 = vdwg.mxu0
      %1658 = vmatprep.subr.mxu0 %v1440
      %1659 = vmatpush1.msra.mxu0 %v1439
      %1660 = vmatprep.subr.mxu0 %v1444
      %1661 = vmatpush1.msra.mxu0 %v1443
      %1662 = vmatprep.subr.mxu0 %v1448
      %1663 = vmatpush1.msra.mxu0 %v1447
      %1664 = vmatprep.subr.mxu0 %v1452
      %1665 = vmatpush1.msra.mxu0 %v1451
      %1666 = vmatprep.subr.mxu0 %v1456
      %1667 = vmatpush1.msra.mxu0 %v1455
      %1668 = vmatprep.subr.mxu0 %v1460
      %1669 = vmatpush1.msra.mxu0 %v1459
      %1670 = vmatprep.subr.mxu0 %v1464
      %1671 = vmatpush1.msra.mxu0 %v1463
      %1672 = vmatprep.subr.mxu0 %v1468
      %1673 = vmatpush1.msra.mxu0 %v1467
      %1674 = vmatprep.subr.mxu0 %v1472
      %1675 = vmatpush1.msra.mxu0 %v1471
      %1676 = vmatprep.subr.mxu0 %v1476
      %1677 = vmatpush1.msra.mxu0 %v1475
      %1678 = vmatprep.subr.mxu0 %v1480
      %1679 = vmatpush1.msra.mxu0 %v1479
      %1680 = vmatprep.subr.mxu0 %v1484
      %1681 = vmatpush1.msra.mxu0 %v1483
      %1682 = vmatprep.subr.mxu0 %v1488
      %1683 = vmatpush1.msra.mxu0 %v1487
      %1684 = vmatprep.subr.mxu0 %v1492
      %1685 = vmatpush1.msra.mxu0 %v1491
      %1686 = vmatprep.subr.mxu0 %v1496
      %1687 = vmatpush1.msra.mxu0 %v1495
      %1688 = vmatprep.subr.mxu0 %v1500
      %1689 = vmatpush1.msra.mxu0 %v1499
      %1690 = vmatprep.subr.mxu0 %v1504
      %1691 = vmatpush1.msra.mxu0 %v1503
      %1692 = vmatprep.subr.mxu0 %v1508
      %1693 = vmatpush1.msra.mxu0 %v1507
      %1694 = vmatprep.subr.mxu0 %v1512
      %1695 = vmatpush1.msra.mxu0 %v1511
      %1696 = vmatprep.subr.mxu0 %v1516
      %1697 = vmatpush1.msra.mxu0 %v1515
      %1698 = vmatprep.subr.mxu0 %v1520
      %1699 = vmatpush1.msra.mxu0 %v1519
      %1700 = vmatprep.subr.mxu0 %v1524
      %1701 = vmatpush1.msra.mxu0 %v1523
      %1702 = vmatprep.subr.mxu0 %v1528
      %1703 = vmatpush1.msra.mxu0 %v1527
      %1704 = vmatprep.subr.mxu0 %v1532
      %1705 = vmatpush1.msra.mxu0 %v1531
      %1706 = vmatprep.subr.mxu0 %v1536
      %1707 = vmatpush1.msra.mxu0 %v1535
      %1708 = vmatprep.subr.mxu0 %v1540
      %1709 = vmatpush1.msra.mxu0 %v1539
      %1710 = vmatprep.subr.mxu0 %v1544
      %1711 = vmatpush1.msra.mxu0 %v1543
      %1712 = vmatprep.subr.mxu0 %v1548
      %1713 = vmatpush1.msra.mxu0 %v1547
      %1714 = vmatprep.subr.mxu0 %v1552
      %1715 = vmatpush1.msra.mxu0 %v1551
      %1716 = vmatprep.subr.mxu0 %v1556
      %1717 = vmatpush1.msra.mxu0 %v1555
      %1718 = vmatprep.subr.mxu0 %v1560
      %1719 = vmatpush1.msra.mxu0 %v1559
      %1720 = vmatprep.subr.mxu0 %v1564
      %1721 = vmatpush1.msra.mxu0 %v1563
      %1722 = vmatprep.mubr.f32.mxu0 %v1436
      %1723 = vmatmul.mubr.f32.gmra.mrb[0].mxu0 %v1435
      %v1724 = vpop.f32.mrb[0].mxu0
      %v1725 = vadd.f32 %v1578, %v1724
      %v1726 = vpop.f32.mrb[0].mxu0
      %v1727 = vadd.f32 %v1582, %v1726
      %1728 = vdwg.mxu0
      %v1729 = vmul.f32 %v1654, 0.5
      %v1730 = vmul.f32 %v1656, 0.5
      %v1731 = vmul.f32 %v1725, 0.5
      %v1732 = vmul.f32 %v1727, 0.5
      %v1733 = vmul.f32 %v1654, 0.70710677
      %v1734 = vmul.f32 %v1656, 0.70710677
      %v1735 = vmul.f32 %v1725, 0.70710677
      %v1736 = vmul.f32 %v1727, 0.70710677
      %v1737 = verf.f32.pop %v1733
      %v1738 = verf.f32.pop %v1734
      %v1739 = verf.f32.pop %v1735
      %v1740 = verf.f32.pop %v1736
      %v1741 = vadd.f32 %v1737, 1.0
      %v1742 = vadd.f32 %v1738, 1.0
      %v1743 = vadd.f32 %v1739, 1.0
      %v1744 = vadd.f32 %v1740, 1.0
      %v1745 = vmul.f32 %v1729, %v1741
      %v1746 = vmul.f32 %v1730, %v1742
      %v1747 = vmul.f32 %v1731, %v1743
      %v1748 = vmul.f32 %v1732, %v1744
      %v1749 = vld [vmem:[%s10] sm:$0xff]
      %v1750 = vld [vmem:[%s10 + $0x8] sm:$0xff]
      %v1751 = vld [vmem:[%s10 + $0x10] sm:$0xff]
      %v1752 = vld [vmem:[%s10 + $0x18] sm:$0xff]
      %v1753 = vld [vmem:[%s10 + $0x20] sm:$0xff]
      %v1754 = vld [vmem:[%s10 + $0x28] sm:$0xff]
      %v1755 = vld [vmem:[%s10 + $0x30] sm:$0xff]
      %v1756 = vld [vmem:[%s10 + $0x38] sm:$0xff]
      %v1757 = vld [vmem:[%s10 + $0x40] sm:$0xff]
      %v1758 = vld [vmem:[%s10 + $0x48] sm:$0xff]
      %v1759 = vld [vmem:[%s10 + $0x50] sm:$0xff]
      %v1760 = vld [vmem:[%s10 + $0x58] sm:$0xff]
      %v1761 = vld [vmem:[%s10 + $0x60] sm:$0xff]
      %v1762 = vld [vmem:[%s10 + $0x68] sm:$0xff]
      %v1763 = vld [vmem:[%s10 + $0x70] sm:$0xff]
      %v1764 = vld [vmem:[%s10 + $0x78] sm:$0xff]
      %v1765 = vld [vmem:[%s10 + $0x80] sm:$0xff]
      %v1766 = vld [vmem:[%s10 + $0x88] sm:$0xff]
      %v1767 = vld [vmem:[%s10 + $0x90] sm:$0xff]
      %v1768 = vld [vmem:[%s10 + $0x98] sm:$0xff]
      %v1769 = vld [vmem:[%s10 + $0xa0] sm:$0xff]
      %v1770 = vld [vmem:[%s10 + $0xa8] sm:$0xff]
      %v1771 = vld [vmem:[%s10 + $0xb0] sm:$0xff]
      %v1772 = vld [vmem:[%s10 + $0xb8] sm:$0xff]
      %v1773 = vld [vmem:[%s10 + $0xc0] sm:$0xff]
      %v1774 = vld [vmem:[%s10 + $0xc8] sm:$0xff]
      %v1775 = vld [vmem:[%s10 + $0xd0] sm:$0xff]
      %v1776 = vld [vmem:[%s10 + $0xd8] sm:$0xff]
      %v1777 = vld [vmem:[%s10 + $0xe0] sm:$0xff]
      %v1778 = vld [vmem:[%s10 + $0xe8] sm:$0xff]
      %v1779 = vld [vmem:[%s10 + $0xf0] sm:$0xff]
      %v1780 = vld [vmem:[%s10 + $0xf8] sm:$0xff]
      %v1781 = vld [vmem:[%s10 + $0x100] sm:$0xff]
      %v1782 = vld [vmem:[%s10 + $0x108] sm:$0xff]
      %v1783 = vld [vmem:[%s10 + $0x110] sm:$0xff]
      %v1784 = vld [vmem:[%s10 + $0x118] sm:$0xff]
      %v1785 = vld [vmem:[%s10 + $0x120] sm:$0xff]
      %v1786 = vld [vmem:[%s10 + $0x128] sm:$0xff]
      %v1787 = vld [vmem:[%s10 + $0x130] sm:$0xff]
      %v1788 = vld [vmem:[%s10 + $0x138] sm:$0xff]
      %v1789 = vld [vmem:[%s10 + $0x140] sm:$0xff]
      %v1790 = vld [vmem:[%s10 + $0x148] sm:$0xff]
      %v1791 = vld [vmem:[%s10 + $0x150] sm:$0xff]
      %v1792 = vld [vmem:[%s10 + $0x158] sm:$0xff]
      %v1793 = vld [vmem:[%s10 + $0x160] sm:$0xff]
      %v1794 = vld [vmem:[%s10 + $0x168] sm:$0xff]
      %v1795 = vld [vmem:[%s10 + $0x170] sm:$0xff]
      %v1796 = vld [vmem:[%s10 + $0x178] sm:$0xff]
      %v1797 = vld [vmem:[%s10 + $0x180] sm:$0xff]
      %v1798 = vld [vmem:[%s10 + $0x188] sm:$0xff]
      %v1799 = vld [vmem:[%s10 + $0x190] sm:$0xff]
      %v1800 = vld [vmem:[%s10 + $0x198] sm:$0xff]
      %v1801 = vld [vmem:[%s10 + $0x1a0] sm:$0xff]
      %v1802 = vld [vmem:[%s10 + $0x1a8] sm:$0xff]
      %v1803 = vld [vmem:[%s10 + $0x1b0] sm:$0xff]
      %v1804 = vld [vmem:[%s10 + $0x1b8] sm:$0xff]
      %v1805 = vld [vmem:[%s10 + $0x1c0] sm:$0xff]
      %v1806 = vld [vmem:[%s10 + $0x1c8] sm:$0xff]
      %v1807 = vld [vmem:[%s10 + $0x1d0] sm:$0xff]
      %v1808 = vld [vmem:[%s10 + $0x1d8] sm:$0xff]
      %v1809 = vld [vmem:[%s10 + $0x1e0] sm:$0xff]
      %v1810 = vld [vmem:[%s10 + $0x1e8] sm:$0xff]
      %v1811 = vld [vmem:[%s10 + $0x1f0] sm:$0xff]
      %v1812 = vld [vmem:[%s10 + $0x1f8] sm:$0xff]
      %v1813 = vld [vmem:[%s10 + $0x200] sm:$0xff]
      %v1814 = vld [vmem:[%s10 + $0x208] sm:$0xff]
      %v1815 = vld [vmem:[%s10 + $0x210] sm:$0xff]
      %v1816 = vld [vmem:[%s10 + $0x218] sm:$0xff]
      %v1817 = vld [vmem:[%s10 + $0x220] sm:$0xff]
      %v1818 = vld [vmem:[%s10 + $0x228] sm:$0xff]
      %v1819 = vld [vmem:[%s10 + $0x230] sm:$0xff]
      %v1820 = vld [vmem:[%s10 + $0x238] sm:$0xff]
      %v1821 = vld [vmem:[%s10 + $0x240] sm:$0xff]
      %v1822 = vld [vmem:[%s10 + $0x248] sm:$0xff]
      %v1823 = vld [vmem:[%s10 + $0x250] sm:$0xff]
      %v1824 = vld [vmem:[%s10 + $0x258] sm:$0xff]
      %v1825 = vld [vmem:[%s10 + $0x260] sm:$0xff]
      %v1826 = vld [vmem:[%s10 + $0x268] sm:$0xff]
      %v1827 = vld [vmem:[%s10 + $0x270] sm:$0xff]
      %v1828 = vld [vmem:[%s10 + $0x278] sm:$0xff]
      %v1829 = vld [vmem:[%s10 + $0x280] sm:$0xff]
      %v1830 = vld [vmem:[%s10 + $0x288] sm:$0xff]
      %v1831 = vld [vmem:[%s10 + $0x290] sm:$0xff]
      %v1832 = vld [vmem:[%s10 + $0x298] sm:$0xff]
      %v1833 = vld [vmem:[%s10 + $0x2a0] sm:$0xff]
      %v1834 = vld [vmem:[%s10 + $0x2a8] sm:$0xff]
      %v1835 = vld [vmem:[%s10 + $0x2b0] sm:$0xff]
      %v1836 = vld [vmem:[%s10 + $0x2b8] sm:$0xff]
      %v1837 = vld [vmem:[%s10 + $0x2c0] sm:$0xff]
      %v1838 = vld [vmem:[%s10 + $0x2c8] sm:$0xff]
      %v1839 = vld [vmem:[%s10 + $0x2d0] sm:$0xff]
      %v1840 = vld [vmem:[%s10 + $0x2d8] sm:$0xff]
      %v1841 = vld [vmem:[%s10 + $0x2e0] sm:$0xff]
      %v1842 = vld [vmem:[%s10 + $0x2e8] sm:$0xff]
      %v1843 = vld [vmem:[%s10 + $0x2f0] sm:$0xff]
      %v1844 = vld [vmem:[%s10 + $0x2f8] sm:$0xff]
      %v1845 = vld [vmem:[%s10 + $0x300] sm:$0xff]
      %v1846 = vld [vmem:[%s10 + $0x308] sm:$0xff]
      %v1847 = vld [vmem:[%s10 + $0x310] sm:$0xff]
      %v1848 = vld [vmem:[%s10 + $0x318] sm:$0xff]
      %v1849 = vld [vmem:[%s10 + $0x320] sm:$0xff]
      %v1850 = vld [vmem:[%s10 + $0x328] sm:$0xff]
      %v1851 = vld [vmem:[%s10 + $0x330] sm:$0xff]
      %v1852 = vld [vmem:[%s10 + $0x338] sm:$0xff]
      %v1853 = vld [vmem:[%s10 + $0x340] sm:$0xff]
      %v1854 = vld [vmem:[%s10 + $0x348] sm:$0xff]
      %v1855 = vld [vmem:[%s10 + $0x350] sm:$0xff]
      %v1856 = vld [vmem:[%s10 + $0x358] sm:$0xff]
      %v1857 = vld [vmem:[%s10 + $0x360] sm:$0xff]
      %v1858 = vld [vmem:[%s10 + $0x368] sm:$0xff]
      %v1859 = vld [vmem:[%s10 + $0x370] sm:$0xff]
      %v1860 = vld [vmem:[%s10 + $0x378] sm:$0xff]
      %v1861 = vld [vmem:[%s10 + $0x380] sm:$0xff]
      %v1862 = vld [vmem:[%s10 + $0x388] sm:$0xff]
      %v1863 = vld [vmem:[%s10 + $0x390] sm:$0xff]
      %v1864 = vld [vmem:[%s10 + $0x398] sm:$0xff]
      %v1865 = vld [vmem:[%s10 + $0x3a0] sm:$0xff]
      %v1866 = vld [vmem:[%s10 + $0x3a8] sm:$0xff]
      %v1867 = vld [vmem:[%s10 + $0x3b0] sm:$0xff]
      %v1868 = vld [vmem:[%s10 + $0x3b8] sm:$0xff]
      %v1869 = vld [vmem:[%s10 + $0x3c0] sm:$0xff]
      %v1870 = vld [vmem:[%s10 + $0x3c8] sm:$0xff]
      %v1871 = vld [vmem:[%s10 + $0x3d0] sm:$0xff]
      %v1872 = vld [vmem:[%s10 + $0x3d8] sm:$0xff]
      %v1873 = vld [vmem:[%s10 + $0x3e0] sm:$0xff]
      %v1874 = vld [vmem:[%s10 + $0x3e8] sm:$0xff]
      %v1875 = vld [vmem:[%s10 + $0x3f0] sm:$0xff]
      %v1876 = vld [vmem:[%s10 + $0x3f8] sm:$0xff]
      %v1877 = vld [vmem:[%s11] sm:$0x3]
      %v1879 = vlaneseq
      %v1880 = vshrl.u32 %v1879, 7
      %v1881 = vsub.s32 0, %v1880
      %v1882 = vrot.slane %v1877, %v1881
      %v1883 = vlaneseq
      %v1884 = vshrl.u32 %v1883, 7
      %v1885 = vsub.s32 1, %v1884
      %v1886 = vrot.slane %v1877, %v1885
      %1889 = vmatprep.subr.mxu0 %v1750
      %1890 = vmatpush1.msra.mxu0 %v1749
      %1891 = vmatprep.subr.mxu0 %v1752
      %1892 = vmatpush1.msra.mxu0 %v1751
      %1893 = vmatprep.subr.mxu0 %v1754
      %1894 = vmatpush1.msra.mxu0 %v1753
      %1895 = vmatprep.subr.mxu0 %v1756
      %1896 = vmatpush1.msra.mxu0 %v1755
      %1897 = vmatprep.subr.mxu0 %v1758
      %1898 = vmatpush1.msra.mxu0 %v1757
      %1899 = vmatprep.subr.mxu0 %v1760
      %1900 = vmatpush1.msra.mxu0 %v1759
      %1901 = vmatprep.subr.mxu0 %v1762
      %1902 = vmatpush1.msra.mxu0 %v1761
      %1903 = vmatprep.subr.mxu0 %v1764
      %1904 = vmatpush1.msra.mxu0 %v1763
      %1905 = vmatprep.subr.mxu0 %v1766
      %1906 = vmatpush1.msra.mxu0 %v1765
      %1907 = vmatprep.subr.mxu0 %v1768
      %1908 = vmatpush1.msra.mxu0 %v1767
      %1909 = vmatprep.subr.mxu0 %v1770
      %1910 = vmatpush1.msra.mxu0 %v1769
      %1911 = vmatprep.subr.mxu0 %v1772
      %1912 = vmatpush1.msra.mxu0 %v1771
      %1913 = vmatprep.subr.mxu0 %v1774
      %1914 = vmatpush1.msra.mxu0 %v1773
      %1915 = vmatprep.subr.mxu0 %v1776
      %1916 = vmatpush1.msra.mxu0 %v1775
      %1917 = vmatprep.subr.mxu0 %v1778
      %1918 = vmatpush1.msra.mxu0 %v1777
      %1919 = vmatprep.subr.mxu0 %v1780
      %1920 = vmatpush1.msra.mxu0 %v1779
      %1921 = vmatprep.subr.mxu0 %v1782
      %1922 = vmatpush1.msra.mxu0 %v1781
      %1923 = vmatprep.subr.mxu0 %v1784
      %1924 = vmatpush1.msra.mxu0 %v1783
      %1925 = vmatprep.subr.mxu0 %v1786
      %1926 = vmatpush1.msra.mxu0 %v1785
      %1927 = vmatprep.subr.mxu0 %v1788
      %1928 = vmatpush1.msra.mxu0 %v1787
      %1929 = vmatprep.subr.mxu0 %v1790
      %1930 = vmatpush1.msra.mxu0 %v1789
      %1931 = vmatprep.subr.mxu0 %v1792
      %1932 = vmatpush1.msra.mxu0 %v1791
      %1933 = vmatprep.subr.mxu0 %v1794
      %1934 = vmatpush1.msra.mxu0 %v1793
      %1935 = vmatprep.subr.mxu0 %v1796
      %1936 = vmatpush1.msra.mxu0 %v1795
      %1937 = vmatprep.subr.mxu0 %v1798
      %1938 = vmatpush1.msra.mxu0 %v1797
      %1939 = vmatprep.subr.mxu0 %v1800
      %1940 = vmatpush1.msra.mxu0 %v1799
      %1941 = vmatprep.subr.mxu0 %v1802
      %1942 = vmatpush1.msra.mxu0 %v1801
      %1943 = vmatprep.subr.mxu0 %v1804
      %1944 = vmatpush1.msra.mxu0 %v1803
      %1945 = vmatprep.subr.mxu0 %v1806
      %1946 = vmatpush1.msra.mxu0 %v1805
      %1947 = vmatprep.subr.mxu0 %v1808
      %1948 = vmatpush1.msra.mxu0 %v1807
      %1949 = vmatprep.subr.mxu0 %v1810
      %1950 = vmatpush1.msra.mxu0 %v1809
      %1951 = vmatprep.subr.mxu0 %v1812
      %1952 = vmatpush1.msra.mxu0 %v1811
      %1953 = vmatprep.mubr.f32.mxu0 %v1746
      %1954 = vmatmul.mubr.f32.gmra.mrb[0].mxu0 %v1745
      %v1955 = vpop.f32.mrb[0].mxu0
      %v1956 = vadd.f32 %v1882, %v1955
      %v1957 = vpop.f32.mrb[0].mxu0
      %v1958 = vadd.f32 %v1886, %v1957
      %1959 = vdwg.mxu0
      %1960 = vmatprep.subr.mxu0 %v1814
      %1961 = vmatpush1.msra.mxu0 %v1813
      %1962 = vmatprep.subr.mxu0 %v1816
      %1963 = vmatpush1.msra.mxu0 %v1815
      %1964 = vmatprep.subr.mxu0 %v1818
      %1965 = vmatpush1.msra.mxu0 %v1817
      %1966 = vmatprep.subr.mxu0 %v1820
      %1967 = vmatpush1.msra.mxu0 %v1819
      %1968 = vmatprep.subr.mxu0 %v1822
      %1969 = vmatpush1.msra.mxu0 %v1821
      %1970 = vmatprep.subr.mxu0 %v1824
      %1971 = vmatpush1.msra.mxu0 %v1823
      %1972 = vmatprep.subr.mxu0 %v1826
      %1973 = vmatpush1.msra.mxu0 %v1825
      %1974 = vmatprep.subr.mxu0 %v1828
      %1975 = vmatpush1.msra.mxu0 %v1827
      %1976 = vmatprep.subr.mxu0 %v1830
      %1977 = vmatpush1.msra.mxu0 %v1829
      %1978 = vmatprep.subr.mxu0 %v1832
      %1979 = vmatpush1.msra.mxu0 %v1831
      %1980 = vmatprep.subr.mxu0 %v1834
      %1981 = vmatpush1.msra.mxu0 %v1833
      %1982 = vmatprep.subr.mxu0 %v1836
      %1983 = vmatpush1.msra.mxu0 %v1835
      %1984 = vmatprep.subr.mxu0 %v1838
      %1985 = vmatpush1.msra.mxu0 %v1837
      %1986 = vmatprep.subr.mxu0 %v1840
      %1987 = vmatpush1.msra.mxu0 %v1839
      %1988 = vmatprep.subr.mxu0 %v1842
      %1989 = vmatpush1.msra.mxu0 %v1841
      %1990 = vmatprep.subr.mxu0 %v1844
      %1991 = vmatpush1.msra.mxu0 %v1843
      %1992 = vmatprep.subr.mxu0 %v1846
      %1993 = vmatpush1.msra.mxu0 %v1845
      %1994 = vmatprep.subr.mxu0 %v1848
      %1995 = vmatpush1.msra.mxu0 %v1847
      %1996 = vmatprep.subr.mxu0 %v1850
      %1997 = vmatpush1.msra.mxu0 %v1849
      %1998 = vmatprep.subr.mxu0 %v1852
      %1999 = vmatpush1.msra.mxu0 %v1851
      %2000 = vmatprep.subr.mxu0 %v1854
      %2001 = vmatpush1.msra.mxu0 %v1853
      %2002 = vmatprep.subr.mxu0 %v1856
      %2003 = vmatpush1.msra.mxu0 %v1855
      %2004 = vmatprep.subr.mxu0 %v1858
      %2005 = vmatpush1.msra.mxu0 %v1857
      %2006 = vmatprep.subr.mxu0 %v1860
      %2007 = vmatpush1.msra.mxu0 %v1859
      %2008 = vmatprep.subr.mxu0 %v1862
      %2009 = vmatpush1.msra.mxu0 %v1861
      %2010 = vmatprep.subr.mxu0 %v1864
      %2011 = vmatpush1.msra.mxu0 %v1863
      %2012 = vmatprep.subr.mxu0 %v1866
      %2013 = vmatpush1.msra.mxu0 %v1865
      %2014 = vmatprep.subr.mxu0 %v1868
      %2015 = vmatpush1.msra.mxu0 %v1867
      %2016 = vmatprep.subr.mxu0 %v1870
      %2017 = vmatpush1.msra.mxu0 %v1869
      %2018 = vmatprep.subr.mxu0 %v1872
      %2019 = vmatpush1.msra.mxu0 %v1871
      %2020 = vmatprep.subr.mxu0 %v1874
      %2021 = vmatpush1.msra.mxu0 %v1873
      %2022 = vmatprep.subr.mxu0 %v1876
      %2023 = vmatpush1.msra.mxu0 %v1875
      %2024 = vmatprep.mubr.f32.mxu0 %v1748
      %2025 = vmatmul.mubr.f32.gmra.mrb[0].mxu0 %v1747
      %v2026 = vpop.f32.mrb[0].mxu0
      %v2027 = vadd.f32 %v1956, %v2026
      %v2028 = vpop.f32.mrb[0].mxu0
      %v2029 = vadd.f32 %v1958, %v2028
      %2030 = vdwg.mxu0
      %v2031 = vadd.f32 %v1435, %v2027
      %v2032 = vadd.f32 %v1436, %v2029
      %v2033 = vld [vmem:[%s12] sm:$0x3]
      %v2034 = vld [vmem:[%s13] sm:$0x3]
      %v2035 = vadd.f32 %v2031, %v2032
      %2036 = vadd.xlane.f32.xlu0 %v2035
      %v2037 = vpop.xlane.xlu0 %2036
      %v2038 = vmul.f32 %v2037, %v1397
      %v2039 = vsub.f32 %v2031, %v2038
      %v2040 = vsub.f32 %v2032, %v2038
      %v2041 = vmul.f32 %v2039, %v2039
      %v2042 = vmul.f32 %v2040, %v2040
      %v2043 = vadd.f32 %v2041, %v2042
      %2044 = vadd.xlane.f32.xlu0 %v2043
      %v2045 = vpop.xlane.xlu0 %2044
      %v2046 = vmul.f32 %v2045, %v1397
      %v2047 = vadd.f32 %v2046, 1e-12
      %v2048 = vrsqrt.pop %v2047
      %v2049 = vmul.f32 %v2039, %v2048
      %v2050 = vmul.f32 %v2040, %v2048
      %v2052 = vlaneseq
      %v2053 = vshrl.u32 %v2052, 7
      %v2054 = vsub.s32 0, %v2053
      %v2055 = vrot.slane %v2033, %v2054
      %v2056 = vlaneseq
      %v2057 = vshrl.u32 %v2056, 7
      %v2058 = vsub.s32 1, %v2057
      %v2059 = vrot.slane %v2033, %v2058
      %v2062 = vmul.f32 %v2049, %v2055
      %v2063 = vmul.f32 %v2050, %v2059
      %v2065 = vlaneseq
      %v2066 = vshrl.u32 %v2065, 7
      %v2067 = vsub.s32 0, %v2066
      %v2068 = vrot.slane %v2034, %v2067
      %v2069 = vlaneseq
      %v2070 = vshrl.u32 %v2069, 7
      %v2071 = vsub.s32 1, %v2070
      %v2072 = vrot.slane %v2034, %v2071
      %v2075 = vadd.f32 %v2062, %v2068
      %v2076 = vadd.f32 %v2063, %v2072
      %2077 = vst [vmem:[%s481] sm:$0xff] %v2075
      %2078 = vst [vmem:[%s481 + $0x8] sm:$0xff] %v2076
      %p2079 = scmp.lt.s32.totalorder %s25, 1
      %s2080 = scalar_select %p2079, %s25, 1
      %s2081 = smul.addr %s2080, 2
      %s2082 = smul.addr %s2081, 8
      %s2083 = scalar_lea.vmem %s14, %s2082
      // Predicated region
      $region77: #{sentiment_classifier_forward.6} parent=75 // pred_check
        %p2084 = pneg %p347
      $region78: #{sentiment_classifier_forward.6} parent=75 // pred_check_branch
        %2086 = sbr.rel (%p2084) target = $region80
      $region79: #{sentiment_classifier_forward.6} parent=75 // pred_region
        _
      $region80: #{sentiment_classifier_forward.6} parent=75 // pred_fallthru
        _
    $region76: #{sentiment_classifier_forward.6} parent=5 // pred_fallthru
      _
    %p2087 = scmp.le.s32.totalorder 2, %s20
    // Predicated region
    $region81: #{sentiment_classifier_forward.6} parent=5 // pred_check
      %p2088 = pneg %p2087
    $region82: #{sentiment_classifier_forward.6} parent=5 // pred_check_branch
      %2090 = sbr.rel (%p2088) target = $region84
    $region83: #{sentiment_classifier_forward.6} parent=5 // pred_region
      %s2091 = ssub.s32 %s20, 2
      // Predicated region
      $region85: #{sentiment_classifier_forward.6} parent=83 // pred_check
        %p2092 = pneg %p353
      $region86: #{sentiment_classifier_forward.6} parent=83 // pred_check_branch
        %2094 = sbr.rel (%p2092) target = $region88
      $region87: #{sentiment_classifier_forward.6} parent=83 // pred_region
        %p2095 = scmp.lt.s32.totalorder %s26, 1
        %s2096 = scalar_select %p2095, %s26, 1
        %s2097 = smul.addr %s2096, 2
        %s2098 = smul.addr %s2097, 8
        %s2099 = scalar_lea.vmem %s14, %s2098
      $region88: #{sentiment_classifier_forward.6} parent=83 // pred_fallthru
        _
    $region84: #{sentiment_classifier_forward.6} parent=5 // pred_fallthru
      _
  $region6: #{sentiment_classifier_forward.6} parent=0 // loop_footer
    %s24 = sadd.s32 1, %s20
  $region7: #{sentiment_classifier_forward.6} parent=0 // loop_footer_branch
    %19 = sbr.rel target = $region3
  $region8: #{sentiment_classifier_forward.6} parent=0 // loop_exit
    _

</llo_original>
